<compile_context>
chip_gen: v6e
topology: v6e:2x2x1
jax: 0.10.0
libtpu: 0.0.40
codegen_flags: <defaults>
</compile_context>

<pallas_src>
import jax
import jax.numpy as jnp
from jax import lax
from jax.experimental import pallas as pl
from jax.experimental.pallas import tpu as pltpu

EPS = 1e-5
MATMUL_DTYPE = jnp.bfloat16     # matmul operands; accumulation is always f32


# ---------------------------------------------------------------------------
# small helpers
# ---------------------------------------------------------------------------
def _cp(ndim):
    return pltpu.CompilerParams(
        dimension_semantics=("parallel",) * ndim,
        vmem_limit_bytes=32 * 1024 * 1024,
    )


def _pick_tile(n, cap):
    """largest multiple of 8 that divides n and is <= cap, else n (full dim)."""
    best = None
    t = 8
    while t <= min(n, cap):
        if n % t == 0:
            best = t
        t += 8
    return best if best is not None else n


def _mish(x):
    # x * tanh(softplus(x)) with one exp: tanh(log(1+e^x)) = e^x(e^x+2)/(e^x(e^x+2)+2)
    ex = jnp.exp(jnp.minimum(x, 20.0))
    num = ex * (ex + 2.0)
    return jnp.where(x > 20.0, x, x * (num / (num + 2.0)))


def _bn_scale_shift(stat_sum, count, gamma, beta):
    # stat_sum: (2, C) = [sum, sum of squares]; training-mode (biased) statistics
    mean = stat_sum[0] / count
    var = jnp.maximum(stat_sum[1] / count - mean * mean, 0.0)
    scale = gamma * lax.rsqrt(var + EPS)
    shift = beta - mean * scale
    return scale.reshape(1, -1), shift.reshape(1, -1)


def _w3x3_to_slab(w):   # torch (Co, Ci, 3, 3) -> (9*Ci, Co), tap-major (dy, dx, ci)
    return jnp.transpose(w, (2, 3, 1, 0)).reshape(-1, w.shape[0])


# ---------------------------------------------------------------------------
# Kernel: 3x3 same-conv, one output row per grid step, single K=9C matmul,
#         plus per-row BN partial statistics (and optionally text-emb statistics).
# ---------------------------------------------------------------------------
def _conv_row_slab(x0_ref, x1_ref, x2_ref, w_ref, b_ref, out_w):
    pieces = []
    for r in (x0_ref, x1_ref, x2_ref):          # dy = 0, 1, 2 (padded rows)
        for dx in range(3):
            pieces.append(r[dx:dx + out_w, :])  # (W, C) window
    slab = jnp.concatenate(pieces, axis=1).astype(MATMUL_DTYPE)        # (W, 9C)
    return jnp.dot(slab, w_ref[...], preferred_element_type=jnp.float32) + b_ref[...]


def _conv1_kernel(x0_ref, x1_ref, x2_ref, te_ref, w_ref, b_ref,
                  y_ref, st_ref, stt_ref):
    out_w = y_ref.shape[0]
    y = _conv_row_slab(x0_ref, x1_ref, x2_ref, w_ref, b_ref, out_w)
    y_ref[...] = y
    st_ref[0:1, :] = jnp.sum(y, axis=0, keepdims=True)
    st_ref[1:2, :] = jnp.sum(y * y, axis=0, keepdims=True)
    te = te_ref[...]
    stt_ref[0:1, :] = jnp.sum(te, axis=0, keepdims=True)
    stt_ref[1:2, :] = jnp.sum(te * te, axis=0, keepdims=True)


def _conv2_kernel(x0_ref, x1_ref, x2_ref, w_ref, b_ref, y_ref, st_ref):
    out_w = y_ref.shape[0]
    y = _conv_row_slab(x0_ref, x1_ref, x2_ref, w_ref, b_ref, out_w)
    y_ref[...] = y
    st_ref[0:1, :] = jnp.sum(y, axis=0, keepdims=True)
    st_ref[1:2, :] = jnp.sum(y * y, axis=0, keepdims=True)


def _conv3x3_rows(xp, w_slab, bias, te=None):
    """xp: (B, H+2, W+2, C) padded NHWC.  Returns conv output (B,H,W,C) + partial stats."""
    B, Hp2, Wp2, C = xp.shape
    H, W = Hp2 - 2, Wp2 - 2

    def row_spec(dy):
        return pl.BlockSpec((None, None, Wp2, C),
                            lambda b, h, dy=dy: (b, h + dy, 0, 0))

    in_specs = [row_spec(0), row_spec(1), row_spec(2)]
    args = [xp, xp, xp]
    out_shapes = [jax.ShapeDtypeStruct((B, H, W, C), jnp.float32),
                  jax.ShapeDtypeStruct((B, H, 2, C), jnp.float32)]
    out_specs = [pl.BlockSpec((None, None, W, C), lambda b, h: (b, h, 0, 0)),
                 pl.BlockSpec((None, None, 2, C), lambda b, h: (b, h, 0, 0))]
    kernel = _conv2_kernel
    if te is not None:
        in_specs.append(pl.BlockSpec((None, None, W, C), lambda b, h: (b, h, 0, 0)))
        args.append(te)
        out_shapes.append(jax.ShapeDtypeStruct((B, H, 2, C), jnp.float32))
        out_specs.append(pl.BlockSpec((None, None, 2, C), lambda b, h: (b, h, 0, 0)))
        kernel = _conv1_kernel
    in_specs += [pl.BlockSpec(w_slab.shape, lambda b, h: (0, 0)),
                 pl.BlockSpec(bias.shape, lambda b, h: (0, 0))]
    args += [w_slab, bias]

    return pl.pallas_call(
        kernel,
        grid=(B, H),
        in_specs=in_specs,
        out_specs=tuple(out_specs),
        out_shape=tuple(out_shapes),
        compiler_params=_cp(2),
    )(*args)


# ---------------------------------------------------------------------------
# Kernel: apply BN (precomputed scale/shift) + mish, tiled over pixels
# ---------------------------------------------------------------------------
def _bn_mish_kernel(y_ref, sc_ref, sh_ref, o_ref):
    o_ref[...] = _mish(y_ref[...] * sc_ref[...] + sh_ref[...])


def _bn_mish_apply(y_flat, scale, shift):
    P, C = y_flat.shape
    tp = _pick_tile(P, 1024)
    return pl.pallas_call(
        _bn_mish_kernel,
        grid=(P // tp,),
        in_specs=[pl.BlockSpec((tp, C), lambda i: (i, 0)),
                  pl.BlockSpec((1, C), lambda i: (0, 0)),
                  pl.BlockSpec((1, C), lambda i: (0, 0))],
        out_specs=pl.BlockSpec((tp, C), lambda i: (i, 0)),
        out_shape=jax.ShapeDtypeStruct((P, C), jnp.float32),
        compiler_params=_cp(1),
    )(y_flat, scale, shift)


# ---------------------------------------------------------------------------
# Kernel: MBA front — concat-1x1 conv with bn2 / text-BN folded into the weights,
#         plus partial statistics of its output (input of the next BN).
# ---------------------------------------------------------------------------
def _mba_pre_kernel(y2_ref, te_ref, war_ref, wae_ref, ba_ref, f_ref, st_ref):
    fpre = (jnp.dot(y2_ref[...].astype(MATMUL_DTYPE), war_ref[...],
                    preferred_element_type=jnp.float32)
            + jnp.dot(te_ref[...].astype(MATMUL_DTYPE), wae_ref[...],
                      preferred_element_type=jnp.float32)
            + ba_ref[...])
    f_ref[...] = fpre
    st_ref[0:1, :] = jnp.sum(fpre, axis=0, keepdims=True)
    st_ref[1:2, :] = jnp.sum(fpre * fpre, axis=0, keepdims=True)


def _mba_pre(y2_flat, te_flat, warp, waep, bap):
    P, C = y2_flat.shape
    tp = _pick_tile(P, 1024)
    nt = P // tp
    return pl.pallas_call(
        _mba_pre_kernel,
        grid=(nt,),
        in_specs=[pl.BlockSpec((tp, C), lambda i: (i, 0)),
                  pl.BlockSpec((tp, C), lambda i: (i, 0)),
                  pl.BlockSpec(warp.shape, lambda i: (0, 0)),
                  pl.BlockSpec(waep.shape, lambda i: (0, 0)),
                  pl.BlockSpec(bap.shape, lambda i: (0, 0))],
        out_specs=(pl.BlockSpec((tp, C), lambda i: (i, 0)),
                   pl.BlockSpec((None, 2, C), lambda i: (i, 0, 0))),
        out_shape=(jax.ShapeDtypeStruct((P, C), jnp.float32),
                   jax.ShapeDtypeStruct((nt, 2, C), jnp.float32)),
        compiler_params=_cp(1),
    )(y2_flat, te_flat, warp, waep, bap)


# ---------------------------------------------------------------------------
# Kernel: MBA mid — BN3 + PReLU + 1x1 conv -> feature; ESA conv1 (1x1);
#         per-batch CA pooling partials.
# ---------------------------------------------------------------------------
def _mba_mid_kernel(fp_ref, sc_ref, sh_ref, al_ref, wb_ref, bb_ref, we_ref, be_ref,
                    feat_ref, c1u_ref, pool_ref):
    f1 = fp_ref[...] * sc_ref[...] + sh_ref[...]
    f1 = jnp.where(f1 >= 0.0, f1, f1 * al_ref[...])                    # PReLU (scalar)
    feat = jnp.dot(f1.astype(MATMUL_DTYPE), wb_ref[...],
                   preferred_element_type=jnp.float32) + bb_ref[...]
    feat_ref[...] = feat
    c1u_ref[...] = jnp.dot(feat, we_ref[...],
                           preferred_element_type=jnp.float32) + be_ref[...]
    pool_ref[...] = jnp.sum(feat, axis=0, keepdims=True)


def _mba_mid(fpre3, scale3, shift3, alpha, wb, bb, wesa1, besa1):
    B, HW, C = fpre3.shape
    f = wesa1.shape[1]
    tp = _pick_tile(HW, 1024)
    nt = HW // tp
    return pl.pallas_call(
        _mba_mid_kernel,
        grid=(B, nt),
        in_specs=[pl.BlockSpec((None, tp, C), lambda b, i: (b, i, 0)),
                  pl.BlockSpec((1, C), lambda b, i: (0, 0)),
                  pl.BlockSpec((1, C), lambda b, i: (0, 0)),
                  pl.BlockSpec((1, 1), lambda b, i: (0, 0)),
                  pl.BlockSpec(wb.shape, lambda b, i: (0, 0)),
                  pl.BlockSpec(bb.shape, lambda b, i: (0, 0)),
                  pl.BlockSpec(wesa1.shape, lambda b, i: (0, 0)),
                  pl.BlockSpec(besa1.shape, lambda b, i: (0, 0))],
        out_specs=(pl.BlockSpec((None, tp, C), lambda b, i: (b, i, 0)),
                   pl.BlockSpec((None, tp, f), lambda b, i: (b, i, 0)),
                   pl.BlockSpec((None, None, 1, C), lambda b, i: (b, i, 0, 0))),
        out_shape=(jax.ShapeDtypeStruct((B, HW, C), jnp.float32),
                   jax.ShapeDtypeStruct((B, HW, f), jnp.float32),
                   jax.ShapeDtypeStruct((B, nt, 1, C), jnp.float32)),
        compiler_params=_cp(2),
    )(fpre3, scale3, shift3, alpha, wb, bb, wesa1, besa1)


# ---------------------------------------------------------------------------
# Kernel: MBA tail (ESA conv_f / conv4 / sigmoid, CA gate, E + C combine) fused
#         with gru1's 1x1 conv + GRU input-gate projection (one folded matmul).
# ---------------------------------------------------------------------------
def _mba_tail_kernel(feat_ref, c1u_ref, c3_ref, ca_ref,
                     wf_ref, bf_ref, w4_ref, b4_ref, wg_ref, bg_ref, g_ref):
    feat = feat_ref[...]
    cf = jnp.dot(c1u_ref[...], wf_ref[...], preferred_element_type=jnp.float32) + bf_ref[...]
    c4 = jnp.dot(c3_ref[...] + cf, w4_ref[...], preferred_element_type=jnp.float32) + b4_ref[...]
    cat = feat * (jax.nn.sigmoid(c4) + ca_ref[...])                     # E + C
    g_ref[...] = jnp.dot(cat.astype(MATMUL_DTYPE), wg_ref[...],
                         preferred_element_type=jnp.float32) + bg_ref[...]


def _mba_tail(feat3, c1u3, c33, ca_gate, wf, bf, w4, b4, wg1, bg1):
    B, HW, C = feat3.shape
    f = c1u3.shape[2]
    G = wg1.shape[1]
    tp = _pick_tile(HW, 1024)
    return pl.pallas_call(
        _mba_tail_kernel,
        grid=(B, HW // tp),
        in_specs=[pl.BlockSpec((None, tp, C), lambda b, i: (b, i, 0)),
                  pl.BlockSpec((None, tp, f), lambda b, i: (b, i, 0)),
                  pl.BlockSpec((None, tp, f), lambda b, i: (b, i, 0)),
                  pl.BlockSpec((None, 1, C), lambda b, i: (b, 0, 0)),
                  pl.BlockSpec(wf.shape, lambda b, i: (0, 0)),
                  pl.BlockSpec(bf.shape, lambda b, i: (0, 0)),
                  pl.BlockSpec(w4.shape, lambda b, i: (0, 0)),
                  pl.BlockSpec(b4.shape, lambda b, i: (0, 0)),
                  pl.BlockSpec(wg1.shape, lambda b, i: (0, 0)),
                  pl.BlockSpec(bg1.shape, lambda b, i: (0, 0))],
        out_specs=pl.BlockSpec((None, tp, G), lambda b, i: (b, i, 0)),
        out_shape=jax.ShapeDtypeStruct((B, HW, G), jnp.float32),
        compiler_params=_cp(2),
    )(feat3, c1u3, c33, ca_gate, wf, bf, w4, b4, wg1, bg1)


# ---------------------------------------------------------------------------
# Kernel: gru2 input path — (x + residual) fused with 1x1 conv + gate projection
# ---------------------------------------------------------------------------
def _gru_in_kernel(x_ref, r_ref, wg_ref, bg_ref, g_ref):
    s = x_ref[...] + r_ref[...]
    g_ref[...] = jnp.dot(s.astype(MATMUL_DTYPE), wg_ref[...],
                         preferred_element_type=jnp.float32) + bg_ref[...]


def _gru_input_gates(x_flat, r_flat, wg, bg):
    P, C = x_flat.shape
    G = wg.shape[1]
    tp = _pick_tile(P, 1024)
    return pl.pallas_call(
        _gru_in_kernel,
        grid=(P // tp,),
        in_specs=[pl.BlockSpec((tp, C), lambda i: (i, 0)),
                  pl.BlockSpec((tp, C), lambda i: (i, 0)),
                  pl.BlockSpec(wg.shape, lambda i: (0, 0)),
                  pl.BlockSpec(bg.shape, lambda i: (0, 0))],
        out_specs=pl.BlockSpec((tp, G), lambda i: (i, 0)),
        out_shape=jax.ShapeDtypeStruct((P, G), jnp.float32),
        compiler_params=_cp(1),
    )(x_flat, r_flat, wg, bg)


# ---------------------------------------------------------------------------
# Kernel: bidirectional GRU scan — both directions in one fori_loop, one
#         block-diagonal hidden matmul per step, single (T, N, C) output.
# ---------------------------------------------------------------------------
def _gru_scan_kernel(gx_ref, whh_ref, bhh_ref, out_ref):
    T, Nt, _ = gx_ref.shape
    Hh = whh_ref.shape[0] // 2
    G3 = 3 * Hh

    def step(i, h_cat):
        t_f = i
        t_b = T - 1 - i
        gx_f = gx_ref[t_f][:, 0:G3]
        gx_b = gx_ref[t_b][:, G3:2 * G3]
        hg = jnp.dot(h_cat, whh_ref[...], preferred_element_type=jnp.float32) + bhh_ref[...]

        def one_dir(gx, hgd, h_prev):
            r = jax.nn.sigmoid(gx[:, 0:Hh] + hgd[:, 0:Hh])
            z = jax.nn.sigmoid(gx[:, Hh:2 * Hh] + hgd[:, Hh:2 * Hh])
            n = jnp.tanh(gx[:, 2 * Hh:3 * Hh] + r * hgd[:, 2 * Hh:3 * Hh])
            return (1.0 - z) * n + z * h_prev

        h_f = one_dir(gx_f, hg[:, 0:G3], h_cat[:, 0:Hh])
        h_b = one_dir(gx_b, hg[:, G3:2 * G3], h_cat[:, Hh:2 * Hh])
        out_ref[t_f, :, 0:Hh] = h_f
        out_ref[t_b, :, Hh:2 * Hh] = h_b
        return jnp.concatenate([h_f, h_b], axis=1)

    h0 = jnp.zeros((Nt, 2 * Hh), jnp.float32)
    lax.fori_loop(0, T, step, h0)


def _gru_recurrence(gates, whh_blk, bhh_cat):
    """gates: (B, T, N, 6*Hh)  ->  (B, T, N, 2*Hh)   (fwd | bwd concatenated)."""
    B, T, N, G = gates.shape
    C = whh_blk.shape[0]
    tn = _pick_tile(N, 128)
    return pl.pallas_call(
        _gru_scan_kernel,
        grid=(B, N // tn),
        in_specs=[pl.BlockSpec((None, T, tn, G), lambda b, j: (b, 0, j, 0)),
                  pl.BlockSpec(whh_blk.shape, lambda b, j: (0, 0)),
                  pl.BlockSpec(bhh_cat.shape, lambda b, j: (0, 0))],
        out_specs=pl.BlockSpec((None, T, tn, C), lambda b, j: (b, 0, j, 0)),
        out_shape=jax.ShapeDtypeStruct((B, T, N, C), jnp.float32),
        compiler_params=_cp(2),
    )(gates, whh_blk, bhh_cat)


def _gru_matrices(gp, C):
    """Fold GruBlock's 1x1 conv into the GRU input projection; build block-diag W_hh."""
    Hh = C // 2
    wih_cat = jnp.concatenate([gp['wih_f'], gp['wih_b']], axis=1)          # (C, 6Hh)
    bih_cat = jnp.concatenate([gp['bih_f'], gp['bih_b']], axis=0)          # (6Hh,)
    wg = jnp.dot(gp['wc'], wih_cat)                                        # (C, 6Hh)
    bg = jnp.dot(gp['bc'].reshape(1, C), wih_cat) + bih_cat.reshape(1, -1)
    whh_blk = jnp.zeros((C, 3 * C), jnp.float32)
    whh_blk = whh_blk.at[0:Hh, 0:3 * Hh].set(gp['whh_f'])
    whh_blk = whh_blk.at[Hh:C, 3 * Hh:6 * Hh].set(gp['whh_b'])
    bhh_cat = jnp.concatenate([gp['bhh_f'], gp['bhh_b']], axis=0).reshape(1, -1)
    return wg.astype(MATMUL_DTYPE), bg, whh_blk, bhh_cat


# ---------------------------------------------------------------------------
# plain-JAX glue for ESA's tiny downsampled branch
# ---------------------------------------------------------------------------
def _conv3x3_same(x, w, b):                        # x NHWC (tiny), w (Co,Ci,3,3)
    B, H, W, Ci = x.shape
    xp = jnp.pad(x, ((0, 0), (1, 1), (1, 1), (0, 0)))
    out = jnp.zeros((B, H, W, w.shape[0]), jnp.float32) + b
    for dy in range(3):
        for dx in range(3):
            out = out + jnp.einsum('bhwc,dc->bhwd',
                                   xp[:, dy:dy + H, dx:dx + W, :], w[:, :, dy, dx])
    return out


def _conv3x3_valid_s2(x, w, b):                    # stride 2, no padding
    B, H, W, Ci = x.shape
    OH, OW = (H - 3) // 2 + 1, (W - 3) // 2 + 1
    out = jnp.zeros((B, OH, OW, w.shape[0]), jnp.float32) + b
    for dy in range(3):
        for dx in range(3):
            patch = x[:, dy:dy + 2 * OH - 1:2, dx:dx + 2 * OW - 1:2, :]
            out = out + jnp.einsum('bhwc,dc->bhwd', patch, w[:, :, dy, dx])
    return out


def _bilinear_resize(x, oh, ow):                   # align_corners=False
    B, ih, iw, C = x.shape
    sh, sw = ih / oh, iw / ow
    ys = jnp.maximum((jnp.arange(oh, dtype=jnp.float32) + 0.5) * sh - 0.5, 0.0)
    xs = jnp.maximum((jnp.arange(ow, dtype=jnp.float32) + 0.5) * sw - 0.5, 0.0)
    y0 = jnp.floor(ys).astype(jnp.int32)
    x0 = jnp.floor(xs).astype(jnp.int32)
    y1 = jnp.minimum(y0 + 1, ih - 1)
    x1 = jnp.minimum(x0 + 1, iw - 1)
    ly = (ys - y0.astype(jnp.float32))[None, :, None, None]
    lx = (xs - x0.astype(jnp.float32))[None, None, :, None]
    top, bot = x[:, y0, :, :], x[:, y1, :, :]

    def horiz(v):
        return v[:, :, x0, :] * (1.0 - lx) + v[:, :, x1, :] * lx

    return horiz(top) * (1.0 - ly) + horiz(bot) * ly


# ---------------------------------------------------------------------------
# forward
# ---------------------------------------------------------------------------
def recurrent_residual_block_tl(x_nchw, text_emb_nchw, params):
    B, C, H, W = x_nchw.shape
    f = C // 16
    P = B * H * W
    HW = H * W

    x = jnp.transpose(x_nchw, (0, 2, 3, 1)).astype(jnp.float32)        # NHWC
    te = jnp.transpose(text_emb_nchw, (0, 2, 3, 1)).astype(jnp.float32)

    # ---- conv1 (3x3) + partial stats of its output and of text_emb ----
    xp = jnp.pad(x, ((0, 0), (1, 1), (1, 1), (0, 0)))
    w1s = _w3x3_to_slab(params['w1']).astype(MATMUL_DTYPE)
    y1, st1, stt = _conv3x3_rows(xp, w1s, params['b1'].reshape(1, C), te=te)
    sc1, sh1 = _bn_scale_shift(jnp.sum(st1, axis=(0, 1)), P, params['g1'], params['be1'])
    sct, sht = _bn_scale_shift(jnp.sum(stt, axis=(0, 1)), P, params['gt'], params['bt'])

    # ---- bn1 + mish (tiled elementwise) ----
    a1 = _bn_mish_apply(y1.reshape(P, C), sc1, sh1)

    # ---- conv2 (3x3) + partial stats ----
    a1p = jnp.pad(a1.reshape(B, H, W, C), ((0, 0), (1, 1), (1, 1), (0, 0)))
    w2s = _w3x3_to_slab(params['w2']).astype(MATMUL_DTYPE)
    y2, st2 = _conv3x3_rows(a1p, w2s, params['b2'].reshape(1, C))
    sc2, sh2 = _bn_scale_shift(jnp.sum(st2, axis=(0, 1)), P, params['g2'], params['be2'])

    # ---- MBA front: fold bn2 / text-BN into the concat-1x1 conv ----
    warp = (sc2.reshape(C, 1) * params['war']).astype(MATMUL_DTYPE)
    waep = (sct.reshape(C, 1) * params['wae']).astype(MATMUL_DTYPE)
    bap = (params['ba'].reshape(1, C)
           + jnp.dot(sh2, params['war']) + jnp.dot(sht, params['wae']))
    fpre, st3 = _mba_pre(y2.reshape(P, C), te.reshape(P, C), warp, waep, bap)
    sc3, sh3 = _bn_scale_shift(jnp.sum(st3, axis=0), P, params['g3'], params['be3'])

    # ---- MBA mid: BN3 + PReLU + 1x1 conv -> feature; ESA conv1; CA pooling ----
    feat3, c1u3, pool_part = _mba_mid(
        fpre.reshape(B, HW, C), sc3, sh3, params['alpha'],
        params['wb'].astype(MATMUL_DTYPE), params['bb'].reshape(1, C),
        params['wesa1'], params['besa1'].reshape(1, f))

    # ---- CA gate (tiny (B, C) MLP, plain JAX) ----
    pooled = jnp.sum(pool_part, axis=(1, 2)) / HW
    ca = jax.nn.sigmoid(
        jnp.dot(jnp.maximum(jnp.dot(pooled, params['wca1']), 0.0),
                params['wca2'])).reshape(B, 1, C)

    # ---- ESA downsampled branch (tiny spatial sizes, plain-JAX glue) ----
    c1_map = c1u3.reshape(B, H, W, f)
    c1 = _conv3x3_valid_s2(c1_map, params['w_esa2'], params['b_esa2'])
    v_max = lax.reduce_window(c1, -jnp.inf, lax.max, (1, 7, 7, 1), (1, 3, 3, 1), 'VALID')
    v_range = jnp.maximum(_conv3x3_same(v_max, params['w_esamax'], params['b_esamax']), 0.0)
    c3 = jnp.maximum(_conv3x3_same(v_range, params['w_esa3'], params['b_esa3']), 0.0)
    c3 = _conv3x3_same(c3, params['w_esa3_'], params['b_esa3_'])
    c3 = _bilinear_resize(c3, H, W).reshape(B, HW, f)

    # ---- MBA tail (ESA + CA combine) fused with gru1's input projection ----
    wg1, bg1, whh1, bhh1 = _gru_matrices(params['gru1'], C)
    gates1 = _mba_tail(feat3, c1u3, c3, ca,
                       params['wf'], params['bf'].reshape(1, f),
                       params['w4'], params['b4'].reshape(1, C), wg1, bg1)

    # ---- gru1: bidirectional recurrence along H (inner batch = W), output is NHWC ----
    residual = _gru_recurrence(gates1.reshape(B, H, W, 3 * C), whh1, bhh1)   # (B,H,W,C)

    # ---- gru2 input path: (x + residual) fused with 1x1 conv + gate projection ----
    wg2, bg2, whh2, bhh2 = _gru_matrices(params['gru2'], C)
    gates2 = _gru_input_gates(x.reshape(P, C), residual.reshape(P, C), wg2, bg2)
    gates2 = jnp.transpose(gates2.reshape(B, H, W, 3 * C), (0, 2, 1, 3))     # (B,W,H,3C)
    # TODO(synk): this (H,W) transpose is a wrapper-side XLA pass; an in-kernel
    # sublane-axis transpose would save one memory sweep but is layout-fragile.

    # ---- gru2: bidirectional recurrence along W (inner batch = H) ----
    out_t = _gru_recurrence(gates2, whh2, bhh2)                               # (B,W,H,C)
    return jnp.transpose(out_t, (0, 3, 2, 1))                                 # NCHW


# ---------------------------------------------------------------------------
# deterministic parameter init (PyTorch-equivalent shapes, right-multiply layout)
# ---------------------------------------------------------------------------
def init_params(key, C):
    Hh = C // 2
    f = C // 16
    red = C // 16
    it = iter(jax.random.split(key, 80))

    def w(shape, s=0.15):
        return (s * jax.random.normal(next(it), shape)).astype(jnp.float32)

    def gru_params():
        return {
            'wc': w((C, C)), 'bc': w((C,), 0.05),                 # GruBlock.conv1 (1x1)
            'wih_f': w((C, 3 * Hh)), 'whh_f': w((Hh, 3 * Hh)),    # torch weights, transposed
            'bih_f': w((3 * Hh,), 0.05), 'bhh_f': w((3 * Hh,), 0.05),
            'wih_b': w((C, 3 * Hh)), 'whh_b': w((Hh, 3 * Hh)),    # *_reverse
            'bih_b': w((3 * Hh,), 0.05), 'bhh_b': w((3 * Hh,), 0.05),
        }

    return {
        'w1': w((C, C, 3, 3)), 'b1': w((C,), 0.05),
        'g1': 1.0 + w((C,), 0.05), 'be1': w((C,), 0.05),
        'w2': w((C, C, 3, 3)), 'b2': w((C,), 0.05),
        'g2': 1.0 + w((C,), 0.05), 'be2': w((C,), 0.05),
        'gt': 1.0 + w((C,), 0.05), 'bt': w((C,), 0.05),           # MBA.BN (text)
        'war': w((C, C)), 'wae': w((C, C)), 'ba': w((C,), 0.05),  # conv1x1 on concat, split
        'g3': 1.0 + w((C,), 0.05), 'be3': w((C,), 0.05),
        'alpha': jnp.full((1, 1), 0.25, jnp.float32),             # PReLU default
        'wb': w((C, C)), 'bb': w((C,), 0.05),
        'wca1': w((C, red)), 'wca2': w((red, C)),                 # CALayer (bias=False)
        'wesa1': w((C, f)), 'besa1': w((f,), 0.05),               # ESA conv1 (1x1)
        'w_esa2': w((f, f, 3, 3)), 'b_esa2': w((f,), 0.05),
        'w_esamax': w((f, f, 3, 3)), 'b_esamax': w((f,), 0.05),
        'w_esa3': w((f, f, 3, 3)), 'b_esa3': w((f,), 0.05),
        'w_esa3_': w((f, f, 3, 3)), 'b_esa3_': w((f,), 0.05),
        'wf': w((f, f)), 'bf': w((f,), 0.05),                     # ESA conv_f (1x1)
        'w4': w((f, C)), 'b4': w((C,), 0.05),                     # ESA conv4 (1x1)
        'gru1': gru_params(), 'gru2': gru_params(),
    }


if __name__ == "__main__":
    # channels multiple of 16 (f = C//16, CA reduction 16) and even (GRU);
    # spatial >= 15 so ESA's 7x7 maxpool is valid.
    B, C, H, W = 2, 32, 16, 16
    key = jax.random.PRNGKey(0)
    kx, kt, kp = jax.random.split(key, 3)
    x = jax.random.normal(kx, (B, C, H, W), dtype=jnp.float32)
    text_emb = jax.random.normal(kt, (B, C, H, W), dtype=jnp.float32)
    params = init_params(kp, C)

    fwd = jax.jit(recurrent_residual_block_tl)
    out = fwd(x, text_emb, params)
    jax.block_until_ready(out)
    assert out.shape == (B, C, H, W) and out.dtype == jnp.float32
    print("KERNEL_OK")
</pallas_src>

<mosaic_0001>
module attributes {stable_mosaic.version = 11 : i64} {
  func.func @_conv1_kernel(%arg0: i32, %arg1: i32, %arg2: memref<1x1x18x32xf32, #tpu.memory_space<vmem>>, %arg3: memref<1x1x18x32xf32, #tpu.memory_space<vmem>>, %arg4: memref<1x1x18x32xf32, #tpu.memory_space<vmem>>, %arg5: memref<1x1x16x32xf32, #tpu.memory_space<vmem>>, %arg6: memref<288x32xbf16, #tpu.memory_space<vmem>>, %arg7: memref<1x32xf32, #tpu.memory_space<vmem>>, %arg8: memref<1x1x16x32xf32, #tpu.memory_space<vmem>>, %arg9: memref<1x1x2x32xf32, #tpu.memory_space<vmem>>, %arg10: memref<1x1x2x32xf32, #tpu.memory_space<vmem>>) attributes {dimension_semantics = [#tpu.dimension_semantics<parallel>, #tpu.dimension_semantics<parallel>], iteration_bounds = array<i64: 2, 16>, scalar_prefetch = 0 : i64, scratch_operands = 0 : i64, tpu.core_type = #tpu.core_type<tc>, window_params = [{transform_indices = @transform_0, window_bounds = array<i64: 1, 1, 18, 32>}, {transform_indices = @transform_1, window_bounds = array<i64: 1, 1, 18, 32>}, {transform_indices = @transform_2, window_bounds = array<i64: 1, 1, 18, 32>}, {transform_indices = @transform_3, window_bounds = array<i64: 1, 1, 16, 32>}, {pipeline_mode = #tpu.pipeline_mode<synchronous>, transform_indices = @transform_4, window_bounds = array<i64: 288, 32>}, {pipeline_mode = #tpu.pipeline_mode<synchronous>, transform_indices = @transform_5, window_bounds = array<i64: 1, 32>}, {transform_indices = @transform_6, window_bounds = array<i64: 1, 1, 16, 32>}, {transform_indices = @transform_7, window_bounds = array<i64: 1, 1, 2, 32>}, {transform_indices = @transform_8, window_bounds = array<i64: 1, 1, 2, 32>}]} {
    %c0 = arith.constant 0 : index
    %c0_0 = arith.constant 0 : index
    %c0_1 = arith.constant 0 : index
    %c0_2 = arith.constant 0 : index
    %0 = vector.load %arg2[%c0, %c0_0, %c0_1, %c0_2] : memref<1x1x18x32xf32, #tpu.memory_space<vmem>>, vector<1x1x16x32xf32>
    %1 = vector.shape_cast %0 : vector<1x1x16x32xf32> to vector<16x32xf32>
    %c0_3 = arith.constant 0 : index
    %c0_4 = arith.constant 0 : index
    %c1 = arith.constant 1 : index
    %c0_5 = arith.constant 0 : index
    %2 = vector.load %arg2[%c0_3, %c0_4, %c1, %c0_5] : memref<1x1x18x32xf32, #tpu.memory_space<vmem>>, vector<1x1x16x32xf32>
    %3 = vector.shape_cast %2 : vector<1x1x16x32xf32> to vector<16x32xf32>
    %c0_6 = arith.constant 0 : index
    %c0_7 = arith.constant 0 : index
    %c2 = arith.constant 2 : index
    %c0_8 = arith.constant 0 : index
    %4 = vector.load %arg2[%c0_6, %c0_7, %c2, %c0_8] : memref<1x1x18x32xf32, #tpu.memory_space<vmem>>, vector<1x1x16x32xf32>
    %5 = vector.shape_cast %4 : vector<1x1x16x32xf32> to vector<16x32xf32>
    %c0_9 = arith.constant 0 : index
    %c0_10 = arith.constant 0 : index
    %c0_11 = arith.constant 0 : index
    %c0_12 = arith.constant 0 : index
    %6 = vector.load %arg3[%c0_9, %c0_10, %c0_11, %c0_12] : memref<1x1x18x32xf32, #tpu.memory_space<vmem>>, vector<1x1x16x32xf32>
    %7 = vector.shape_cast %6 : vector<1x1x16x32xf32> to vector<16x32xf32>
    %c0_13 = arith.constant 0 : index
    %c0_14 = arith.constant 0 : index
    %c1_15 = arith.constant 1 : index
    %c0_16 = arith.constant 0 : index
    %8 = vector.load %arg3[%c0_13, %c0_14, %c1_15, %c0_16] : memref<1x1x18x32xf32, #tpu.memory_space<vmem>>, vector<1x1x16x32xf32>
    %9 = vector.shape_cast %8 : vector<1x1x16x32xf32> to vector<16x32xf32>
    %c0_17 = arith.constant 0 : index
    %c0_18 = arith.constant 0 : index
    %c2_19 = arith.constant 2 : index
    %c0_20 = arith.constant 0 : index
    %10 = vector.load %arg3[%c0_17, %c0_18, %c2_19, %c0_20] : memref<1x1x18x32xf32, #tpu.memory_space<vmem>>, vector<1x1x16x32xf32>
    %11 = vector.shape_cast %10 : vector<1x1x16x32xf32> to vector<16x32xf32>
    %c0_21 = arith.constant 0 : index
    %c0_22 = arith.constant 0 : index
    %c0_23 = arith.constant 0 : index
    %c0_24 = arith.constant 0 : index
    %12 = vector.load %arg4[%c0_21, %c0_22, %c0_23, %c0_24] : memref<1x1x18x32xf32, #tpu.memory_space<vmem>>, vector<1x1x16x32xf32>
    %13 = vector.shape_cast %12 : vector<1x1x16x32xf32> to vector<16x32xf32>
    %c0_25 = arith.constant 0 : index
    %c0_26 = arith.constant 0 : index
    %c1_27 = arith.constant 1 : index
    %c0_28 = arith.constant 0 : index
    %14 = vector.load %arg4[%c0_25, %c0_26, %c1_27, %c0_28] : memref<1x1x18x32xf32, #tpu.memory_space<vmem>>, vector<1x1x16x32xf32>
    %15 = vector.shape_cast %14 : vector<1x1x16x32xf32> to vector<16x32xf32>
    %c0_29 = arith.constant 0 : index
    %c0_30 = arith.constant 0 : index
    %c2_31 = arith.constant 2 : index
    %c0_32 = arith.constant 0 : index
    %16 = vector.load %arg4[%c0_29, %c0_30, %c2_31, %c0_32] : memref<1x1x18x32xf32, #tpu.memory_space<vmem>>, vector<1x1x16x32xf32>
    %17 = vector.shape_cast %16 : vector<1x1x16x32xf32> to vector<16x32xf32>
    %18 = tpu.concatenate %1, %3, %5, %7, %9, %11, %13, %15, %17 in 1 : vector<16x32xf32>, vector<16x32xf32>, vector<16x32xf32>, vector<16x32xf32>, vector<16x32xf32>, vector<16x32xf32>, vector<16x32xf32>, vector<16x32xf32>, vector<16x32xf32> -> vector<16x288xf32>
    %19 = arith.truncf %18 : vector<16x288xf32> to vector<16x288xbf16>
    %c0_33 = arith.constant 0 : index
    %c0_34 = arith.constant 0 : index
    %20 = vector.load %arg6[%c0_33, %c0_34] : memref<288x32xbf16, #tpu.memory_space<vmem>>, vector<288x32xbf16>
    %cst = arith.constant dense<0.000000e+00> : vector<16x32xf32>
    %21 = tpu.matmul %19, %20, %cst {dimension_numbers = #tpu.dot_dimension_numbers<[1], [0], [0], [1], [0, 0, 1, 1], [], []>} : vector<16x288xbf16>, vector<288x32xbf16>, vector<16x32xf32> -> vector<16x32xf32>
    %c0_35 = arith.constant 0 : index
    %c0_36 = arith.constant 0 : index
    %22 = vector.load %arg7[%c0_35, %c0_36] : memref<1x32xf32, #tpu.memory_space<vmem>>, vector<1x32xf32>
    %23 = vector.broadcast %22 : vector<1x32xf32> to vector<16x32xf32>
    %24 = arith.addf %21, %23 : vector<16x32xf32>
    %c0_37 = arith.constant 0 : index
    %c0_38 = arith.constant 0 : index
    %c0_39 = arith.constant 0 : index
    %c0_40 = arith.constant 0 : index
    %25 = vector.load %arg8[%c0_37, %c0_38, %c0_39, %c0_40] : memref<1x1x16x32xf32, #tpu.memory_space<vmem>>, vector<1x1x16x32xf32>
    %26 = vector.shape_cast %25 : vector<1x1x16x32xf32> to vector<16x32xf32>
    %27 = vector.shape_cast %24 : vector<16x32xf32> to vector<1x1x16x32xf32>
    tpu.vector_store %arg8[%c0_37, %c0_38, %c0_39, %c0_40], %27 {strides = array<i32>} : memref<1x1x16x32xf32, #tpu.memory_space<vmem>>, vector<1x1x16x32xf32>,
    %cst_41 = arith.constant dense<0.000000e+00> : vector<32xf32>
    %28 = vector.multi_reduction <add>, %24, %cst_41 [0] : vector<16x32xf32> to vector<32xf32>
    %29 = vector.shape_cast %28 : vector<32xf32> to vector<1x32xf32>
    %c0_42 = arith.constant 0 : index
    %c0_43 = arith.constant 0 : index
    %c0_44 = arith.constant 0 : index
    %c0_45 = arith.constant 0 : index
    %30 = vector.load %arg9[%c0_42, %c0_43, %c0_44, %c0_45] : memref<1x1x2x32xf32, #tpu.memory_space<vmem>>, vector<1x1x1x32xf32>
    %31 = vector.shape_cast %30 : vector<1x1x1x32xf32> to vector<1x32xf32>
    %32 = vector.shape_cast %29 : vector<1x32xf32> to vector<1x1x1x32xf32>
    tpu.vector_store %arg9[%c0_42, %c0_43, %c0_44, %c0_45], %32 {strides = array<i32>} : memref<1x1x2x32xf32, #tpu.memory_space<vmem>>, vector<1x1x1x32xf32>,
    %33 = arith.mulf %24, %24 : vector<16x32xf32>
    %cst_46 = arith.constant dense<0.000000e+00> : vector<32xf32>
    %34 = vector.multi_reduction <add>, %33, %cst_46 [0] : vector<16x32xf32> to vector<32xf32>
    %35 = vector.shape_cast %34 : vector<32xf32> to vector<1x32xf32>
    %c0_47 = arith.constant 0 : index
    %c0_48 = arith.constant 0 : index
    %c1_49 = arith.constant 1 : index
    %c0_50 = arith.constant 0 : index
    %36 = vector.load %arg9[%c0_47, %c0_48, %c1_49, %c0_50] : memref<1x1x2x32xf32, #tpu.memory_space<vmem>>, vector<1x1x1x32xf32>
    %37 = vector.shape_cast %36 : vector<1x1x1x32xf32> to vector<1x32xf32>
    %38 = vector.shape_cast %35 : vector<1x32xf32> to vector<1x1x1x32xf32>
    tpu.vector_store %arg9[%c0_47, %c0_48, %c1_49, %c0_50], %38 {strides = array<i32>} : memref<1x1x2x32xf32, #tpu.memory_space<vmem>>, vector<1x1x1x32xf32>,
    %c0_51 = arith.constant 0 : index
    %c0_52 = arith.constant 0 : index
    %c0_53 = arith.constant 0 : index
    %c0_54 = arith.constant 0 : index
    %39 = vector.load %arg5[%c0_51, %c0_52, %c0_53, %c0_54] : memref<1x1x16x32xf32, #tpu.memory_space<vmem>>, vector<1x1x16x32xf32>
    %40 = vector.shape_cast %39 : vector<1x1x16x32xf32> to vector<16x32xf32>
    %cst_55 = arith.constant dense<0.000000e+00> : vector<32xf32>
    %41 = vector.multi_reduction <add>, %40, %cst_55 [0] : vector<16x32xf32> to vector<32xf32>
    %42 = vector.shape_cast %41 : vector<32xf32> to vector<1x32xf32>
    %c0_56 = arith.constant 0 : index
    %c0_57 = arith.constant 0 : index
    %c0_58 = arith.constant 0 : index
    %c0_59 = arith.constant 0 : index
    %43 = vector.load %arg10[%c0_56, %c0_57, %c0_58, %c0_59] : memref<1x1x2x32xf32, #tpu.memory_space<vmem>>, vector<1x1x1x32xf32>
    %44 = vector.shape_cast %43 : vector<1x1x1x32xf32> to vector<1x32xf32>
    %45 = vector.shape_cast %42 : vector<1x32xf32> to vector<1x1x1x32xf32>
    tpu.vector_store %arg10[%c0_56, %c0_57, %c0_58, %c0_59], %45 {strides = array<i32>} : memref<1x1x2x32xf32, #tpu.memory_space<vmem>>, vector<1x1x1x32xf32>,
    %46 = arith.mulf %40, %40 : vector<16x32xf32>
    %cst_60 = arith.constant dense<0.000000e+00> : vector<32xf32>
    %47 = vector.multi_reduction <add>, %46, %cst_60 [0] : vector<16x32xf32> to vector<32xf32>
    %48 = vector.shape_cast %47 : vector<32xf32> to vector<1x32xf32>
    %c0_61 = arith.constant 0 : index
    %c0_62 = arith.constant 0 : index
    %c1_63 = arith.constant 1 : index
    %c0_64 = arith.constant 0 : index
    %49 = vector.load %arg10[%c0_61, %c0_62, %c1_63, %c0_64] : memref<1x1x2x32xf32, #tpu.memory_space<vmem>>, vector<1x1x1x32xf32>
    %50 = vector.shape_cast %49 : vector<1x1x1x32xf32> to vector<1x32xf32>
    %51 = vector.shape_cast %48 : vector<1x32xf32> to vector<1x1x1x32xf32>
    tpu.vector_store %arg10[%c0_61, %c0_62, %c1_63, %c0_64], %51 {strides = array<i32>} : memref<1x1x2x32xf32, #tpu.memory_space<vmem>>, vector<1x1x1x32xf32>,
    return
  }
  func.func @transform_0(%arg0: i32, %arg1: i32) -> (i32, i32, i32, i32) {
    %c0_i32 = arith.constant 0 : i32
    %0 = arith.addi %arg1, %c0_i32 : i32
    %c0_i32_0 = arith.constant 0 : i32
    %c0_i32_1 = arith.constant 0 : i32
    %c0_i32_2 = arith.constant 0 : i32
    return %arg0, %0, %c0_i32_0, %c0_i32_1 : i32, i32, i32, i32
  }
  func.func @transform_1(%arg0: i32, %arg1: i32) -> (i32, i32, i32, i32) {
    %c1_i32 = arith.constant 1 : i32
    %0 = arith.addi %arg1, %c1_i32 : i32
    %c0_i32 = arith.constant 0 : i32
    %c0_i32_0 = arith.constant 0 : i32
    %c0_i32_1 = arith.constant 0 : i32
    return %arg0, %0, %c0_i32, %c0_i32_0 : i32, i32, i32, i32
  }
  func.func @transform_2(%arg0: i32, %arg1: i32) -> (i32, i32, i32, i32) {
    %c2_i32 = arith.constant 2 : i32
    %0 = arith.addi %arg1, %c2_i32 : i32
    %c0_i32 = arith.constant 0 : i32
    %c0_i32_0 = arith.constant 0 : i32
    %c0_i32_1 = arith.constant 0 : i32
    return %arg0, %0, %c0_i32, %c0_i32_0 : i32, i32, i32, i32
  }
  func.func @transform_3(%arg0: i32, %arg1: i32) -> (i32, i32, i32, i32) {
    %c0_i32 = arith.constant 0 : i32
    %c0_i32_0 = arith.constant 0 : i32
    %c0_i32_1 = arith.constant 0 : i32
    return %arg0, %arg1, %c0_i32, %c0_i32_0 : i32, i32, i32, i32
  }
  func.func @transform_4(%arg0: i32, %arg1: i32) -> (i32, i32) {
    %c0_i32 = arith.constant 0 : i32
    %c0_i32_0 = arith.constant 0 : i32
    %c0_i32_1 = arith.constant 0 : i32
    return %c0_i32, %c0_i32_0 : i32, i32
  }
  func.func @transform_5(%arg0: i32, %arg1: i32) -> (i32, i32) {
    %c0_i32 = arith.constant 0 : i32
    %c0_i32_0 = arith.constant 0 : i32
    %c0_i32_1 = arith.constant 0 : i32
    return %c0_i32, %c0_i32_0 : i32, i32
  }
  func.func @transform_6(%arg0: i32, %arg1: i32) -> (i32, i32, i32, i32) {
    %c0_i32 = arith.constant 0 : i32
    %c0_i32_0 = arith.constant 0 : i32
    %c0_i32_1 = arith.constant 0 : i32
    return %arg0, %arg1, %c0_i32, %c0_i32_0 : i32, i32, i32, i32
  }
  func.func @transform_7(%arg0: i32, %arg1: i32) -> (i32, i32, i32, i32) {
    %c0_i32 = arith.constant 0 : i32
    %c0_i32_0 = arith.constant 0 : i32
    %c0_i32_1 = arith.constant 0 : i32
    return %arg0, %arg1, %c0_i32, %c0_i32_0 : i32, i32, i32, i32
  }
  func.func @transform_8(%arg0: i32, %arg1: i32) -> (i32, i32, i32, i32) {
    %c0_i32 = arith.constant 0 : i32
    %c0_i32_0 = arith.constant 0 : i32
    %c0_i32_1 = arith.constant 0 : i32
    return %arg0, %arg1, %c0_i32, %c0_i32_0 : i32, i32, i32, i32
  }
}

module attributes {stable_mosaic.version = 11 : i64} {
  func.func @_bn_mish_kernel(%arg0: i32, %arg1: memref<512x32xf32, #tpu.memory_space<vmem>>, %arg2: memref<1x32xf32, #tpu.memory_space<vmem>>, %arg3: memref<1x32xf32, #tpu.memory_space<vmem>>, %arg4: memref<512x32xf32, #tpu.memory_space<vmem>>) attributes {dimension_semantics = [#tpu.dimension_semantics<parallel>], iteration_bounds = array<i64: 1>, scalar_prefetch = 0 : i64, scratch_operands = 0 : i64, tpu.core_type = #tpu.core_type<tc>, window_params = [{transform_indices = @transform_0, window_bounds = array<i64: 512, 32>}, {pipeline_mode = #tpu.pipeline_mode<synchronous>, transform_indices = @transform_1, window_bounds = array<i64: 1, 32>}, {pipeline_mode = #tpu.pipeline_mode<synchronous>, transform_indices = @transform_2, window_bounds = array<i64: 1, 32>}, {transform_indices = @transform_3, window_bounds = array<i64: 512, 32>}]} {
    %c0 = arith.constant 0 : index
    %c0_0 = arith.constant 0 : index
    %0 = vector.load %arg1[%c0, %c0_0] : memref<512x32xf32, #tpu.memory_space<vmem>>, vector<512x32xf32>
    %c0_1 = arith.constant 0 : index
    %c0_2 = arith.constant 0 : index
    %1 = vector.load %arg2[%c0_1, %c0_2] : memref<1x32xf32, #tpu.memory_space<vmem>>, vector<1x32xf32>
    %2 = vector.broadcast %1 : vector<1x32xf32> to vector<512x32xf32>
    %3 = arith.mulf %0, %2 : vector<512x32xf32>
    %c0_3 = arith.constant 0 : index
    %c0_4 = arith.constant 0 : index
    %4 = vector.load %arg3[%c0_3, %c0_4] : memref<1x32xf32, #tpu.memory_space<vmem>>, vector<1x32xf32>
    %5 = vector.broadcast %4 : vector<1x32xf32> to vector<512x32xf32>
    %6 = arith.addf %3, %5 : vector<512x32xf32>
    %cst = arith.constant 2.000000e+01 : f32
    %7 = vector.broadcast %cst : f32 to vector<512x32xf32>
    %8 = arith.minimumf %6, %7 : vector<512x32xf32>
    %9 = math.exp %8 : vector<512x32xf32>
    %cst_5 = arith.constant 2.000000e+00 : f32
    %10 = vector.broadcast %cst_5 : f32 to vector<512x32xf32>
    %11 = arith.addf %9, %10 : vector<512x32xf32>
    %12 = arith.mulf %9, %11 : vector<512x32xf32>
    %cst_6 = arith.constant 2.000000e+01 : f32
    %13 = vector.broadcast %cst_6 : f32 to vector<512x32xf32>
    %14 = arith.cmpf ogt, %6, %13 : vector<512x32xf32>
    %cst_7 = arith.constant 2.000000e+00 : f32
    %15 = vector.broadcast %cst_7 : f32 to vector<512x32xf32>
    %16 = arith.addf %12, %15 : vector<512x32xf32>
    %17 = arith.divf %12, %16 : vector<512x32xf32>
    %18 = arith.mulf %6, %17 : vector<512x32xf32>
    %19 = arith.select %14, %6, %18 : vector<512x32xi1>, vector<512x32xf32>
    %c0_8 = arith.constant 0 : index
    %c0_9 = arith.constant 0 : index
    %20 = vector.load %arg4[%c0_8, %c0_9] : memref<512x32xf32, #tpu.memory_space<vmem>>, vector<512x32xf32>
    tpu.vector_store %arg4[%c0_8, %c0_9], %19 {strides = array<i32>} : memref<512x32xf32, #tpu.memory_space<vmem>>, vector<512x32xf32>,
    return
  }
  func.func @transform_0(%arg0: i32) -> (i32, i32) {
    %c0_i32 = arith.constant 0 : i32
    %c0_i32_0 = arith.constant 0 : i32
    return %arg0, %c0_i32 : i32, i32
  }
  func.func @transform_1(%arg0: i32) -> (i32, i32) {
    %c0_i32 = arith.constant 0 : i32
    %c0_i32_0 = arith.constant 0 : i32
    %c0_i32_1 = arith.constant 0 : i32
    return %c0_i32, %c0_i32_0 : i32, i32
  }
  func.func @transform_2(%arg0: i32) -> (i32, i32) {
    %c0_i32 = arith.constant 0 : i32
    %c0_i32_0 = arith.constant 0 : i32
    %c0_i32_1 = arith.constant 0 : i32
    return %c0_i32, %c0_i32_0 : i32, i32
  }
  func.func @transform_3(%arg0: i32) -> (i32, i32) {
    %c0_i32 = arith.constant 0 : i32
    %c0_i32_0 = arith.constant 0 : i32
    return %arg0, %c0_i32 : i32, i32
  }
}

module attributes {stable_mosaic.version = 11 : i64} {
  func.func @_conv2_kernel(%arg0: i32, %arg1: i32, %arg2: memref<1x1x18x32xf32, #tpu.memory_space<vmem>>, %arg3: memref<1x1x18x32xf32, #tpu.memory_space<vmem>>, %arg4: memref<1x1x18x32xf32, #tpu.memory_space<vmem>>, %arg5: memref<288x32xbf16, #tpu.memory_space<vmem>>, %arg6: memref<1x32xf32, #tpu.memory_space<vmem>>, %arg7: memref<1x1x16x32xf32, #tpu.memory_space<vmem>>, %arg8: memref<1x1x2x32xf32, #tpu.memory_space<vmem>>) attributes {dimension_semantics = [#tpu.dimension_semantics<parallel>, #tpu.dimension_semantics<parallel>], iteration_bounds = array<i64: 2, 16>, scalar_prefetch = 0 : i64, scratch_operands = 0 : i64, tpu.core_type = #tpu.core_type<tc>, window_params = [{transform_indices = @transform_0, window_bounds = array<i64: 1, 1, 18, 32>}, {transform_indices = @transform_1, window_bounds = array<i64: 1, 1, 18, 32>}, {transform_indices = @transform_2, window_bounds = array<i64: 1, 1, 18, 32>}, {pipeline_mode = #tpu.pipeline_mode<synchronous>, transform_indices = @transform_3, window_bounds = array<i64: 288, 32>}, {pipeline_mode = #tpu.pipeline_mode<synchronous>, transform_indices = @transform_4, window_bounds = array<i64: 1, 32>}, {transform_indices = @transform_5, window_bounds = array<i64: 1, 1, 16, 32>}, {transform_indices = @transform_6, window_bounds = array<i64: 1, 1, 2, 32>}]} {
    %c0 = arith.constant 0 : index
    %c0_0 = arith.constant 0 : index
    %c0_1 = arith.constant 0 : index
    %c0_2 = arith.constant 0 : index
    %0 = vector.load %arg2[%c0, %c0_0, %c0_1, %c0_2] : memref<1x1x18x32xf32, #tpu.memory_space<vmem>>, vector<1x1x16x32xf32>
    %1 = vector.shape_cast %0 : vector<1x1x16x32xf32> to vector<16x32xf32>
    %c0_3 = arith.constant 0 : index
    %c0_4 = arith.constant 0 : index
    %c1 = arith.constant 1 : index
    %c0_5 = arith.constant 0 : index
    %2 = vector.load %arg2[%c0_3, %c0_4, %c1, %c0_5] : memref<1x1x18x32xf32, #tpu.memory_space<vmem>>, vector<1x1x16x32xf32>
    %3 = vector.shape_cast %2 : vector<1x1x16x32xf32> to vector<16x32xf32>
    %c0_6 = arith.constant 0 : index
    %c0_7 = arith.constant 0 : index
    %c2 = arith.constant 2 : index
    %c0_8 = arith.constant 0 : index
    %4 = vector.load %arg2[%c0_6, %c0_7, %c2, %c0_8] : memref<1x1x18x32xf32, #tpu.memory_space<vmem>>, vector<1x1x16x32xf32>
    %5 = vector.shape_cast %4 : vector<1x1x16x32xf32> to vector<16x32xf32>
    %c0_9 = arith.constant 0 : index
    %c0_10 = arith.constant 0 : index
    %c0_11 = arith.constant 0 : index
    %c0_12 = arith.constant 0 : index
    %6 = vector.load %arg3[%c0_9, %c0_10, %c0_11, %c0_12] : memref<1x1x18x32xf32, #tpu.memory_space<vmem>>, vector<1x1x16x32xf32>
    %7 = vector.shape_cast %6 : vector<1x1x16x32xf32> to vector<16x32xf32>
    %c0_13 = arith.constant 0 : index
    %c0_14 = arith.constant 0 : index
    %c1_15 = arith.constant 1 : index
    %c0_16 = arith.constant 0 : index
    %8 = vector.load %arg3[%c0_13, %c0_14, %c1_15, %c0_16] : memref<1x1x18x32xf32, #tpu.memory_space<vmem>>, vector<1x1x16x32xf32>
    %9 = vector.shape_cast %8 : vector<1x1x16x32xf32> to vector<16x32xf32>
    %c0_17 = arith.constant 0 : index
    %c0_18 = arith.constant 0 : index
    %c2_19 = arith.constant 2 : index
    %c0_20 = arith.constant 0 : index
    %10 = vector.load %arg3[%c0_17, %c0_18, %c2_19, %c0_20] : memref<1x1x18x32xf32, #tpu.memory_space<vmem>>, vector<1x1x16x32xf32>
    %11 = vector.shape_cast %10 : vector<1x1x16x32xf32> to vector<16x32xf32>
    %c0_21 = arith.constant 0 : index
    %c0_22 = arith.constant 0 : index
    %c0_23 = arith.constant 0 : index
    %c0_24 = arith.constant 0 : index
    %12 = vector.load %arg4[%c0_21, %c0_22, %c0_23, %c0_24] : memref<1x1x18x32xf32, #tpu.memory_space<vmem>>, vector<1x1x16x32xf32>
    %13 = vector.shape_cast %12 : vector<1x1x16x32xf32> to vector<16x32xf32>
    %c0_25 = arith.constant 0 : index
    %c0_26 = arith.constant 0 : index
    %c1_27 = arith.constant 1 : index
    %c0_28 = arith.constant 0 : index
    %14 = vector.load %arg4[%c0_25, %c0_26, %c1_27, %c0_28] : memref<1x1x18x32xf32, #tpu.memory_space<vmem>>, vector<1x1x16x32xf32>
    %15 = vector.shape_cast %14 : vector<1x1x16x32xf32> to vector<16x32xf32>
    %c0_29 = arith.constant 0 : index
    %c0_30 = arith.constant 0 : index
    %c2_31 = arith.constant 2 : index
    %c0_32 = arith.constant 0 : index
    %16 = vector.load %arg4[%c0_29, %c0_30, %c2_31, %c0_32] : memref<1x1x18x32xf32, #tpu.memory_space<vmem>>, vector<1x1x16x32xf32>
    %17 = vector.shape_cast %16 : vector<1x1x16x32xf32> to vector<16x32xf32>
    %18 = tpu.concatenate %1, %3, %5, %7, %9, %11, %13, %15, %17 in 1 : vector<16x32xf32>, vector<16x32xf32>, vector<16x32xf32>, vector<16x32xf32>, vector<16x32xf32>, vector<16x32xf32>, vector<16x32xf32>, vector<16x32xf32>, vector<16x32xf32> -> vector<16x288xf32>
    %19 = arith.truncf %18 : vector<16x288xf32> to vector<16x288xbf16>
    %c0_33 = arith.constant 0 : index
    %c0_34 = arith.constant 0 : index
    %20 = vector.load %arg5[%c0_33, %c0_34] : memref<288x32xbf16, #tpu.memory_space<vmem>>, vector<288x32xbf16>
    %cst = arith.constant dense<0.000000e+00> : vector<16x32xf32>
    %21 = tpu.matmul %19, %20, %cst {dimension_numbers = #tpu.dot_dimension_numbers<[1], [0], [0], [1], [0, 0, 1, 1], [], []>} : vector<16x288xbf16>, vector<288x32xbf16>, vector<16x32xf32> -> vector<16x32xf32>
    %c0_35 = arith.constant 0 : index
    %c0_36 = arith.constant 0 : index
    %22 = vector.load %arg6[%c0_35, %c0_36] : memref<1x32xf32, #tpu.memory_space<vmem>>, vector<1x32xf32>
    %23 = vector.broadcast %22 : vector<1x32xf32> to vector<16x32xf32>
    %24 = arith.addf %21, %23 : vector<16x32xf32>
    %c0_37 = arith.constant 0 : index
    %c0_38 = arith.constant 0 : index
    %c0_39 = arith.constant 0 : index
    %c0_40 = arith.constant 0 : index
    %25 = vector.load %arg7[%c0_37, %c0_38, %c0_39, %c0_40] : memref<1x1x16x32xf32, #tpu.memory_space<vmem>>, vector<1x1x16x32xf32>
    %26 = vector.shape_cast %25 : vector<1x1x16x32xf32> to vector<16x32xf32>
    %27 = vector.shape_cast %24 : vector<16x32xf32> to vector<1x1x16x32xf32>
    tpu.vector_store %arg7[%c0_37, %c0_38, %c0_39, %c0_40], %27 {strides = array<i32>} : memref<1x1x16x32xf32, #tpu.memory_space<vmem>>, vector<1x1x16x32xf32>,
    %cst_41 = arith.constant dense<0.000000e+00> : vector<32xf32>
    %28 = vector.multi_reduction <add>, %24, %cst_41 [0] : vector<16x32xf32> to vector<32xf32>
    %29 = vector.shape_cast %28 : vector<32xf32> to vector<1x32xf32>
    %c0_42 = arith.constant 0 : index
    %c0_43 = arith.constant 0 : index
    %c0_44 = arith.constant 0 : index
    %c0_45 = arith.constant 0 : index
    %30 = vector.load %arg8[%c0_42, %c0_43, %c0_44, %c0_45] : memref<1x1x2x32xf32, #tpu.memory_space<vmem>>, vector<1x1x1x32xf32>
    %31 = vector.shape_cast %30 : vector<1x1x1x32xf32> to vector<1x32xf32>
    %32 = vector.shape_cast %29 : vector<1x32xf32> to vector<1x1x1x32xf32>
    tpu.vector_store %arg8[%c0_42, %c0_43, %c0_44, %c0_45], %32 {strides = array<i32>} : memref<1x1x2x32xf32, #tpu.memory_space<vmem>>, vector<1x1x1x32xf32>,
    %33 = arith.mulf %24, %24 : vector<16x32xf32>
    %cst_46 = arith.constant dense<0.000000e+00> : vector<32xf32>
    %34 = vector.multi_reduction <add>, %33, %cst_46 [0] : vector<16x32xf32> to vector<32xf32>
    %35 = vector.shape_cast %34 : vector<32xf32> to vector<1x32xf32>
    %c0_47 = arith.constant 0 : index
    %c0_48 = arith.constant 0 : index
    %c1_49 = arith.constant 1 : index
    %c0_50 = arith.constant 0 : index
    %36 = vector.load %arg8[%c0_47, %c0_48, %c1_49, %c0_50] : memref<1x1x2x32xf32, #tpu.memory_space<vmem>>, vector<1x1x1x32xf32>
    %37 = vector.shape_cast %36 : vector<1x1x1x32xf32> to vector<1x32xf32>
    %38 = vector.shape_cast %35 : vector<1x32xf32> to vector<1x1x1x32xf32>
    tpu.vector_store %arg8[%c0_47, %c0_48, %c1_49, %c0_50], %38 {strides = array<i32>} : memref<1x1x2x32xf32, #tpu.memory_space<vmem>>, vector<1x1x1x32xf32>,
    return
  }
  func.func @transform_0(%arg0: i32, %arg1: i32) -> (i32, i32, i32, i32) {
    %c0_i32 = arith.constant 0 : i32
    %0 = arith.addi %arg1, %c0_i32 : i32
    %c0_i32_0 = arith.constant 0 : i32
    %c0_i32_1 = arith.constant 0 : i32
    %c0_i32_2 = arith.constant 0 : i32
    return %arg0, %0, %c0_i32_0, %c0_i32_1 : i32, i32, i32, i32
  }
  func.func @transform_1(%arg0: i32, %arg1: i32) -> (i32, i32, i32, i32) {
    %c1_i32 = arith.constant 1 : i32
    %0 = arith.addi %arg1, %c1_i32 : i32
    %c0_i32 = arith.constant 0 : i32
    %c0_i32_0 = arith.constant 0 : i32
    %c0_i32_1 = arith.constant 0 : i32
    return %arg0, %0, %c0_i32, %c0_i32_0 : i32, i32, i32, i32
  }
  func.func @transform_2(%arg0: i32, %arg1: i32) -> (i32, i32, i32, i32) {
    %c2_i32 = arith.constant 2 : i32
    %0 = arith.addi %arg1, %c2_i32 : i32
    %c0_i32 = arith.constant 0 : i32
    %c0_i32_0 = arith.constant 0 : i32
    %c0_i32_1 = arith.constant 0 : i32
    return %arg0, %0, %c0_i32, %c0_i32_0 : i32, i32, i32, i32
  }
  func.func @transform_3(%arg0: i32, %arg1: i32) -> (i32, i32) {
    %c0_i32 = arith.constant 0 : i32
    %c0_i32_0 = arith.constant 0 : i32
    %c0_i32_1 = arith.constant 0 : i32
    return %c0_i32, %c0_i32_0 : i32, i32
  }
  func.func @transform_4(%arg0: i32, %arg1: i32) -> (i32, i32) {
    %c0_i32 = arith.constant 0 : i32
    %c0_i32_0 = arith.constant 0 : i32
    %c0_i32_1 = arith.constant 0 : i32
    return %c0_i32, %c0_i32_0 : i32, i32
  }
  func.func @transform_5(%arg0: i32, %arg1: i32) -> (i32, i32, i32, i32) {
    %c0_i32 = arith.constant 0 : i32
    %c0_i32_0 = arith.constant 0 : i32
    %c0_i32_1 = arith.constant 0 : i32
    return %arg0, %arg1, %c0_i32, %c0_i32_0 : i32, i32, i32, i32
  }
  func.func @transform_6(%arg0: i32, %arg1: i32) -> (i32, i32, i32, i32) {
    %c0_i32 = arith.constant 0 : i32
    %c0_i32_0 = arith.constant 0 : i32
    %c0_i32_1 = arith.constant 0 : i32
    return %arg0, %arg1, %c0_i32, %c0_i32_0 : i32, i32, i32, i32
  }
}

module attributes {stable_mosaic.version = 11 : i64} {
  func.func @_mba_pre_kernel(%arg0: i32, %arg1: memref<512x32xf32, #tpu.memory_space<vmem>>, %arg2: memref<512x32xf32, #tpu.memory_space<vmem>>, %arg3: memref<32x32xbf16, #tpu.memory_space<vmem>>, %arg4: memref<32x32xbf16, #tpu.memory_space<vmem>>, %arg5: memref<1x32xf32, #tpu.memory_space<vmem>>, %arg6: memref<512x32xf32, #tpu.memory_space<vmem>>, %arg7: memref<1x2x32xf32, #tpu.memory_space<vmem>>) attributes {dimension_semantics = [#tpu.dimension_semantics<parallel>], iteration_bounds = array<i64: 1>, scalar_prefetch = 0 : i64, scratch_operands = 0 : i64, tpu.core_type = #tpu.core_type<tc>, window_params = [{transform_indices = @transform_0, window_bounds = array<i64: 512, 32>}, {transform_indices = @transform_1, window_bounds = array<i64: 512, 32>}, {pipeline_mode = #tpu.pipeline_mode<synchronous>, transform_indices = @transform_2, window_bounds = array<i64: 32, 32>}, {pipeline_mode = #tpu.pipeline_mode<synchronous>, transform_indices = @transform_3, window_bounds = array<i64: 32, 32>}, {pipeline_mode = #tpu.pipeline_mode<synchronous>, transform_indices = @transform_4, window_bounds = array<i64: 1, 32>}, {transform_indices = @transform_5, window_bounds = array<i64: 512, 32>}, {transform_indices = @transform_6, window_bounds = array<i64: 1, 2, 32>}]} {
    %c0 = arith.constant 0 : index
    %c0_0 = arith.constant 0 : index
    %0 = vector.load %arg1[%c0, %c0_0] : memref<512x32xf32, #tpu.memory_space<vmem>>, vector<512x32xf32>
    %1 = arith.truncf %0 : vector<512x32xf32> to vector<512x32xbf16>
    %c0_1 = arith.constant 0 : index
    %c0_2 = arith.constant 0 : index
    %2 = vector.load %arg3[%c0_1, %c0_2] : memref<32x32xbf16, #tpu.memory_space<vmem>>, vector<32x32xbf16>
    %cst = arith.constant dense<0.000000e+00> : vector<512x32xf32>
    %3 = tpu.matmul %1, %2, %cst {dimension_numbers = #tpu.dot_dimension_numbers<[1], [0], [0], [1], [0, 0, 1, 1], [], []>} : vector<512x32xbf16>, vector<32x32xbf16>, vector<512x32xf32> -> vector<512x32xf32>
    %c0_3 = arith.constant 0 : index
    %c0_4 = arith.constant 0 : index
    %4 = vector.load %arg2[%c0_3, %c0_4] : memref<512x32xf32, #tpu.memory_space<vmem>>, vector<512x32xf32>
    %5 = arith.truncf %4 : vector<512x32xf32> to vector<512x32xbf16>
    %c0_5 = arith.constant 0 : index
    %c0_6 = arith.constant 0 : index
    %6 = vector.load %arg4[%c0_5, %c0_6] : memref<32x32xbf16, #tpu.memory_space<vmem>>, vector<32x32xbf16>
    %cst_7 = arith.constant dense<0.000000e+00> : vector<512x32xf32>
    %7 = tpu.matmul %5, %6, %cst_7 {dimension_numbers = #tpu.dot_dimension_numbers<[1], [0], [0], [1], [0, 0, 1, 1], [], []>} : vector<512x32xbf16>, vector<32x32xbf16>, vector<512x32xf32> -> vector<512x32xf32>
    %8 = arith.addf %3, %7 : vector<512x32xf32>
    %c0_8 = arith.constant 0 : index
    %c0_9 = arith.constant 0 : index
    %9 = vector.load %arg5[%c0_8, %c0_9] : memref<1x32xf32, #tpu.memory_space<vmem>>, vector<1x32xf32>
    %10 = vector.broadcast %9 : vector<1x32xf32> to vector<512x32xf32>
    %11 = arith.addf %8, %10 : vector<512x32xf32>
    %c0_10 = arith.constant 0 : index
    %c0_11 = arith.constant 0 : index
    %12 = vector.load %arg6[%c0_10, %c0_11] : memref<512x32xf32, #tpu.memory_space<vmem>>, vector<512x32xf32>
    tpu.vector_store %arg6[%c0_10, %c0_11], %11 {strides = array<i32>} : memref<512x32xf32, #tpu.memory_space<vmem>>, vector<512x32xf32>,
    %cst_12 = arith.constant dense<0.000000e+00> : vector<32xf32>
    %13 = vector.multi_reduction <add>, %11, %cst_12 [0] : vector<512x32xf32> to vector<32xf32>
    %14 = vector.shape_cast %13 : vector<32xf32> to vector<1x32xf32>
    %c0_13 = arith.constant 0 : index
    %c0_14 = arith.constant 0 : index
    %c0_15 = arith.constant 0 : index
    %15 = vector.load %arg7[%c0_13, %c0_14, %c0_15] : memref<1x2x32xf32, #tpu.memory_space<vmem>>, vector<1x1x32xf32>
    %16 = vector.shape_cast %15 : vector<1x1x32xf32> to vector<1x32xf32>
    %17 = vector.shape_cast %14 : vector<1x32xf32> to vector<1x1x32xf32>
    tpu.vector_store %arg7[%c0_13, %c0_14, %c0_15], %17 {strides = array<i32>} : memref<1x2x32xf32, #tpu.memory_space<vmem>>, vector<1x1x32xf32>,
    %18 = arith.mulf %11, %11 : vector<512x32xf32>
    %cst_16 = arith.constant dense<0.000000e+00> : vector<32xf32>
    %19 = vector.multi_reduction <add>, %18, %cst_16 [0] : vector<512x32xf32> to vector<32xf32>
    %20 = vector.shape_cast %19 : vector<32xf32> to vector<1x32xf32>
    %c0_17 = arith.constant 0 : index
    %c1 = arith.constant 1 : index
    %c0_18 = arith.constant 0 : index
    %21 = vector.load %arg7[%c0_17, %c1, %c0_18] : memref<1x2x32xf32, #tpu.memory_space<vmem>>, vector<1x1x32xf32>
    %22 = vector.shape_cast %21 : vector<1x1x32xf32> to vector<1x32xf32>
    %23 = vector.shape_cast %20 : vector<1x32xf32> to vector<1x1x32xf32>
    tpu.vector_store %arg7[%c0_17, %c1, %c0_18], %23 {strides = array<i32>} : memref<1x2x32xf32, #tpu.memory_space<vmem>>, vector<1x1x32xf32>,
    return
  }
  func.func @transform_0(%arg0: i32) -> (i32, i32) {
    %c0_i32 = arith.constant 0 : i32
    %c0_i32_0 = arith.constant 0 : i32
    return %arg0, %c0_i32 : i32, i32
  }
  func.func @transform_1(%arg0: i32) -> (i32, i32) {
    %c0_i32 = arith.constant 0 : i32
    %c0_i32_0 = arith.constant 0 : i32
    return %arg0, %c0_i32 : i32, i32
  }
  func.func @transform_2(%arg0: i32) -> (i32, i32) {
    %c0_i32 = arith.constant 0 : i32
    %c0_i32_0 = arith.constant 0 : i32
    %c0_i32_1 = arith.constant 0 : i32
    return %c0_i32, %c0_i32_0 : i32, i32
  }
  func.func @transform_3(%arg0: i32) -> (i32, i32) {
    %c0_i32 = arith.constant 0 : i32
    %c0_i32_0 = arith.constant 0 : i32
    %c0_i32_1 = arith.constant 0 : i32
    return %c0_i32, %c0_i32_0 : i32, i32
  }
  func.func @transform_4(%arg0: i32) -> (i32, i32) {
    %c0_i32 = arith.constant 0 : i32
    %c0_i32_0 = arith.constant 0 : i32
    %c0_i32_1 = arith.constant 0 : i32
    return %c0_i32, %c0_i32_0 : i32, i32
  }
  func.func @transform_5(%arg0: i32) -> (i32, i32) {
    %c0_i32 = arith.constant 0 : i32
    %c0_i32_0 = arith.constant 0 : i32
    return %arg0, %c0_i32 : i32, i32
  }
  func.func @transform_6(%arg0: i32) -> (i32, i32, i32) {
    %c0_i32 = arith.constant 0 : i32
    %c0_i32_0 = arith.constant 0 : i32
    %c0_i32_1 = arith.constant 0 : i32
    return %arg0, %c0_i32, %c0_i32_0 : i32, i32, i32
  }
}

module attributes {stable_mosaic.version = 11 : i64} {
  func.func @_mba_mid_kernel(%arg0: i32, %arg1: i32, %arg2: memref<1x256x32xf32, #tpu.memory_space<vmem>>, %arg3: memref<1x32xf32, #tpu.memory_space<vmem>>, %arg4: memref<1x32xf32, #tpu.memory_space<vmem>>, %arg5: memref<1x1xf32, #tpu.memory_space<vmem>>, %arg6: memref<32x32xbf16, #tpu.memory_space<vmem>>, %arg7: memref<1x32xf32, #tpu.memory_space<vmem>>, %arg8: memref<32x2xf32, #tpu.memory_space<vmem>>, %arg9: memref<1x2xf32, #tpu.memory_space<vmem>>, %arg10: memref<1x256x32xf32, #tpu.memory_space<vmem>>, %arg11: memref<1x256x2xf32, #tpu.memory_space<vmem>>, %arg12: memref<1x1x1x32xf32, #tpu.memory_space<vmem>>) attributes {dimension_semantics = [#tpu.dimension_semantics<parallel>, #tpu.dimension_semantics<parallel>], iteration_bounds = array<i64: 2, 1>, scalar_prefetch = 0 : i64, scratch_operands = 0 : i64, tpu.core_type = #tpu.core_type<tc>, window_params = [{transform_indices = @transform_0, window_bounds = array<i64: 1, 256, 32>}, {pipeline_mode = #tpu.pipeline_mode<synchronous>, transform_indices = @transform_1, window_bounds = array<i64: 1, 32>}, {pipeline_mode = #tpu.pipeline_mode<synchronous>, transform_indices = @transform_2, window_bounds = array<i64: 1, 32>}, {pipeline_mode = #tpu.pipeline_mode<synchronous>, transform_indices = @transform_3, window_bounds = array<i64: 1, 1>}, {pipeline_mode = #tpu.pipeline_mode<synchronous>, transform_indices = @transform_4, window_bounds = array<i64: 32, 32>}, {pipeline_mode = #tpu.pipeline_mode<synchronous>, transform_indices = @transform_5, window_bounds = array<i64: 1, 32>}, {pipeline_mode = #tpu.pipeline_mode<synchronous>, transform_indices = @transform_6, window_bounds = array<i64: 32, 2>}, {pipeline_mode = #tpu.pipeline_mode<synchronous>, transform_indices = @transform_7, window_bounds = array<i64: 1, 2>}, {transform_indices = @transform_8, window_bounds = array<i64: 1, 256, 32>}, {transform_indices = @transform_9, window_bounds = array<i64: 1, 256, 2>}, {transform_indices = @transform_10, window_bounds = array<i64: 1, 1, 1, 32>}]} {
    %c0 = arith.constant 0 : index
    %c0_0 = arith.constant 0 : index
    %c0_1 = arith.constant 0 : index
    %0 = vector.load %arg2[%c0, %c0_0, %c0_1] : memref<1x256x32xf32, #tpu.memory_space<vmem>>, vector<1x256x32xf32>
    %1 = vector.shape_cast %0 : vector<1x256x32xf32> to vector<256x32xf32>
    %c0_2 = arith.constant 0 : index
    %c0_3 = arith.constant 0 : index
    %2 = vector.load %arg3[%c0_2, %c0_3] : memref<1x32xf32, #tpu.memory_space<vmem>>, vector<1x32xf32>
    %3 = vector.broadcast %2 : vector<1x32xf32> to vector<256x32xf32>
    %4 = arith.mulf %1, %3 : vector<256x32xf32>
    %c0_4 = arith.constant 0 : index
    %c0_5 = arith.constant 0 : index
    %5 = vector.load %arg4[%c0_4, %c0_5] : memref<1x32xf32, #tpu.memory_space<vmem>>, vector<1x32xf32>
    %6 = vector.broadcast %5 : vector<1x32xf32> to vector<256x32xf32>
    %7 = arith.addf %4, %6 : vector<256x32xf32>
    %cst = arith.constant 0.000000e+00 : f32
    %8 = vector.broadcast %cst : f32 to vector<256x32xf32>
    %9 = arith.cmpf oge, %7, %8 : vector<256x32xf32>
    %c0_6 = arith.constant 0 : index
    %c0_7 = arith.constant 0 : index
    %10 = vector.load %arg5[%c0_6, %c0_7] : memref<1x1xf32, #tpu.memory_space<vmem>>, vector<1x1xf32>
    %11 = vector.broadcast %10 : vector<1x1xf32> to vector<256x32xf32>
    %12 = arith.mulf %7, %11 : vector<256x32xf32>
    %13 = arith.select %9, %7, %12 : vector<256x32xi1>, vector<256x32xf32>
    %14 = arith.truncf %13 : vector<256x32xf32> to vector<256x32xbf16>
    %c0_8 = arith.constant 0 : index
    %c0_9 = arith.constant 0 : index
    %15 = vector.load %arg6[%c0_8, %c0_9] : memref<32x32xbf16, #tpu.memory_space<vmem>>, vector<32x32xbf16>
    %cst_10 = arith.constant dense<0.000000e+00> : vector<256x32xf32>
    %16 = tpu.matmul %14, %15, %cst_10 {dimension_numbers = #tpu.dot_dimension_numbers<[1], [0], [0], [1], [0, 0, 1, 1], [], []>} : vector<256x32xbf16>, vector<32x32xbf16>, vector<256x32xf32> -> vector<256x32xf32>
    %c0_11 = arith.constant 0 : index
    %c0_12 = arith.constant 0 : index
    %17 = vector.load %arg7[%c0_11, %c0_12] : memref<1x32xf32, #tpu.memory_space<vmem>>, vector<1x32xf32>
    %18 = vector.broadcast %17 : vector<1x32xf32> to vector<256x32xf32>
    %19 = arith.addf %16, %18 : vector<256x32xf32>
    %c0_13 = arith.constant 0 : index
    %c0_14 = arith.constant 0 : index
    %c0_15 = arith.constant 0 : index
    %20 = vector.load %arg10[%c0_13, %c0_14, %c0_15] : memref<1x256x32xf32, #tpu.memory_space<vmem>>, vector<1x256x32xf32>
    %21 = vector.shape_cast %20 : vector<1x256x32xf32> to vector<256x32xf32>
    %22 = vector.shape_cast %19 : vector<256x32xf32> to vector<1x256x32xf32>
    tpu.vector_store %arg10[%c0_13, %c0_14, %c0_15], %22 {strides = array<i32>} : memref<1x256x32xf32, #tpu.memory_space<vmem>>, vector<1x256x32xf32>,
    %c0_16 = arith.constant 0 : index
    %c0_17 = arith.constant 0 : index
    %23 = vector.load %arg8[%c0_16, %c0_17] : memref<32x2xf32, #tpu.memory_space<vmem>>, vector<32x2xf32>
    %cst_18 = arith.constant dense<0.000000e+00> : vector<256x2xf32>
    %24 = tpu.matmul %19, %23, %cst_18 {dimension_numbers = #tpu.dot_dimension_numbers<[1], [0], [0], [1], [0, 0, 1, 1], [], []>} : vector<256x32xf32>, vector<32x2xf32>, vector<256x2xf32> -> vector<256x2xf32>
    %c0_19 = arith.constant 0 : index
    %c0_20 = arith.constant 0 : index
    %25 = vector.load %arg9[%c0_19, %c0_20] : memref<1x2xf32, #tpu.memory_space<vmem>>, vector<1x2xf32>
    %26 = vector.broadcast %25 : vector<1x2xf32> to vector<256x2xf32>
    %27 = arith.addf %24, %26 : vector<256x2xf32>
    %c0_21 = arith.constant 0 : index
    %c0_22 = arith.constant 0 : index
    %c0_23 = arith.constant 0 : index
    %28 = vector.load %arg11[%c0_21, %c0_22, %c0_23] : memref<1x256x2xf32, #tpu.memory_space<vmem>>, vector<1x256x2xf32>
    %29 = vector.shape_cast %28 : vector<1x256x2xf32> to vector<256x2xf32>
    %30 = vector.shape_cast %27 : vector<256x2xf32> to vector<1x256x2xf32>
    tpu.vector_store %arg11[%c0_21, %c0_22, %c0_23], %30 {strides = array<i32>} : memref<1x256x2xf32, #tpu.memory_space<vmem>>, vector<1x256x2xf32>,
    %cst_24 = arith.constant dense<0.000000e+00> : vector<32xf32>
    %31 = vector.multi_reduction <add>, %19, %cst_24 [0] : vector<256x32xf32> to vector<32xf32>
    %32 = vector.shape_cast %31 : vector<32xf32> to vector<1x32xf32>
    %c0_25 = arith.constant 0 : index
    %c0_26 = arith.constant 0 : index
    %c0_27 = arith.constant 0 : index
    %c0_28 = arith.constant 0 : index
    %33 = vector.load %arg12[%c0_25, %c0_26, %c0_27, %c0_28] : memref<1x1x1x32xf32, #tpu.memory_space<vmem>>, vector<1x1x1x32xf32>
    %34 = vector.shape_cast %33 : vector<1x1x1x32xf32> to vector<1x32xf32>
    %35 = vector.shape_cast %32 : vector<1x32xf32> to vector<1x1x1x32xf32>
    tpu.vector_store %arg12[%c0_25, %c0_26, %c0_27, %c0_28], %35 {strides = array<i32>} : memref<1x1x1x32xf32, #tpu.memory_space<vmem>>, vector<1x1x1x32xf32>,
    return
  }
  func.func @transform_0(%arg0: i32, %arg1: i32) -> (i32, i32, i32) {
    %c0_i32 = arith.constant 0 : i32
    %c0_i32_0 = arith.constant 0 : i32
    return %arg0, %arg1, %c0_i32 : i32, i32, i32
  }
  func.func @transform_1(%arg0: i32, %arg1: i32) -> (i32, i32) {
    %c0_i32 = arith.constant 0 : i32
    %c0_i32_0 = arith.constant 0 : i32
    %c0_i32_1 = arith.constant 0 : i32
    return %c0_i32, %c0_i32_0 : i32, i32
  }
  func.func @transform_2(%arg0: i32, %arg1: i32) -> (i32, i32) {
    %c0_i32 = arith.constant 0 : i32
    %c0_i32_0 = arith.constant 0 : i32
    %c0_i32_1 = arith.constant 0 : i32
    return %c0_i32, %c0_i32_0 : i32, i32
  }
  func.func @transform_3(%arg0: i32, %arg1: i32) -> (i32, i32) {
    %c0_i32 = arith.constant 0 : i32
    %c0_i32_0 = arith.constant 0 : i32
    %c0_i32_1 = arith.constant 0 : i32
    return %c0_i32, %c0_i32_0 : i32, i32
  }
  func.func @transform_4(%arg0: i32, %arg1: i32) -> (i32, i32) {
    %c0_i32 = arith.constant 0 : i32
    %c0_i32_0 = arith.constant 0 : i32
    %c0_i32_1 = arith.constant 0 : i32
    return %c0_i32, %c0_i32_0 : i32, i32
  }
  func.func @transform_5(%arg0: i32, %arg1: i32) -> (i32, i32) {
    %c0_i32 = arith.constant 0 : i32
    %c0_i32_0 = arith.constant 0 : i32
    %c0_i32_1 = arith.constant 0 : i32
    return %c0_i32, %c0_i32_0 : i32, i32
  }
  func.func @transform_6(%arg0: i32, %arg1: i32) -> (i32, i32) {
    %c0_i32 = arith.constant 0 : i32
    %c0_i32_0 = arith.constant 0 : i32
    %c0_i32_1 = arith.constant 0 : i32
    return %c0_i32, %c0_i32_0 : i32, i32
  }
  func.func @transform_7(%arg0: i32, %arg1: i32) -> (i32, i32) {
    %c0_i32 = arith.constant 0 : i32
    %c0_i32_0 = arith.constant 0 : i32
    %c0_i32_1 = arith.constant 0 : i32
    return %c0_i32, %c0_i32_0 : i32, i32
  }
  func.func @transform_8(%arg0: i32, %arg1: i32) -> (i32, i32, i32) {
    %c0_i32 = arith.constant 0 : i32
    %c0_i32_0 = arith.constant 0 : i32
    return %arg0, %arg1, %c0_i32 : i32, i32, i32
  }
  func.func @transform_9(%arg0: i32, %arg1: i32) -> (i32, i32, i32) {
    %c0_i32 = arith.constant 0 : i32
    %c0_i32_0 = arith.constant 0 : i32
    return %arg0, %arg1, %c0_i32 : i32, i32, i32
  }
  func.func @transform_10(%arg0: i32, %arg1: i32) -> (i32, i32, i32, i32) {
    %c0_i32 = arith.constant 0 : i32
    %c0_i32_0 = arith.constant 0 : i32
    %c0_i32_1 = arith.constant 0 : i32
    return %arg0, %arg1, %c0_i32, %c0_i32_0 : i32, i32, i32, i32
  }
}

module attributes {stable_mosaic.version = 11 : i64} {
  func.func @_mba_tail_kernel(%arg0: i32, %arg1: i32, %arg2: memref<1x256x32xf32, #tpu.memory_space<vmem>>, %arg3: memref<1x256x2xf32, #tpu.memory_space<vmem>>, %arg4: memref<1x256x2xf32, #tpu.memory_space<vmem>>, %arg5: memref<1x1x32xf32, #tpu.memory_space<vmem>>, %arg6: memref<2x2xf32, #tpu.memory_space<vmem>>, %arg7: memref<1x2xf32, #tpu.memory_space<vmem>>, %arg8: memref<2x32xf32, #tpu.memory_space<vmem>>, %arg9: memref<1x32xf32, #tpu.memory_space<vmem>>, %arg10: memref<32x96xbf16, #tpu.memory_space<vmem>>, %arg11: memref<1x96xf32, #tpu.memory_space<vmem>>, %arg12: memref<1x256x96xf32, #tpu.memory_space<vmem>>) attributes {dimension_semantics = [#tpu.dimension_semantics<parallel>, #tpu.dimension_semantics<parallel>], iteration_bounds = array<i64: 2, 1>, scalar_prefetch = 0 : i64, scratch_operands = 0 : i64, tpu.core_type = #tpu.core_type<tc>, window_params = [{transform_indices = @transform_0, window_bounds = array<i64: 1, 256, 32>}, {transform_indices = @transform_1, window_bounds = array<i64: 1, 256, 2>}, {transform_indices = @transform_2, window_bounds = array<i64: 1, 256, 2>}, {transform_indices = @transform_3, window_bounds = array<i64: 1, 1, 32>}, {pipeline_mode = #tpu.pipeline_mode<synchronous>, transform_indices = @transform_4, window_bounds = array<i64: 2, 2>}, {pipeline_mode = #tpu.pipeline_mode<synchronous>, transform_indices = @transform_5, window_bounds = array<i64: 1, 2>}, {pipeline_mode = #tpu.pipeline_mode<synchronous>, transform_indices = @transform_6, window_bounds = array<i64: 2, 32>}, {pipeline_mode = #tpu.pipeline_mode<synchronous>, transform_indices = @transform_7, window_bounds = array<i64: 1, 32>}, {pipeline_mode = #tpu.pipeline_mode<synchronous>, transform_indices = @transform_8, window_bounds = array<i64: 32, 96>}, {pipeline_mode = #tpu.pipeline_mode<synchronous>, transform_indices = @transform_9, window_bounds = array<i64: 1, 96>}, {transform_indices = @transform_10, window_bounds = array<i64: 1, 256, 96>}]} {
    %c0 = arith.constant 0 : index
    %c0_0 = arith.constant 0 : index
    %c0_1 = arith.constant 0 : index
    %0 = vector.load %arg2[%c0, %c0_0, %c0_1] : memref<1x256x32xf32, #tpu.memory_space<vmem>>, vector<1x256x32xf32>
    %1 = vector.shape_cast %0 : vector<1x256x32xf32> to vector<256x32xf32>
    %c0_2 = arith.constant 0 : index
    %c0_3 = arith.constant 0 : index
    %c0_4 = arith.constant 0 : index
    %2 = vector.load %arg3[%c0_2, %c0_3, %c0_4] : memref<1x256x2xf32, #tpu.memory_space<vmem>>, vector<1x256x2xf32>
    %3 = vector.shape_cast %2 : vector<1x256x2xf32> to vector<256x2xf32>
    %c0_5 = arith.constant 0 : index
    %c0_6 = arith.constant 0 : index
    %4 = vector.load %arg6[%c0_5, %c0_6] : memref<2x2xf32, #tpu.memory_space<vmem>>, vector<2x2xf32>
    %cst = arith.constant dense<0.000000e+00> : vector<256x2xf32>
    %5 = tpu.matmul %3, %4, %cst {dimension_numbers = #tpu.dot_dimension_numbers<[1], [0], [0], [1], [0, 0, 1, 1], [], []>} : vector<256x2xf32>, vector<2x2xf32>, vector<256x2xf32> -> vector<256x2xf32>
    %c0_7 = arith.constant 0 : index
    %c0_8 = arith.constant 0 : index
    %6 = vector.load %arg7[%c0_7, %c0_8] : memref<1x2xf32, #tpu.memory_space<vmem>>, vector<1x2xf32>
    %7 = vector.broadcast %6 : vector<1x2xf32> to vector<256x2xf32>
    %8 = arith.addf %5, %7 : vector<256x2xf32>
    %c0_9 = arith.constant 0 : index
    %c0_10 = arith.constant 0 : index
    %c0_11 = arith.constant 0 : index
    %9 = vector.load %arg4[%c0_9, %c0_10, %c0_11] : memref<1x256x2xf32, #tpu.memory_space<vmem>>, vector<1x256x2xf32>
    %10 = vector.shape_cast %9 : vector<1x256x2xf32> to vector<256x2xf32>
    %11 = arith.addf %10, %8 : vector<256x2xf32>
    %c0_12 = arith.constant 0 : index
    %c0_13 = arith.constant 0 : index
    %12 = vector.load %arg8[%c0_12, %c0_13] : memref<2x32xf32, #tpu.memory_space<vmem>>, vector<2x32xf32>
    %cst_14 = arith.constant dense<0.000000e+00> : vector<256x32xf32>
    %13 = tpu.matmul %11, %12, %cst_14 {dimension_numbers = #tpu.dot_dimension_numbers<[1], [0], [0], [1], [0, 0, 1, 1], [], []>} : vector<256x2xf32>, vector<2x32xf32>, vector<256x32xf32> -> vector<256x32xf32>
    %c0_15 = arith.constant 0 : index
    %c0_16 = arith.constant 0 : index
    %14 = vector.load %arg9[%c0_15, %c0_16] : memref<1x32xf32, #tpu.memory_space<vmem>>, vector<1x32xf32>
    %15 = vector.broadcast %14 : vector<1x32xf32> to vector<256x32xf32>
    %16 = arith.addf %13, %15 : vector<256x32xf32>
    %17 = arith.negf %16 : vector<256x32xf32>
    %18 = math.exp %17 : vector<256x32xf32>
    %cst_17 = arith.constant 1.000000e+00 : f32
    %19 = vector.broadcast %cst_17 : f32 to vector<256x32xf32>
    %20 = arith.addf %19, %18 : vector<256x32xf32>
    %21 = arith.divf %19, %20 : vector<256x32xf32>
    %c0_18 = arith.constant 0 : index
    %c0_19 = arith.constant 0 : index
    %c0_20 = arith.constant 0 : index
    %22 = vector.load %arg5[%c0_18, %c0_19, %c0_20] : memref<1x1x32xf32, #tpu.memory_space<vmem>>, vector<1x1x32xf32>
    %23 = vector.shape_cast %22 : vector<1x1x32xf32> to vector<1x32xf32>
    %24 = vector.broadcast %23 : vector<1x32xf32> to vector<256x32xf32>
    %25 = arith.addf %21, %24 : vector<256x32xf32>
    %26 = arith.mulf %1, %25 : vector<256x32xf32>
    %27 = arith.truncf %26 : vector<256x32xf32> to vector<256x32xbf16>
    %c0_21 = arith.constant 0 : index
    %c0_22 = arith.constant 0 : index
    %28 = vector.load %arg10[%c0_21, %c0_22] : memref<32x96xbf16, #tpu.memory_space<vmem>>, vector<32x96xbf16>
    %cst_23 = arith.constant dense<0.000000e+00> : vector<256x96xf32>
    %29 = tpu.matmul %27, %28, %cst_23 {dimension_numbers = #tpu.dot_dimension_numbers<[1], [0], [0], [1], [0, 0, 1, 1], [], []>} : vector<256x32xbf16>, vector<32x96xbf16>, vector<256x96xf32> -> vector<256x96xf32>
    %c0_24 = arith.constant 0 : index
    %c0_25 = arith.constant 0 : index
    %30 = vector.load %arg11[%c0_24, %c0_25] : memref<1x96xf32, #tpu.memory_space<vmem>>, vector<1x96xf32>
    %31 = vector.broadcast %30 : vector<1x96xf32> to vector<256x96xf32>
    %32 = arith.addf %29, %31 : vector<256x96xf32>
    %c0_26 = arith.constant 0 : index
    %c0_27 = arith.constant 0 : index
    %c0_28 = arith.constant 0 : index
    %33 = vector.load %arg12[%c0_26, %c0_27, %c0_28] : memref<1x256x96xf32, #tpu.memory_space<vmem>>, vector<1x256x96xf32>
    %34 = vector.shape_cast %33 : vector<1x256x96xf32> to vector<256x96xf32>
    %35 = vector.shape_cast %32 : vector<256x96xf32> to vector<1x256x96xf32>
    tpu.vector_store %arg12[%c0_26, %c0_27, %c0_28], %35 {strides = array<i32>} : memref<1x256x96xf32, #tpu.memory_space<vmem>>, vector<1x256x96xf32>,
    return
  }
  func.func @transform_0(%arg0: i32, %arg1: i32) -> (i32, i32, i32) {
    %c0_i32 = arith.constant 0 : i32
    %c0_i32_0 = arith.constant 0 : i32
    return %arg0, %arg1, %c0_i32 : i32, i32, i32
  }
  func.func @transform_1(%arg0: i32, %arg1: i32) -> (i32, i32, i32) {
    %c0_i32 = arith.constant 0 : i32
    %c0_i32_0 = arith.constant 0 : i32
    return %arg0, %arg1, %c0_i32 : i32, i32, i32
  }
  func.func @transform_2(%arg0: i32, %arg1: i32) -> (i32, i32, i32) {
    %c0_i32 = arith.constant 0 : i32
    %c0_i32_0 = arith.constant 0 : i32
    return %arg0, %arg1, %c0_i32 : i32, i32, i32
  }
  func.func @transform_3(%arg0: i32, %arg1: i32) -> (i32, i32, i32) {
    %c0_i32 = arith.constant 0 : i32
    %c0_i32_0 = arith.constant 0 : i32
    %c0_i32_1 = arith.constant 0 : i32
    return %arg0, %c0_i32, %c0_i32_0 : i32, i32, i32
  }
  func.func @transform_4(%arg0: i32, %arg1: i32) -> (i32, i32) {
    %c0_i32 = arith.constant 0 : i32
    %c0_i32_0 = arith.constant 0 : i32
    %c0_i32_1 = arith.constant 0 : i32
    return %c0_i32, %c0_i32_0 : i32, i32
  }
  func.func @transform_5(%arg0: i32, %arg1: i32) -> (i32, i32) {
    %c0_i32 = arith.constant 0 : i32
    %c0_i32_0 = arith.constant 0 : i32
    %c0_i32_1 = arith.constant 0 : i32
    return %c0_i32, %c0_i32_0 : i32, i32
  }
  func.func @transform_6(%arg0: i32, %arg1: i32) -> (i32, i32) {
    %c0_i32 = arith.constant 0 : i32
    %c0_i32_0 = arith.constant 0 : i32
    %c0_i32_1 = arith.constant 0 : i32
    return %c0_i32, %c0_i32_0 : i32, i32
  }
  func.func @transform_7(%arg0: i32, %arg1: i32) -> (i32, i32) {
    %c0_i32 = arith.constant 0 : i32
    %c0_i32_0 = arith.constant 0 : i32
    %c0_i32_1 = arith.constant 0 : i32
    return %c0_i32, %c0_i32_0 : i32, i32
  }
  func.func @transform_8(%arg0: i32, %arg1: i32) -> (i32, i32) {
    %c0_i32 = arith.constant 0 : i32
    %c0_i32_0 = arith.constant 0 : i32
    %c0_i32_1 = arith.constant 0 : i32
    return %c0_i32, %c0_i32_0 : i32, i32
  }
  func.func @transform_9(%arg0: i32, %arg1: i32) -> (i32, i32) {
    %c0_i32 = arith.constant 0 : i32
    %c0_i32_0 = arith.constant 0 : i32
    %c0_i32_1 = arith.constant 0 : i32
    return %c0_i32, %c0_i32_0 : i32, i32
  }
  func.func @transform_10(%arg0: i32, %arg1: i32) -> (i32, i32, i32) {
    %c0_i32 = arith.constant 0 : i32
    %c0_i32_0 = arith.constant 0 : i32
    return %arg0, %arg1, %c0_i32 : i32, i32, i32
  }
}

module attributes {stable_mosaic.version = 11 : i64} {
  func.func @_gru_scan_kernel(%arg0: i32, %arg1: i32, %arg2: memref<1x16x16x96xf32, #tpu.memory_space<vmem>>, %arg3: memref<32x96xf32, #tpu.memory_space<vmem>>, %arg4: memref<1x96xf32, #tpu.memory_space<vmem>>, %arg5: memref<1x16x16x32xf32, #tpu.memory_space<vmem>>) attributes {dimension_semantics = [#tpu.dimension_semantics<parallel>, #tpu.dimension_semantics<parallel>], iteration_bounds = array<i64: 2, 1>, scalar_prefetch = 0 : i64, scratch_operands = 0 : i64, tpu.core_type = #tpu.core_type<tc>, window_params = [{transform_indices = @transform_0, window_bounds = array<i64: 1, 16, 16, 96>}, {pipeline_mode = #tpu.pipeline_mode<synchronous>, transform_indices = @transform_1, window_bounds = array<i64: 32, 96>}, {pipeline_mode = #tpu.pipeline_mode<synchronous>, transform_indices = @transform_2, window_bounds = array<i64: 1, 96>}, {transform_indices = @transform_3, window_bounds = array<i64: 1, 16, 16, 32>}]} {
    %cst = arith.constant 0.000000e+00 : f32
    %0 = vector.broadcast %cst : f32 to vector<16x32xf32>
    %c0_i32 = arith.constant 0 : i32
    %c16_i32 = arith.constant 16 : i32
    %1 = arith.addi %c0_i32, %c16_i32 : i32
    %c1_i32 = arith.constant 1 : i32
    %2 = scf.for %arg6 = %c0_i32 to %1 step %c1_i32 iter_args(%arg7 = %0) -> (vector<16x32xf32>)  : i32 {
      %c15_i32 = arith.constant 15 : i32
      %3 = arith.subi %c15_i32, %arg6 : i32
      %c0 = arith.constant 0 : index
      %4 = arith.index_cast %arg6 : i32 to index
      %c0_1 = arith.constant 0 : index
      %c0_2 = arith.constant 0 : index
      %5 = vector.load %arg2[%c0, %4, %c0_1, %c0_2] : memref<1x16x16x96xf32, #tpu.memory_space<vmem>>, vector<1x1x16x96xf32>
      %6 = vector.shape_cast %5 : vector<1x1x16x96xf32> to vector<16x96xf32>
      %7 = vector.extract_strided_slice %6 {offsets = [0, 0], sizes = [16, 48], strides = [1, 1]} : vector<16x96xf32> to vector<16x48xf32>
      %c0_3 = arith.constant 0 : index
      %8 = arith.index_cast %3 : i32 to index
      %c0_4 = arith.constant 0 : index
      %c0_5 = arith.constant 0 : index
      %9 = vector.load %arg2[%c0_3, %8, %c0_4, %c0_5] : memref<1x16x16x96xf32, #tpu.memory_space<vmem>>, vector<1x1x16x96xf32>
      %10 = vector.shape_cast %9 : vector<1x1x16x96xf32> to vector<16x96xf32>
      %11 = vector.extract_strided_slice %10 {offsets = [0, 48], sizes = [16, 48], strides = [1, 1]} : vector<16x96xf32> to vector<16x48xf32>
      %c0_6 = arith.constant 0 : index
      %c0_7 = arith.constant 0 : index
      %12 = vector.load %arg3[%c0_6, %c0_7] : memref<32x96xf32, #tpu.memory_space<vmem>>, vector<32x96xf32>
      %cst_8 = arith.constant dense<0.000000e+00> : vector<16x96xf32>
      %13 = tpu.matmul %arg7, %12, %cst_8 {dimension_numbers = #tpu.dot_dimension_numbers<[1], [0], [0], [1], [0, 0, 1, 1], [], []>} : vector<16x32xf32>, vector<32x96xf32>, vector<16x96xf32> -> vector<16x96xf32>
      %c0_9 = arith.constant 0 : index
      %c0_10 = arith.constant 0 : index
      %14 = vector.load %arg4[%c0_9, %c0_10] : memref<1x96xf32, #tpu.memory_space<vmem>>, vector<1x96xf32>
      %15 = vector.broadcast %14 : vector<1x96xf32> to vector<16x96xf32>
      %16 = arith.addf %13, %15 : vector<16x96xf32>
      %17 = vector.extract_strided_slice %16 {offsets = [0, 0], sizes = [16, 48], strides = [1, 1]} : vector<16x96xf32> to vector<16x48xf32>
      %18 = vector.extract_strided_slice %arg7 {offsets = [0, 0], sizes = [16, 16], strides = [1, 1]} : vector<16x32xf32> to vector<16x16xf32>
      %19 = vector.extract_strided_slice %7 {offsets = [0, 0], sizes = [16, 16], strides = [1, 1]} : vector<16x48xf32> to vector<16x16xf32>
      %20 = vector.extract_strided_slice %17 {offsets = [0, 0], sizes = [16, 16], strides = [1, 1]} : vector<16x48xf32> to vector<16x16xf32>
      %21 = arith.addf %19, %20 : vector<16x16xf32>
      %22 = arith.negf %21 : vector<16x16xf32>
      %23 = math.exp %22 : vector<16x16xf32>
      %cst_11 = arith.constant 1.000000e+00 : f32
      %24 = vector.broadcast %cst_11 : f32 to vector<16x16xf32>
      %25 = arith.addf %24, %23 : vector<16x16xf32>
      %26 = arith.divf %24, %25 : vector<16x16xf32>
      %27 = vector.extract_strided_slice %7 {offsets = [0, 16], sizes = [16, 16], strides = [1, 1]} : vector<16x48xf32> to vector<16x16xf32>
      %28 = vector.extract_strided_slice %17 {offsets = [0, 16], sizes = [16, 16], strides = [1, 1]} : vector<16x48xf32> to vector<16x16xf32>
      %29 = arith.addf %27, %28 : vector<16x16xf32>
      %30 = arith.negf %29 : vector<16x16xf32>
      %31 = math.exp %30 : vector<16x16xf32>
      %cst_12 = arith.constant 1.000000e+00 : f32
      %32 = vector.broadcast %cst_12 : f32 to vector<16x16xf32>
      %33 = arith.addf %32, %31 : vector<16x16xf32>
      %34 = arith.divf %32, %33 : vector<16x16xf32>
      %35 = vector.extract_strided_slice %7 {offsets = [0, 32], sizes = [16, 16], strides = [1, 1]} : vector<16x48xf32> to vector<16x16xf32>
      %36 = vector.extract_strided_slice %17 {offsets = [0, 32], sizes = [16, 16], strides = [1, 1]} : vector<16x48xf32> to vector<16x16xf32>
      %37 = arith.mulf %26, %36 : vector<16x16xf32>
      %38 = arith.addf %35, %37 : vector<16x16xf32>
      %39 = math.tanh %38 : vector<16x16xf32>
      %cst_13 = arith.constant 1.000000e+00 : f32
      %40 = vector.broadcast %cst_13 : f32 to vector<16x16xf32>
      %41 = arith.subf %40, %34 : vector<16x16xf32>
      %42 = arith.mulf %41, %39 : vector<16x16xf32>
      %43 = arith.mulf %34, %18 : vector<16x16xf32>
      %44 = arith.addf %42, %43 : vector<16x16xf32>
      %45 = vector.extract_strided_slice %16 {offsets = [0, 48], sizes = [16, 48], strides = [1, 1]} : vector<16x96xf32> to vector<16x48xf32>
      %46 = vector.extract_strided_slice %arg7 {offsets = [0, 16], sizes = [16, 16], strides = [1, 1]} : vector<16x32xf32> to vector<16x16xf32>
      %47 = vector.extract_strided_slice %11 {offsets = [0, 0], sizes = [16, 16], strides = [1, 1]} : vector<16x48xf32> to vector<16x16xf32>
      %48 = vector.extract_strided_slice %45 {offsets = [0, 0], sizes = [16, 16], strides = [1, 1]} : vector<16x48xf32> to vector<16x16xf32>
      %49 = arith.addf %47, %48 : vector<16x16xf32>
      %50 = arith.negf %49 : vector<16x16xf32>
      %51 = math.exp %50 : vector<16x16xf32>
      %cst_14 = arith.constant 1.000000e+00 : f32
      %52 = vector.broadcast %cst_14 : f32 to vector<16x16xf32>
      %53 = arith.addf %52, %51 : vector<16x16xf32>
      %54 = arith.divf %52, %53 : vector<16x16xf32>
      %55 = vector.extract_strided_slice %11 {offsets = [0, 16], sizes = [16, 16], strides = [1, 1]} : vector<16x48xf32> to vector<16x16xf32>
      %56 = vector.extract_strided_slice %45 {offsets = [0, 16], sizes = [16, 16], strides = [1, 1]} : vector<16x48xf32> to vector<16x16xf32>
      %57 = arith.addf %55, %56 : vector<16x16xf32>
      %58 = arith.negf %57 : vector<16x16xf32>
      %59 = math.exp %58 : vector<16x16xf32>
      %cst_15 = arith.constant 1.000000e+00 : f32
      %60 = vector.broadcast %cst_15 : f32 to vector<16x16xf32>
      %61 = arith.addf %60, %59 : vector<16x16xf32>
      %62 = arith.divf %60, %61 : vector<16x16xf32>
      %63 = vector.extract_strided_slice %11 {offsets = [0, 32], sizes = [16, 16], strides = [1, 1]} : vector<16x48xf32> to vector<16x16xf32>
      %64 = vector.extract_strided_slice %45 {offsets = [0, 32], sizes = [16, 16], strides = [1, 1]} : vector<16x48xf32> to vector<16x16xf32>
      %65 = arith.mulf %54, %64 : vector<16x16xf32>
      %66 = arith.addf %63, %65 : vector<16x16xf32>
      %67 = math.tanh %66 : vector<16x16xf32>
      %cst_16 = arith.constant 1.000000e+00 : f32
      %68 = vector.broadcast %cst_16 : f32 to vector<16x16xf32>
      %69 = arith.subf %68, %62 : vector<16x16xf32>
      %70 = arith.mulf %69, %67 : vector<16x16xf32>
      %71 = arith.mulf %62, %46 : vector<16x16xf32>
      %72 = arith.addf %70, %71 : vector<16x16xf32>
      %c0_17 = arith.constant 0 : index
      %73 = arith.index_cast %arg6 : i32 to index
      %c0_18 = arith.constant 0 : index
      %c0_19 = arith.constant 0 : index
      %74 = vector.load %arg5[%c0_17, %73, %c0_18, %c0_19] : memref<1x16x16x32xf32, #tpu.memory_space<vmem>>, vector<1x1x16x16xf32>
      %75 = vector.shape_cast %74 : vector<1x1x16x16xf32> to vector<16x16xf32>
      %76 = vector.shape_cast %44 : vector<16x16xf32> to vector<1x1x16x16xf32>
      tpu.vector_store %arg5[%c0_17, %73, %c0_18, %c0_19], %76 {strides = array<i32>} : memref<1x16x16x32xf32, #tpu.memory_space<vmem>>, vector<1x1x16x16xf32>,
      %c0_20 = arith.constant 0 : index
      %77 = arith.index_cast %3 : i32 to index
      %c0_21 = arith.constant 0 : index
      %c16 = arith.constant 16 : index
      %78 = vector.load %arg5[%c0_20, %77, %c0_21, %c16] : memref<1x16x16x32xf32, #tpu.memory_space<vmem>>, vector<1x1x16x16xf32>
      %79 = vector.shape_cast %78 : vector<1x1x16x16xf32> to vector<16x16xf32>
      %80 = vector.shape_cast %72 : vector<16x16xf32> to vector<1x1x16x16xf32>
      tpu.vector_store %arg5[%c0_20, %77, %c0_21, %c16], %80 {strides = array<i32>} : memref<1x16x16x32xf32, #tpu.memory_space<vmem>>, vector<1x1x16x16xf32>,
      %81 = tpu.concatenate %44, %72 in 1 : vector<16x16xf32>, vector<16x16xf32> -> vector<16x32xf32>
      scf.yield %81 : vector<16x32xf32>
    }
    %c16_i32_0 = arith.constant 16 : i32
    return
  }
  func.func @transform_0(%arg0: i32, %arg1: i32) -> (i32, i32, i32, i32) {
    %c0_i32 = arith.constant 0 : i32
    %c0_i32_0 = arith.constant 0 : i32
    %c0_i32_1 = arith.constant 0 : i32
    return %arg0, %c0_i32, %arg1, %c0_i32_0 : i32, i32, i32, i32
  }
  func.func @transform_1(%arg0: i32, %arg1: i32) -> (i32, i32) {
    %c0_i32 = arith.constant 0 : i32
    %c0_i32_0 = arith.constant 0 : i32
    %c0_i32_1 = arith.constant 0 : i32
    return %c0_i32, %c0_i32_0 : i32, i32
  }
  func.func @transform_2(%arg0: i32, %arg1: i32) -> (i32, i32) {
    %c0_i32 = arith.constant 0 : i32
    %c0_i32_0 = arith.constant 0 : i32
    %c0_i32_1 = arith.constant 0 : i32
    return %c0_i32, %c0_i32_0 : i32, i32
  }
  func.func @transform_3(%arg0: i32, %arg1: i32) -> (i32, i32, i32, i32) {
    %c0_i32 = arith.constant 0 : i32
    %c0_i32_0 = arith.constant 0 : i32
    %c0_i32_1 = arith.constant 0 : i32
    return %arg0, %c0_i32, %arg1, %c0_i32_0 : i32, i32, i32, i32
  }
}

module attributes {stable_mosaic.version = 11 : i64} {
  func.func @_gru_in_kernel(%arg0: i32, %arg1: memref<512x32xf32, #tpu.memory_space<vmem>>, %arg2: memref<512x32xf32, #tpu.memory_space<vmem>>, %arg3: memref<32x96xbf16, #tpu.memory_space<vmem>>, %arg4: memref<1x96xf32, #tpu.memory_space<vmem>>, %arg5: memref<512x96xf32, #tpu.memory_space<vmem>>) attributes {dimension_semantics = [#tpu.dimension_semantics<parallel>], iteration_bounds = array<i64: 1>, scalar_prefetch = 0 : i64, scratch_operands = 0 : i64, tpu.core_type = #tpu.core_type<tc>, window_params = [{transform_indices = @transform_0, window_bounds = array<i64: 512, 32>}, {transform_indices = @transform_1, window_bounds = array<i64: 512, 32>}, {pipeline_mode = #tpu.pipeline_mode<synchronous>, transform_indices = @transform_2, window_bounds = array<i64: 32, 96>}, {pipeline_mode = #tpu.pipeline_mode<synchronous>, transform_indices = @transform_3, window_bounds = array<i64: 1, 96>}, {transform_indices = @transform_4, window_bounds = array<i64: 512, 96>}]} {
    %c0 = arith.constant 0 : index
    %c0_0 = arith.constant 0 : index
    %0 = vector.load %arg1[%c0, %c0_0] : memref<512x32xf32, #tpu.memory_space<vmem>>, vector<512x32xf32>
    %c0_1 = arith.constant 0 : index
    %c0_2 = arith.constant 0 : index
    %1 = vector.load %arg2[%c0_1, %c0_2] : memref<512x32xf32, #tpu.memory_space<vmem>>, vector<512x32xf32>
    %2 = arith.addf %0, %1 : vector<512x32xf32>
    %3 = arith.truncf %2 : vector<512x32xf32> to vector<512x32xbf16>
    %c0_3 = arith.constant 0 : index
    %c0_4 = arith.constant 0 : index
    %4 = vector.load %arg3[%c0_3, %c0_4] : memref<32x96xbf16, #tpu.memory_space<vmem>>, vector<32x96xbf16>
    %cst = arith.constant dense<0.000000e+00> : vector<512x96xf32>
    %5 = tpu.matmul %3, %4, %cst {dimension_numbers = #tpu.dot_dimension_numbers<[1], [0], [0], [1], [0, 0, 1, 1], [], []>} : vector<512x32xbf16>, vector<32x96xbf16>, vector<512x96xf32> -> vector<512x96xf32>
    %c0_5 = arith.constant 0 : index
    %c0_6 = arith.constant 0 : index
    %6 = vector.load %arg4[%c0_5, %c0_6] : memref<1x96xf32, #tpu.memory_space<vmem>>, vector<1x96xf32>
    %7 = vector.broadcast %6 : vector<1x96xf32> to vector<512x96xf32>
    %8 = arith.addf %5, %7 : vector<512x96xf32>
    %c0_7 = arith.constant 0 : index
    %c0_8 = arith.constant 0 : index
    %9 = vector.load %arg5[%c0_7, %c0_8] : memref<512x96xf32, #tpu.memory_space<vmem>>, vector<512x96xf32>
    tpu.vector_store %arg5[%c0_7, %c0_8], %8 {strides = array<i32>} : memref<512x96xf32, #tpu.memory_space<vmem>>, vector<512x96xf32>,
    return
  }
  func.func @transform_0(%arg0: i32) -> (i32, i32) {
    %c0_i32 = arith.constant 0 : i32
    %c0_i32_0 = arith.constant 0 : i32
    return %arg0, %c0_i32 : i32, i32
  }
  func.func @transform_1(%arg0: i32) -> (i32, i32) {
    %c0_i32 = arith.constant 0 : i32
    %c0_i32_0 = arith.constant 0 : i32
    return %arg0, %c0_i32 : i32, i32
  }
  func.func @transform_2(%arg0: i32) -> (i32, i32) {
    %c0_i32 = arith.constant 0 : i32
    %c0_i32_0 = arith.constant 0 : i32
    %c0_i32_1 = arith.constant 0 : i32
    return %c0_i32, %c0_i32_0 : i32, i32
  }
  func.func @transform_3(%arg0: i32) -> (i32, i32) {
    %c0_i32 = arith.constant 0 : i32
    %c0_i32_0 = arith.constant 0 : i32
    %c0_i32_1 = arith.constant 0 : i32
    return %c0_i32, %c0_i32_0 : i32, i32
  }
  func.func @transform_4(%arg0: i32) -> (i32, i32) {
    %c0_i32 = arith.constant 0 : i32
    %c0_i32_0 = arith.constant 0 : i32
    return %arg0, %c0_i32 : i32, i32
  }
}

</mosaic_0001>

<llo_original>
// kernel: recurrent_residual_block_tl.9
$region0: #{recurrent_residual_block_tl.9}
  #allocation0 [shape = 'u32[]', space=smem, size = 0x4, offset = 0x4, fixed_abs, tag = 'smem constant byte address 0x4 - core index']
  #allocation1 [shape = 'u32[144,128]{1,0:T(1,128)}', space=vmem, size = 0x12000, scoped, tag = 'internal scratch']
  %s0 = inlined_call_operand.vmem [shape: f32[2,18,18,32], index: 0, kind: input, shape index: {}, may-alias: {0,1,2}]
  %s1 = inlined_call_operand.vmem [shape: f32[2,18,18,32], index: 1, kind: input, shape index: {}, may-alias: {0,1,2}]
  %s2 = inlined_call_operand.vmem [shape: f32[2,18,18,32], index: 2, kind: input, shape index: {}, may-alias: {0,1,2}]
  %s3 = inlined_call_operand.vmem [shape: f32[2,16,16,32], index: 3, kind: input, shape index: {}]
  %s4 = inlined_call_operand.vmem [shape: bf16[288,32], index: 4, kind: input, shape index: {}]
  %s5 = inlined_call_operand.vmem [shape: f32[1,32], index: 5, kind: input, shape index: {}]
  %s6 = inlined_call_operand.vmem [shape: f32[2,16,16,32], index: 6, kind: output, shape index: {0}]
  %s7 = inlined_call_operand.vmem [shape: f32[2,16,2,32], index: 7, kind: output, shape index: {1}]
  %s8 = inlined_call_operand.vmem [shape: f32[2,16,2,32], index: 8, kind: output, shape index: {2}]
  %9 = xla_tuple %s6, %s7, %s8
  %s10 = sld [smem:[#allocation0]]
  $region73: #{recurrent_residual_block_tl.9} parent=0
    _
  %s12 = ssub.s32 1, %s10
  %s13 = scalar_select 0, %s12, %s10
  loop: start=0, step=1, limit=34
  $region2: #{recurrent_residual_block_tl.9} parent=0 // loop_pre_header
    _
  $region3: #{recurrent_residual_block_tl.9} parent=0 // loop_header
    %s15 = sphi 0, %s19
    %p16 = scmp.ge.s32.totalorder %s15, 34
    %s22 = sphi 0, %s34
    %s23 = sphi 0, %s30
    %s24 = sphi 0, %s22
    %s25 = sphi 0, %s23
    %s26 = sphi 0, %s24
    %s27 = sphi 0, %s25
    %s39 = sphi 0, %s41
    %s42 = sphi 0, %s39
    %s43 = sphi 0, %s42
    %s59 = sphi 0, %s43
    %s69 = sphi 0, %s71
    %s72 = sphi 0, %s69
    %s73 = sphi 0, %s72
    %s89 = sphi 0, %s73
    %s99 = sphi 0, %s101
    %s102 = sphi 0, %s99
    %s103 = sphi 0, %s102
    %s119 = sphi 0, %s103
    %s127 = sphi 0, %s129
    %s130 = sphi 0, %s127
    %s131 = sphi 0, %s130
    %s147 = sphi 0, %s131
    %s151 = sphi 0, %s151
    %s153 = sphi 0, %s151
    %s154 = sphi 0, %s153
    %s168 = sphi 0, %s154
    %s172 = sphi 0, %s172
    %s174 = sphi 0, %s172
    %s175 = sphi 0, %s174
    %s189 = sphi 0, %s175
    %s197 = sphi 0, %s199
    %s200 = sphi 0, %s197
    %s201 = sphi 0, %s200
    %s217 = sphi 0, %s201
    %s225 = sphi 0, %s227
    %s228 = sphi 0, %s225
    %s229 = sphi 0, %s228
    %s245 = sphi 0, %s229
    %s253 = sphi 0, %s255
    %s256 = sphi 0, %s253
    %s257 = sphi 0, %s256
    %s273 = sphi 0, %s257
  $region4: #{recurrent_residual_block_tl.9} parent=0 // loop_header_branch
    %18 = sbr.rel (%p16) target = $region8
  $region5: #{recurrent_residual_block_tl.9} parent=0 // loop_body
    %s20 = ssub.s32 %s15, 1
    %s21 = ssub.s32 %s15, 2
    %s28 = sadd.s32 1, %s23
    %p29 = scmp.ge.s32.totalorder %s28, 16
    %s30 = scalar_select %p29, 0, %s28
    %s31 = sadd.s32 1, %s22
    %s32 = scalar_select %p29, %s31, %s22
    %p33 = scmp.ge.s32.totalorder %s32, 2
    %s34 = scalar_select %p33, 0, %s32
    %s35 = ssub.s32 %s22, %s34
    %s36 = ssub.s32 %s23, %s30
    %s37 = sor.u32 %s35, %s36
    %p38 = scmp.eq.s32.totalorder %s37, 0
    %s40 = sadd.s32 %s39, 1
    %s41 = scalar_select %p38, %s39, %s40
    %p44 = pneg %p38
    %p45 = scmp.eq.s32.totalorder %s15, 31
    %p46 = por %p44, %p45
    %p47 = scmp.ne.s32.totalorder %s39, %s42
    %p48 = scmp.eq.s32.totalorder %s15, 0
    %p49 = por %p47, %p48
    %p50 = scmp.ne.s32.totalorder %s39, %s42
    %p51 = scmp.eq.s32.totalorder %s20, 31
    %p52 = por %p50, %p51
    %p53 = scmp.ne.s32.totalorder %s42, %s43
    %p54 = scmp.eq.s32.totalorder %s20, 0
    %p55 = por %p53, %p54
    %p56 = scmp.ne.s32.totalorder %s42, %s43
    %p57 = scmp.eq.s32.totalorder %s21, 31
    %p58 = por %p56, %p57
    %p60 = scmp.ne.s32.totalorder %s43, %s59
    %p61 = scmp.eq.s32.totalorder %s21, 0
    %p62 = por %p60, %p61
    %s63 = sadd.s32 %s23, 1
    %s64 = sadd.s32 %s30, 1
    %s65 = ssub.s32 %s22, %s34
    %s66 = ssub.s32 %s63, %s64
    %s67 = sor.u32 %s65, %s66
    %p68 = scmp.eq.s32.totalorder %s67, 0
    %s70 = sadd.s32 %s69, 1
    %s71 = scalar_select %p68, %s69, %s70
    %p74 = pneg %p68
    %p75 = scmp.eq.s32.totalorder %s15, 31
    %p76 = por %p74, %p75
    %p77 = scmp.ne.s32.totalorder %s69, %s72
    %p78 = scmp.eq.s32.totalorder %s15, 0
    %p79 = por %p77, %p78
    %p80 = scmp.ne.s32.totalorder %s69, %s72
    %p81 = scmp.eq.s32.totalorder %s20, 31
    %p82 = por %p80, %p81
    %p83 = scmp.ne.s32.totalorder %s72, %s73
    %p84 = scmp.eq.s32.totalorder %s20, 0
    %p85 = por %p83, %p84
    %p86 = scmp.ne.s32.totalorder %s72, %s73
    %p87 = scmp.eq.s32.totalorder %s21, 31
    %p88 = por %p86, %p87
    %p90 = scmp.ne.s32.totalorder %s73, %s89
    %p91 = scmp.eq.s32.totalorder %s21, 0
    %p92 = por %p90, %p91
    %s93 = sadd.s32 %s23, 2
    %s94 = sadd.s32 %s30, 2
    %s95 = ssub.s32 %s22, %s34
    %s96 = ssub.s32 %s93, %s94
    %s97 = sor.u32 %s95, %s96
    %p98 = scmp.eq.s32.totalorder %s97, 0
    %s100 = sadd.s32 %s99, 1
    %s101 = scalar_select %p98, %s99, %s100
    %p104 = pneg %p98
    %p105 = scmp.eq.s32.totalorder %s15, 31
    %p106 = por %p104, %p105
    %p107 = scmp.ne.s32.totalorder %s99, %s102
    %p108 = scmp.eq.s32.totalorder %s15, 0
    %p109 = por %p107, %p108
    %p110 = scmp.ne.s32.totalorder %s99, %s102
    %p111 = scmp.eq.s32.totalorder %s20, 31
    %p112 = por %p110, %p111
    %p113 = scmp.ne.s32.totalorder %s102, %s103
    %p114 = scmp.eq.s32.totalorder %s20, 0
    %p115 = por %p113, %p114
    %p116 = scmp.ne.s32.totalorder %s102, %s103
    %p117 = scmp.eq.s32.totalorder %s21, 31
    %p118 = por %p116, %p117
    %p120 = scmp.ne.s32.totalorder %s103, %s119
    %p121 = scmp.eq.s32.totalorder %s21, 0
    %p122 = por %p120, %p121
    %s123 = ssub.s32 %s22, %s34
    %s124 = ssub.s32 %s23, %s30
    %s125 = sor.u32 %s123, %s124
    %p126 = scmp.eq.s32.totalorder %s125, 0
    %s128 = sadd.s32 %s127, 1
    %s129 = scalar_select %p126, %s127, %s128
    %p132 = pneg %p126
    %p133 = scmp.eq.s32.totalorder %s15, 31
    %p134 = por %p132, %p133
    %p135 = scmp.ne.s32.totalorder %s127, %s130
    %p136 = scmp.eq.s32.totalorder %s15, 0
    %p137 = por %p135, %p136
    %p138 = scmp.ne.s32.totalorder %s127, %s130
    %p139 = scmp.eq.s32.totalorder %s20, 31
    %p140 = por %p138, %p139
    %p141 = scmp.ne.s32.totalorder %s130, %s131
    %p142 = scmp.eq.s32.totalorder %s20, 0
    %p143 = por %p141, %p142
    %p144 = scmp.ne.s32.totalorder %s130, %s131
    %p145 = scmp.eq.s32.totalorder %s21, 31
    %p146 = por %p144, %p145
    %p148 = scmp.ne.s32.totalorder %s131, %s147
    %p149 = scmp.eq.s32.totalorder %s21, 0
    %p150 = por %p148, %p149
    %s152 = sadd.s32 %s151, 1
    %p155 = scmp.eq.s32.totalorder %s15, 31
    %p156 = scmp.ne.s32.totalorder %s151, %s153
    %p157 = scmp.eq.s32.totalorder %s15, 0
    %p158 = por %p156, %p157
    %p159 = scmp.ne.s32.totalorder %s151, %s153
    %p160 = scmp.eq.s32.totalorder %s20, 31
    %p161 = por %p159, %p160
    %p162 = scmp.ne.s32.totalorder %s153, %s154
    %p163 = scmp.eq.s32.totalorder %s20, 0
    %p164 = por %p162, %p163
    %p165 = scmp.ne.s32.totalorder %s153, %s154
    %p166 = scmp.eq.s32.totalorder %s21, 31
    %p167 = por %p165, %p166
    %p169 = scmp.ne.s32.totalorder %s154, %s168
    %p170 = scmp.eq.s32.totalorder %s21, 0
    %p171 = por %p169, %p170
    %s173 = sadd.s32 %s172, 1
    %p176 = scmp.eq.s32.totalorder %s15, 31
    %p177 = scmp.ne.s32.totalorder %s172, %s174
    %p178 = scmp.eq.s32.totalorder %s15, 0
    %p179 = por %p177, %p178
    %p180 = scmp.ne.s32.totalorder %s172, %s174
    %p181 = scmp.eq.s32.totalorder %s20, 31
    %p182 = por %p180, %p181
    %p183 = scmp.ne.s32.totalorder %s174, %s175
    %p184 = scmp.eq.s32.totalorder %s20, 0
    %p185 = por %p183, %p184
    %p186 = scmp.ne.s32.totalorder %s174, %s175
    %p187 = scmp.eq.s32.totalorder %s21, 31
    %p188 = por %p186, %p187
    %p190 = scmp.ne.s32.totalorder %s175, %s189
    %p191 = scmp.eq.s32.totalorder %s21, 0
    %p192 = por %p190, %p191
    %s193 = ssub.s32 %s22, %s34
    %s194 = ssub.s32 %s23, %s30
    %s195 = sor.u32 %s193, %s194
    %p196 = scmp.eq.s32.totalorder %s195, 0
    %s198 = sadd.s32 %s197, 1
    %s199 = scalar_select %p196, %s197, %s198
    %p202 = pneg %p196
    %p203 = scmp.eq.s32.totalorder %s15, 31
    %p204 = por %p202, %p203
    %p205 = scmp.ne.s32.totalorder %s197, %s200
    %p206 = scmp.eq.s32.totalorder %s15, 0
    %p207 = por %p205, %p206
    %p208 = scmp.ne.s32.totalorder %s197, %s200
    %p209 = scmp.eq.s32.totalorder %s20, 31
    %p210 = por %p208, %p209
    %p211 = scmp.ne.s32.totalorder %s200, %s201
    %p212 = scmp.eq.s32.totalorder %s20, 0
    %p213 = por %p211, %p212
    %p214 = scmp.ne.s32.totalorder %s200, %s201
    %p215 = scmp.eq.s32.totalorder %s21, 31
    %p216 = por %p214, %p215
    %p218 = scmp.ne.s32.totalorder %s201, %s217
    %p219 = scmp.eq.s32.totalorder %s21, 0
    %p220 = por %p218, %p219
    %s221 = ssub.s32 %s22, %s34
    %s222 = ssub.s32 %s23, %s30
    %s223 = sor.u32 %s221, %s222
    %p224 = scmp.eq.s32.totalorder %s223, 0
    %s226 = sadd.s32 %s225, 1
    %s227 = scalar_select %p224, %s225, %s226
    %p230 = pneg %p224
    %p231 = scmp.eq.s32.totalorder %s15, 31
    %p232 = por %p230, %p231
    %p233 = scmp.ne.s32.totalorder %s225, %s228
    %p234 = scmp.eq.s32.totalorder %s15, 0
    %p235 = por %p233, %p234
    %p236 = scmp.ne.s32.totalorder %s225, %s228
    %p237 = scmp.eq.s32.totalorder %s20, 31
    %p238 = por %p236, %p237
    %p239 = scmp.ne.s32.totalorder %s228, %s229
    %p240 = scmp.eq.s32.totalorder %s20, 0
    %p241 = por %p239, %p240
    %p242 = scmp.ne.s32.totalorder %s228, %s229
    %p243 = scmp.eq.s32.totalorder %s21, 31
    %p244 = por %p242, %p243
    %p246 = scmp.ne.s32.totalorder %s229, %s245
    %p247 = scmp.eq.s32.totalorder %s21, 0
    %p248 = por %p246, %p247
    %s249 = ssub.s32 %s22, %s34
    %s250 = ssub.s32 %s23, %s30
    %s251 = sor.u32 %s249, %s250
    %p252 = scmp.eq.s32.totalorder %s251, 0
    %s254 = sadd.s32 %s253, 1
    %s255 = scalar_select %p252, %s253, %s254
    %p258 = pneg %p252
    %p259 = scmp.eq.s32.totalorder %s15, 31
    %p260 = por %p258, %p259
    %p261 = scmp.ne.s32.totalorder %s253, %s256
    %p262 = scmp.eq.s32.totalorder %s15, 0
    %p263 = por %p261, %p262
    %p264 = scmp.ne.s32.totalorder %s253, %s256
    %p265 = scmp.eq.s32.totalorder %s20, 31
    %p266 = por %p264, %p265
    %p267 = scmp.ne.s32.totalorder %s256, %s257
    %p268 = scmp.eq.s32.totalorder %s20, 0
    %p269 = por %p267, %p268
    %p270 = scmp.ne.s32.totalorder %s256, %s257
    %p271 = scmp.eq.s32.totalorder %s21, 31
    %p272 = por %p270, %p271
    %p274 = scmp.ne.s32.totalorder %s257, %s273
    %p275 = scmp.eq.s32.totalorder %s21, 0
    %p276 = por %p274, %p275
    %p277 = scmp.le.s32.totalorder 1, %s15
    %p278 = scmp.lt.s32.totalorder %s15, 33
    %p279 = pnand %p277, %p278
    %p280 = pneg %p279
    // Predicated region
    $region9: #{recurrent_residual_block_tl.9} parent=5 // pred_check
      _
    $region10: #{recurrent_residual_block_tl.9} parent=5 // pred_check_branch
      %282 = sbr.rel (%p279) target = $region12
    $region11: #{recurrent_residual_block_tl.9} parent=5 // pred_region
      %s283 = ssub.s32 %s15, 1
      // Predicated region
      $region13: #{recurrent_residual_block_tl.9} parent=11 // pred_check
        %p284 = pneg %p164
      $region14: #{recurrent_residual_block_tl.9} parent=11 // pred_check_branch
        %286 = sbr.rel (%p284) target = $region16
      $region15: #{recurrent_residual_block_tl.9} parent=11 // pred_region
        _
      $region16: #{recurrent_residual_block_tl.9} parent=11 // pred_fallthru
        _
      // Predicated region
      $region17: #{recurrent_residual_block_tl.9} parent=11 // pred_check
        %p287 = pneg %p185
      $region18: #{recurrent_residual_block_tl.9} parent=11 // pred_check_branch
        %289 = sbr.rel (%p287) target = $region20
      $region19: #{recurrent_residual_block_tl.9} parent=11 // pred_region
        _
      $region20: #{recurrent_residual_block_tl.9} parent=11 // pred_fallthru
        _
    $region12: #{recurrent_residual_block_tl.9} parent=5 // pred_fallthru
      _
    %p290 = scmp.lt.s32.totalorder %s15, 32
    // Predicated region
    $region21: #{recurrent_residual_block_tl.9} parent=5 // pred_check
      %p291 = pneg %p290
    $region22: #{recurrent_residual_block_tl.9} parent=5 // pred_check_branch
      %293 = sbr.rel (%p291) target = $region24
    $region23: #{recurrent_residual_block_tl.9} parent=5 // pred_region
      // Predicated region
      $region25: #{recurrent_residual_block_tl.9} parent=23 // pred_check
        %p294 = pneg %p49
      $region26: #{recurrent_residual_block_tl.9} parent=23 // pred_check_branch
        %296 = sbr.rel (%p294) target = $region28
      $region27: #{recurrent_residual_block_tl.9} parent=23 // pred_region
        %p297 = scmp.lt.s32.totalorder %s22, 1
        %s298 = scalar_select %p297, %s22, 1
        %p299 = scmp.lt.s32.totalorder %s23, 17
        %s300 = scalar_select %p299, %s23, 17
        %s301 = smul.addr %s300, 3
        %s302 = smul.addr %s298, 54
        %s303 = sadd.s32 %s301, %s302
        %s304 = smul.addr %s303, 8
        %s305 = scalar_lea.vmem %s0, %s304
      $region28: #{recurrent_residual_block_tl.9} parent=23 // pred_fallthru
        _
      // Predicated region
      $region29: #{recurrent_residual_block_tl.9} parent=23 // pred_check
        %p306 = pneg %p79
      $region30: #{recurrent_residual_block_tl.9} parent=23 // pred_check_branch
        %308 = sbr.rel (%p306) target = $region32
      $region31: #{recurrent_residual_block_tl.9} parent=23 // pred_region
        %s309 = sadd.s32 %s23, 1
        %p310 = scmp.lt.s32.totalorder %s22, 1
        %s311 = scalar_select %p310, %s22, 1
        %p312 = scmp.lt.s32.totalorder %s309, 17
        %s313 = scalar_select %p312, %s309, 17
        %s314 = smul.addr %s313, 3
        %s315 = smul.addr %s311, 54
        %s316 = sadd.s32 %s314, %s315
        %s317 = smul.addr %s316, 8
        %s318 = scalar_lea.vmem %s1, %s317
        %s319 = sadd.s32 %s23, 1
      $region32: #{recurrent_residual_block_tl.9} parent=23 // pred_fallthru
        _
      // Predicated region
      $region33: #{recurrent_residual_block_tl.9} parent=23 // pred_check
        %p320 = pneg %p109
      $region34: #{recurrent_residual_block_tl.9} parent=23 // pred_check_branch
        %322 = sbr.rel (%p320) target = $region36
      $region35: #{recurrent_residual_block_tl.9} parent=23 // pred_region
        %s323 = sadd.s32 %s23, 2
        %p324 = scmp.lt.s32.totalorder %s22, 1
        %s325 = scalar_select %p324, %s22, 1
        %p326 = scmp.lt.s32.totalorder %s323, 17
        %s327 = scalar_select %p326, %s323, 17
        %s328 = smul.addr %s327, 3
        %s329 = smul.addr %s325, 54
        %s330 = sadd.s32 %s328, %s329
        %s331 = smul.addr %s330, 8
        %s332 = scalar_lea.vmem %s2, %s331
        %s333 = sadd.s32 %s23, 2
      $region36: #{recurrent_residual_block_tl.9} parent=23 // pred_fallthru
        _
      // Predicated region
      $region37: #{recurrent_residual_block_tl.9} parent=23 // pred_check
        %p334 = pneg %p137
      $region38: #{recurrent_residual_block_tl.9} parent=23 // pred_check_branch
        %336 = sbr.rel (%p334) target = $region40
      $region39: #{recurrent_residual_block_tl.9} parent=23 // pred_region
        %p337 = scmp.lt.s32.totalorder %s22, 1
        %s338 = scalar_select %p337, %s22, 1
        %p339 = scmp.lt.s32.totalorder %s23, 15
        %s340 = scalar_select %p339, %s23, 15
        %s341 = smul.addr %s340, 2
        %s342 = smul.addr %s338, 32
        %s343 = sadd.s32 %s341, %s342
        %s344 = smul.addr %s343, 8
        %s345 = scalar_lea.vmem %s3, %s344
      $region40: #{recurrent_residual_block_tl.9} parent=23 // pred_fallthru
        _
    $region24: #{recurrent_residual_block_tl.9} parent=5 // pred_fallthru
      _
    %p346 = scmp.le.s32.totalorder 1, %s15
    %p347 = scmp.lt.s32.totalorder %s15, 33
    %p348 = pnand %p346, %p347
    %p349 = pneg %p348
    // Predicated region
    $region41: #{recurrent_residual_block_tl.9} parent=5 // pred_check
      _
    $region42: #{recurrent_residual_block_tl.9} parent=5 // pred_check_branch
      %351 = sbr.rel (%p348) target = $region44
    $region43: #{recurrent_residual_block_tl.9} parent=5 // pred_region
      %s352 = ssub.s32 %s15, 1
      %p353 = scmp.lt.s32.totalorder %s24, 1
      %s354 = scalar_select %p353, %s24, 1
      %p355 = scmp.lt.s32.totalorder %s25, 17
      %s356 = scalar_select %p355, %s25, 17
      %s357 = smul.addr %s356, 3
      %s358 = smul.addr %s354, 54
      %s359 = sadd.s32 %s357, %s358
      %s360 = smul.addr %s359, 8
      %s361 = scalar_lea.vmem %s0, %s360
      %p362 = pneg %p55
      %p363 = pneg %p52
      %s364 = sadd.s32 %s25, 1
      %p365 = scmp.lt.s32.totalorder %s24, 1
      %s366 = scalar_select %p365, %s24, 1
      %p367 = scmp.lt.s32.totalorder %s364, 17
      %s368 = scalar_select %p367, %s364, 17
      %s369 = smul.addr %s368, 3
      %s370 = smul.addr %s366, 54
      %s371 = sadd.s32 %s369, %s370
      %s372 = smul.addr %s371, 8
      %s373 = scalar_lea.vmem %s1, %s372
      %p374 = pneg %p85
      %p375 = pneg %p82
      %s376 = sadd.s32 %s25, 2
      %p377 = scmp.lt.s32.totalorder %s24, 1
      %s378 = scalar_select %p377, %s24, 1
      %p379 = scmp.lt.s32.totalorder %s376, 17
      %s380 = scalar_select %p379, %s376, 17
      %s381 = smul.addr %s380, 3
      %s382 = smul.addr %s378, 54
      %s383 = sadd.s32 %s381, %s382
      %s384 = smul.addr %s383, 8
      %s385 = scalar_lea.vmem %s2, %s384
      %p386 = pneg %p115
      %p387 = pneg %p112
      %p388 = scmp.lt.s32.totalorder %s24, 1
      %s389 = scalar_select %p388, %s24, 1
      %p390 = scmp.lt.s32.totalorder %s25, 15
      %s391 = scalar_select %p390, %s25, 15
      %s392 = smul.addr %s391, 2
      %s393 = smul.addr %s389, 32
      %s394 = sadd.s32 %s392, %s393
      %s395 = smul.addr %s394, 8
      %s396 = scalar_lea.vmem %s3, %s395
      %p397 = pneg %p143
      %p398 = pneg %p140
      %p399 = pneg %p164
      %p400 = pneg %p161
      %p401 = pneg %p185
      %p402 = pneg %p182
      %p403 = pneg %p213
      %p404 = pneg %p210
      %p405 = scmp.lt.s32.totalorder %s24, 1
      %s406 = scalar_select %p405, %s24, 1
      %p407 = scmp.lt.s32.totalorder %s25, 15
      %s408 = scalar_select %p407, %s25, 15
      %s409 = smul.addr %s408, 2
      %s410 = smul.addr %s406, 32
      %s411 = sadd.s32 %s409, %s410
      %s412 = smul.addr %s411, 8
      %s413 = scalar_lea.vmem %s6, %s412
      %p414 = pneg %p241
      %p415 = pneg %p238
      %p416 = scmp.lt.s32.totalorder %s24, 1
      %s417 = scalar_select %p416, %s24, 1
      %p418 = scmp.lt.s32.totalorder %s25, 15
      %s419 = scalar_select %p418, %s25, 15
      %s420 = smul.addr %s417, 16
      %s421 = sadd.s32 %s419, %s420
      %s422 = smul.addr %s421, 2
      %s423 = scalar_lea.vmem %s7, %s422
      %p424 = pneg %p269
      %p425 = pneg %p266
      %p426 = scmp.lt.s32.totalorder %s24, 1
      %s427 = scalar_select %p426, %s24, 1
      %p428 = scmp.lt.s32.totalorder %s25, 15
      %s429 = scalar_select %p428, %s25, 15
      %s430 = smul.addr %s427, 16
      %s431 = sadd.s32 %s429, %s430
      %s432 = smul.addr %s431, 2
      %s433 = scalar_lea.vmem %s8, %s432
      %p434 = scmp.lt.s32.totalorder %s24, 1
      %s435 = scalar_select %p434, %s24, 1
      %p436 = scmp.lt.s32.totalorder %s25, 17
      %s437 = scalar_select %p436, %s25, 17
      %s438 = smul.addr %s437, 3
      %s439 = smul.addr %s435, 54
      %s440 = sadd.s32 %s438, %s439
      %s441 = smul.addr %s440, 8
      %s442 = scalar_lea.vmem %s0, %s441
      %s443 = sadd.s32 %s25, 1
      %p444 = scmp.lt.s32.totalorder %s24, 1
      %s445 = scalar_select %p444, %s24, 1
      %p446 = scmp.lt.s32.totalorder %s443, 17
      %s447 = scalar_select %p446, %s443, 17
      %s448 = smul.addr %s447, 3
      %s449 = smul.addr %s445, 54
      %s450 = sadd.s32 %s448, %s449
      %s451 = smul.addr %s450, 8
      %s452 = scalar_lea.vmem %s1, %s451
      %s453 = sadd.s32 %s25, 1
      %s454 = sadd.s32 %s25, 2
      %p455 = scmp.lt.s32.totalorder %s24, 1
      %s456 = scalar_select %p455, %s24, 1
      %p457 = scmp.lt.s32.totalorder %s454, 17
      %s458 = scalar_select %p457, %s454, 17
      %s459 = smul.addr %s458, 3
      %s460 = smul.addr %s456, 54
      %s461 = sadd.s32 %s459, %s460
      %s462 = smul.addr %s461, 8
      %s463 = scalar_lea.vmem %s2, %s462
      %s464 = sadd.s32 %s25, 2
      %p465 = scmp.lt.s32.totalorder %s24, 1
      %s466 = scalar_select %p465, %s24, 1
      %p467 = scmp.lt.s32.totalorder %s25, 15
      %s468 = scalar_select %p467, %s25, 15
      %s469 = smul.addr %s468, 2
      %s470 = smul.addr %s466, 32
      %s471 = sadd.s32 %s469, %s470
      %s472 = smul.addr %s471, 8
      %s473 = scalar_lea.vmem %s3, %s472
      %p474 = scmp.lt.s32.totalorder %s24, 1
      %s475 = scalar_select %p474, %s24, 1
      %p476 = scmp.lt.s32.totalorder %s25, 15
      %s477 = scalar_select %p476, %s25, 15
      %s478 = smul.addr %s477, 2
      %s479 = smul.addr %s475, 32
      %s480 = sadd.s32 %s478, %s479
      %s481 = smul.addr %s480, 8
      %s482 = scalar_lea.vmem %s6, %s481
      %p483 = scmp.lt.s32.totalorder %s24, 1
      %s484 = scalar_select %p483, %s24, 1
      %p485 = scmp.lt.s32.totalorder %s25, 15
      %s486 = scalar_select %p485, %s25, 15
      %s487 = smul.addr %s484, 16
      %s488 = sadd.s32 %s486, %s487
      %s489 = smul.addr %s488, 2
      %s490 = scalar_lea.vmem %s7, %s489
      %p491 = scmp.lt.s32.totalorder %s24, 1
      %s492 = scalar_select %p491, %s24, 1
      %p493 = scmp.lt.s32.totalorder %s25, 15
      %s494 = scalar_select %p493, %s25, 15
      %s495 = smul.addr %s492, 16
      %s496 = sadd.s32 %s494, %s495
      %s497 = smul.addr %s496, 2
      %s498 = scalar_lea.vmem %s8, %s497
      %v500 = vld [vmem:[%s442] sm:$0xff]
      %v501 = vld [vmem:[%s442 + $0x8] sm:$0xff]
      %v502 = vld [vmem:[%s442 + $0x1] sm:$0xff]
      %v503 = vld [vmem:[%s442 + $0x9] sm:$0xff]
      %v504 = vld [vmem:[%s442 + $0x2] sm:$0xff]
      %v505 = vld [vmem:[%s442 + $0xa] sm:$0xff]
      %v506 = vld [vmem:[%s452] sm:$0xff]
      %v507 = vld [vmem:[%s452 + $0x8] sm:$0xff]
      %v508 = vld [vmem:[%s452 + $0x1] sm:$0xff]
      %v509 = vld [vmem:[%s452 + $0x9] sm:$0xff]
      %v510 = vld [vmem:[%s452 + $0x2] sm:$0xff]
      %v511 = vld [vmem:[%s452 + $0xa] sm:$0xff]
      %v512 = vld [vmem:[%s463] sm:$0xff]
      %v513 = vld [vmem:[%s463 + $0x8] sm:$0xff]
      %v514 = vld [vmem:[%s463 + $0x1] sm:$0xff]
      %v515 = vld [vmem:[%s463 + $0x9] sm:$0xff]
      %v516 = vld [vmem:[%s463 + $0x2] sm:$0xff]
      %v517 = vld [vmem:[%s463 + $0xa] sm:$0xff]
      %520 = vrot.lane.b32.xlu0 %v502, 32
      %v521 = vpop.permute.xlu0 %520
      %522 = vrot.lane.b32.xlu0 %v503, 32
      %v523 = vpop.permute.xlu0 %522
      %528 = vrot.lane.b32.xlu0 %v504, 64
      %v529 = vpop.permute.xlu0 %528
      %530 = vrot.lane.b32.xlu0 %v505, 64
      %v531 = vpop.permute.xlu0 %530
      %536 = vrot.lane.b32.xlu0 %v506, 96
      %v537 = vpop.permute.xlu0 %536
      %538 = vrot.lane.b32.xlu0 %v507, 96
      %v539 = vpop.permute.xlu0 %538
      %544 = vrot.lane.b32.xlu0 %v510, 32
      %v545 = vpop.permute.xlu0 %544
      %546 = vrot.lane.b32.xlu0 %v511, 32
      %v547 = vpop.permute.xlu0 %546
      %552 = vrot.lane.b32.xlu0 %v512, 64
      %v553 = vpop.permute.xlu0 %552
      %554 = vrot.lane.b32.xlu0 %v513, 64
      %v555 = vpop.permute.xlu0 %554
      %560 = vrot.lane.b32.xlu0 %v514, 96
      %v561 = vpop.permute.xlu0 %560
      %562 = vrot.lane.b32.xlu0 %v515, 96
      %v563 = vpop.permute.xlu0 %562
      %vm566 = vcmask 261120
      %v567 = vsel %vm566, %v500, %v521
      %v568 = vsel %vm566, %v501, %v523
      %vm569 = vcmask 523264
      %v570 = vsel %vm569, %v567, %v529
      %v571 = vsel %vm569, %v568, %v531
      %vm572 = vcmask 785408
      %v573 = vsel %vm572, %v570, %v537
      %v574 = vsel %vm572, %v571, %v539
      %v575 = vsel %vm566, %v508, %v545
      %v576 = vsel %vm566, %v509, %v547
      %v577 = vsel %vm569, %v575, %v553
      %v578 = vsel %vm569, %v576, %v555
      %v579 = vsel %vm572, %v577, %v561
      %v580 = vsel %vm572, %v578, %v563
      %v581 = vpack.c.bf16 %v574, %v573
      %v582 = vpack.c.bf16 %v580, %v579
      %v583 = vpack.c.bf16 %v517, %v516
      %v584 = vld [vmem:[%s4] sm:$0xf]
      %v585 = vld [vmem:[%s4 + $0x4] sm:$0xf]
      %v586 = vld [vmem:[%s4 + $0x8] sm:$0xf]
      %v587 = vld [vmem:[%s4 + $0xc] sm:$0xf]
      %v588 = vld [vmem:[%s4 + $0x10] sm:$0xf]
      %v589 = vld [vmem:[%s4 + $0x14] sm:$0xf]
      %v590 = vld [vmem:[%s4 + $0x18] sm:$0xf]
      %v591 = vld [vmem:[%s4 + $0x1c] sm:$0xf]
      %v592 = vld [vmem:[%s4 + $0x20] sm:$0xf]
      %v593 = vld [vmem:[%s4 + $0x24] sm:$0xf]
      %v594 = vld [vmem:[%s4 + $0x28] sm:$0xf]
      %v595 = vld [vmem:[%s4 + $0x2c] sm:$0xf]
      %v596 = vld [vmem:[%s4 + $0x30] sm:$0xf]
      %v597 = vld [vmem:[%s4 + $0x34] sm:$0xf]
      %v598 = vld [vmem:[%s4 + $0x38] sm:$0xf]
      %v599 = vld [vmem:[%s4 + $0x3c] sm:$0xf]
      %v600 = vld [vmem:[%s4 + $0x40] sm:$0xf]
      %v601 = vld [vmem:[%s4 + $0x44] sm:$0xf]
      %v602 = vld [vmem:[%s4 + $0x48] sm:$0xf]
      %v603 = vld [vmem:[%s4 + $0x4c] sm:$0xf]
      %v604 = vld [vmem:[%s4 + $0x50] sm:$0xf]
      %v605 = vld [vmem:[%s4 + $0x54] sm:$0xf]
      %v606 = vld [vmem:[%s4 + $0x58] sm:$0xf]
      %v607 = vld [vmem:[%s4 + $0x5c] sm:$0xf]
      %v608 = vld [vmem:[%s4 + $0x60] sm:$0xf]
      %v609 = vld [vmem:[%s4 + $0x64] sm:$0xf]
      %v610 = vld [vmem:[%s4 + $0x68] sm:$0xf]
      %v611 = vld [vmem:[%s4 + $0x6c] sm:$0xf]
      %v612 = vld [vmem:[%s4 + $0x70] sm:$0xf]
      %v613 = vld [vmem:[%s4 + $0x74] sm:$0xf]
      %v614 = vld [vmem:[%s4 + $0x78] sm:$0xf]
      %v615 = vld [vmem:[%s4 + $0x7c] sm:$0xf]
      %v616 = vld [vmem:[%s4 + $0x80] sm:$0xf]
      %v617 = vld [vmem:[%s4 + $0x84] sm:$0xf]
      %v618 = vld [vmem:[%s4 + $0x88] sm:$0xf]
      %v619 = vld [vmem:[%s4 + $0x8c] sm:$0xf]
      %v620 = vld [vmem:[%s5] sm:$0x1]
      %v622 = vlaneseq
      %v623 = vshrl.u32 %v622, 7
      %v624 = vsub.s32 0, %v623
      %v625 = vrot.slane %v620, %v624
      %v663 = vunpack.c.l.b16 %v584
      %v664 = vunpack.c.l.b16 %v585
      %v665 = vunpack.c.l.b16 %v586
      %v666 = vunpack.c.l.b16 %v587
      %v667 = vunpack.c.l.b16 %v588
      %v668 = vunpack.c.l.b16 %v589
      %v669 = vunpack.c.l.b16 %v590
      %v670 = vunpack.c.l.b16 %v591
      %v671 = vunpack.c.l.b16 %v592
      %v672 = vunpack.c.l.b16 %v593
      %v673 = vunpack.c.l.b16 %v594
      %v674 = vunpack.c.l.b16 %v595
      %v675 = vunpack.c.l.b16 %v596
      %v676 = vunpack.c.l.b16 %v597
      %v677 = vunpack.c.l.b16 %v598
      %v678 = vunpack.c.l.b16 %v599
      %v679 = vunpack.c.l.b16 %v600
      %v680 = vunpack.c.l.b16 %v601
      %v681 = vunpack.c.l.b16 %v602
      %v682 = vunpack.c.l.b16 %v603
      %v683 = vunpack.c.l.b16 %v604
      %v684 = vunpack.c.l.b16 %v605
      %v685 = vunpack.c.l.b16 %v606
      %v686 = vunpack.c.l.b16 %v607
      %v687 = vunpack.c.l.b16 %v608
      %v688 = vunpack.c.l.b16 %v609
      %v689 = vunpack.c.l.b16 %v610
      %v690 = vunpack.c.l.b16 %v611
      %v691 = vunpack.c.l.b16 %v612
      %v692 = vunpack.c.l.b16 %v613
      %v693 = vunpack.c.l.b16 %v614
      %v694 = vunpack.c.l.b16 %v615
      %v695 = vunpack.c.l.b16 %v616
      %v696 = vunpack.c.l.b16 %v617
      %v697 = vunpack.c.l.b16 %v618
      %v698 = vunpack.c.l.b16 %v619
      %v699 = vpack.c.b16 %v664, %v663
      %v700 = vpack.c.b16 %v666, %v665
      %v701 = vpack.c.b16 %v668, %v667
      %v702 = vpack.c.b16 %v670, %v669
      %v703 = vpack.c.b16 %v672, %v671
      %v704 = vpack.c.b16 %v674, %v673
      %v705 = vpack.c.b16 %v676, %v675
      %v706 = vpack.c.b16 %v678, %v677
      %v707 = vpack.c.b16 %v680, %v679
      %v708 = vpack.c.b16 %v682, %v681
      %v709 = vpack.c.b16 %v684, %v683
      %v710 = vpack.c.b16 %v686, %v685
      %v711 = vpack.c.b16 %v688, %v687
      %v712 = vpack.c.b16 %v690, %v689
      %v713 = vpack.c.b16 %v692, %v691
      %v714 = vpack.c.b16 %v694, %v693
      %v715 = vpack.c.b16 %v696, %v695
      %v716 = vpack.c.b16 %v698, %v697
      %v736 = vsel %vm566, %v583, 0
      %738 = vmatprep.subr.bf16.mxu0 0
      %739 = vmatpush1.bf16.msra.mxu0 %v706
      %740 = vmatprep.subr.bf16.mxu0 0
      %741 = vmatpush1.bf16.msra.mxu0 %v705
      %742 = vmatprep.subr.bf16.mxu0 0
      %743 = vmatpush1.bf16.msra.mxu0 %v704
      %744 = vmatprep.subr.bf16.mxu0 0
      %745 = vmatpush1.bf16.msra.mxu0 %v703
      %746 = vmatprep.subr.bf16.mxu0 0
      %747 = vmatpush1.bf16.msra.mxu0 %v702
      %748 = vmatprep.subr.bf16.mxu0 0
      %749 = vmatpush1.bf16.msra.mxu0 %v701
      %750 = vmatprep.subr.bf16.mxu0 0
      %751 = vmatpush1.bf16.msra.mxu0 %v700
      %752 = vmatprep.subr.bf16.mxu0 0
      %753 = vmatpush1.bf16.msra.mxu0 %v699
      %754 = vmatprep.subr.bf16.mxu0 0
      %755 = vmatpush2.bf16.msra.mxu0 %v714
      %756 = vmatprep.subr.bf16.mxu0 0
      %757 = vmatpush2.bf16.msra.mxu0 %v713
      %758 = vmatprep.subr.bf16.mxu0 0
      %759 = vmatpush2.bf16.msra.mxu0 %v712
      %760 = vmatprep.subr.bf16.mxu0 0
      %761 = vmatpush2.bf16.msra.mxu0 %v711
      %762 = vmatprep.subr.bf16.mxu0 0
      %763 = vmatpush2.bf16.msra.mxu0 %v710
      %764 = vmatprep.subr.bf16.mxu0 0
      %765 = vmatpush2.bf16.msra.mxu0 %v709
      %766 = vmatprep.subr.bf16.mxu0 0
      %767 = vmatpush2.bf16.msra.mxu0 %v708
      %768 = vmatprep.subr.bf16.mxu0 0
      %769 = vmatpush2.bf16.msra.mxu0 %v707
      %770 = vmatprep.mubr.bf16.mxu0 %v582
      %771 = vmatmul.mubr.bf16.gmra.mxu0 %v581
      %v772 = vpop.f32.mrf.mxu0
      %v773 = vadd.f32 %v625, %v772
      %v774 = vpop.f32.mrf.mxu0
      %v775 = vpop.f32.mrf.mxu0
      %v776 = vadd.f32 %v625, %v775
      %v777 = vpop.f32.mrf.mxu0
      %778 = vdwg.mxu0
      %779 = vmatprep.subr.bf16.mxu0 0
      %780 = vmatpush1.bf16.msra.mxu0 0
      %781 = vmatprep.subr.bf16.mxu0 0
      %782 = vmatpush1.bf16.msra.mxu0 0
      %783 = vmatprep.subr.bf16.mxu0 0
      %784 = vmatpush1.bf16.msra.mxu0 0
      %785 = vmatprep.subr.bf16.mxu0 0
      %786 = vmatpush1.bf16.msra.mxu0 0
      %787 = vmatprep.subr.bf16.mxu0 0
      %788 = vmatpush1.bf16.msra.mxu0 0
      %789 = vmatprep.subr.bf16.mxu0 0
      %790 = vmatpush1.bf16.msra.mxu0 0
      %791 = vmatprep.subr.bf16.mxu0 0
      %792 = vmatpush1.bf16.msra.mxu0 %v716
      %793 = vmatprep.subr.bf16.mxu0 0
      %794 = vmatpush1.bf16.msra.mxu0 %v715
      %795 = vmatprep.subr.bf16.mxu0 0
      %796 = vmatpush2.bf16.msra.mxu0 0
      %797 = vmatprep.subr.bf16.mxu0 0
      %798 = vmatpush2.bf16.msra.mxu0 0
      %799 = vmatprep.subr.bf16.mxu0 0
      %800 = vmatpush2.bf16.msra.mxu0 0
      %801 = vmatprep.subr.bf16.mxu0 0
      %802 = vmatpush2.bf16.msra.mxu0 0
      %803 = vmatprep.subr.bf16.mxu0 0
      %804 = vmatpush2.bf16.msra.mxu0 0
      %805 = vmatprep.subr.bf16.mxu0 0
      %806 = vmatpush2.bf16.msra.mxu0 0
      %807 = vmatprep.subr.bf16.mxu0 0
      %808 = vmatpush2.bf16.msra.mxu0 0
      %809 = vmatprep.subr.bf16.mxu0 0
      %810 = vmatpush2.bf16.msra.mxu0 0
      %811 = vmatprep.mubr.bf16.mxu0 0
      %812 = vmatmul.mubr.bf16.gmra.mxu0 %v736
      %v813 = vpop.f32.mrf.mxu0
      %v814 = vadd.f32 %v773, %v813
      %v815 = vpop.f32.mrf.mxu0
      %v816 = vpop.f32.mrf.mxu0
      %v817 = vadd.f32 %v776, %v816
      %v818 = vpop.f32.mrf.mxu0
      %819 = vdwg.mxu0
      %820 = vst.msk [vmem:[%s482] sm:$0xff] %vm566, %v814
      %821 = vst.msk [vmem:[%s482 + $0x8] sm:$0xff] %vm566, %v817
      %v822 = vsel %vm566, %v814, 0.0
      %v823 = vsel %vm566, %v817, 0.0
      %v824 = vadd.f32 %v822, %v823
      %v825 = vrot.slane %v824, 4
      %v826 = vadd.f32 %v824, %v825
      %v827 = vrot.slane %v826, 2
      %v828 = vadd.f32 %v826, %v827
      %v829 = vrot.slane %v828, 1
      %v830 = vadd.f32 %v828, %v829
      %vm831 = vcmask 253952
      %832 = vst.msk [vmem:[%s490] sm:$0x1] %vm831, %v830
      %v833 = vmul.f32 %v814, %v814
      %v834 = vmul.f32 %v817, %v817
      %v835 = vsel %vm566, %v833, 0.0
      %v836 = vsel %vm566, %v834, 0.0
      %v837 = vadd.f32 %v835, %v836
      %v838 = vrot.slane %v837, 4
      %v839 = vadd.f32 %v837, %v838
      %v840 = vrot.slane %v839, 2
      %v841 = vadd.f32 %v839, %v840
      %v842 = vrot.slane %v841, 1
      %v843 = vadd.f32 %v841, %v842
      %844 = vst.msk [vmem:[%s490 + $0x1] sm:$0x1] %vm831, %v843
      %v845 = vld [vmem:[%s473] sm:$0xff]
      %v846 = vld [vmem:[%s473 + $0x8] sm:$0xff]
      %v847 = vsel %vm566, %v845, 0.0
      %v848 = vsel %vm566, %v846, 0.0
      %v849 = vadd.f32 %v847, %v848
      %v850 = vrot.slane %v849, 4
      %v851 = vadd.f32 %v849, %v850
      %v852 = vrot.slane %v851, 2
      %v853 = vadd.f32 %v851, %v852
      %v854 = vrot.slane %v853, 1
      %v855 = vadd.f32 %v853, %v854
      %856 = vst.msk [vmem:[%s498] sm:$0x1] %vm831, %v855
      %v857 = vmul.f32 %v845, %v845
      %v858 = vmul.f32 %v846, %v846
      %v859 = vsel %vm566, %v857, 0.0
      %v860 = vsel %vm566, %v858, 0.0
      %v861 = vadd.f32 %v859, %v860
      %v862 = vrot.slane %v861, 4
      %v863 = vadd.f32 %v861, %v862
      %v864 = vrot.slane %v863, 2
      %v865 = vadd.f32 %v863, %v864
      %v866 = vrot.slane %v865, 1
      %v867 = vadd.f32 %v865, %v866
      %868 = vst.msk [vmem:[%s498 + $0x1] sm:$0x1] %vm831, %v867
      %p869 = scmp.lt.s32.totalorder %s24, 1
      %s870 = scalar_select %p869, %s24, 1
      %p871 = scmp.lt.s32.totalorder %s25, 15
      %s872 = scalar_select %p871, %s25, 15
      %s873 = smul.addr %s872, 2
      %s874 = smul.addr %s870, 32
      %s875 = sadd.s32 %s873, %s874
      %s876 = smul.addr %s875, 8
      %s877 = scalar_lea.vmem %s6, %s876
      %p878 = scmp.lt.s32.totalorder %s24, 1
      %s879 = scalar_select %p878, %s24, 1
      %p880 = scmp.lt.s32.totalorder %s25, 15
      %s881 = scalar_select %p880, %s25, 15
      %s882 = smul.addr %s879, 16
      %s883 = sadd.s32 %s881, %s882
      %s884 = smul.addr %s883, 2
      %s885 = scalar_lea.vmem %s7, %s884
      %p886 = scmp.lt.s32.totalorder %s24, 1
      %s887 = scalar_select %p886, %s24, 1
      %p888 = scmp.lt.s32.totalorder %s25, 15
      %s889 = scalar_select %p888, %s25, 15
      %s890 = smul.addr %s887, 16
      %s891 = sadd.s32 %s889, %s890
      %s892 = smul.addr %s891, 2
      %s893 = scalar_lea.vmem %s8, %s892
      // Predicated region
      $region45: #{recurrent_residual_block_tl.9} parent=43 // pred_check
        %p894 = pneg %p210
      $region46: #{recurrent_residual_block_tl.9} parent=43 // pred_check_branch
        %896 = sbr.rel (%p894) target = $region48
      $region47: #{recurrent_residual_block_tl.9} parent=43 // pred_region
        _
      $region48: #{recurrent_residual_block_tl.9} parent=43 // pred_fallthru
        _
      // Predicated region
      $region49: #{recurrent_residual_block_tl.9} parent=43 // pred_check
        %p897 = pneg %p238
      $region50: #{recurrent_residual_block_tl.9} parent=43 // pred_check_branch
        %899 = sbr.rel (%p897) target = $region52
      $region51: #{recurrent_residual_block_tl.9} parent=43 // pred_region
        _
      $region52: #{recurrent_residual_block_tl.9} parent=43 // pred_fallthru
        _
      // Predicated region
      $region53: #{recurrent_residual_block_tl.9} parent=43 // pred_check
        %p900 = pneg %p266
      $region54: #{recurrent_residual_block_tl.9} parent=43 // pred_check_branch
        %902 = sbr.rel (%p900) target = $region56
      $region55: #{recurrent_residual_block_tl.9} parent=43 // pred_region
        _
      $region56: #{recurrent_residual_block_tl.9} parent=43 // pred_fallthru
        _
    $region44: #{recurrent_residual_block_tl.9} parent=5 // pred_fallthru
      _
    %p903 = scmp.le.s32.totalorder 2, %s15
    // Predicated region
    $region57: #{recurrent_residual_block_tl.9} parent=5 // pred_check
      %p904 = pneg %p903
    $region58: #{recurrent_residual_block_tl.9} parent=5 // pred_check_branch
      %906 = sbr.rel (%p904) target = $region60
    $region59: #{recurrent_residual_block_tl.9} parent=5 // pred_region
      %s907 = ssub.s32 %s15, 2
      // Predicated region
      $region61: #{recurrent_residual_block_tl.9} parent=59 // pred_check
        %p908 = pneg %p216
      $region62: #{recurrent_residual_block_tl.9} parent=59 // pred_check_branch
        %910 = sbr.rel (%p908) target = $region64
      $region63: #{recurrent_residual_block_tl.9} parent=59 // pred_region
        %p911 = scmp.lt.s32.totalorder %s26, 1
        %s912 = scalar_select %p911, %s26, 1
        %p913 = scmp.lt.s32.totalorder %s27, 15
        %s914 = scalar_select %p913, %s27, 15
        %s915 = smul.addr %s914, 2
        %s916 = smul.addr %s912, 32
        %s917 = sadd.s32 %s915, %s916
        %s918 = smul.addr %s917, 8
        %s919 = scalar_lea.vmem %s6, %s918
      $region64: #{recurrent_residual_block_tl.9} parent=59 // pred_fallthru
        _
      // Predicated region
      $region65: #{recurrent_residual_block_tl.9} parent=59 // pred_check
        %p920 = pneg %p244
      $region66: #{recurrent_residual_block_tl.9} parent=59 // pred_check_branch
        %922 = sbr.rel (%p920) target = $region68
      $region67: #{recurrent_residual_block_tl.9} parent=59 // pred_region
        %p923 = scmp.lt.s32.totalorder %s26, 1
        %s924 = scalar_select %p923, %s26, 1
        %p925 = scmp.lt.s32.totalorder %s27, 15
        %s926 = scalar_select %p925, %s27, 15
        %s927 = smul.addr %s924, 16
        %s928 = sadd.s32 %s926, %s927
        %s929 = smul.addr %s928, 2
        %s930 = scalar_lea.vmem %s7, %s929
      $region68: #{recurrent_residual_block_tl.9} parent=59 // pred_fallthru
        _
      // Predicated region
      $region69: #{recurrent_residual_block_tl.9} parent=59 // pred_check
        %p931 = pneg %p272
      $region70: #{recurrent_residual_block_tl.9} parent=59 // pred_check_branch
        %933 = sbr.rel (%p931) target = $region72
      $region71: #{recurrent_residual_block_tl.9} parent=59 // pred_region
        %p934 = scmp.lt.s32.totalorder %s26, 1
        %s935 = scalar_select %p934, %s26, 1
        %p936 = scmp.lt.s32.totalorder %s27, 15
        %s937 = scalar_select %p936, %s27, 15
        %s938 = smul.addr %s935, 16
        %s939 = sadd.s32 %s937, %s938
        %s940 = smul.addr %s939, 2
        %s941 = scalar_lea.vmem %s8, %s940
      $region72: #{recurrent_residual_block_tl.9} parent=59 // pred_fallthru
        _
    $region60: #{recurrent_residual_block_tl.9} parent=5 // pred_fallthru
      _
  $region6: #{recurrent_residual_block_tl.9} parent=0 // loop_footer
    %s19 = sadd.s32 1, %s15
  $region7: #{recurrent_residual_block_tl.9} parent=0 // loop_footer_branch
    %14 = sbr.rel target = $region3
  $region8: #{recurrent_residual_block_tl.9} parent=0 // loop_exit
    _

// kernel: recurrent_residual_block_tl.10
$region0: #{recurrent_residual_block_tl.10}
  #allocation0 [shape = 'u32[]', space=smem, size = 0x4, offset = 0x4, fixed_abs, tag = 'smem constant byte address 0x4 - core index']
  #allocation1 [shape = 'u32[144,128]{1,0:T(1,128)}', space=vmem, size = 0x12000, scoped, tag = 'internal scratch']
  %s0 = inlined_call_operand.vmem [shape: f32[512,32], index: 0, kind: input, shape index: {}]
  %s1 = inlined_call_operand.vmem [shape: f32[1,32], index: 1, kind: input, shape index: {}]
  %s2 = inlined_call_operand.vmem [shape: f32[1,32], index: 2, kind: input, shape index: {}]
  %s3 = inlined_call_operand.vmem [shape: f32[512,32], index: 3, kind: output, shape index: {}]
  %s4 = sld [smem:[#allocation0]]
  $region22: #{recurrent_residual_block_tl.10} parent=0
    _
  %s6 = ssub.s32 1, %s4
  %s7 = scalar_select 0, %s6, %s4
  // Predicated region
  $region2: #{recurrent_residual_block_tl.10} parent=0 // pred_check
    _
  $region3: #{recurrent_residual_block_tl.10} parent=0 // pred_check_branch
    %9 = sbr.rel (0) target = $region5
  $region4: #{recurrent_residual_block_tl.10} parent=0 // pred_region
    _
  $region5: #{recurrent_residual_block_tl.10} parent=0 // pred_fallthru
    _
  // Predicated region
  $region6: #{recurrent_residual_block_tl.10} parent=0 // pred_check
    _
  $region7: #{recurrent_residual_block_tl.10} parent=0 // pred_check_branch
    %11 = sbr.rel (0) target = $region9
  $region8: #{recurrent_residual_block_tl.10} parent=0 // pred_region
    _
  $region9: #{recurrent_residual_block_tl.10} parent=0 // pred_fallthru
    _
  // Predicated region
  $region10: #{recurrent_residual_block_tl.10} parent=0 // pred_check
    _
  $region11: #{recurrent_residual_block_tl.10} parent=0 // pred_check_branch
    %13 = sbr.rel (0) target = $region13
  $region12: #{recurrent_residual_block_tl.10} parent=0 // pred_region
    _
  $region13: #{recurrent_residual_block_tl.10} parent=0 // pred_fallthru
    _
  %v14 = vld [vmem:[%s0] sm:$0xff]
  %v15 = vld [vmem:[%s0 + $0x8] sm:$0xff]
  %v16 = vld [vmem:[%s0 + $0x10] sm:$0xff]
  %v17 = vld [vmem:[%s0 + $0x18] sm:$0xff]
  %v18 = vld [vmem:[%s0 + $0x20] sm:$0xff]
  %v19 = vld [vmem:[%s0 + $0x28] sm:$0xff]
  %v20 = vld [vmem:[%s0 + $0x30] sm:$0xff]
  %v21 = vld [vmem:[%s0 + $0x38] sm:$0xff]
  %v22 = vld [vmem:[%s0 + $0x40] sm:$0xff]
  %v23 = vld [vmem:[%s0 + $0x48] sm:$0xff]
  %v24 = vld [vmem:[%s0 + $0x50] sm:$0xff]
  %v25 = vld [vmem:[%s0 + $0x58] sm:$0xff]
  %v26 = vld [vmem:[%s0 + $0x60] sm:$0xff]
  %v27 = vld [vmem:[%s0 + $0x68] sm:$0xff]
  %v28 = vld [vmem:[%s0 + $0x70] sm:$0xff]
  %v29 = vld [vmem:[%s0 + $0x78] sm:$0xff]
  %v30 = vld [vmem:[%s0 + $0x80] sm:$0xff]
  %v31 = vld [vmem:[%s0 + $0x88] sm:$0xff]
  %v32 = vld [vmem:[%s0 + $0x90] sm:$0xff]
  %v33 = vld [vmem:[%s0 + $0x98] sm:$0xff]
  %v34 = vld [vmem:[%s0 + $0xa0] sm:$0xff]
  %v35 = vld [vmem:[%s0 + $0xa8] sm:$0xff]
  %v36 = vld [vmem:[%s0 + $0xb0] sm:$0xff]
  %v37 = vld [vmem:[%s0 + $0xb8] sm:$0xff]
  %v38 = vld [vmem:[%s0 + $0xc0] sm:$0xff]
  %v39 = vld [vmem:[%s0 + $0xc8] sm:$0xff]
  %v40 = vld [vmem:[%s0 + $0xd0] sm:$0xff]
  %v41 = vld [vmem:[%s0 + $0xd8] sm:$0xff]
  %v42 = vld [vmem:[%s0 + $0xe0] sm:$0xff]
  %v43 = vld [vmem:[%s0 + $0xe8] sm:$0xff]
  %v44 = vld [vmem:[%s0 + $0xf0] sm:$0xff]
  %v45 = vld [vmem:[%s0 + $0xf8] sm:$0xff]
  %v46 = vld [vmem:[%s0 + $0x100] sm:$0xff]
  %v47 = vld [vmem:[%s0 + $0x108] sm:$0xff]
  %v48 = vld [vmem:[%s0 + $0x110] sm:$0xff]
  %v49 = vld [vmem:[%s0 + $0x118] sm:$0xff]
  %v50 = vld [vmem:[%s0 + $0x120] sm:$0xff]
  %v51 = vld [vmem:[%s0 + $0x128] sm:$0xff]
  %v52 = vld [vmem:[%s0 + $0x130] sm:$0xff]
  %v53 = vld [vmem:[%s0 + $0x138] sm:$0xff]
  %v54 = vld [vmem:[%s0 + $0x140] sm:$0xff]
  %v55 = vld [vmem:[%s0 + $0x148] sm:$0xff]
  %v56 = vld [vmem:[%s0 + $0x150] sm:$0xff]
  %v57 = vld [vmem:[%s0 + $0x158] sm:$0xff]
  %v58 = vld [vmem:[%s0 + $0x160] sm:$0xff]
  %v59 = vld [vmem:[%s0 + $0x168] sm:$0xff]
  %v60 = vld [vmem:[%s0 + $0x170] sm:$0xff]
  %v61 = vld [vmem:[%s0 + $0x178] sm:$0xff]
  %v62 = vld [vmem:[%s0 + $0x180] sm:$0xff]
  %v63 = vld [vmem:[%s0 + $0x188] sm:$0xff]
  %v64 = vld [vmem:[%s0 + $0x190] sm:$0xff]
  %v65 = vld [vmem:[%s0 + $0x198] sm:$0xff]
  %v66 = vld [vmem:[%s0 + $0x1a0] sm:$0xff]
  %v67 = vld [vmem:[%s0 + $0x1a8] sm:$0xff]
  %v68 = vld [vmem:[%s0 + $0x1b0] sm:$0xff]
  %v69 = vld [vmem:[%s0 + $0x1b8] sm:$0xff]
  %v70 = vld [vmem:[%s0 + $0x1c0] sm:$0xff]
  %v71 = vld [vmem:[%s0 + $0x1c8] sm:$0xff]
  %v72 = vld [vmem:[%s0 + $0x1d0] sm:$0xff]
  %v73 = vld [vmem:[%s0 + $0x1d8] sm:$0xff]
  %v74 = vld [vmem:[%s0 + $0x1e0] sm:$0xff]
  %v75 = vld [vmem:[%s0 + $0x1e8] sm:$0xff]
  %v76 = vld [vmem:[%s0 + $0x1f0] sm:$0xff]
  %v77 = vld [vmem:[%s0 + $0x1f8] sm:$0xff]
  %v78 = vld [vmem:[%s1] sm:$0x1]
  %v80 = vlaneseq
  %v81 = vshrl.u32 %v80, 7
  %v82 = vsub.s32 0, %v81
  %v83 = vrot.slane %v78, %v82
  %v85 = vmul.f32 %v14, %v83
  %v86 = vmul.f32 %v15, %v83
  %v87 = vmul.f32 %v16, %v83
  %v88 = vmul.f32 %v17, %v83
  %v89 = vmul.f32 %v18, %v83
  %v90 = vmul.f32 %v19, %v83
  %v91 = vmul.f32 %v20, %v83
  %v92 = vmul.f32 %v21, %v83
  %v93 = vmul.f32 %v22, %v83
  %v94 = vmul.f32 %v23, %v83
  %v95 = vmul.f32 %v24, %v83
  %v96 = vmul.f32 %v25, %v83
  %v97 = vmul.f32 %v26, %v83
  %v98 = vmul.f32 %v27, %v83
  %v99 = vmul.f32 %v28, %v83
  %v100 = vmul.f32 %v29, %v83
  %v101 = vmul.f32 %v30, %v83
  %v102 = vmul.f32 %v31, %v83
  %v103 = vmul.f32 %v32, %v83
  %v104 = vmul.f32 %v33, %v83
  %v105 = vmul.f32 %v34, %v83
  %v106 = vmul.f32 %v35, %v83
  %v107 = vmul.f32 %v36, %v83
  %v108 = vmul.f32 %v37, %v83
  %v109 = vmul.f32 %v38, %v83
  %v110 = vmul.f32 %v39, %v83
  %v111 = vmul.f32 %v40, %v83
  %v112 = vmul.f32 %v41, %v83
  %v113 = vmul.f32 %v42, %v83
  %v114 = vmul.f32 %v43, %v83
  %v115 = vmul.f32 %v44, %v83
  %v116 = vmul.f32 %v45, %v83
  %v117 = vmul.f32 %v46, %v83
  %v118 = vmul.f32 %v47, %v83
  %v119 = vmul.f32 %v48, %v83
  %v120 = vmul.f32 %v49, %v83
  %v121 = vmul.f32 %v50, %v83
  %v122 = vmul.f32 %v51, %v83
  %v123 = vmul.f32 %v52, %v83
  %v124 = vmul.f32 %v53, %v83
  %v125 = vmul.f32 %v54, %v83
  %v126 = vmul.f32 %v55, %v83
  %v127 = vmul.f32 %v56, %v83
  %v128 = vmul.f32 %v57, %v83
  %v129 = vmul.f32 %v58, %v83
  %v130 = vmul.f32 %v59, %v83
  %v131 = vmul.f32 %v60, %v83
  %v132 = vmul.f32 %v61, %v83
  %v133 = vmul.f32 %v62, %v83
  %v134 = vmul.f32 %v63, %v83
  %v135 = vmul.f32 %v64, %v83
  %v136 = vmul.f32 %v65, %v83
  %v137 = vmul.f32 %v66, %v83
  %v138 = vmul.f32 %v67, %v83
  %v139 = vmul.f32 %v68, %v83
  %v140 = vmul.f32 %v69, %v83
  %v141 = vmul.f32 %v70, %v83
  %v142 = vmul.f32 %v71, %v83
  %v143 = vmul.f32 %v72, %v83
  %v144 = vmul.f32 %v73, %v83
  %v145 = vmul.f32 %v74, %v83
  %v146 = vmul.f32 %v75, %v83
  %v147 = vmul.f32 %v76, %v83
  %v148 = vmul.f32 %v77, %v83
  %v149 = vld [vmem:[%s2] sm:$0x1]
  %v151 = vlaneseq
  %v152 = vshrl.u32 %v151, 7
  %v153 = vsub.s32 0, %v152
  %v154 = vrot.slane %v149, %v153
  %v156 = vadd.f32 %v85, %v154
  %v157 = vadd.f32 %v86, %v154
  %v158 = vadd.f32 %v87, %v154
  %v159 = vadd.f32 %v88, %v154
  %v160 = vadd.f32 %v89, %v154
  %v161 = vadd.f32 %v90, %v154
  %v162 = vadd.f32 %v91, %v154
  %v163 = vadd.f32 %v92, %v154
  %v164 = vadd.f32 %v93, %v154
  %v165 = vadd.f32 %v94, %v154
  %v166 = vadd.f32 %v95, %v154
  %v167 = vadd.f32 %v96, %v154
  %v168 = vadd.f32 %v97, %v154
  %v169 = vadd.f32 %v98, %v154
  %v170 = vadd.f32 %v99, %v154
  %v171 = vadd.f32 %v100, %v154
  %v172 = vadd.f32 %v101, %v154
  %v173 = vadd.f32 %v102, %v154
  %v174 = vadd.f32 %v103, %v154
  %v175 = vadd.f32 %v104, %v154
  %v176 = vadd.f32 %v105, %v154
  %v177 = vadd.f32 %v106, %v154
  %v178 = vadd.f32 %v107, %v154
  %v179 = vadd.f32 %v108, %v154
  %v180 = vadd.f32 %v109, %v154
  %v181 = vadd.f32 %v110, %v154
  %v182 = vadd.f32 %v111, %v154
  %v183 = vadd.f32 %v112, %v154
  %v184 = vadd.f32 %v113, %v154
  %v185 = vadd.f32 %v114, %v154
  %v186 = vadd.f32 %v115, %v154
  %v187 = vadd.f32 %v116, %v154
  %v188 = vadd.f32 %v117, %v154
  %v189 = vadd.f32 %v118, %v154
  %v190 = vadd.f32 %v119, %v154
  %v191 = vadd.f32 %v120, %v154
  %v192 = vadd.f32 %v121, %v154
  %v193 = vadd.f32 %v122, %v154
  %v194 = vadd.f32 %v123, %v154
  %v195 = vadd.f32 %v124, %v154
  %v196 = vadd.f32 %v125, %v154
  %v197 = vadd.f32 %v126, %v154
  %v198 = vadd.f32 %v127, %v154
  %v199 = vadd.f32 %v128, %v154
  %v200 = vadd.f32 %v129, %v154
  %v201 = vadd.f32 %v130, %v154
  %v202 = vadd.f32 %v131, %v154
  %v203 = vadd.f32 %v132, %v154
  %v204 = vadd.f32 %v133, %v154
  %v205 = vadd.f32 %v134, %v154
  %v206 = vadd.f32 %v135, %v154
  %v207 = vadd.f32 %v136, %v154
  %v208 = vadd.f32 %v137, %v154
  %v209 = vadd.f32 %v138, %v154
  %v210 = vadd.f32 %v139, %v154
  %v211 = vadd.f32 %v140, %v154
  %v212 = vadd.f32 %v141, %v154
  %v213 = vadd.f32 %v142, %v154
  %v214 = vadd.f32 %v143, %v154
  %v215 = vadd.f32 %v144, %v154
  %v216 = vadd.f32 %v145, %v154
  %v217 = vadd.f32 %v146, %v154
  %v218 = vadd.f32 %v147, %v154
  %v219 = vadd.f32 %v148, %v154
  %v220 = vmin.f32 %v156, 20.0
  %v221 = vmin.f32 %v157, 20.0
  %v222 = vmin.f32 %v158, 20.0
  %v223 = vmin.f32 %v159, 20.0
  %v224 = vmin.f32 %v160, 20.0
  %v225 = vmin.f32 %v161, 20.0
  %v226 = vmin.f32 %v162, 20.0
  %v227 = vmin.f32 %v163, 20.0
  %v228 = vmin.f32 %v164, 20.0
  %v229 = vmin.f32 %v165, 20.0
  %v230 = vmin.f32 %v166, 20.0
  %v231 = vmin.f32 %v167, 20.0
  %v232 = vmin.f32 %v168, 20.0
  %v233 = vmin.f32 %v169, 20.0
  %v234 = vmin.f32 %v170, 20.0
  %v235 = vmin.f32 %v171, 20.0
  %v236 = vmin.f32 %v172, 20.0
  %v237 = vmin.f32 %v173, 20.0
  %v238 = vmin.f32 %v174, 20.0
  %v239 = vmin.f32 %v175, 20.0
  %v240 = vmin.f32 %v176, 20.0
  %v241 = vmin.f32 %v177, 20.0
  %v242 = vmin.f32 %v178, 20.0
  %v243 = vmin.f32 %v179, 20.0
  %v244 = vmin.f32 %v180, 20.0
  %v245 = vmin.f32 %v181, 20.0
  %v246 = vmin.f32 %v182, 20.0
  %v247 = vmin.f32 %v183, 20.0
  %v248 = vmin.f32 %v184, 20.0
  %v249 = vmin.f32 %v185, 20.0
  %v250 = vmin.f32 %v186, 20.0
  %v251 = vmin.f32 %v187, 20.0
  %v252 = vmin.f32 %v188, 20.0
  %v253 = vmin.f32 %v189, 20.0
  %v254 = vmin.f32 %v190, 20.0
  %v255 = vmin.f32 %v191, 20.0
  %v256 = vmin.f32 %v192, 20.0
  %v257 = vmin.f32 %v193, 20.0
  %v258 = vmin.f32 %v194, 20.0
  %v259 = vmin.f32 %v195, 20.0
  %v260 = vmin.f32 %v196, 20.0
  %v261 = vmin.f32 %v197, 20.0
  %v262 = vmin.f32 %v198, 20.0
  %v263 = vmin.f32 %v199, 20.0
  %v264 = vmin.f32 %v200, 20.0
  %v265 = vmin.f32 %v201, 20.0
  %v266 = vmin.f32 %v202, 20.0
  %v267 = vmin.f32 %v203, 20.0
  %v268 = vmin.f32 %v204, 20.0
  %v269 = vmin.f32 %v205, 20.0
  %v270 = vmin.f32 %v206, 20.0
  %v271 = vmin.f32 %v207, 20.0
  %v272 = vmin.f32 %v208, 20.0
  %v273 = vmin.f32 %v209, 20.0
  %v274 = vmin.f32 %v210, 20.0
  %v275 = vmin.f32 %v211, 20.0
  %v276 = vmin.f32 %v212, 20.0
  %v277 = vmin.f32 %v213, 20.0
  %v278 = vmin.f32 %v214, 20.0
  %v279 = vmin.f32 %v215, 20.0
  %v280 = vmin.f32 %v216, 20.0
  %v281 = vmin.f32 %v217, 20.0
  %v282 = vmin.f32 %v218, 20.0
  %v283 = vmin.f32 %v219, 20.0
  %v284 = vmul.f32 %v220, 1.442695
  %v285 = vpow.pop %v284
  %v286 = vmul.f32 %v221, 1.442695
  %v287 = vpow.pop %v286
  %v288 = vmul.f32 %v222, 1.442695
  %v289 = vpow.pop %v288
  %v290 = vmul.f32 %v223, 1.442695
  %v291 = vpow.pop %v290
  %v292 = vmul.f32 %v224, 1.442695
  %v293 = vpow.pop %v292
  %v294 = vmul.f32 %v225, 1.442695
  %v295 = vpow.pop %v294
  %v296 = vmul.f32 %v226, 1.442695
  %v297 = vpow.pop %v296
  %v298 = vmul.f32 %v227, 1.442695
  %v299 = vpow.pop %v298
  %v300 = vmul.f32 %v228, 1.442695
  %v301 = vpow.pop %v300
  %v302 = vmul.f32 %v229, 1.442695
  %v303 = vpow.pop %v302
  %v304 = vmul.f32 %v230, 1.442695
  %v305 = vpow.pop %v304
  %v306 = vmul.f32 %v231, 1.442695
  %v307 = vpow.pop %v306
  %v308 = vmul.f32 %v232, 1.442695
  %v309 = vpow.pop %v308
  %v310 = vmul.f32 %v233, 1.442695
  %v311 = vpow.pop %v310
  %v312 = vmul.f32 %v234, 1.442695
  %v313 = vpow.pop %v312
  %v314 = vmul.f32 %v235, 1.442695
  %v315 = vpow.pop %v314
  %v316 = vmul.f32 %v236, 1.442695
  %v317 = vpow.pop %v316
  %v318 = vmul.f32 %v237, 1.442695
  %v319 = vpow.pop %v318
  %v320 = vmul.f32 %v238, 1.442695
  %v321 = vpow.pop %v320
  %v322 = vmul.f32 %v239, 1.442695
  %v323 = vpow.pop %v322
  %v324 = vmul.f32 %v240, 1.442695
  %v325 = vpow.pop %v324
  %v326 = vmul.f32 %v241, 1.442695
  %v327 = vpow.pop %v326
  %v328 = vmul.f32 %v242, 1.442695
  %v329 = vpow.pop %v328
  %v330 = vmul.f32 %v243, 1.442695
  %v331 = vpow.pop %v330
  %v332 = vmul.f32 %v244, 1.442695
  %v333 = vpow.pop %v332
  %v334 = vmul.f32 %v245, 1.442695
  %v335 = vpow.pop %v334
  %v336 = vmul.f32 %v246, 1.442695
  %v337 = vpow.pop %v336
  %v338 = vmul.f32 %v247, 1.442695
  %v339 = vpow.pop %v338
  %v340 = vmul.f32 %v248, 1.442695
  %v341 = vpow.pop %v340
  %v342 = vmul.f32 %v249, 1.442695
  %v343 = vpow.pop %v342
  %v344 = vmul.f32 %v250, 1.442695
  %v345 = vpow.pop %v344
  %v346 = vmul.f32 %v251, 1.442695
  %v347 = vpow.pop %v346
  %v348 = vmul.f32 %v252, 1.442695
  %v349 = vpow.pop %v348
  %v350 = vmul.f32 %v253, 1.442695
  %v351 = vpow.pop %v350
  %v352 = vmul.f32 %v254, 1.442695
  %v353 = vpow.pop %v352
  %v354 = vmul.f32 %v255, 1.442695
  %v355 = vpow.pop %v354
  %v356 = vmul.f32 %v256, 1.442695
  %v357 = vpow.pop %v356
  %v358 = vmul.f32 %v257, 1.442695
  %v359 = vpow.pop %v358
  %v360 = vmul.f32 %v258, 1.442695
  %v361 = vpow.pop %v360
  %v362 = vmul.f32 %v259, 1.442695
  %v363 = vpow.pop %v362
  %v364 = vmul.f32 %v260, 1.442695
  %v365 = vpow.pop %v364
  %v366 = vmul.f32 %v261, 1.442695
  %v367 = vpow.pop %v366
  %v368 = vmul.f32 %v262, 1.442695
  %v369 = vpow.pop %v368
  %v370 = vmul.f32 %v263, 1.442695
  %v371 = vpow.pop %v370
  %v372 = vmul.f32 %v264, 1.442695
  %v373 = vpow.pop %v372
  %v374 = vmul.f32 %v265, 1.442695
  %v375 = vpow.pop %v374
  %v376 = vmul.f32 %v266, 1.442695
  %v377 = vpow.pop %v376
  %v378 = vmul.f32 %v267, 1.442695
  %v379 = vpow.pop %v378
  %v380 = vmul.f32 %v268, 1.442695
  %v381 = vpow.pop %v380
  %v382 = vmul.f32 %v269, 1.442695
  %v383 = vpow.pop %v382
  %v384 = vmul.f32 %v270, 1.442695
  %v385 = vpow.pop %v384
  %v386 = vmul.f32 %v271, 1.442695
  %v387 = vpow.pop %v386
  %v388 = vmul.f32 %v272, 1.442695
  %v389 = vpow.pop %v388
  %v390 = vmul.f32 %v273, 1.442695
  %v391 = vpow.pop %v390
  %v392 = vmul.f32 %v274, 1.442695
  %v393 = vpow.pop %v392
  %v394 = vmul.f32 %v275, 1.442695
  %v395 = vpow.pop %v394
  %v396 = vmul.f32 %v276, 1.442695
  %v397 = vpow.pop %v396
  %v398 = vmul.f32 %v277, 1.442695
  %v399 = vpow.pop %v398
  %v400 = vmul.f32 %v278, 1.442695
  %v401 = vpow.pop %v400
  %v402 = vmul.f32 %v279, 1.442695
  %v403 = vpow.pop %v402
  %v404 = vmul.f32 %v280, 1.442695
  %v405 = vpow.pop %v404
  %v406 = vmul.f32 %v281, 1.442695
  %v407 = vpow.pop %v406
  %v408 = vmul.f32 %v282, 1.442695
  %v409 = vpow.pop %v408
  %v410 = vmul.f32 %v283, 1.442695
  %v411 = vpow.pop %v410
  %v412 = vadd.f32 %v285, 2.0
  %v413 = vadd.f32 %v287, 2.0
  %v414 = vadd.f32 %v289, 2.0
  %v415 = vadd.f32 %v291, 2.0
  %v416 = vadd.f32 %v293, 2.0
  %v417 = vadd.f32 %v295, 2.0
  %v418 = vadd.f32 %v297, 2.0
  %v419 = vadd.f32 %v299, 2.0
  %v420 = vadd.f32 %v301, 2.0
  %v421 = vadd.f32 %v303, 2.0
  %v422 = vadd.f32 %v305, 2.0
  %v423 = vadd.f32 %v307, 2.0
  %v424 = vadd.f32 %v309, 2.0
  %v425 = vadd.f32 %v311, 2.0
  %v426 = vadd.f32 %v313, 2.0
  %v427 = vadd.f32 %v315, 2.0
  %v428 = vadd.f32 %v317, 2.0
  %v429 = vadd.f32 %v319, 2.0
  %v430 = vadd.f32 %v321, 2.0
  %v431 = vadd.f32 %v323, 2.0
  %v432 = vadd.f32 %v325, 2.0
  %v433 = vadd.f32 %v327, 2.0
  %v434 = vadd.f32 %v329, 2.0
  %v435 = vadd.f32 %v331, 2.0
  %v436 = vadd.f32 %v333, 2.0
  %v437 = vadd.f32 %v335, 2.0
  %v438 = vadd.f32 %v337, 2.0
  %v439 = vadd.f32 %v339, 2.0
  %v440 = vadd.f32 %v341, 2.0
  %v441 = vadd.f32 %v343, 2.0
  %v442 = vadd.f32 %v345, 2.0
  %v443 = vadd.f32 %v347, 2.0
  %v444 = vadd.f32 %v349, 2.0
  %v445 = vadd.f32 %v351, 2.0
  %v446 = vadd.f32 %v353, 2.0
  %v447 = vadd.f32 %v355, 2.0
  %v448 = vadd.f32 %v357, 2.0
  %v449 = vadd.f32 %v359, 2.0
  %v450 = vadd.f32 %v361, 2.0
  %v451 = vadd.f32 %v363, 2.0
  %v452 = vadd.f32 %v365, 2.0
  %v453 = vadd.f32 %v367, 2.0
  %v454 = vadd.f32 %v369, 2.0
  %v455 = vadd.f32 %v371, 2.0
  %v456 = vadd.f32 %v373, 2.0
  %v457 = vadd.f32 %v375, 2.0
  %v458 = vadd.f32 %v377, 2.0
  %v459 = vadd.f32 %v379, 2.0
  %v460 = vadd.f32 %v381, 2.0
  %v461 = vadd.f32 %v383, 2.0
  %v462 = vadd.f32 %v385, 2.0
  %v463 = vadd.f32 %v387, 2.0
  %v464 = vadd.f32 %v389, 2.0
  %v465 = vadd.f32 %v391, 2.0
  %v466 = vadd.f32 %v393, 2.0
  %v467 = vadd.f32 %v395, 2.0
  %v468 = vadd.f32 %v397, 2.0
  %v469 = vadd.f32 %v399, 2.0
  %v470 = vadd.f32 %v401, 2.0
  %v471 = vadd.f32 %v403, 2.0
  %v472 = vadd.f32 %v405, 2.0
  %v473 = vadd.f32 %v407, 2.0
  %v474 = vadd.f32 %v409, 2.0
  %v475 = vadd.f32 %v411, 2.0
  %v476 = vmul.f32 %v285, %v412
  %v477 = vmul.f32 %v287, %v413
  %v478 = vmul.f32 %v289, %v414
  %v479 = vmul.f32 %v291, %v415
  %v480 = vmul.f32 %v293, %v416
  %v481 = vmul.f32 %v295, %v417
  %v482 = vmul.f32 %v297, %v418
  %v483 = vmul.f32 %v299, %v419
  %v484 = vmul.f32 %v301, %v420
  %v485 = vmul.f32 %v303, %v421
  %v486 = vmul.f32 %v305, %v422
  %v487 = vmul.f32 %v307, %v423
  %v488 = vmul.f32 %v309, %v424
  %v489 = vmul.f32 %v311, %v425
  %v490 = vmul.f32 %v313, %v426
  %v491 = vmul.f32 %v315, %v427
  %v492 = vmul.f32 %v317, %v428
  %v493 = vmul.f32 %v319, %v429
  %v494 = vmul.f32 %v321, %v430
  %v495 = vmul.f32 %v323, %v431
  %v496 = vmul.f32 %v325, %v432
  %v497 = vmul.f32 %v327, %v433
  %v498 = vmul.f32 %v329, %v434
  %v499 = vmul.f32 %v331, %v435
  %v500 = vmul.f32 %v333, %v436
  %v501 = vmul.f32 %v335, %v437
  %v502 = vmul.f32 %v337, %v438
  %v503 = vmul.f32 %v339, %v439
  %v504 = vmul.f32 %v341, %v440
  %v505 = vmul.f32 %v343, %v441
  %v506 = vmul.f32 %v345, %v442
  %v507 = vmul.f32 %v347, %v443
  %v508 = vmul.f32 %v349, %v444
  %v509 = vmul.f32 %v351, %v445
  %v510 = vmul.f32 %v353, %v446
  %v511 = vmul.f32 %v355, %v447
  %v512 = vmul.f32 %v357, %v448
  %v513 = vmul.f32 %v359, %v449
  %v514 = vmul.f32 %v361, %v450
  %v515 = vmul.f32 %v363, %v451
  %v516 = vmul.f32 %v365, %v452
  %v517 = vmul.f32 %v367, %v453
  %v518 = vmul.f32 %v369, %v454
  %v519 = vmul.f32 %v371, %v455
  %v520 = vmul.f32 %v373, %v456
  %v521 = vmul.f32 %v375, %v457
  %v522 = vmul.f32 %v377, %v458
  %v523 = vmul.f32 %v379, %v459
  %v524 = vmul.f32 %v381, %v460
  %v525 = vmul.f32 %v383, %v461
  %v526 = vmul.f32 %v385, %v462
  %v527 = vmul.f32 %v387, %v463
  %v528 = vmul.f32 %v389, %v464
  %v529 = vmul.f32 %v391, %v465
  %v530 = vmul.f32 %v393, %v466
  %v531 = vmul.f32 %v395, %v467
  %v532 = vmul.f32 %v397, %v468
  %v533 = vmul.f32 %v399, %v469
  %v534 = vmul.f32 %v401, %v470
  %v535 = vmul.f32 %v403, %v471
  %v536 = vmul.f32 %v405, %v472
  %v537 = vmul.f32 %v407, %v473
  %v538 = vmul.f32 %v409, %v474
  %v539 = vmul.f32 %v411, %v475
  %vm540 = vcmp.gt.f32.partialorder %v156, 20.0
  %vm541 = vcmp.gt.f32.partialorder %v157, 20.0
  %vm542 = vcmp.gt.f32.partialorder %v158, 20.0
  %vm543 = vcmp.gt.f32.partialorder %v159, 20.0
  %vm544 = vcmp.gt.f32.partialorder %v160, 20.0
  %vm545 = vcmp.gt.f32.partialorder %v161, 20.0
  %vm546 = vcmp.gt.f32.partialorder %v162, 20.0
  %vm547 = vcmp.gt.f32.partialorder %v163, 20.0
  %vm548 = vcmp.gt.f32.partialorder %v164, 20.0
  %vm549 = vcmp.gt.f32.partialorder %v165, 20.0
  %vm550 = vcmp.gt.f32.partialorder %v166, 20.0
  %vm551 = vcmp.gt.f32.partialorder %v167, 20.0
  %vm552 = vcmp.gt.f32.partialorder %v168, 20.0
  %vm553 = vcmp.gt.f32.partialorder %v169, 20.0
  %vm554 = vcmp.gt.f32.partialorder %v170, 20.0
  %vm555 = vcmp.gt.f32.partialorder %v171, 20.0
  %vm556 = vcmp.gt.f32.partialorder %v172, 20.0
  %vm557 = vcmp.gt.f32.partialorder %v173, 20.0
  %vm558 = vcmp.gt.f32.partialorder %v174, 20.0
  %vm559 = vcmp.gt.f32.partialorder %v175, 20.0
  %vm560 = vcmp.gt.f32.partialorder %v176, 20.0
  %vm561 = vcmp.gt.f32.partialorder %v177, 20.0
  %vm562 = vcmp.gt.f32.partialorder %v178, 20.0
  %vm563 = vcmp.gt.f32.partialorder %v179, 20.0
  %vm564 = vcmp.gt.f32.partialorder %v180, 20.0
  %vm565 = vcmp.gt.f32.partialorder %v181, 20.0
  %vm566 = vcmp.gt.f32.partialorder %v182, 20.0
  %vm567 = vcmp.gt.f32.partialorder %v183, 20.0
  %vm568 = vcmp.gt.f32.partialorder %v184, 20.0
  %vm569 = vcmp.gt.f32.partialorder %v185, 20.0
  %vm570 = vcmp.gt.f32.partialorder %v186, 20.0
  %vm571 = vcmp.gt.f32.partialorder %v187, 20.0
  %vm572 = vcmp.gt.f32.partialorder %v188, 20.0
  %vm573 = vcmp.gt.f32.partialorder %v189, 20.0
  %vm574 = vcmp.gt.f32.partialorder %v190, 20.0
  %vm575 = vcmp.gt.f32.partialorder %v191, 20.0
  %vm576 = vcmp.gt.f32.partialorder %v192, 20.0
  %vm577 = vcmp.gt.f32.partialorder %v193, 20.0
  %vm578 = vcmp.gt.f32.partialorder %v194, 20.0
  %vm579 = vcmp.gt.f32.partialorder %v195, 20.0
  %vm580 = vcmp.gt.f32.partialorder %v196, 20.0
  %vm581 = vcmp.gt.f32.partialorder %v197, 20.0
  %vm582 = vcmp.gt.f32.partialorder %v198, 20.0
  %vm583 = vcmp.gt.f32.partialorder %v199, 20.0
  %vm584 = vcmp.gt.f32.partialorder %v200, 20.0
  %vm585 = vcmp.gt.f32.partialorder %v201, 20.0
  %vm586 = vcmp.gt.f32.partialorder %v202, 20.0
  %vm587 = vcmp.gt.f32.partialorder %v203, 20.0
  %vm588 = vcmp.gt.f32.partialorder %v204, 20.0
  %vm589 = vcmp.gt.f32.partialorder %v205, 20.0
  %vm590 = vcmp.gt.f32.partialorder %v206, 20.0
  %vm591 = vcmp.gt.f32.partialorder %v207, 20.0
  %vm592 = vcmp.gt.f32.partialorder %v208, 20.0
  %vm593 = vcmp.gt.f32.partialorder %v209, 20.0
  %vm594 = vcmp.gt.f32.partialorder %v210, 20.0
  %vm595 = vcmp.gt.f32.partialorder %v211, 20.0
  %vm596 = vcmp.gt.f32.partialorder %v212, 20.0
  %vm597 = vcmp.gt.f32.partialorder %v213, 20.0
  %vm598 = vcmp.gt.f32.partialorder %v214, 20.0
  %vm599 = vcmp.gt.f32.partialorder %v215, 20.0
  %vm600 = vcmp.gt.f32.partialorder %v216, 20.0
  %vm601 = vcmp.gt.f32.partialorder %v217, 20.0
  %vm602 = vcmp.gt.f32.partialorder %v218, 20.0
  %vm603 = vcmp.gt.f32.partialorder %v219, 20.0
  %v604 = vadd.f32 %v476, 2.0
  %v605 = vadd.f32 %v477, 2.0
  %v606 = vadd.f32 %v478, 2.0
  %v607 = vadd.f32 %v479, 2.0
  %v608 = vadd.f32 %v480, 2.0
  %v609 = vadd.f32 %v481, 2.0
  %v610 = vadd.f32 %v482, 2.0
  %v611 = vadd.f32 %v483, 2.0
  %v612 = vadd.f32 %v484, 2.0
  %v613 = vadd.f32 %v485, 2.0
  %v614 = vadd.f32 %v486, 2.0
  %v615 = vadd.f32 %v487, 2.0
  %v616 = vadd.f32 %v488, 2.0
  %v617 = vadd.f32 %v489, 2.0
  %v618 = vadd.f32 %v490, 2.0
  %v619 = vadd.f32 %v491, 2.0
  %v620 = vadd.f32 %v492, 2.0
  %v621 = vadd.f32 %v493, 2.0
  %v622 = vadd.f32 %v494, 2.0
  %v623 = vadd.f32 %v495, 2.0
  %v624 = vadd.f32 %v496, 2.0
  %v625 = vadd.f32 %v497, 2.0
  %v626 = vadd.f32 %v498, 2.0
  %v627 = vadd.f32 %v499, 2.0
  %v628 = vadd.f32 %v500, 2.0
  %v629 = vadd.f32 %v501, 2.0
  %v630 = vadd.f32 %v502, 2.0
  %v631 = vadd.f32 %v503, 2.0
  %v632 = vadd.f32 %v504, 2.0
  %v633 = vadd.f32 %v505, 2.0
  %v634 = vadd.f32 %v506, 2.0
  %v635 = vadd.f32 %v507, 2.0
  %v636 = vadd.f32 %v508, 2.0
  %v637 = vadd.f32 %v509, 2.0
  %v638 = vadd.f32 %v510, 2.0
  %v639 = vadd.f32 %v511, 2.0
  %v640 = vadd.f32 %v512, 2.0
  %v641 = vadd.f32 %v513, 2.0
  %v642 = vadd.f32 %v514, 2.0
  %v643 = vadd.f32 %v515, 2.0
  %v644 = vadd.f32 %v516, 2.0
  %v645 = vadd.f32 %v517, 2.0
  %v646 = vadd.f32 %v518, 2.0
  %v647 = vadd.f32 %v519, 2.0
  %v648 = vadd.f32 %v520, 2.0
  %v649 = vadd.f32 %v521, 2.0
  %v650 = vadd.f32 %v522, 2.0
  %v651 = vadd.f32 %v523, 2.0
  %v652 = vadd.f32 %v524, 2.0
  %v653 = vadd.f32 %v525, 2.0
  %v654 = vadd.f32 %v526, 2.0
  %v655 = vadd.f32 %v527, 2.0
  %v656 = vadd.f32 %v528, 2.0
  %v657 = vadd.f32 %v529, 2.0
  %v658 = vadd.f32 %v530, 2.0
  %v659 = vadd.f32 %v531, 2.0
  %v660 = vadd.f32 %v532, 2.0
  %v661 = vadd.f32 %v533, 2.0
  %v662 = vadd.f32 %v534, 2.0
  %v663 = vadd.f32 %v535, 2.0
  %v664 = vadd.f32 %v536, 2.0
  %v665 = vadd.f32 %v537, 2.0
  %v666 = vadd.f32 %v538, 2.0
  %v667 = vadd.f32 %v539, 2.0
  %v668 = vrcp.pop %v604
  %v669 = vmul.f32 %v476, %v668
  %v670 = vrcp.pop %v605
  %v671 = vmul.f32 %v477, %v670
  %v672 = vrcp.pop %v606
  %v673 = vmul.f32 %v478, %v672
  %v674 = vrcp.pop %v607
  %v675 = vmul.f32 %v479, %v674
  %v676 = vrcp.pop %v608
  %v677 = vmul.f32 %v480, %v676
  %v678 = vrcp.pop %v609
  %v679 = vmul.f32 %v481, %v678
  %v680 = vrcp.pop %v610
  %v681 = vmul.f32 %v482, %v680
  %v682 = vrcp.pop %v611
  %v683 = vmul.f32 %v483, %v682
  %v684 = vrcp.pop %v612
  %v685 = vmul.f32 %v484, %v684
  %v686 = vrcp.pop %v613
  %v687 = vmul.f32 %v485, %v686
  %v688 = vrcp.pop %v614
  %v689 = vmul.f32 %v486, %v688
  %v690 = vrcp.pop %v615
  %v691 = vmul.f32 %v487, %v690
  %v692 = vrcp.pop %v616
  %v693 = vmul.f32 %v488, %v692
  %v694 = vrcp.pop %v617
  %v695 = vmul.f32 %v489, %v694
  %v696 = vrcp.pop %v618
  %v697 = vmul.f32 %v490, %v696
  %v698 = vrcp.pop %v619
  %v699 = vmul.f32 %v491, %v698
  %v700 = vrcp.pop %v620
  %v701 = vmul.f32 %v492, %v700
  %v702 = vrcp.pop %v621
  %v703 = vmul.f32 %v493, %v702
  %v704 = vrcp.pop %v622
  %v705 = vmul.f32 %v494, %v704
  %v706 = vrcp.pop %v623
  %v707 = vmul.f32 %v495, %v706
  %v708 = vrcp.pop %v624
  %v709 = vmul.f32 %v496, %v708
  %v710 = vrcp.pop %v625
  %v711 = vmul.f32 %v497, %v710
  %v712 = vrcp.pop %v626
  %v713 = vmul.f32 %v498, %v712
  %v714 = vrcp.pop %v627
  %v715 = vmul.f32 %v499, %v714
  %v716 = vrcp.pop %v628
  %v717 = vmul.f32 %v500, %v716
  %v718 = vrcp.pop %v629
  %v719 = vmul.f32 %v501, %v718
  %v720 = vrcp.pop %v630
  %v721 = vmul.f32 %v502, %v720
  %v722 = vrcp.pop %v631
  %v723 = vmul.f32 %v503, %v722
  %v724 = vrcp.pop %v632
  %v725 = vmul.f32 %v504, %v724
  %v726 = vrcp.pop %v633
  %v727 = vmul.f32 %v505, %v726
  %v728 = vrcp.pop %v634
  %v729 = vmul.f32 %v506, %v728
  %v730 = vrcp.pop %v635
  %v731 = vmul.f32 %v507, %v730
  %v732 = vrcp.pop %v636
  %v733 = vmul.f32 %v508, %v732
  %v734 = vrcp.pop %v637
  %v735 = vmul.f32 %v509, %v734
  %v736 = vrcp.pop %v638
  %v737 = vmul.f32 %v510, %v736
  %v738 = vrcp.pop %v639
  %v739 = vmul.f32 %v511, %v738
  %v740 = vrcp.pop %v640
  %v741 = vmul.f32 %v512, %v740
  %v742 = vrcp.pop %v641
  %v743 = vmul.f32 %v513, %v742
  %v744 = vrcp.pop %v642
  %v745 = vmul.f32 %v514, %v744
  %v746 = vrcp.pop %v643
  %v747 = vmul.f32 %v515, %v746
  %v748 = vrcp.pop %v644
  %v749 = vmul.f32 %v516, %v748
  %v750 = vrcp.pop %v645
  %v751 = vmul.f32 %v517, %v750
  %v752 = vrcp.pop %v646
  %v753 = vmul.f32 %v518, %v752
  %v754 = vrcp.pop %v647
  %v755 = vmul.f32 %v519, %v754
  %v756 = vrcp.pop %v648
  %v757 = vmul.f32 %v520, %v756
  %v758 = vrcp.pop %v649
  %v759 = vmul.f32 %v521, %v758
  %v760 = vrcp.pop %v650
  %v761 = vmul.f32 %v522, %v760
  %v762 = vrcp.pop %v651
  %v763 = vmul.f32 %v523, %v762
  %v764 = vrcp.pop %v652
  %v765 = vmul.f32 %v524, %v764
  %v766 = vrcp.pop %v653
  %v767 = vmul.f32 %v525, %v766
  %v768 = vrcp.pop %v654
  %v769 = vmul.f32 %v526, %v768
  %v770 = vrcp.pop %v655
  %v771 = vmul.f32 %v527, %v770
  %v772 = vrcp.pop %v656
  %v773 = vmul.f32 %v528, %v772
  %v774 = vrcp.pop %v657
  %v775 = vmul.f32 %v529, %v774
  %v776 = vrcp.pop %v658
  %v777 = vmul.f32 %v530, %v776
  %v778 = vrcp.pop %v659
  %v779 = vmul.f32 %v531, %v778
  %v780 = vrcp.pop %v660
  %v781 = vmul.f32 %v532, %v780
  %v782 = vrcp.pop %v661
  %v783 = vmul.f32 %v533, %v782
  %v784 = vrcp.pop %v662
  %v785 = vmul.f32 %v534, %v784
  %v786 = vrcp.pop %v663
  %v787 = vmul.f32 %v535, %v786
  %v788 = vrcp.pop %v664
  %v789 = vmul.f32 %v536, %v788
  %v790 = vrcp.pop %v665
  %v791 = vmul.f32 %v537, %v790
  %v792 = vrcp.pop %v666
  %v793 = vmul.f32 %v538, %v792
  %v794 = vrcp.pop %v667
  %v795 = vmul.f32 %v539, %v794
  %v796 = vmul.f32 %v156, %v669
  %v797 = vmul.f32 %v157, %v671
  %v798 = vmul.f32 %v158, %v673
  %v799 = vmul.f32 %v159, %v675
  %v800 = vmul.f32 %v160, %v677
  %v801 = vmul.f32 %v161, %v679
  %v802 = vmul.f32 %v162, %v681
  %v803 = vmul.f32 %v163, %v683
  %v804 = vmul.f32 %v164, %v685
  %v805 = vmul.f32 %v165, %v687
  %v806 = vmul.f32 %v166, %v689
  %v807 = vmul.f32 %v167, %v691
  %v808 = vmul.f32 %v168, %v693
  %v809 = vmul.f32 %v169, %v695
  %v810 = vmul.f32 %v170, %v697
  %v811 = vmul.f32 %v171, %v699
  %v812 = vmul.f32 %v172, %v701
  %v813 = vmul.f32 %v173, %v703
  %v814 = vmul.f32 %v174, %v705
  %v815 = vmul.f32 %v175, %v707
  %v816 = vmul.f32 %v176, %v709
  %v817 = vmul.f32 %v177, %v711
  %v818 = vmul.f32 %v178, %v713
  %v819 = vmul.f32 %v179, %v715
  %v820 = vmul.f32 %v180, %v717
  %v821 = vmul.f32 %v181, %v719
  %v822 = vmul.f32 %v182, %v721
  %v823 = vmul.f32 %v183, %v723
  %v824 = vmul.f32 %v184, %v725
  %v825 = vmul.f32 %v185, %v727
  %v826 = vmul.f32 %v186, %v729
  %v827 = vmul.f32 %v187, %v731
  %v828 = vmul.f32 %v188, %v733
  %v829 = vmul.f32 %v189, %v735
  %v830 = vmul.f32 %v190, %v737
  %v831 = vmul.f32 %v191, %v739
  %v832 = vmul.f32 %v192, %v741
  %v833 = vmul.f32 %v193, %v743
  %v834 = vmul.f32 %v194, %v745
  %v835 = vmul.f32 %v195, %v747
  %v836 = vmul.f32 %v196, %v749
  %v837 = vmul.f32 %v197, %v751
  %v838 = vmul.f32 %v198, %v753
  %v839 = vmul.f32 %v199, %v755
  %v840 = vmul.f32 %v200, %v757
  %v841 = vmul.f32 %v201, %v759
  %v842 = vmul.f32 %v202, %v761
  %v843 = vmul.f32 %v203, %v763
  %v844 = vmul.f32 %v204, %v765
  %v845 = vmul.f32 %v205, %v767
  %v846 = vmul.f32 %v206, %v769
  %v847 = vmul.f32 %v207, %v771
  %v848 = vmul.f32 %v208, %v773
  %v849 = vmul.f32 %v209, %v775
  %v850 = vmul.f32 %v210, %v777
  %v851 = vmul.f32 %v211, %v779
  %v852 = vmul.f32 %v212, %v781
  %v853 = vmul.f32 %v213, %v783
  %v854 = vmul.f32 %v214, %v785
  %v855 = vmul.f32 %v215, %v787
  %v856 = vmul.f32 %v216, %v789
  %v857 = vmul.f32 %v217, %v791
  %v858 = vmul.f32 %v218, %v793
  %v859 = vmul.f32 %v219, %v795
  %v860 = vsel %vm540, %v156, %v796
  %v861 = vsel %vm541, %v157, %v797
  %v862 = vsel %vm542, %v158, %v798
  %v863 = vsel %vm543, %v159, %v799
  %v864 = vsel %vm544, %v160, %v800
  %v865 = vsel %vm545, %v161, %v801
  %v866 = vsel %vm546, %v162, %v802
  %v867 = vsel %vm547, %v163, %v803
  %v868 = vsel %vm548, %v164, %v804
  %v869 = vsel %vm549, %v165, %v805
  %v870 = vsel %vm550, %v166, %v806
  %v871 = vsel %vm551, %v167, %v807
  %v872 = vsel %vm552, %v168, %v808
  %v873 = vsel %vm553, %v169, %v809
  %v874 = vsel %vm554, %v170, %v810
  %v875 = vsel %vm555, %v171, %v811
  %v876 = vsel %vm556, %v172, %v812
  %v877 = vsel %vm557, %v173, %v813
  %v878 = vsel %vm558, %v174, %v814
  %v879 = vsel %vm559, %v175, %v815
  %v880 = vsel %vm560, %v176, %v816
  %v881 = vsel %vm561, %v177, %v817
  %v882 = vsel %vm562, %v178, %v818
  %v883 = vsel %vm563, %v179, %v819
  %v884 = vsel %vm564, %v180, %v820
  %v885 = vsel %vm565, %v181, %v821
  %v886 = vsel %vm566, %v182, %v822
  %v887 = vsel %vm567, %v183, %v823
  %v888 = vsel %vm568, %v184, %v824
  %v889 = vsel %vm569, %v185, %v825
  %v890 = vsel %vm570, %v186, %v826
  %v891 = vsel %vm571, %v187, %v827
  %v892 = vsel %vm572, %v188, %v828
  %v893 = vsel %vm573, %v189, %v829
  %v894 = vsel %vm574, %v190, %v830
  %v895 = vsel %vm575, %v191, %v831
  %v896 = vsel %vm576, %v192, %v832
  %v897 = vsel %vm577, %v193, %v833
  %v898 = vsel %vm578, %v194, %v834
  %v899 = vsel %vm579, %v195, %v835
  %v900 = vsel %vm580, %v196, %v836
  %v901 = vsel %vm581, %v197, %v837
  %v902 = vsel %vm582, %v198, %v838
  %v903 = vsel %vm583, %v199, %v839
  %v904 = vsel %vm584, %v200, %v840
  %v905 = vsel %vm585, %v201, %v841
  %v906 = vsel %vm586, %v202, %v842
  %v907 = vsel %vm587, %v203, %v843
  %v908 = vsel %vm588, %v204, %v844
  %v909 = vsel %vm589, %v205, %v845
  %v910 = vsel %vm590, %v206, %v846
  %v911 = vsel %vm591, %v207, %v847
  %v912 = vsel %vm592, %v208, %v848
  %v913 = vsel %vm593, %v209, %v849
  %v914 = vsel %vm594, %v210, %v850
  %v915 = vsel %vm595, %v211, %v851
  %v916 = vsel %vm596, %v212, %v852
  %v917 = vsel %vm597, %v213, %v853
  %v918 = vsel %vm598, %v214, %v854
  %v919 = vsel %vm599, %v215, %v855
  %v920 = vsel %vm600, %v216, %v856
  %v921 = vsel %vm601, %v217, %v857
  %v922 = vsel %vm602, %v218, %v858
  %v923 = vsel %vm603, %v219, %v859
  %vm924 = vcmask 261120
  %925 = vst.msk [vmem:[%s3] sm:$0xff] %vm924, %v860
  %926 = vst.msk [vmem:[%s3 + $0x8] sm:$0xff] %vm924, %v861
  %927 = vst.msk [vmem:[%s3 + $0x10] sm:$0xff] %vm924, %v862
  %928 = vst.msk [vmem:[%s3 + $0x18] sm:$0xff] %vm924, %v863
  %929 = vst.msk [vmem:[%s3 + $0x20] sm:$0xff] %vm924, %v864
  %930 = vst.msk [vmem:[%s3 + $0x28] sm:$0xff] %vm924, %v865
  %931 = vst.msk [vmem:[%s3 + $0x30] sm:$0xff] %vm924, %v866
  %932 = vst.msk [vmem:[%s3 + $0x38] sm:$0xff] %vm924, %v867
  %933 = vst.msk [vmem:[%s3 + $0x40] sm:$0xff] %vm924, %v868
  %934 = vst.msk [vmem:[%s3 + $0x48] sm:$0xff] %vm924, %v869
  %935 = vst.msk [vmem:[%s3 + $0x50] sm:$0xff] %vm924, %v870
  %936 = vst.msk [vmem:[%s3 + $0x58] sm:$0xff] %vm924, %v871
  %937 = vst.msk [vmem:[%s3 + $0x60] sm:$0xff] %vm924, %v872
  %938 = vst.msk [vmem:[%s3 + $0x68] sm:$0xff] %vm924, %v873
  %939 = vst.msk [vmem:[%s3 + $0x70] sm:$0xff] %vm924, %v874
  %940 = vst.msk [vmem:[%s3 + $0x78] sm:$0xff] %vm924, %v875
  %941 = vst.msk [vmem:[%s3 + $0x80] sm:$0xff] %vm924, %v876
  %942 = vst.msk [vmem:[%s3 + $0x88] sm:$0xff] %vm924, %v877
  %943 = vst.msk [vmem:[%s3 + $0x90] sm:$0xff] %vm924, %v878
  %944 = vst.msk [vmem:[%s3 + $0x98] sm:$0xff] %vm924, %v879
  %945 = vst.msk [vmem:[%s3 + $0xa0] sm:$0xff] %vm924, %v880
  %946 = vst.msk [vmem:[%s3 + $0xa8] sm:$0xff] %vm924, %v881
  %947 = vst.msk [vmem:[%s3 + $0xb0] sm:$0xff] %vm924, %v882
  %948 = vst.msk [vmem:[%s3 + $0xb8] sm:$0xff] %vm924, %v883
  %949 = vst.msk [vmem:[%s3 + $0xc0] sm:$0xff] %vm924, %v884
  %950 = vst.msk [vmem:[%s3 + $0xc8] sm:$0xff] %vm924, %v885
  %951 = vst.msk [vmem:[%s3 + $0xd0] sm:$0xff] %vm924, %v886
  %952 = vst.msk [vmem:[%s3 + $0xd8] sm:$0xff] %vm924, %v887
  %953 = vst.msk [vmem:[%s3 + $0xe0] sm:$0xff] %vm924, %v888
  %954 = vst.msk [vmem:[%s3 + $0xe8] sm:$0xff] %vm924, %v889
  %955 = vst.msk [vmem:[%s3 + $0xf0] sm:$0xff] %vm924, %v890
  %956 = vst.msk [vmem:[%s3 + $0xf8] sm:$0xff] %vm924, %v891
  %957 = vst.msk [vmem:[%s3 + $0x100] sm:$0xff] %vm924, %v892
  %958 = vst.msk [vmem:[%s3 + $0x108] sm:$0xff] %vm924, %v893
  %959 = vst.msk [vmem:[%s3 + $0x110] sm:$0xff] %vm924, %v894
  %960 = vst.msk [vmem:[%s3 + $0x118] sm:$0xff] %vm924, %v895
  %961 = vst.msk [vmem:[%s3 + $0x120] sm:$0xff] %vm924, %v896
  %962 = vst.msk [vmem:[%s3 + $0x128] sm:$0xff] %vm924, %v897
  %963 = vst.msk [vmem:[%s3 + $0x130] sm:$0xff] %vm924, %v898
  %964 = vst.msk [vmem:[%s3 + $0x138] sm:$0xff] %vm924, %v899
  %965 = vst.msk [vmem:[%s3 + $0x140] sm:$0xff] %vm924, %v900
  %966 = vst.msk [vmem:[%s3 + $0x148] sm:$0xff] %vm924, %v901
  %967 = vst.msk [vmem:[%s3 + $0x150] sm:$0xff] %vm924, %v902
  %968 = vst.msk [vmem:[%s3 + $0x158] sm:$0xff] %vm924, %v903
  %969 = vst.msk [vmem:[%s3 + $0x160] sm:$0xff] %vm924, %v904
  %970 = vst.msk [vmem:[%s3 + $0x168] sm:$0xff] %vm924, %v905
  %971 = vst.msk [vmem:[%s3 + $0x170] sm:$0xff] %vm924, %v906
  %972 = vst.msk [vmem:[%s3 + $0x178] sm:$0xff] %vm924, %v907
  %973 = vst.msk [vmem:[%s3 + $0x180] sm:$0xff] %vm924, %v908
  %974 = vst.msk [vmem:[%s3 + $0x188] sm:$0xff] %vm924, %v909
  %975 = vst.msk [vmem:[%s3 + $0x190] sm:$0xff] %vm924, %v910
  %976 = vst.msk [vmem:[%s3 + $0x198] sm:$0xff] %vm924, %v911
  %977 = vst.msk [vmem:[%s3 + $0x1a0] sm:$0xff] %vm924, %v912
  %978 = vst.msk [vmem:[%s3 + $0x1a8] sm:$0xff] %vm924, %v913
  %979 = vst.msk [vmem:[%s3 + $0x1b0] sm:$0xff] %vm924, %v914
  %980 = vst.msk [vmem:[%s3 + $0x1b8] sm:$0xff] %vm924, %v915
  %981 = vst.msk [vmem:[%s3 + $0x1c0] sm:$0xff] %vm924, %v916
  %982 = vst.msk [vmem:[%s3 + $0x1c8] sm:$0xff] %vm924, %v917
  %983 = vst.msk [vmem:[%s3 + $0x1d0] sm:$0xff] %vm924, %v918
  %984 = vst.msk [vmem:[%s3 + $0x1d8] sm:$0xff] %vm924, %v919
  %985 = vst.msk [vmem:[%s3 + $0x1e0] sm:$0xff] %vm924, %v920
  %986 = vst.msk [vmem:[%s3 + $0x1e8] sm:$0xff] %vm924, %v921
  %987 = vst.msk [vmem:[%s3 + $0x1f0] sm:$0xff] %vm924, %v922
  %988 = vst.msk [vmem:[%s3 + $0x1f8] sm:$0xff] %vm924, %v923
  // Predicated region
  $region14: #{recurrent_residual_block_tl.10} parent=0 // pred_check
    _
  $region15: #{recurrent_residual_block_tl.10} parent=0 // pred_check_branch
    %990 = sbr.rel (0) target = $region17
  $region16: #{recurrent_residual_block_tl.10} parent=0 // pred_region
    _
  $region17: #{recurrent_residual_block_tl.10} parent=0 // pred_fallthru
    _
  // Predicated region
  $region18: #{recurrent_residual_block_tl.10} parent=0 // pred_check
    _
  $region19: #{recurrent_residual_block_tl.10} parent=0 // pred_check_branch
    %992 = sbr.rel (0) target = $region21
  $region20: #{recurrent_residual_block_tl.10} parent=0 // pred_region
    _
  $region21: #{recurrent_residual_block_tl.10} parent=0 // pred_fallthru
    _

// kernel: recurrent_residual_block_tl.11
$region0: #{recurrent_residual_block_tl.11}
  #allocation0 [shape = 'u32[]', space=smem, size = 0x4, offset = 0x4, fixed_abs, tag = 'smem constant byte address 0x4 - core index']
  #allocation1 [shape = 'u32[144,128]{1,0:T(1,128)}', space=vmem, size = 0x12000, scoped, tag = 'internal scratch']
  %s0 = inlined_call_operand.vmem [shape: f32[2,18,18,32], index: 0, kind: input, shape index: {}, may-alias: {0,1,2}]
  %s1 = inlined_call_operand.vmem [shape: f32[2,18,18,32], index: 1, kind: input, shape index: {}, may-alias: {0,1,2}]
  %s2 = inlined_call_operand.vmem [shape: f32[2,18,18,32], index: 2, kind: input, shape index: {}, may-alias: {0,1,2}]
  %s3 = inlined_call_operand.vmem [shape: bf16[288,32], index: 3, kind: input, shape index: {}]
  %s4 = inlined_call_operand.vmem [shape: f32[1,32], index: 4, kind: input, shape index: {}]
  %s5 = inlined_call_operand.vmem [shape: f32[2,16,16,32], index: 5, kind: output, shape index: {0}]
  %s6 = inlined_call_operand.vmem [shape: f32[2,16,2,32], index: 6, kind: output, shape index: {1}]
  %7 = xla_tuple %s5, %s6
  %s8 = sld [smem:[#allocation0]]
  $region61: #{recurrent_residual_block_tl.11} parent=0
    _
  %s10 = ssub.s32 1, %s8
  %s11 = scalar_select 0, %s10, %s8
  loop: start=0, step=1, limit=34
  $region2: #{recurrent_residual_block_tl.11} parent=0 // loop_pre_header
    _
  $region3: #{recurrent_residual_block_tl.11} parent=0 // loop_header
    %s13 = sphi 0, %s17
    %p14 = scmp.ge.s32.totalorder %s13, 34
    %s20 = sphi 0, %s32
    %s21 = sphi 0, %s28
    %s22 = sphi 0, %s20
    %s23 = sphi 0, %s21
    %s24 = sphi 0, %s22
    %s25 = sphi 0, %s23
    %s37 = sphi 0, %s39
    %s40 = sphi 0, %s37
    %s41 = sphi 0, %s40
    %s57 = sphi 0, %s41
    %s67 = sphi 0, %s69
    %s70 = sphi 0, %s67
    %s71 = sphi 0, %s70
    %s87 = sphi 0, %s71
    %s97 = sphi 0, %s99
    %s100 = sphi 0, %s97
    %s101 = sphi 0, %s100
    %s117 = sphi 0, %s101
    %s121 = sphi 0, %s121
    %s123 = sphi 0, %s121
    %s124 = sphi 0, %s123
    %s138 = sphi 0, %s124
    %s142 = sphi 0, %s142
    %s144 = sphi 0, %s142
    %s145 = sphi 0, %s144
    %s159 = sphi 0, %s145
    %s167 = sphi 0, %s169
    %s170 = sphi 0, %s167
    %s171 = sphi 0, %s170
    %s187 = sphi 0, %s171
    %s195 = sphi 0, %s197
    %s198 = sphi 0, %s195
    %s199 = sphi 0, %s198
    %s215 = sphi 0, %s199
  $region4: #{recurrent_residual_block_tl.11} parent=0 // loop_header_branch
    %16 = sbr.rel (%p14) target = $region8
  $region5: #{recurrent_residual_block_tl.11} parent=0 // loop_body
    %s18 = ssub.s32 %s13, 1
    %s19 = ssub.s32 %s13, 2
    %s26 = sadd.s32 1, %s21
    %p27 = scmp.ge.s32.totalorder %s26, 16
    %s28 = scalar_select %p27, 0, %s26
    %s29 = sadd.s32 1, %s20
    %s30 = scalar_select %p27, %s29, %s20
    %p31 = scmp.ge.s32.totalorder %s30, 2
    %s32 = scalar_select %p31, 0, %s30
    %s33 = ssub.s32 %s20, %s32
    %s34 = ssub.s32 %s21, %s28
    %s35 = sor.u32 %s33, %s34
    %p36 = scmp.eq.s32.totalorder %s35, 0
    %s38 = sadd.s32 %s37, 1
    %s39 = scalar_select %p36, %s37, %s38
    %p42 = pneg %p36
    %p43 = scmp.eq.s32.totalorder %s13, 31
    %p44 = por %p42, %p43
    %p45 = scmp.ne.s32.totalorder %s37, %s40
    %p46 = scmp.eq.s32.totalorder %s13, 0
    %p47 = por %p45, %p46
    %p48 = scmp.ne.s32.totalorder %s37, %s40
    %p49 = scmp.eq.s32.totalorder %s18, 31
    %p50 = por %p48, %p49
    %p51 = scmp.ne.s32.totalorder %s40, %s41
    %p52 = scmp.eq.s32.totalorder %s18, 0
    %p53 = por %p51, %p52
    %p54 = scmp.ne.s32.totalorder %s40, %s41
    %p55 = scmp.eq.s32.totalorder %s19, 31
    %p56 = por %p54, %p55
    %p58 = scmp.ne.s32.totalorder %s41, %s57
    %p59 = scmp.eq.s32.totalorder %s19, 0
    %p60 = por %p58, %p59
    %s61 = sadd.s32 %s21, 1
    %s62 = sadd.s32 %s28, 1
    %s63 = ssub.s32 %s20, %s32
    %s64 = ssub.s32 %s61, %s62
    %s65 = sor.u32 %s63, %s64
    %p66 = scmp.eq.s32.totalorder %s65, 0
    %s68 = sadd.s32 %s67, 1
    %s69 = scalar_select %p66, %s67, %s68
    %p72 = pneg %p66
    %p73 = scmp.eq.s32.totalorder %s13, 31
    %p74 = por %p72, %p73
    %p75 = scmp.ne.s32.totalorder %s67, %s70
    %p76 = scmp.eq.s32.totalorder %s13, 0
    %p77 = por %p75, %p76
    %p78 = scmp.ne.s32.totalorder %s67, %s70
    %p79 = scmp.eq.s32.totalorder %s18, 31
    %p80 = por %p78, %p79
    %p81 = scmp.ne.s32.totalorder %s70, %s71
    %p82 = scmp.eq.s32.totalorder %s18, 0
    %p83 = por %p81, %p82
    %p84 = scmp.ne.s32.totalorder %s70, %s71
    %p85 = scmp.eq.s32.totalorder %s19, 31
    %p86 = por %p84, %p85
    %p88 = scmp.ne.s32.totalorder %s71, %s87
    %p89 = scmp.eq.s32.totalorder %s19, 0
    %p90 = por %p88, %p89
    %s91 = sadd.s32 %s21, 2
    %s92 = sadd.s32 %s28, 2
    %s93 = ssub.s32 %s20, %s32
    %s94 = ssub.s32 %s91, %s92
    %s95 = sor.u32 %s93, %s94
    %p96 = scmp.eq.s32.totalorder %s95, 0
    %s98 = sadd.s32 %s97, 1
    %s99 = scalar_select %p96, %s97, %s98
    %p102 = pneg %p96
    %p103 = scmp.eq.s32.totalorder %s13, 31
    %p104 = por %p102, %p103
    %p105 = scmp.ne.s32.totalorder %s97, %s100
    %p106 = scmp.eq.s32.totalorder %s13, 0
    %p107 = por %p105, %p106
    %p108 = scmp.ne.s32.totalorder %s97, %s100
    %p109 = scmp.eq.s32.totalorder %s18, 31
    %p110 = por %p108, %p109
    %p111 = scmp.ne.s32.totalorder %s100, %s101
    %p112 = scmp.eq.s32.totalorder %s18, 0
    %p113 = por %p111, %p112
    %p114 = scmp.ne.s32.totalorder %s100, %s101
    %p115 = scmp.eq.s32.totalorder %s19, 31
    %p116 = por %p114, %p115
    %p118 = scmp.ne.s32.totalorder %s101, %s117
    %p119 = scmp.eq.s32.totalorder %s19, 0
    %p120 = por %p118, %p119
    %s122 = sadd.s32 %s121, 1
    %p125 = scmp.eq.s32.totalorder %s13, 31
    %p126 = scmp.ne.s32.totalorder %s121, %s123
    %p127 = scmp.eq.s32.totalorder %s13, 0
    %p128 = por %p126, %p127
    %p129 = scmp.ne.s32.totalorder %s121, %s123
    %p130 = scmp.eq.s32.totalorder %s18, 31
    %p131 = por %p129, %p130
    %p132 = scmp.ne.s32.totalorder %s123, %s124
    %p133 = scmp.eq.s32.totalorder %s18, 0
    %p134 = por %p132, %p133
    %p135 = scmp.ne.s32.totalorder %s123, %s124
    %p136 = scmp.eq.s32.totalorder %s19, 31
    %p137 = por %p135, %p136
    %p139 = scmp.ne.s32.totalorder %s124, %s138
    %p140 = scmp.eq.s32.totalorder %s19, 0
    %p141 = por %p139, %p140
    %s143 = sadd.s32 %s142, 1
    %p146 = scmp.eq.s32.totalorder %s13, 31
    %p147 = scmp.ne.s32.totalorder %s142, %s144
    %p148 = scmp.eq.s32.totalorder %s13, 0
    %p149 = por %p147, %p148
    %p150 = scmp.ne.s32.totalorder %s142, %s144
    %p151 = scmp.eq.s32.totalorder %s18, 31
    %p152 = por %p150, %p151
    %p153 = scmp.ne.s32.totalorder %s144, %s145
    %p154 = scmp.eq.s32.totalorder %s18, 0
    %p155 = por %p153, %p154
    %p156 = scmp.ne.s32.totalorder %s144, %s145
    %p157 = scmp.eq.s32.totalorder %s19, 31
    %p158 = por %p156, %p157
    %p160 = scmp.ne.s32.totalorder %s145, %s159
    %p161 = scmp.eq.s32.totalorder %s19, 0
    %p162 = por %p160, %p161
    %s163 = ssub.s32 %s20, %s32
    %s164 = ssub.s32 %s21, %s28
    %s165 = sor.u32 %s163, %s164
    %p166 = scmp.eq.s32.totalorder %s165, 0
    %s168 = sadd.s32 %s167, 1
    %s169 = scalar_select %p166, %s167, %s168
    %p172 = pneg %p166
    %p173 = scmp.eq.s32.totalorder %s13, 31
    %p174 = por %p172, %p173
    %p175 = scmp.ne.s32.totalorder %s167, %s170
    %p176 = scmp.eq.s32.totalorder %s13, 0
    %p177 = por %p175, %p176
    %p178 = scmp.ne.s32.totalorder %s167, %s170
    %p179 = scmp.eq.s32.totalorder %s18, 31
    %p180 = por %p178, %p179
    %p181 = scmp.ne.s32.totalorder %s170, %s171
    %p182 = scmp.eq.s32.totalorder %s18, 0
    %p183 = por %p181, %p182
    %p184 = scmp.ne.s32.totalorder %s170, %s171
    %p185 = scmp.eq.s32.totalorder %s19, 31
    %p186 = por %p184, %p185
    %p188 = scmp.ne.s32.totalorder %s171, %s187
    %p189 = scmp.eq.s32.totalorder %s19, 0
    %p190 = por %p188, %p189
    %s191 = ssub.s32 %s20, %s32
    %s192 = ssub.s32 %s21, %s28
    %s193 = sor.u32 %s191, %s192
    %p194 = scmp.eq.s32.totalorder %s193, 0
    %s196 = sadd.s32 %s195, 1
    %s197 = scalar_select %p194, %s195, %s196
    %p200 = pneg %p194
    %p201 = scmp.eq.s32.totalorder %s13, 31
    %p202 = por %p200, %p201
    %p203 = scmp.ne.s32.totalorder %s195, %s198
    %p204 = scmp.eq.s32.totalorder %s13, 0
    %p205 = por %p203, %p204
    %p206 = scmp.ne.s32.totalorder %s195, %s198
    %p207 = scmp.eq.s32.totalorder %s18, 31
    %p208 = por %p206, %p207
    %p209 = scmp.ne.s32.totalorder %s198, %s199
    %p210 = scmp.eq.s32.totalorder %s18, 0
    %p211 = por %p209, %p210
    %p212 = scmp.ne.s32.totalorder %s198, %s199
    %p213 = scmp.eq.s32.totalorder %s19, 31
    %p214 = por %p212, %p213
    %p216 = scmp.ne.s32.totalorder %s199, %s215
    %p217 = scmp.eq.s32.totalorder %s19, 0
    %p218 = por %p216, %p217
    %p219 = scmp.le.s32.totalorder 1, %s13
    %p220 = scmp.lt.s32.totalorder %s13, 33
    %p221 = pnand %p219, %p220
    %p222 = pneg %p221
    // Predicated region
    $region9: #{recurrent_residual_block_tl.11} parent=5 // pred_check
      _
    $region10: #{recurrent_residual_block_tl.11} parent=5 // pred_check_branch
      %224 = sbr.rel (%p221) target = $region12
    $region11: #{recurrent_residual_block_tl.11} parent=5 // pred_region
      %s225 = ssub.s32 %s13, 1
      // Predicated region
      $region13: #{recurrent_residual_block_tl.11} parent=11 // pred_check
        %p226 = pneg %p134
      $region14: #{recurrent_residual_block_tl.11} parent=11 // pred_check_branch
        %228 = sbr.rel (%p226) target = $region16
      $region15: #{recurrent_residual_block_tl.11} parent=11 // pred_region
        _
      $region16: #{recurrent_residual_block_tl.11} parent=11 // pred_fallthru
        _
      // Predicated region
      $region17: #{recurrent_residual_block_tl.11} parent=11 // pred_check
        %p229 = pneg %p155
      $region18: #{recurrent_residual_block_tl.11} parent=11 // pred_check_branch
        %231 = sbr.rel (%p229) target = $region20
      $region19: #{recurrent_residual_block_tl.11} parent=11 // pred_region
        _
      $region20: #{recurrent_residual_block_tl.11} parent=11 // pred_fallthru
        _
    $region12: #{recurrent_residual_block_tl.11} parent=5 // pred_fallthru
      _
    %p232 = scmp.lt.s32.totalorder %s13, 32
    // Predicated region
    $region21: #{recurrent_residual_block_tl.11} parent=5 // pred_check
      %p233 = pneg %p232
    $region22: #{recurrent_residual_block_tl.11} parent=5 // pred_check_branch
      %235 = sbr.rel (%p233) target = $region24
    $region23: #{recurrent_residual_block_tl.11} parent=5 // pred_region
      // Predicated region
      $region25: #{recurrent_residual_block_tl.11} parent=23 // pred_check
        %p236 = pneg %p47
      $region26: #{recurrent_residual_block_tl.11} parent=23 // pred_check_branch
        %238 = sbr.rel (%p236) target = $region28
      $region27: #{recurrent_residual_block_tl.11} parent=23 // pred_region
        %p239 = scmp.lt.s32.totalorder %s20, 1
        %s240 = scalar_select %p239, %s20, 1
        %p241 = scmp.lt.s32.totalorder %s21, 17
        %s242 = scalar_select %p241, %s21, 17
        %s243 = smul.addr %s242, 3
        %s244 = smul.addr %s240, 54
        %s245 = sadd.s32 %s243, %s244
        %s246 = smul.addr %s245, 8
        %s247 = scalar_lea.vmem %s0, %s246
      $region28: #{recurrent_residual_block_tl.11} parent=23 // pred_fallthru
        _
      // Predicated region
      $region29: #{recurrent_residual_block_tl.11} parent=23 // pred_check
        %p248 = pneg %p77
      $region30: #{recurrent_residual_block_tl.11} parent=23 // pred_check_branch
        %250 = sbr.rel (%p248) target = $region32
      $region31: #{recurrent_residual_block_tl.11} parent=23 // pred_region
        %s251 = sadd.s32 %s21, 1
        %p252 = scmp.lt.s32.totalorder %s20, 1
        %s253 = scalar_select %p252, %s20, 1
        %p254 = scmp.lt.s32.totalorder %s251, 17
        %s255 = scalar_select %p254, %s251, 17
        %s256 = smul.addr %s255, 3
        %s257 = smul.addr %s253, 54
        %s258 = sadd.s32 %s256, %s257
        %s259 = smul.addr %s258, 8
        %s260 = scalar_lea.vmem %s1, %s259
        %s261 = sadd.s32 %s21, 1
      $region32: #{recurrent_residual_block_tl.11} parent=23 // pred_fallthru
        _
      // Predicated region
      $region33: #{recurrent_residual_block_tl.11} parent=23 // pred_check
        %p262 = pneg %p107
      $region34: #{recurrent_residual_block_tl.11} parent=23 // pred_check_branch
        %264 = sbr.rel (%p262) target = $region36
      $region35: #{recurrent_residual_block_tl.11} parent=23 // pred_region
        %s265 = sadd.s32 %s21, 2
        %p266 = scmp.lt.s32.totalorder %s20, 1
        %s267 = scalar_select %p266, %s20, 1
        %p268 = scmp.lt.s32.totalorder %s265, 17
        %s269 = scalar_select %p268, %s265, 17
        %s270 = smul.addr %s269, 3
        %s271 = smul.addr %s267, 54
        %s272 = sadd.s32 %s270, %s271
        %s273 = smul.addr %s272, 8
        %s274 = scalar_lea.vmem %s2, %s273
        %s275 = sadd.s32 %s21, 2
      $region36: #{recurrent_residual_block_tl.11} parent=23 // pred_fallthru
        _
    $region24: #{recurrent_residual_block_tl.11} parent=5 // pred_fallthru
      _
    %p276 = scmp.le.s32.totalorder 1, %s13
    %p277 = scmp.lt.s32.totalorder %s13, 33
    %p278 = pnand %p276, %p277
    %p279 = pneg %p278
    // Predicated region
    $region37: #{recurrent_residual_block_tl.11} parent=5 // pred_check
      _
    $region38: #{recurrent_residual_block_tl.11} parent=5 // pred_check_branch
      %281 = sbr.rel (%p278) target = $region40
    $region39: #{recurrent_residual_block_tl.11} parent=5 // pred_region
      %s282 = ssub.s32 %s13, 1
      %p283 = scmp.lt.s32.totalorder %s22, 1
      %s284 = scalar_select %p283, %s22, 1
      %p285 = scmp.lt.s32.totalorder %s23, 17
      %s286 = scalar_select %p285, %s23, 17
      %s287 = smul.addr %s286, 3
      %s288 = smul.addr %s284, 54
      %s289 = sadd.s32 %s287, %s288
      %s290 = smul.addr %s289, 8
      %s291 = scalar_lea.vmem %s0, %s290
      %p292 = pneg %p53
      %p293 = pneg %p50
      %s294 = sadd.s32 %s23, 1
      %p295 = scmp.lt.s32.totalorder %s22, 1
      %s296 = scalar_select %p295, %s22, 1
      %p297 = scmp.lt.s32.totalorder %s294, 17
      %s298 = scalar_select %p297, %s294, 17
      %s299 = smul.addr %s298, 3
      %s300 = smul.addr %s296, 54
      %s301 = sadd.s32 %s299, %s300
      %s302 = smul.addr %s301, 8
      %s303 = scalar_lea.vmem %s1, %s302
      %p304 = pneg %p83
      %p305 = pneg %p80
      %s306 = sadd.s32 %s23, 2
      %p307 = scmp.lt.s32.totalorder %s22, 1
      %s308 = scalar_select %p307, %s22, 1
      %p309 = scmp.lt.s32.totalorder %s306, 17
      %s310 = scalar_select %p309, %s306, 17
      %s311 = smul.addr %s310, 3
      %s312 = smul.addr %s308, 54
      %s313 = sadd.s32 %s311, %s312
      %s314 = smul.addr %s313, 8
      %s315 = scalar_lea.vmem %s2, %s314
      %p316 = pneg %p113
      %p317 = pneg %p110
      %p318 = pneg %p134
      %p319 = pneg %p131
      %p320 = pneg %p155
      %p321 = pneg %p152
      %p322 = pneg %p183
      %p323 = pneg %p180
      %p324 = scmp.lt.s32.totalorder %s22, 1
      %s325 = scalar_select %p324, %s22, 1
      %p326 = scmp.lt.s32.totalorder %s23, 15
      %s327 = scalar_select %p326, %s23, 15
      %s328 = smul.addr %s327, 2
      %s329 = smul.addr %s325, 32
      %s330 = sadd.s32 %s328, %s329
      %s331 = smul.addr %s330, 8
      %s332 = scalar_lea.vmem %s5, %s331
      %p333 = pneg %p211
      %p334 = pneg %p208
      %p335 = scmp.lt.s32.totalorder %s22, 1
      %s336 = scalar_select %p335, %s22, 1
      %p337 = scmp.lt.s32.totalorder %s23, 15
      %s338 = scalar_select %p337, %s23, 15
      %s339 = smul.addr %s336, 16
      %s340 = sadd.s32 %s338, %s339
      %s341 = smul.addr %s340, 2
      %s342 = scalar_lea.vmem %s6, %s341
      %p343 = scmp.lt.s32.totalorder %s22, 1
      %s344 = scalar_select %p343, %s22, 1
      %p345 = scmp.lt.s32.totalorder %s23, 17
      %s346 = scalar_select %p345, %s23, 17
      %s347 = smul.addr %s346, 3
      %s348 = smul.addr %s344, 54
      %s349 = sadd.s32 %s347, %s348
      %s350 = smul.addr %s349, 8
      %s351 = scalar_lea.vmem %s0, %s350
      %s352 = sadd.s32 %s23, 1
      %p353 = scmp.lt.s32.totalorder %s22, 1
      %s354 = scalar_select %p353, %s22, 1
      %p355 = scmp.lt.s32.totalorder %s352, 17
      %s356 = scalar_select %p355, %s352, 17
      %s357 = smul.addr %s356, 3
      %s358 = smul.addr %s354, 54
      %s359 = sadd.s32 %s357, %s358
      %s360 = smul.addr %s359, 8
      %s361 = scalar_lea.vmem %s1, %s360
      %s362 = sadd.s32 %s23, 1
      %s363 = sadd.s32 %s23, 2
      %p364 = scmp.lt.s32.totalorder %s22, 1
      %s365 = scalar_select %p364, %s22, 1
      %p366 = scmp.lt.s32.totalorder %s363, 17
      %s367 = scalar_select %p366, %s363, 17
      %s368 = smul.addr %s367, 3
      %s369 = smul.addr %s365, 54
      %s370 = sadd.s32 %s368, %s369
      %s371 = smul.addr %s370, 8
      %s372 = scalar_lea.vmem %s2, %s371
      %s373 = sadd.s32 %s23, 2
      %p374 = scmp.lt.s32.totalorder %s22, 1
      %s375 = scalar_select %p374, %s22, 1
      %p376 = scmp.lt.s32.totalorder %s23, 15
      %s377 = scalar_select %p376, %s23, 15
      %s378 = smul.addr %s377, 2
      %s379 = smul.addr %s375, 32
      %s380 = sadd.s32 %s378, %s379
      %s381 = smul.addr %s380, 8
      %s382 = scalar_lea.vmem %s5, %s381
      %p383 = scmp.lt.s32.totalorder %s22, 1
      %s384 = scalar_select %p383, %s22, 1
      %p385 = scmp.lt.s32.totalorder %s23, 15
      %s386 = scalar_select %p385, %s23, 15
      %s387 = smul.addr %s384, 16
      %s388 = sadd.s32 %s386, %s387
      %s389 = smul.addr %s388, 2
      %s390 = scalar_lea.vmem %s6, %s389
      %v392 = vld [vmem:[%s351] sm:$0xff]
      %v393 = vld [vmem:[%s351 + $0x8] sm:$0xff]
      %v394 = vld [vmem:[%s351 + $0x1] sm:$0xff]
      %v395 = vld [vmem:[%s351 + $0x9] sm:$0xff]
      %v396 = vld [vmem:[%s351 + $0x2] sm:$0xff]
      %v397 = vld [vmem:[%s351 + $0xa] sm:$0xff]
      %v398 = vld [vmem:[%s361] sm:$0xff]
      %v399 = vld [vmem:[%s361 + $0x8] sm:$0xff]
      %v400 = vld [vmem:[%s361 + $0x1] sm:$0xff]
      %v401 = vld [vmem:[%s361 + $0x9] sm:$0xff]
      %v402 = vld [vmem:[%s361 + $0x2] sm:$0xff]
      %v403 = vld [vmem:[%s361 + $0xa] sm:$0xff]
      %v404 = vld [vmem:[%s372] sm:$0xff]
      %v405 = vld [vmem:[%s372 + $0x8] sm:$0xff]
      %v406 = vld [vmem:[%s372 + $0x1] sm:$0xff]
      %v407 = vld [vmem:[%s372 + $0x9] sm:$0xff]
      %v408 = vld [vmem:[%s372 + $0x2] sm:$0xff]
      %v409 = vld [vmem:[%s372 + $0xa] sm:$0xff]
      %412 = vrot.lane.b32.xlu0 %v394, 32
      %v413 = vpop.permute.xlu0 %412
      %414 = vrot.lane.b32.xlu0 %v395, 32
      %v415 = vpop.permute.xlu0 %414
      %420 = vrot.lane.b32.xlu0 %v396, 64
      %v421 = vpop.permute.xlu0 %420
      %422 = vrot.lane.b32.xlu0 %v397, 64
      %v423 = vpop.permute.xlu0 %422
      %428 = vrot.lane.b32.xlu0 %v398, 96
      %v429 = vpop.permute.xlu0 %428
      %430 = vrot.lane.b32.xlu0 %v399, 96
      %v431 = vpop.permute.xlu0 %430
      %436 = vrot.lane.b32.xlu0 %v402, 32
      %v437 = vpop.permute.xlu0 %436
      %438 = vrot.lane.b32.xlu0 %v403, 32
      %v439 = vpop.permute.xlu0 %438
      %444 = vrot.lane.b32.xlu0 %v404, 64
      %v445 = vpop.permute.xlu0 %444
      %446 = vrot.lane.b32.xlu0 %v405, 64
      %v447 = vpop.permute.xlu0 %446
      %452 = vrot.lane.b32.xlu0 %v406, 96
      %v453 = vpop.permute.xlu0 %452
      %454 = vrot.lane.b32.xlu0 %v407, 96
      %v455 = vpop.permute.xlu0 %454
      %vm458 = vcmask 261120
      %v459 = vsel %vm458, %v392, %v413
      %v460 = vsel %vm458, %v393, %v415
      %vm461 = vcmask 523264
      %v462 = vsel %vm461, %v459, %v421
      %v463 = vsel %vm461, %v460, %v423
      %vm464 = vcmask 785408
      %v465 = vsel %vm464, %v462, %v429
      %v466 = vsel %vm464, %v463, %v431
      %v467 = vsel %vm458, %v400, %v437
      %v468 = vsel %vm458, %v401, %v439
      %v469 = vsel %vm461, %v467, %v445
      %v470 = vsel %vm461, %v468, %v447
      %v471 = vsel %vm464, %v469, %v453
      %v472 = vsel %vm464, %v470, %v455
      %v473 = vpack.c.bf16 %v466, %v465
      %v474 = vpack.c.bf16 %v472, %v471
      %v475 = vpack.c.bf16 %v409, %v408
      %v476 = vld [vmem:[%s3] sm:$0xf]
      %v477 = vld [vmem:[%s3 + $0x4] sm:$0xf]
      %v478 = vld [vmem:[%s3 + $0x8] sm:$0xf]
      %v479 = vld [vmem:[%s3 + $0xc] sm:$0xf]
      %v480 = vld [vmem:[%s3 + $0x10] sm:$0xf]
      %v481 = vld [vmem:[%s3 + $0x14] sm:$0xf]
      %v482 = vld [vmem:[%s3 + $0x18] sm:$0xf]
      %v483 = vld [vmem:[%s3 + $0x1c] sm:$0xf]
      %v484 = vld [vmem:[%s3 + $0x20] sm:$0xf]
      %v485 = vld [vmem:[%s3 + $0x24] sm:$0xf]
      %v486 = vld [vmem:[%s3 + $0x28] sm:$0xf]
      %v487 = vld [vmem:[%s3 + $0x2c] sm:$0xf]
      %v488 = vld [vmem:[%s3 + $0x30] sm:$0xf]
      %v489 = vld [vmem:[%s3 + $0x34] sm:$0xf]
      %v490 = vld [vmem:[%s3 + $0x38] sm:$0xf]
      %v491 = vld [vmem:[%s3 + $0x3c] sm:$0xf]
      %v492 = vld [vmem:[%s3 + $0x40] sm:$0xf]
      %v493 = vld [vmem:[%s3 + $0x44] sm:$0xf]
      %v494 = vld [vmem:[%s3 + $0x48] sm:$0xf]
      %v495 = vld [vmem:[%s3 + $0x4c] sm:$0xf]
      %v496 = vld [vmem:[%s3 + $0x50] sm:$0xf]
      %v497 = vld [vmem:[%s3 + $0x54] sm:$0xf]
      %v498 = vld [vmem:[%s3 + $0x58] sm:$0xf]
      %v499 = vld [vmem:[%s3 + $0x5c] sm:$0xf]
      %v500 = vld [vmem:[%s3 + $0x60] sm:$0xf]
      %v501 = vld [vmem:[%s3 + $0x64] sm:$0xf]
      %v502 = vld [vmem:[%s3 + $0x68] sm:$0xf]
      %v503 = vld [vmem:[%s3 + $0x6c] sm:$0xf]
      %v504 = vld [vmem:[%s3 + $0x70] sm:$0xf]
      %v505 = vld [vmem:[%s3 + $0x74] sm:$0xf]
      %v506 = vld [vmem:[%s3 + $0x78] sm:$0xf]
      %v507 = vld [vmem:[%s3 + $0x7c] sm:$0xf]
      %v508 = vld [vmem:[%s3 + $0x80] sm:$0xf]
      %v509 = vld [vmem:[%s3 + $0x84] sm:$0xf]
      %v510 = vld [vmem:[%s3 + $0x88] sm:$0xf]
      %v511 = vld [vmem:[%s3 + $0x8c] sm:$0xf]
      %v512 = vld [vmem:[%s4] sm:$0x1]
      %v514 = vlaneseq
      %v515 = vshrl.u32 %v514, 7
      %v516 = vsub.s32 0, %v515
      %v517 = vrot.slane %v512, %v516
      %v555 = vunpack.c.l.b16 %v476
      %v556 = vunpack.c.l.b16 %v477
      %v557 = vunpack.c.l.b16 %v478
      %v558 = vunpack.c.l.b16 %v479
      %v559 = vunpack.c.l.b16 %v480
      %v560 = vunpack.c.l.b16 %v481
      %v561 = vunpack.c.l.b16 %v482
      %v562 = vunpack.c.l.b16 %v483
      %v563 = vunpack.c.l.b16 %v484
      %v564 = vunpack.c.l.b16 %v485
      %v565 = vunpack.c.l.b16 %v486
      %v566 = vunpack.c.l.b16 %v487
      %v567 = vunpack.c.l.b16 %v488
      %v568 = vunpack.c.l.b16 %v489
      %v569 = vunpack.c.l.b16 %v490
      %v570 = vunpack.c.l.b16 %v491
      %v571 = vunpack.c.l.b16 %v492
      %v572 = vunpack.c.l.b16 %v493
      %v573 = vunpack.c.l.b16 %v494
      %v574 = vunpack.c.l.b16 %v495
      %v575 = vunpack.c.l.b16 %v496
      %v576 = vunpack.c.l.b16 %v497
      %v577 = vunpack.c.l.b16 %v498
      %v578 = vunpack.c.l.b16 %v499
      %v579 = vunpack.c.l.b16 %v500
      %v580 = vunpack.c.l.b16 %v501
      %v581 = vunpack.c.l.b16 %v502
      %v582 = vunpack.c.l.b16 %v503
      %v583 = vunpack.c.l.b16 %v504
      %v584 = vunpack.c.l.b16 %v505
      %v585 = vunpack.c.l.b16 %v506
      %v586 = vunpack.c.l.b16 %v507
      %v587 = vunpack.c.l.b16 %v508
      %v588 = vunpack.c.l.b16 %v509
      %v589 = vunpack.c.l.b16 %v510
      %v590 = vunpack.c.l.b16 %v511
      %v591 = vpack.c.b16 %v556, %v555
      %v592 = vpack.c.b16 %v558, %v557
      %v593 = vpack.c.b16 %v560, %v559
      %v594 = vpack.c.b16 %v562, %v561
      %v595 = vpack.c.b16 %v564, %v563
      %v596 = vpack.c.b16 %v566, %v565
      %v597 = vpack.c.b16 %v568, %v567
      %v598 = vpack.c.b16 %v570, %v569
      %v599 = vpack.c.b16 %v572, %v571
      %v600 = vpack.c.b16 %v574, %v573
      %v601 = vpack.c.b16 %v576, %v575
      %v602 = vpack.c.b16 %v578, %v577
      %v603 = vpack.c.b16 %v580, %v579
      %v604 = vpack.c.b16 %v582, %v581
      %v605 = vpack.c.b16 %v584, %v583
      %v606 = vpack.c.b16 %v586, %v585
      %v607 = vpack.c.b16 %v588, %v587
      %v608 = vpack.c.b16 %v590, %v589
      %v628 = vsel %vm458, %v475, 0
      %630 = vmatprep.subr.bf16.mxu0 0
      %631 = vmatpush1.bf16.msra.mxu0 %v598
      %632 = vmatprep.subr.bf16.mxu0 0
      %633 = vmatpush1.bf16.msra.mxu0 %v597
      %634 = vmatprep.subr.bf16.mxu0 0
      %635 = vmatpush1.bf16.msra.mxu0 %v596
      %636 = vmatprep.subr.bf16.mxu0 0
      %637 = vmatpush1.bf16.msra.mxu0 %v595
      %638 = vmatprep.subr.bf16.mxu0 0
      %639 = vmatpush1.bf16.msra.mxu0 %v594
      %640 = vmatprep.subr.bf16.mxu0 0
      %641 = vmatpush1.bf16.msra.mxu0 %v593
      %642 = vmatprep.subr.bf16.mxu0 0
      %643 = vmatpush1.bf16.msra.mxu0 %v592
      %644 = vmatprep.subr.bf16.mxu0 0
      %645 = vmatpush1.bf16.msra.mxu0 %v591
      %646 = vmatprep.subr.bf16.mxu0 0
      %647 = vmatpush2.bf16.msra.mxu0 %v606
      %648 = vmatprep.subr.bf16.mxu0 0
      %649 = vmatpush2.bf16.msra.mxu0 %v605
      %650 = vmatprep.subr.bf16.mxu0 0
      %651 = vmatpush2.bf16.msra.mxu0 %v604
      %652 = vmatprep.subr.bf16.mxu0 0
      %653 = vmatpush2.bf16.msra.mxu0 %v603
      %654 = vmatprep.subr.bf16.mxu0 0
      %655 = vmatpush2.bf16.msra.mxu0 %v602
      %656 = vmatprep.subr.bf16.mxu0 0
      %657 = vmatpush2.bf16.msra.mxu0 %v601
      %658 = vmatprep.subr.bf16.mxu0 0
      %659 = vmatpush2.bf16.msra.mxu0 %v600
      %660 = vmatprep.subr.bf16.mxu0 0
      %661 = vmatpush2.bf16.msra.mxu0 %v599
      %662 = vmatprep.mubr.bf16.mxu0 %v474
      %663 = vmatmul.mubr.bf16.gmra.mxu0 %v473
      %v664 = vpop.f32.mrf.mxu0
      %v665 = vadd.f32 %v517, %v664
      %v666 = vpop.f32.mrf.mxu0
      %v667 = vpop.f32.mrf.mxu0
      %v668 = vadd.f32 %v517, %v667
      %v669 = vpop.f32.mrf.mxu0
      %670 = vdwg.mxu0
      %671 = vmatprep.subr.bf16.mxu0 0
      %672 = vmatpush1.bf16.msra.mxu0 0
      %673 = vmatprep.subr.bf16.mxu0 0
      %674 = vmatpush1.bf16.msra.mxu0 0
      %675 = vmatprep.subr.bf16.mxu0 0
      %676 = vmatpush1.bf16.msra.mxu0 0
      %677 = vmatprep.subr.bf16.mxu0 0
      %678 = vmatpush1.bf16.msra.mxu0 0
      %679 = vmatprep.subr.bf16.mxu0 0
      %680 = vmatpush1.bf16.msra.mxu0 0
      %681 = vmatprep.subr.bf16.mxu0 0
      %682 = vmatpush1.bf16.msra.mxu0 0
      %683 = vmatprep.subr.bf16.mxu0 0
      %684 = vmatpush1.bf16.msra.mxu0 %v608
      %685 = vmatprep.subr.bf16.mxu0 0
      %686 = vmatpush1.bf16.msra.mxu0 %v607
      %687 = vmatprep.subr.bf16.mxu0 0
      %688 = vmatpush2.bf16.msra.mxu0 0
      %689 = vmatprep.subr.bf16.mxu0 0
      %690 = vmatpush2.bf16.msra.mxu0 0
      %691 = vmatprep.subr.bf16.mxu0 0
      %692 = vmatpush2.bf16.msra.mxu0 0
      %693 = vmatprep.subr.bf16.mxu0 0
      %694 = vmatpush2.bf16.msra.mxu0 0
      %695 = vmatprep.subr.bf16.mxu0 0
      %696 = vmatpush2.bf16.msra.mxu0 0
      %697 = vmatprep.subr.bf16.mxu0 0
      %698 = vmatpush2.bf16.msra.mxu0 0
      %699 = vmatprep.subr.bf16.mxu0 0
      %700 = vmatpush2.bf16.msra.mxu0 0
      %701 = vmatprep.subr.bf16.mxu0 0
      %702 = vmatpush2.bf16.msra.mxu0 0
      %703 = vmatprep.mubr.bf16.mxu0 0
      %704 = vmatmul.mubr.bf16.gmra.mxu0 %v628
      %v705 = vpop.f32.mrf.mxu0
      %v706 = vadd.f32 %v665, %v705
      %v707 = vpop.f32.mrf.mxu0
      %v708 = vpop.f32.mrf.mxu0
      %v709 = vadd.f32 %v668, %v708
      %v710 = vpop.f32.mrf.mxu0
      %711 = vdwg.mxu0
      %712 = vst.msk [vmem:[%s382] sm:$0xff] %vm458, %v706
      %713 = vst.msk [vmem:[%s382 + $0x8] sm:$0xff] %vm458, %v709
      %v714 = vsel %vm458, %v706, 0.0
      %v715 = vsel %vm458, %v709, 0.0
      %v716 = vadd.f32 %v714, %v715
      %v717 = vrot.slane %v716, 4
      %v718 = vadd.f32 %v716, %v717
      %v719 = vrot.slane %v718, 2
      %v720 = vadd.f32 %v718, %v719
      %v721 = vrot.slane %v720, 1
      %v722 = vadd.f32 %v720, %v721
      %vm723 = vcmask 253952
      %724 = vst.msk [vmem:[%s390] sm:$0x1] %vm723, %v722
      %v725 = vmul.f32 %v706, %v706
      %v726 = vmul.f32 %v709, %v709
      %v727 = vsel %vm458, %v725, 0.0
      %v728 = vsel %vm458, %v726, 0.0
      %v729 = vadd.f32 %v727, %v728
      %v730 = vrot.slane %v729, 4
      %v731 = vadd.f32 %v729, %v730
      %v732 = vrot.slane %v731, 2
      %v733 = vadd.f32 %v731, %v732
      %v734 = vrot.slane %v733, 1
      %v735 = vadd.f32 %v733, %v734
      %736 = vst.msk [vmem:[%s390 + $0x1] sm:$0x1] %vm723, %v735
      %p737 = scmp.lt.s32.totalorder %s22, 1
      %s738 = scalar_select %p737, %s22, 1
      %p739 = scmp.lt.s32.totalorder %s23, 15
      %s740 = scalar_select %p739, %s23, 15
      %s741 = smul.addr %s740, 2
      %s742 = smul.addr %s738, 32
      %s743 = sadd.s32 %s741, %s742
      %s744 = smul.addr %s743, 8
      %s745 = scalar_lea.vmem %s5, %s744
      %p746 = scmp.lt.s32.totalorder %s22, 1
      %s747 = scalar_select %p746, %s22, 1
      %p748 = scmp.lt.s32.totalorder %s23, 15
      %s749 = scalar_select %p748, %s23, 15
      %s750 = smul.addr %s747, 16
      %s751 = sadd.s32 %s749, %s750
      %s752 = smul.addr %s751, 2
      %s753 = scalar_lea.vmem %s6, %s752
      // Predicated region
      $region41: #{recurrent_residual_block_tl.11} parent=39 // pred_check
        %p754 = pneg %p180
      $region42: #{recurrent_residual_block_tl.11} parent=39 // pred_check_branch
        %756 = sbr.rel (%p754) target = $region44
      $region43: #{recurrent_residual_block_tl.11} parent=39 // pred_region
        _
      $region44: #{recurrent_residual_block_tl.11} parent=39 // pred_fallthru
        _
      // Predicated region
      $region45: #{recurrent_residual_block_tl.11} parent=39 // pred_check
        %p757 = pneg %p208
      $region46: #{recurrent_residual_block_tl.11} parent=39 // pred_check_branch
        %759 = sbr.rel (%p757) target = $region48
      $region47: #{recurrent_residual_block_tl.11} parent=39 // pred_region
        _
      $region48: #{recurrent_residual_block_tl.11} parent=39 // pred_fallthru
        _
    $region40: #{recurrent_residual_block_tl.11} parent=5 // pred_fallthru
      _
    %p760 = scmp.le.s32.totalorder 2, %s13
    // Predicated region
    $region49: #{recurrent_residual_block_tl.11} parent=5 // pred_check
      %p761 = pneg %p760
    $region50: #{recurrent_residual_block_tl.11} parent=5 // pred_check_branch
      %763 = sbr.rel (%p761) target = $region52
    $region51: #{recurrent_residual_block_tl.11} parent=5 // pred_region
      %s764 = ssub.s32 %s13, 2
      // Predicated region
      $region53: #{recurrent_residual_block_tl.11} parent=51 // pred_check
        %p765 = pneg %p186
      $region54: #{recurrent_residual_block_tl.11} parent=51 // pred_check_branch
        %767 = sbr.rel (%p765) target = $region56
      $region55: #{recurrent_residual_block_tl.11} parent=51 // pred_region
        %p768 = scmp.lt.s32.totalorder %s24, 1
        %s769 = scalar_select %p768, %s24, 1
        %p770 = scmp.lt.s32.totalorder %s25, 15
        %s771 = scalar_select %p770, %s25, 15
        %s772 = smul.addr %s771, 2
        %s773 = smul.addr %s769, 32
        %s774 = sadd.s32 %s772, %s773
        %s775 = smul.addr %s774, 8
        %s776 = scalar_lea.vmem %s5, %s775
      $region56: #{recurrent_residual_block_tl.11} parent=51 // pred_fallthru
        _
      // Predicated region
      $region57: #{recurrent_residual_block_tl.11} parent=51 // pred_check
        %p777 = pneg %p214
      $region58: #{recurrent_residual_block_tl.11} parent=51 // pred_check_branch
        %779 = sbr.rel (%p777) target = $region60
      $region59: #{recurrent_residual_block_tl.11} parent=51 // pred_region
        %p780 = scmp.lt.s32.totalorder %s24, 1
        %s781 = scalar_select %p780, %s24, 1
        %p782 = scmp.lt.s32.totalorder %s25, 15
        %s783 = scalar_select %p782, %s25, 15
        %s784 = smul.addr %s781, 16
        %s785 = sadd.s32 %s783, %s784
        %s786 = smul.addr %s785, 2
        %s787 = scalar_lea.vmem %s6, %s786
      $region60: #{recurrent_residual_block_tl.11} parent=51 // pred_fallthru
        _
    $region52: #{recurrent_residual_block_tl.11} parent=5 // pred_fallthru
      _
  $region6: #{recurrent_residual_block_tl.11} parent=0 // loop_footer
    %s17 = sadd.s32 1, %s13
  $region7: #{recurrent_residual_block_tl.11} parent=0 // loop_footer_branch
    %12 = sbr.rel target = $region3
  $region8: #{recurrent_residual_block_tl.11} parent=0 // loop_exit
    _

// kernel: recurrent_residual_block_tl.12
$region0: #{recurrent_residual_block_tl.12}
  #allocation0 [shape = 'u32[]', space=smem, size = 0x4, offset = 0x4, fixed_abs, tag = 'smem constant byte address 0x4 - core index']
  #allocation1 [shape = 'u32[144,128]{1,0:T(1,128)}', space=vmem, size = 0x12000, scoped, tag = 'internal scratch']
  %s0 = inlined_call_operand.vmem [shape: f32[512,32], index: 0, kind: input, shape index: {}]
  %s1 = inlined_call_operand.vmem [shape: f32[512,32], index: 1, kind: input, shape index: {}]
  %s2 = inlined_call_operand.vmem [shape: bf16[32,32], index: 2, kind: input, shape index: {}]
  %s3 = inlined_call_operand.vmem [shape: bf16[32,32], index: 3, kind: input, shape index: {}]
  %s4 = inlined_call_operand.vmem [shape: f32[1,32], index: 4, kind: input, shape index: {}]
  %s5 = inlined_call_operand.vmem [shape: f32[512,32], index: 5, kind: output, shape index: {0}]
  %s6 = inlined_call_operand.vmem [shape: f32[1,2,32], index: 6, kind: output, shape index: {1}]
  %7 = xla_tuple %s5, %s6
  %s8 = sld [smem:[#allocation0]]
  $region38: #{recurrent_residual_block_tl.12} parent=0
    _
  %s10 = ssub.s32 1, %s8
  %s11 = scalar_select 0, %s10, %s8
  // Predicated region
  $region2: #{recurrent_residual_block_tl.12} parent=0 // pred_check
    _
  $region3: #{recurrent_residual_block_tl.12} parent=0 // pred_check_branch
    %13 = sbr.rel (0) target = $region5
  $region4: #{recurrent_residual_block_tl.12} parent=0 // pred_region
    _
  $region5: #{recurrent_residual_block_tl.12} parent=0 // pred_fallthru
    _
  // Predicated region
  $region6: #{recurrent_residual_block_tl.12} parent=0 // pred_check
    _
  $region7: #{recurrent_residual_block_tl.12} parent=0 // pred_check_branch
    %15 = sbr.rel (0) target = $region9
  $region8: #{recurrent_residual_block_tl.12} parent=0 // pred_region
    _
  $region9: #{recurrent_residual_block_tl.12} parent=0 // pred_fallthru
    _
  // Predicated region
  $region10: #{recurrent_residual_block_tl.12} parent=0 // pred_check
    _
  $region11: #{recurrent_residual_block_tl.12} parent=0 // pred_check_branch
    %17 = sbr.rel (0) target = $region13
  $region12: #{recurrent_residual_block_tl.12} parent=0 // pred_region
    _
  $region13: #{recurrent_residual_block_tl.12} parent=0 // pred_fallthru
    _
  // Predicated region
  $region14: #{recurrent_residual_block_tl.12} parent=0 // pred_check
    _
  $region15: #{recurrent_residual_block_tl.12} parent=0 // pred_check_branch
    %19 = sbr.rel (0) target = $region17
  $region16: #{recurrent_residual_block_tl.12} parent=0 // pred_region
    _
  $region17: #{recurrent_residual_block_tl.12} parent=0 // pred_fallthru
    _
  // Predicated region
  $region18: #{recurrent_residual_block_tl.12} parent=0 // pred_check
    _
  $region19: #{recurrent_residual_block_tl.12} parent=0 // pred_check_branch
    %21 = sbr.rel (0) target = $region21
  $region20: #{recurrent_residual_block_tl.12} parent=0 // pred_region
    _
  $region21: #{recurrent_residual_block_tl.12} parent=0 // pred_fallthru
    _
  %v23 = vld [vmem:[%s0] sm:$0xff]
  %v24 = vld [vmem:[%s0 + $0x8] sm:$0xff]
  %v25 = vld [vmem:[%s0 + $0x10] sm:$0xff]
  %v26 = vld [vmem:[%s0 + $0x18] sm:$0xff]
  %v27 = vld [vmem:[%s0 + $0x20] sm:$0xff]
  %v28 = vld [vmem:[%s0 + $0x28] sm:$0xff]
  %v29 = vld [vmem:[%s0 + $0x30] sm:$0xff]
  %v30 = vld [vmem:[%s0 + $0x38] sm:$0xff]
  %v31 = vld [vmem:[%s0 + $0x40] sm:$0xff]
  %v32 = vld [vmem:[%s0 + $0x48] sm:$0xff]
  %v33 = vld [vmem:[%s0 + $0x50] sm:$0xff]
  %v34 = vld [vmem:[%s0 + $0x58] sm:$0xff]
  %v35 = vld [vmem:[%s0 + $0x60] sm:$0xff]
  %v36 = vld [vmem:[%s0 + $0x68] sm:$0xff]
  %v37 = vld [vmem:[%s0 + $0x70] sm:$0xff]
  %v38 = vld [vmem:[%s0 + $0x78] sm:$0xff]
  %v39 = vld [vmem:[%s0 + $0x80] sm:$0xff]
  %v40 = vld [vmem:[%s0 + $0x88] sm:$0xff]
  %v41 = vld [vmem:[%s0 + $0x90] sm:$0xff]
  %v42 = vld [vmem:[%s0 + $0x98] sm:$0xff]
  %v43 = vld [vmem:[%s0 + $0xa0] sm:$0xff]
  %v44 = vld [vmem:[%s0 + $0xa8] sm:$0xff]
  %v45 = vld [vmem:[%s0 + $0xb0] sm:$0xff]
  %v46 = vld [vmem:[%s0 + $0xb8] sm:$0xff]
  %v47 = vld [vmem:[%s0 + $0xc0] sm:$0xff]
  %v48 = vld [vmem:[%s0 + $0xc8] sm:$0xff]
  %v49 = vld [vmem:[%s0 + $0xd0] sm:$0xff]
  %v50 = vld [vmem:[%s0 + $0xd8] sm:$0xff]
  %v51 = vld [vmem:[%s0 + $0xe0] sm:$0xff]
  %v52 = vld [vmem:[%s0 + $0xe8] sm:$0xff]
  %v53 = vld [vmem:[%s0 + $0xf0] sm:$0xff]
  %v54 = vld [vmem:[%s0 + $0xf8] sm:$0xff]
  %v55 = vld [vmem:[%s0 + $0x100] sm:$0xff]
  %v56 = vld [vmem:[%s0 + $0x108] sm:$0xff]
  %v57 = vld [vmem:[%s0 + $0x110] sm:$0xff]
  %v58 = vld [vmem:[%s0 + $0x118] sm:$0xff]
  %v59 = vld [vmem:[%s0 + $0x120] sm:$0xff]
  %v60 = vld [vmem:[%s0 + $0x128] sm:$0xff]
  %v61 = vld [vmem:[%s0 + $0x130] sm:$0xff]
  %v62 = vld [vmem:[%s0 + $0x138] sm:$0xff]
  %v63 = vld [vmem:[%s0 + $0x140] sm:$0xff]
  %v64 = vld [vmem:[%s0 + $0x148] sm:$0xff]
  %v65 = vld [vmem:[%s0 + $0x150] sm:$0xff]
  %v66 = vld [vmem:[%s0 + $0x158] sm:$0xff]
  %v67 = vld [vmem:[%s0 + $0x160] sm:$0xff]
  %v68 = vld [vmem:[%s0 + $0x168] sm:$0xff]
  %v69 = vld [vmem:[%s0 + $0x170] sm:$0xff]
  %v70 = vld [vmem:[%s0 + $0x178] sm:$0xff]
  %v71 = vld [vmem:[%s0 + $0x180] sm:$0xff]
  %v72 = vld [vmem:[%s0 + $0x188] sm:$0xff]
  %v73 = vld [vmem:[%s0 + $0x190] sm:$0xff]
  %v74 = vld [vmem:[%s0 + $0x198] sm:$0xff]
  %v75 = vld [vmem:[%s0 + $0x1a0] sm:$0xff]
  %v76 = vld [vmem:[%s0 + $0x1a8] sm:$0xff]
  %v77 = vld [vmem:[%s0 + $0x1b0] sm:$0xff]
  %v78 = vld [vmem:[%s0 + $0x1b8] sm:$0xff]
  %v79 = vld [vmem:[%s0 + $0x1c0] sm:$0xff]
  %v80 = vld [vmem:[%s0 + $0x1c8] sm:$0xff]
  %v81 = vld [vmem:[%s0 + $0x1d0] sm:$0xff]
  %v82 = vld [vmem:[%s0 + $0x1d8] sm:$0xff]
  %v83 = vld [vmem:[%s0 + $0x1e0] sm:$0xff]
  %v84 = vld [vmem:[%s0 + $0x1e8] sm:$0xff]
  %v85 = vld [vmem:[%s0 + $0x1f0] sm:$0xff]
  %v86 = vld [vmem:[%s0 + $0x1f8] sm:$0xff]
  %v87 = vpack.c.bf16 %v24, %v23
  %v88 = vpack.c.bf16 %v26, %v25
  %v89 = vpack.c.bf16 %v28, %v27
  %v90 = vpack.c.bf16 %v30, %v29
  %v91 = vpack.c.bf16 %v32, %v31
  %v92 = vpack.c.bf16 %v34, %v33
  %v93 = vpack.c.bf16 %v36, %v35
  %v94 = vpack.c.bf16 %v38, %v37
  %v95 = vpack.c.bf16 %v40, %v39
  %v96 = vpack.c.bf16 %v42, %v41
  %v97 = vpack.c.bf16 %v44, %v43
  %v98 = vpack.c.bf16 %v46, %v45
  %v99 = vpack.c.bf16 %v48, %v47
  %v100 = vpack.c.bf16 %v50, %v49
  %v101 = vpack.c.bf16 %v52, %v51
  %v102 = vpack.c.bf16 %v54, %v53
  %v103 = vpack.c.bf16 %v56, %v55
  %v104 = vpack.c.bf16 %v58, %v57
  %v105 = vpack.c.bf16 %v60, %v59
  %v106 = vpack.c.bf16 %v62, %v61
  %v107 = vpack.c.bf16 %v64, %v63
  %v108 = vpack.c.bf16 %v66, %v65
  %v109 = vpack.c.bf16 %v68, %v67
  %v110 = vpack.c.bf16 %v70, %v69
  %v111 = vpack.c.bf16 %v72, %v71
  %v112 = vpack.c.bf16 %v74, %v73
  %v113 = vpack.c.bf16 %v76, %v75
  %v114 = vpack.c.bf16 %v78, %v77
  %v115 = vpack.c.bf16 %v80, %v79
  %v116 = vpack.c.bf16 %v82, %v81
  %v117 = vpack.c.bf16 %v84, %v83
  %v118 = vpack.c.bf16 %v86, %v85
  %v119 = vld [vmem:[%s2] sm:$0xf]
  %v120 = vld [vmem:[%s2 + $0x4] sm:$0xf]
  %v121 = vld [vmem:[%s2 + $0x8] sm:$0xf]
  %v122 = vld [vmem:[%s2 + $0xc] sm:$0xf]
  %v123 = vld [vmem:[%s1] sm:$0xff]
  %v124 = vld [vmem:[%s1 + $0x8] sm:$0xff]
  %v125 = vld [vmem:[%s1 + $0x10] sm:$0xff]
  %v126 = vld [vmem:[%s1 + $0x18] sm:$0xff]
  %v127 = vld [vmem:[%s1 + $0x20] sm:$0xff]
  %v128 = vld [vmem:[%s1 + $0x28] sm:$0xff]
  %v129 = vld [vmem:[%s1 + $0x30] sm:$0xff]
  %v130 = vld [vmem:[%s1 + $0x38] sm:$0xff]
  %v131 = vld [vmem:[%s1 + $0x40] sm:$0xff]
  %v132 = vld [vmem:[%s1 + $0x48] sm:$0xff]
  %v133 = vld [vmem:[%s1 + $0x50] sm:$0xff]
  %v134 = vld [vmem:[%s1 + $0x58] sm:$0xff]
  %v135 = vld [vmem:[%s1 + $0x60] sm:$0xff]
  %v136 = vld [vmem:[%s1 + $0x68] sm:$0xff]
  %v137 = vld [vmem:[%s1 + $0x70] sm:$0xff]
  %v138 = vld [vmem:[%s1 + $0x78] sm:$0xff]
  %v139 = vld [vmem:[%s1 + $0x80] sm:$0xff]
  %v140 = vld [vmem:[%s1 + $0x88] sm:$0xff]
  %v141 = vld [vmem:[%s1 + $0x90] sm:$0xff]
  %v142 = vld [vmem:[%s1 + $0x98] sm:$0xff]
  %v143 = vld [vmem:[%s1 + $0xa0] sm:$0xff]
  %v144 = vld [vmem:[%s1 + $0xa8] sm:$0xff]
  %v145 = vld [vmem:[%s1 + $0xb0] sm:$0xff]
  %v146 = vld [vmem:[%s1 + $0xb8] sm:$0xff]
  %v147 = vld [vmem:[%s1 + $0xc0] sm:$0xff]
  %v148 = vld [vmem:[%s1 + $0xc8] sm:$0xff]
  %v149 = vld [vmem:[%s1 + $0xd0] sm:$0xff]
  %v150 = vld [vmem:[%s1 + $0xd8] sm:$0xff]
  %v151 = vld [vmem:[%s1 + $0xe0] sm:$0xff]
  %v152 = vld [vmem:[%s1 + $0xe8] sm:$0xff]
  %v153 = vld [vmem:[%s1 + $0xf0] sm:$0xff]
  %v154 = vld [vmem:[%s1 + $0xf8] sm:$0xff]
  %v155 = vld [vmem:[%s1 + $0x100] sm:$0xff]
  %v156 = vld [vmem:[%s1 + $0x108] sm:$0xff]
  %v157 = vld [vmem:[%s1 + $0x110] sm:$0xff]
  %v158 = vld [vmem:[%s1 + $0x118] sm:$0xff]
  %v159 = vld [vmem:[%s1 + $0x120] sm:$0xff]
  %v160 = vld [vmem:[%s1 + $0x128] sm:$0xff]
  %v161 = vld [vmem:[%s1 + $0x130] sm:$0xff]
  %v162 = vld [vmem:[%s1 + $0x138] sm:$0xff]
  %v163 = vld [vmem:[%s1 + $0x140] sm:$0xff]
  %v164 = vld [vmem:[%s1 + $0x148] sm:$0xff]
  %v165 = vld [vmem:[%s1 + $0x150] sm:$0xff]
  %v166 = vld [vmem:[%s1 + $0x158] sm:$0xff]
  %v167 = vld [vmem:[%s1 + $0x160] sm:$0xff]
  %v168 = vld [vmem:[%s1 + $0x168] sm:$0xff]
  %v169 = vld [vmem:[%s1 + $0x170] sm:$0xff]
  %v170 = vld [vmem:[%s1 + $0x178] sm:$0xff]
  %v171 = vld [vmem:[%s1 + $0x180] sm:$0xff]
  %v172 = vld [vmem:[%s1 + $0x188] sm:$0xff]
  %v173 = vld [vmem:[%s1 + $0x190] sm:$0xff]
  %v174 = vld [vmem:[%s1 + $0x198] sm:$0xff]
  %v175 = vld [vmem:[%s1 + $0x1a0] sm:$0xff]
  %v176 = vld [vmem:[%s1 + $0x1a8] sm:$0xff]
  %v177 = vld [vmem:[%s1 + $0x1b0] sm:$0xff]
  %v178 = vld [vmem:[%s1 + $0x1b8] sm:$0xff]
  %v179 = vld [vmem:[%s1 + $0x1c0] sm:$0xff]
  %v180 = vld [vmem:[%s1 + $0x1c8] sm:$0xff]
  %v181 = vld [vmem:[%s1 + $0x1d0] sm:$0xff]
  %v182 = vld [vmem:[%s1 + $0x1d8] sm:$0xff]
  %v183 = vld [vmem:[%s1 + $0x1e0] sm:$0xff]
  %v184 = vld [vmem:[%s1 + $0x1e8] sm:$0xff]
  %v185 = vld [vmem:[%s1 + $0x1f0] sm:$0xff]
  %v186 = vld [vmem:[%s1 + $0x1f8] sm:$0xff]
  %v187 = vpack.c.bf16 %v124, %v123
  %v188 = vpack.c.bf16 %v126, %v125
  %v189 = vpack.c.bf16 %v128, %v127
  %v190 = vpack.c.bf16 %v130, %v129
  %v191 = vpack.c.bf16 %v132, %v131
  %v192 = vpack.c.bf16 %v134, %v133
  %v193 = vpack.c.bf16 %v136, %v135
  %v194 = vpack.c.bf16 %v138, %v137
  %v195 = vpack.c.bf16 %v140, %v139
  %v196 = vpack.c.bf16 %v142, %v141
  %v197 = vpack.c.bf16 %v144, %v143
  %v198 = vpack.c.bf16 %v146, %v145
  %v199 = vpack.c.bf16 %v148, %v147
  %v200 = vpack.c.bf16 %v150, %v149
  %v201 = vpack.c.bf16 %v152, %v151
  %v202 = vpack.c.bf16 %v154, %v153
  %v203 = vpack.c.bf16 %v156, %v155
  %v204 = vpack.c.bf16 %v158, %v157
  %v205 = vpack.c.bf16 %v160, %v159
  %v206 = vpack.c.bf16 %v162, %v161
  %v207 = vpack.c.bf16 %v164, %v163
  %v208 = vpack.c.bf16 %v166, %v165
  %v209 = vpack.c.bf16 %v168, %v167
  %v210 = vpack.c.bf16 %v170, %v169
  %v211 = vpack.c.bf16 %v172, %v171
  %v212 = vpack.c.bf16 %v174, %v173
  %v213 = vpack.c.bf16 %v176, %v175
  %v214 = vpack.c.bf16 %v178, %v177
  %v215 = vpack.c.bf16 %v180, %v179
  %v216 = vpack.c.bf16 %v182, %v181
  %v217 = vpack.c.bf16 %v184, %v183
  %v218 = vpack.c.bf16 %v186, %v185
  %v219 = vld [vmem:[%s3] sm:$0xf]
  %v220 = vld [vmem:[%s3 + $0x4] sm:$0xf]
  %v221 = vld [vmem:[%s3 + $0x8] sm:$0xf]
  %v222 = vld [vmem:[%s3 + $0xc] sm:$0xf]
  %v227 = vunpack.c.l.b16 %v219
  %v228 = vunpack.c.l.b16 %v220
  %v229 = vunpack.c.l.b16 %v221
  %v230 = vunpack.c.l.b16 %v222
  %v231 = vpack.c.b16 %v228, %v227
  %v232 = vpack.c.b16 %v230, %v229
  %vm235 = vcmask 261120
  %v237 = vsel %vm235, %v187, 0
  %v240 = vsel %vm235, %v188, 0
  %v243 = vsel %vm235, %v189, 0
  %v246 = vsel %vm235, %v190, 0
  %v249 = vsel %vm235, %v191, 0
  %v252 = vsel %vm235, %v192, 0
  %v255 = vsel %vm235, %v193, 0
  %v258 = vsel %vm235, %v194, 0
  %v261 = vsel %vm235, %v195, 0
  %v264 = vsel %vm235, %v196, 0
  %v267 = vsel %vm235, %v197, 0
  %v270 = vsel %vm235, %v198, 0
  %v273 = vsel %vm235, %v199, 0
  %v276 = vsel %vm235, %v200, 0
  %v279 = vsel %vm235, %v201, 0
  %v282 = vsel %vm235, %v202, 0
  %v285 = vsel %vm235, %v203, 0
  %v288 = vsel %vm235, %v204, 0
  %v291 = vsel %vm235, %v205, 0
  %v294 = vsel %vm235, %v206, 0
  %v297 = vsel %vm235, %v207, 0
  %v300 = vsel %vm235, %v208, 0
  %v303 = vsel %vm235, %v209, 0
  %v306 = vsel %vm235, %v210, 0
  %v309 = vsel %vm235, %v211, 0
  %v312 = vsel %vm235, %v212, 0
  %v315 = vsel %vm235, %v213, 0
  %v318 = vsel %vm235, %v214, 0
  %v321 = vsel %vm235, %v215, 0
  %v324 = vsel %vm235, %v216, 0
  %v327 = vsel %vm235, %v217, 0
  %v330 = vsel %vm235, %v218, 0
  %332 = vmatprep.subr.bf16.mxu0 0
  %333 = vmatpush1.bf16.msra.mxu0 0
  %334 = vmatprep.subr.bf16.mxu0 0
  %335 = vmatpush1.bf16.msra.mxu0 0
  %336 = vmatprep.subr.bf16.mxu0 0
  %337 = vmatpush1.bf16.msra.mxu0 0
  %338 = vmatprep.subr.bf16.mxu0 0
  %339 = vmatpush1.bf16.msra.mxu0 0
  %340 = vmatprep.subr.bf16.mxu0 0
  %341 = vmatpush1.bf16.msra.mxu0 0
  %342 = vmatprep.subr.bf16.mxu0 0
  %343 = vmatpush1.bf16.msra.mxu0 0
  %344 = vmatprep.subr.bf16.mxu0 0
  %345 = vmatpush1.bf16.msra.mxu0 %v232
  %346 = vmatprep.subr.bf16.mxu0 0
  %347 = vmatpush1.bf16.msra.mxu0 %v231
  %348 = vmatprep.subr.bf16.mxu0 0
  %349 = vmatpush2.bf16.msra.mxu0 0
  %350 = vmatprep.subr.bf16.mxu0 0
  %351 = vmatpush2.bf16.msra.mxu0 0
  %352 = vmatprep.subr.bf16.mxu0 0
  %353 = vmatpush2.bf16.msra.mxu0 0
  %354 = vmatprep.subr.bf16.mxu0 0
  %355 = vmatpush2.bf16.msra.mxu0 0
  %356 = vmatprep.subr.bf16.mxu0 0
  %357 = vmatpush2.bf16.msra.mxu0 0
  %358 = vmatprep.subr.bf16.mxu0 0
  %359 = vmatpush2.bf16.msra.mxu0 0
  %360 = vmatprep.subr.bf16.mxu0 0
  %361 = vmatpush2.bf16.msra.mxu0 0
  %362 = vmatprep.subr.bf16.mxu0 0
  %363 = vmatpush2.bf16.msra.mxu0 0
  %364 = vmatprep.mubr.bf16.mxu0 0
  %365 = vmatmul.mubr.bf16.gmra.mxu0 %v237
  %v366 = vpop.f32.mrf.mxu0
  %v367 = vadd.f32 0.0, %v366
  %v368 = vpop.f32.mrf.mxu0
  %v369 = vpop.f32.mrf.mxu0
  %v370 = vadd.f32 0.0, %v369
  %v371 = vpop.f32.mrf.mxu0
  %372 = vmatprep.mubr.bf16.mxu0 0
  %373 = vmatmul.mubr.bf16.gmra.mxu0 %v240
  %v374 = vpop.f32.mrf.mxu0
  %v375 = vadd.f32 0.0, %v374
  %v376 = vpop.f32.mrf.mxu0
  %v377 = vpop.f32.mrf.mxu0
  %v378 = vadd.f32 0.0, %v377
  %v379 = vpop.f32.mrf.mxu0
  %380 = vmatprep.mubr.bf16.mxu0 0
  %381 = vmatmul.mubr.bf16.gmra.mxu0 %v243
  %v382 = vpop.f32.mrf.mxu0
  %v383 = vadd.f32 0.0, %v382
  %v384 = vpop.f32.mrf.mxu0
  %v385 = vpop.f32.mrf.mxu0
  %v386 = vadd.f32 0.0, %v385
  %v387 = vpop.f32.mrf.mxu0
  %388 = vmatprep.mubr.bf16.mxu0 0
  %389 = vmatmul.mubr.bf16.gmra.mxu0 %v246
  %v390 = vpop.f32.mrf.mxu0
  %v391 = vadd.f32 0.0, %v390
  %v392 = vpop.f32.mrf.mxu0
  %v393 = vpop.f32.mrf.mxu0
  %v394 = vadd.f32 0.0, %v393
  %v395 = vpop.f32.mrf.mxu0
  %396 = vmatprep.mubr.bf16.mxu0 0
  %397 = vmatmul.mubr.bf16.gmra.mxu0 %v249
  %v398 = vpop.f32.mrf.mxu0
  %v399 = vadd.f32 0.0, %v398
  %v400 = vpop.f32.mrf.mxu0
  %v401 = vpop.f32.mrf.mxu0
  %v402 = vadd.f32 0.0, %v401
  %v403 = vpop.f32.mrf.mxu0
  %404 = vmatprep.mubr.bf16.mxu0 0
  %405 = vmatmul.mubr.bf16.gmra.mxu0 %v252
  %v406 = vpop.f32.mrf.mxu0
  %v407 = vadd.f32 0.0, %v406
  %v408 = vpop.f32.mrf.mxu0
  %v409 = vpop.f32.mrf.mxu0
  %v410 = vadd.f32 0.0, %v409
  %v411 = vpop.f32.mrf.mxu0
  %412 = vmatprep.mubr.bf16.mxu0 0
  %413 = vmatmul.mubr.bf16.gmra.mxu0 %v255
  %v414 = vpop.f32.mrf.mxu0
  %v415 = vadd.f32 0.0, %v414
  %v416 = vpop.f32.mrf.mxu0
  %v417 = vpop.f32.mrf.mxu0
  %v418 = vadd.f32 0.0, %v417
  %v419 = vpop.f32.mrf.mxu0
  %420 = vmatprep.mubr.bf16.mxu0 0
  %421 = vmatmul.mubr.bf16.gmra.mxu0 %v258
  %v422 = vpop.f32.mrf.mxu0
  %v423 = vadd.f32 0.0, %v422
  %v424 = vpop.f32.mrf.mxu0
  %v425 = vpop.f32.mrf.mxu0
  %v426 = vadd.f32 0.0, %v425
  %v427 = vpop.f32.mrf.mxu0
  %428 = vmatprep.mubr.bf16.mxu0 0
  %429 = vmatmul.mubr.bf16.gmra.mxu0 %v261
  %v430 = vpop.f32.mrf.mxu0
  %v431 = vadd.f32 0.0, %v430
  %v432 = vpop.f32.mrf.mxu0
  %v433 = vpop.f32.mrf.mxu0
  %v434 = vadd.f32 0.0, %v433
  %v435 = vpop.f32.mrf.mxu0
  %436 = vmatprep.mubr.bf16.mxu0 0
  %437 = vmatmul.mubr.bf16.gmra.mxu0 %v264
  %v438 = vpop.f32.mrf.mxu0
  %v439 = vadd.f32 0.0, %v438
  %v440 = vpop.f32.mrf.mxu0
  %v441 = vpop.f32.mrf.mxu0
  %v442 = vadd.f32 0.0, %v441
  %v443 = vpop.f32.mrf.mxu0
  %444 = vmatprep.mubr.bf16.mxu0 0
  %445 = vmatmul.mubr.bf16.gmra.mxu0 %v267
  %v446 = vpop.f32.mrf.mxu0
  %v447 = vadd.f32 0.0, %v446
  %v448 = vpop.f32.mrf.mxu0
  %v449 = vpop.f32.mrf.mxu0
  %v450 = vadd.f32 0.0, %v449
  %v451 = vpop.f32.mrf.mxu0
  %452 = vmatprep.mubr.bf16.mxu0 0
  %453 = vmatmul.mubr.bf16.gmra.mxu0 %v270
  %v454 = vpop.f32.mrf.mxu0
  %v455 = vadd.f32 0.0, %v454
  %v456 = vpop.f32.mrf.mxu0
  %v457 = vpop.f32.mrf.mxu0
  %v458 = vadd.f32 0.0, %v457
  %v459 = vpop.f32.mrf.mxu0
  %460 = vmatprep.mubr.bf16.mxu0 0
  %461 = vmatmul.mubr.bf16.gmra.mxu0 %v273
  %v462 = vpop.f32.mrf.mxu0
  %v463 = vadd.f32 0.0, %v462
  %v464 = vpop.f32.mrf.mxu0
  %v465 = vpop.f32.mrf.mxu0
  %v466 = vadd.f32 0.0, %v465
  %v467 = vpop.f32.mrf.mxu0
  %468 = vmatprep.mubr.bf16.mxu0 0
  %469 = vmatmul.mubr.bf16.gmra.mxu0 %v276
  %v470 = vpop.f32.mrf.mxu0
  %v471 = vadd.f32 0.0, %v470
  %v472 = vpop.f32.mrf.mxu0
  %v473 = vpop.f32.mrf.mxu0
  %v474 = vadd.f32 0.0, %v473
  %v475 = vpop.f32.mrf.mxu0
  %476 = vmatprep.mubr.bf16.mxu0 0
  %477 = vmatmul.mubr.bf16.gmra.mxu0 %v279
  %v478 = vpop.f32.mrf.mxu0
  %v479 = vadd.f32 0.0, %v478
  %v480 = vpop.f32.mrf.mxu0
  %v481 = vpop.f32.mrf.mxu0
  %v482 = vadd.f32 0.0, %v481
  %v483 = vpop.f32.mrf.mxu0
  %484 = vmatprep.mubr.bf16.mxu0 0
  %485 = vmatmul.mubr.bf16.gmra.mxu0 %v282
  %v486 = vpop.f32.mrf.mxu0
  %v487 = vadd.f32 0.0, %v486
  %v488 = vpop.f32.mrf.mxu0
  %v489 = vpop.f32.mrf.mxu0
  %v490 = vadd.f32 0.0, %v489
  %v491 = vpop.f32.mrf.mxu0
  %492 = vmatprep.mubr.bf16.mxu0 0
  %493 = vmatmul.mubr.bf16.gmra.mxu0 %v285
  %v494 = vpop.f32.mrf.mxu0
  %v495 = vadd.f32 0.0, %v494
  %v496 = vpop.f32.mrf.mxu0
  %v497 = vpop.f32.mrf.mxu0
  %v498 = vadd.f32 0.0, %v497
  %v499 = vpop.f32.mrf.mxu0
  %500 = vmatprep.mubr.bf16.mxu0 0
  %501 = vmatmul.mubr.bf16.gmra.mxu0 %v288
  %v502 = vpop.f32.mrf.mxu0
  %v503 = vadd.f32 0.0, %v502
  %v504 = vpop.f32.mrf.mxu0
  %v505 = vpop.f32.mrf.mxu0
  %v506 = vadd.f32 0.0, %v505
  %v507 = vpop.f32.mrf.mxu0
  %508 = vmatprep.mubr.bf16.mxu0 0
  %509 = vmatmul.mubr.bf16.gmra.mxu0 %v291
  %v510 = vpop.f32.mrf.mxu0
  %v511 = vadd.f32 0.0, %v510
  %v512 = vpop.f32.mrf.mxu0
  %v513 = vpop.f32.mrf.mxu0
  %v514 = vadd.f32 0.0, %v513
  %v515 = vpop.f32.mrf.mxu0
  %516 = vmatprep.mubr.bf16.mxu0 0
  %517 = vmatmul.mubr.bf16.gmra.mxu0 %v294
  %v518 = vpop.f32.mrf.mxu0
  %v519 = vadd.f32 0.0, %v518
  %v520 = vpop.f32.mrf.mxu0
  %v521 = vpop.f32.mrf.mxu0
  %v522 = vadd.f32 0.0, %v521
  %v523 = vpop.f32.mrf.mxu0
  %524 = vmatprep.mubr.bf16.mxu0 0
  %525 = vmatmul.mubr.bf16.gmra.mxu0 %v297
  %v526 = vpop.f32.mrf.mxu0
  %v527 = vadd.f32 0.0, %v526
  %v528 = vpop.f32.mrf.mxu0
  %v529 = vpop.f32.mrf.mxu0
  %v530 = vadd.f32 0.0, %v529
  %v531 = vpop.f32.mrf.mxu0
  %532 = vmatprep.mubr.bf16.mxu0 0
  %533 = vmatmul.mubr.bf16.gmra.mxu0 %v300
  %v534 = vpop.f32.mrf.mxu0
  %v535 = vadd.f32 0.0, %v534
  %v536 = vpop.f32.mrf.mxu0
  %v537 = vpop.f32.mrf.mxu0
  %v538 = vadd.f32 0.0, %v537
  %v539 = vpop.f32.mrf.mxu0
  %540 = vmatprep.mubr.bf16.mxu0 0
  %541 = vmatmul.mubr.bf16.gmra.mxu0 %v303
  %v542 = vpop.f32.mrf.mxu0
  %v543 = vadd.f32 0.0, %v542
  %v544 = vpop.f32.mrf.mxu0
  %v545 = vpop.f32.mrf.mxu0
  %v546 = vadd.f32 0.0, %v545
  %v547 = vpop.f32.mrf.mxu0
  %548 = vmatprep.mubr.bf16.mxu0 0
  %549 = vmatmul.mubr.bf16.gmra.mxu0 %v306
  %v550 = vpop.f32.mrf.mxu0
  %v551 = vadd.f32 0.0, %v550
  %v552 = vpop.f32.mrf.mxu0
  %v553 = vpop.f32.mrf.mxu0
  %v554 = vadd.f32 0.0, %v553
  %v555 = vpop.f32.mrf.mxu0
  %556 = vmatprep.mubr.bf16.mxu0 0
  %557 = vmatmul.mubr.bf16.gmra.mxu0 %v309
  %v558 = vpop.f32.mrf.mxu0
  %v559 = vadd.f32 0.0, %v558
  %v560 = vpop.f32.mrf.mxu0
  %v561 = vpop.f32.mrf.mxu0
  %v562 = vadd.f32 0.0, %v561
  %v563 = vpop.f32.mrf.mxu0
  %564 = vmatprep.mubr.bf16.mxu0 0
  %565 = vmatmul.mubr.bf16.gmra.mxu0 %v312
  %v566 = vpop.f32.mrf.mxu0
  %v567 = vadd.f32 0.0, %v566
  %v568 = vpop.f32.mrf.mxu0
  %v569 = vpop.f32.mrf.mxu0
  %v570 = vadd.f32 0.0, %v569
  %v571 = vpop.f32.mrf.mxu0
  %572 = vmatprep.mubr.bf16.mxu0 0
  %573 = vmatmul.mubr.bf16.gmra.mxu0 %v315
  %v574 = vpop.f32.mrf.mxu0
  %v575 = vadd.f32 0.0, %v574
  %v576 = vpop.f32.mrf.mxu0
  %v577 = vpop.f32.mrf.mxu0
  %v578 = vadd.f32 0.0, %v577
  %v579 = vpop.f32.mrf.mxu0
  %580 = vmatprep.mubr.bf16.mxu0 0
  %581 = vmatmul.mubr.bf16.gmra.mxu0 %v318
  %v582 = vpop.f32.mrf.mxu0
  %v583 = vadd.f32 0.0, %v582
  %v584 = vpop.f32.mrf.mxu0
  %v585 = vpop.f32.mrf.mxu0
  %v586 = vadd.f32 0.0, %v585
  %v587 = vpop.f32.mrf.mxu0
  %588 = vmatprep.mubr.bf16.mxu0 0
  %589 = vmatmul.mubr.bf16.gmra.mxu0 %v321
  %v590 = vpop.f32.mrf.mxu0
  %v591 = vadd.f32 0.0, %v590
  %v592 = vpop.f32.mrf.mxu0
  %v593 = vpop.f32.mrf.mxu0
  %v594 = vadd.f32 0.0, %v593
  %v595 = vpop.f32.mrf.mxu0
  %596 = vmatprep.mubr.bf16.mxu0 0
  %597 = vmatmul.mubr.bf16.gmra.mxu0 %v324
  %v598 = vpop.f32.mrf.mxu0
  %v599 = vadd.f32 0.0, %v598
  %v600 = vpop.f32.mrf.mxu0
  %v601 = vpop.f32.mrf.mxu0
  %v602 = vadd.f32 0.0, %v601
  %v603 = vpop.f32.mrf.mxu0
  %604 = vmatprep.mubr.bf16.mxu0 0
  %605 = vmatmul.mubr.bf16.gmra.mxu0 %v327
  %v606 = vpop.f32.mrf.mxu0
  %v607 = vadd.f32 0.0, %v606
  %v608 = vpop.f32.mrf.mxu0
  %v609 = vpop.f32.mrf.mxu0
  %v610 = vadd.f32 0.0, %v609
  %v611 = vpop.f32.mrf.mxu0
  %612 = vmatprep.mubr.bf16.mxu0 0
  %613 = vmatmul.mubr.bf16.gmra.mxu0 %v330
  %v614 = vpop.f32.mrf.mxu0
  %v615 = vadd.f32 0.0, %v614
  %v616 = vpop.f32.mrf.mxu0
  %v617 = vpop.f32.mrf.mxu0
  %v618 = vadd.f32 0.0, %v617
  %v619 = vpop.f32.mrf.mxu0
  %620 = vdwg.mxu0
  %v625 = vunpack.c.l.b16 %v119
  %v626 = vunpack.c.l.b16 %v120
  %v627 = vunpack.c.l.b16 %v121
  %v628 = vunpack.c.l.b16 %v122
  %v629 = vpack.c.b16 %v626, %v625
  %v630 = vpack.c.b16 %v628, %v627
  %v634 = vsel %vm235, %v87, 0
  %v637 = vsel %vm235, %v88, 0
  %v640 = vsel %vm235, %v89, 0
  %v643 = vsel %vm235, %v90, 0
  %v646 = vsel %vm235, %v91, 0
  %v649 = vsel %vm235, %v92, 0
  %v652 = vsel %vm235, %v93, 0
  %v655 = vsel %vm235, %v94, 0
  %v658 = vsel %vm235, %v95, 0
  %v661 = vsel %vm235, %v96, 0
  %v664 = vsel %vm235, %v97, 0
  %v667 = vsel %vm235, %v98, 0
  %v670 = vsel %vm235, %v99, 0
  %v673 = vsel %vm235, %v100, 0
  %v676 = vsel %vm235, %v101, 0
  %v679 = vsel %vm235, %v102, 0
  %v682 = vsel %vm235, %v103, 0
  %v685 = vsel %vm235, %v104, 0
  %v688 = vsel %vm235, %v105, 0
  %v691 = vsel %vm235, %v106, 0
  %v694 = vsel %vm235, %v107, 0
  %v697 = vsel %vm235, %v108, 0
  %v700 = vsel %vm235, %v109, 0
  %v703 = vsel %vm235, %v110, 0
  %v706 = vsel %vm235, %v111, 0
  %v709 = vsel %vm235, %v112, 0
  %v712 = vsel %vm235, %v113, 0
  %v715 = vsel %vm235, %v114, 0
  %v718 = vsel %vm235, %v115, 0
  %v721 = vsel %vm235, %v116, 0
  %v724 = vsel %vm235, %v117, 0
  %v727 = vsel %vm235, %v118, 0
  %729 = vmatprep.subr.bf16.mxu0 0
  %730 = vmatpush1.bf16.msra.mxu0 0
  %731 = vmatprep.subr.bf16.mxu0 0
  %732 = vmatpush1.bf16.msra.mxu0 0
  %733 = vmatprep.subr.bf16.mxu0 0
  %734 = vmatpush1.bf16.msra.mxu0 0
  %735 = vmatprep.subr.bf16.mxu0 0
  %736 = vmatpush1.bf16.msra.mxu0 0
  %737 = vmatprep.subr.bf16.mxu0 0
  %738 = vmatpush1.bf16.msra.mxu0 0
  %739 = vmatprep.subr.bf16.mxu0 0
  %740 = vmatpush1.bf16.msra.mxu0 0
  %741 = vmatprep.subr.bf16.mxu0 0
  %742 = vmatpush1.bf16.msra.mxu0 %v630
  %743 = vmatprep.subr.bf16.mxu0 0
  %744 = vmatpush1.bf16.msra.mxu0 %v629
  %745 = vmatprep.subr.bf16.mxu0 0
  %746 = vmatpush2.bf16.msra.mxu0 0
  %747 = vmatprep.subr.bf16.mxu0 0
  %748 = vmatpush2.bf16.msra.mxu0 0
  %749 = vmatprep.subr.bf16.mxu0 0
  %750 = vmatpush2.bf16.msra.mxu0 0
  %751 = vmatprep.subr.bf16.mxu0 0
  %752 = vmatpush2.bf16.msra.mxu0 0
  %753 = vmatprep.subr.bf16.mxu0 0
  %754 = vmatpush2.bf16.msra.mxu0 0
  %755 = vmatprep.subr.bf16.mxu0 0
  %756 = vmatpush2.bf16.msra.mxu0 0
  %757 = vmatprep.subr.bf16.mxu0 0
  %758 = vmatpush2.bf16.msra.mxu0 0
  %759 = vmatprep.subr.bf16.mxu0 0
  %760 = vmatpush2.bf16.msra.mxu0 0
  %761 = vmatprep.mubr.bf16.mxu0 0
  %762 = vmatmul.mubr.bf16.gmra.mxu0 %v634
  %v763 = vpop.f32.mrf.mxu0
  %v764 = vadd.f32 %v367, %v763
  %v765 = vpop.f32.mrf.mxu0
  %v766 = vpop.f32.mrf.mxu0
  %v767 = vadd.f32 %v370, %v766
  %v768 = vpop.f32.mrf.mxu0
  %769 = vmatprep.mubr.bf16.mxu0 0
  %770 = vmatmul.mubr.bf16.gmra.mxu0 %v637
  %v771 = vpop.f32.mrf.mxu0
  %v772 = vadd.f32 %v375, %v771
  %v773 = vpop.f32.mrf.mxu0
  %v774 = vpop.f32.mrf.mxu0
  %v775 = vadd.f32 %v378, %v774
  %v776 = vpop.f32.mrf.mxu0
  %777 = vmatprep.mubr.bf16.mxu0 0
  %778 = vmatmul.mubr.bf16.gmra.mxu0 %v640
  %v779 = vpop.f32.mrf.mxu0
  %v780 = vadd.f32 %v383, %v779
  %v781 = vpop.f32.mrf.mxu0
  %v782 = vpop.f32.mrf.mxu0
  %v783 = vadd.f32 %v386, %v782
  %v784 = vpop.f32.mrf.mxu0
  %785 = vmatprep.mubr.bf16.mxu0 0
  %786 = vmatmul.mubr.bf16.gmra.mxu0 %v643
  %v787 = vpop.f32.mrf.mxu0
  %v788 = vadd.f32 %v391, %v787
  %v789 = vpop.f32.mrf.mxu0
  %v790 = vpop.f32.mrf.mxu0
  %v791 = vadd.f32 %v394, %v790
  %v792 = vpop.f32.mrf.mxu0
  %793 = vmatprep.mubr.bf16.mxu0 0
  %794 = vmatmul.mubr.bf16.gmra.mxu0 %v646
  %v795 = vpop.f32.mrf.mxu0
  %v796 = vadd.f32 %v399, %v795
  %v797 = vpop.f32.mrf.mxu0
  %v798 = vpop.f32.mrf.mxu0
  %v799 = vadd.f32 %v402, %v798
  %v800 = vpop.f32.mrf.mxu0
  %801 = vmatprep.mubr.bf16.mxu0 0
  %802 = vmatmul.mubr.bf16.gmra.mxu0 %v649
  %v803 = vpop.f32.mrf.mxu0
  %v804 = vadd.f32 %v407, %v803
  %v805 = vpop.f32.mrf.mxu0
  %v806 = vpop.f32.mrf.mxu0
  %v807 = vadd.f32 %v410, %v806
  %v808 = vpop.f32.mrf.mxu0
  %809 = vmatprep.mubr.bf16.mxu0 0
  %810 = vmatmul.mubr.bf16.gmra.mxu0 %v652
  %v811 = vpop.f32.mrf.mxu0
  %v812 = vadd.f32 %v415, %v811
  %v813 = vpop.f32.mrf.mxu0
  %v814 = vpop.f32.mrf.mxu0
  %v815 = vadd.f32 %v418, %v814
  %v816 = vpop.f32.mrf.mxu0
  %817 = vmatprep.mubr.bf16.mxu0 0
  %818 = vmatmul.mubr.bf16.gmra.mxu0 %v655
  %v819 = vpop.f32.mrf.mxu0
  %v820 = vadd.f32 %v423, %v819
  %v821 = vpop.f32.mrf.mxu0
  %v822 = vpop.f32.mrf.mxu0
  %v823 = vadd.f32 %v426, %v822
  %v824 = vpop.f32.mrf.mxu0
  %825 = vmatprep.mubr.bf16.mxu0 0
  %826 = vmatmul.mubr.bf16.gmra.mxu0 %v658
  %v827 = vpop.f32.mrf.mxu0
  %v828 = vadd.f32 %v431, %v827
  %v829 = vpop.f32.mrf.mxu0
  %v830 = vpop.f32.mrf.mxu0
  %v831 = vadd.f32 %v434, %v830
  %v832 = vpop.f32.mrf.mxu0
  %833 = vmatprep.mubr.bf16.mxu0 0
  %834 = vmatmul.mubr.bf16.gmra.mxu0 %v661
  %v835 = vpop.f32.mrf.mxu0
  %v836 = vadd.f32 %v439, %v835
  %v837 = vpop.f32.mrf.mxu0
  %v838 = vpop.f32.mrf.mxu0
  %v839 = vadd.f32 %v442, %v838
  %v840 = vpop.f32.mrf.mxu0
  %841 = vmatprep.mubr.bf16.mxu0 0
  %842 = vmatmul.mubr.bf16.gmra.mxu0 %v664
  %v843 = vpop.f32.mrf.mxu0
  %v844 = vadd.f32 %v447, %v843
  %v845 = vpop.f32.mrf.mxu0
  %v846 = vpop.f32.mrf.mxu0
  %v847 = vadd.f32 %v450, %v846
  %v848 = vpop.f32.mrf.mxu0
  %849 = vmatprep.mubr.bf16.mxu0 0
  %850 = vmatmul.mubr.bf16.gmra.mxu0 %v667
  %v851 = vpop.f32.mrf.mxu0
  %v852 = vadd.f32 %v455, %v851
  %v853 = vpop.f32.mrf.mxu0
  %v854 = vpop.f32.mrf.mxu0
  %v855 = vadd.f32 %v458, %v854
  %v856 = vpop.f32.mrf.mxu0
  %857 = vmatprep.mubr.bf16.mxu0 0
  %858 = vmatmul.mubr.bf16.gmra.mxu0 %v670
  %v859 = vpop.f32.mrf.mxu0
  %v860 = vadd.f32 %v463, %v859
  %v861 = vpop.f32.mrf.mxu0
  %v862 = vpop.f32.mrf.mxu0
  %v863 = vadd.f32 %v466, %v862
  %v864 = vpop.f32.mrf.mxu0
  %865 = vmatprep.mubr.bf16.mxu0 0
  %866 = vmatmul.mubr.bf16.gmra.mxu0 %v673
  %v867 = vpop.f32.mrf.mxu0
  %v868 = vadd.f32 %v471, %v867
  %v869 = vpop.f32.mrf.mxu0
  %v870 = vpop.f32.mrf.mxu0
  %v871 = vadd.f32 %v474, %v870
  %v872 = vpop.f32.mrf.mxu0
  %873 = vmatprep.mubr.bf16.mxu0 0
  %874 = vmatmul.mubr.bf16.gmra.mxu0 %v676
  %v875 = vpop.f32.mrf.mxu0
  %v876 = vadd.f32 %v479, %v875
  %v877 = vpop.f32.mrf.mxu0
  %v878 = vpop.f32.mrf.mxu0
  %v879 = vadd.f32 %v482, %v878
  %v880 = vpop.f32.mrf.mxu0
  %881 = vmatprep.mubr.bf16.mxu0 0
  %882 = vmatmul.mubr.bf16.gmra.mxu0 %v679
  %v883 = vpop.f32.mrf.mxu0
  %v884 = vadd.f32 %v487, %v883
  %v885 = vpop.f32.mrf.mxu0
  %v886 = vpop.f32.mrf.mxu0
  %v887 = vadd.f32 %v490, %v886
  %v888 = vpop.f32.mrf.mxu0
  %889 = vmatprep.mubr.bf16.mxu0 0
  %890 = vmatmul.mubr.bf16.gmra.mxu0 %v682
  %v891 = vpop.f32.mrf.mxu0
  %v892 = vadd.f32 %v495, %v891
  %v893 = vpop.f32.mrf.mxu0
  %v894 = vpop.f32.mrf.mxu0
  %v895 = vadd.f32 %v498, %v894
  %v896 = vpop.f32.mrf.mxu0
  %897 = vmatprep.mubr.bf16.mxu0 0
  %898 = vmatmul.mubr.bf16.gmra.mxu0 %v685
  %v899 = vpop.f32.mrf.mxu0
  %v900 = vadd.f32 %v503, %v899
  %v901 = vpop.f32.mrf.mxu0
  %v902 = vpop.f32.mrf.mxu0
  %v903 = vadd.f32 %v506, %v902
  %v904 = vpop.f32.mrf.mxu0
  %905 = vmatprep.mubr.bf16.mxu0 0
  %906 = vmatmul.mubr.bf16.gmra.mxu0 %v688
  %v907 = vpop.f32.mrf.mxu0
  %v908 = vadd.f32 %v511, %v907
  %v909 = vpop.f32.mrf.mxu0
  %v910 = vpop.f32.mrf.mxu0
  %v911 = vadd.f32 %v514, %v910
  %v912 = vpop.f32.mrf.mxu0
  %913 = vmatprep.mubr.bf16.mxu0 0
  %914 = vmatmul.mubr.bf16.gmra.mxu0 %v691
  %v915 = vpop.f32.mrf.mxu0
  %v916 = vadd.f32 %v519, %v915
  %v917 = vpop.f32.mrf.mxu0
  %v918 = vpop.f32.mrf.mxu0
  %v919 = vadd.f32 %v522, %v918
  %v920 = vpop.f32.mrf.mxu0
  %921 = vmatprep.mubr.bf16.mxu0 0
  %922 = vmatmul.mubr.bf16.gmra.mxu0 %v694
  %v923 = vpop.f32.mrf.mxu0
  %v924 = vadd.f32 %v527, %v923
  %v925 = vpop.f32.mrf.mxu0
  %v926 = vpop.f32.mrf.mxu0
  %v927 = vadd.f32 %v530, %v926
  %v928 = vpop.f32.mrf.mxu0
  %929 = vmatprep.mubr.bf16.mxu0 0
  %930 = vmatmul.mubr.bf16.gmra.mxu0 %v697
  %v931 = vpop.f32.mrf.mxu0
  %v932 = vadd.f32 %v535, %v931
  %v933 = vpop.f32.mrf.mxu0
  %v934 = vpop.f32.mrf.mxu0
  %v935 = vadd.f32 %v538, %v934
  %v936 = vpop.f32.mrf.mxu0
  %937 = vmatprep.mubr.bf16.mxu0 0
  %938 = vmatmul.mubr.bf16.gmra.mxu0 %v700
  %v939 = vpop.f32.mrf.mxu0
  %v940 = vadd.f32 %v543, %v939
  %v941 = vpop.f32.mrf.mxu0
  %v942 = vpop.f32.mrf.mxu0
  %v943 = vadd.f32 %v546, %v942
  %v944 = vpop.f32.mrf.mxu0
  %945 = vmatprep.mubr.bf16.mxu0 0
  %946 = vmatmul.mubr.bf16.gmra.mxu0 %v703
  %v947 = vpop.f32.mrf.mxu0
  %v948 = vadd.f32 %v551, %v947
  %v949 = vpop.f32.mrf.mxu0
  %v950 = vpop.f32.mrf.mxu0
  %v951 = vadd.f32 %v554, %v950
  %v952 = vpop.f32.mrf.mxu0
  %953 = vmatprep.mubr.bf16.mxu0 0
  %954 = vmatmul.mubr.bf16.gmra.mxu0 %v706
  %v955 = vpop.f32.mrf.mxu0
  %v956 = vadd.f32 %v559, %v955
  %v957 = vpop.f32.mrf.mxu0
  %v958 = vpop.f32.mrf.mxu0
  %v959 = vadd.f32 %v562, %v958
  %v960 = vpop.f32.mrf.mxu0
  %961 = vmatprep.mubr.bf16.mxu0 0
  %962 = vmatmul.mubr.bf16.gmra.mxu0 %v709
  %v963 = vpop.f32.mrf.mxu0
  %v964 = vadd.f32 %v567, %v963
  %v965 = vpop.f32.mrf.mxu0
  %v966 = vpop.f32.mrf.mxu0
  %v967 = vadd.f32 %v570, %v966
  %v968 = vpop.f32.mrf.mxu0
  %969 = vmatprep.mubr.bf16.mxu0 0
  %970 = vmatmul.mubr.bf16.gmra.mxu0 %v712
  %v971 = vpop.f32.mrf.mxu0
  %v972 = vadd.f32 %v575, %v971
  %v973 = vpop.f32.mrf.mxu0
  %v974 = vpop.f32.mrf.mxu0
  %v975 = vadd.f32 %v578, %v974
  %v976 = vpop.f32.mrf.mxu0
  %977 = vmatprep.mubr.bf16.mxu0 0
  %978 = vmatmul.mubr.bf16.gmra.mxu0 %v715
  %v979 = vpop.f32.mrf.mxu0
  %v980 = vadd.f32 %v583, %v979
  %v981 = vpop.f32.mrf.mxu0
  %v982 = vpop.f32.mrf.mxu0
  %v983 = vadd.f32 %v586, %v982
  %v984 = vpop.f32.mrf.mxu0
  %985 = vmatprep.mubr.bf16.mxu0 0
  %986 = vmatmul.mubr.bf16.gmra.mxu0 %v718
  %v987 = vpop.f32.mrf.mxu0
  %v988 = vadd.f32 %v591, %v987
  %v989 = vpop.f32.mrf.mxu0
  %v990 = vpop.f32.mrf.mxu0
  %v991 = vadd.f32 %v594, %v990
  %v992 = vpop.f32.mrf.mxu0
  %993 = vmatprep.mubr.bf16.mxu0 0
  %994 = vmatmul.mubr.bf16.gmra.mxu0 %v721
  %v995 = vpop.f32.mrf.mxu0
  %v996 = vadd.f32 %v599, %v995
  %v997 = vpop.f32.mrf.mxu0
  %v998 = vpop.f32.mrf.mxu0
  %v999 = vadd.f32 %v602, %v998
  %v1000 = vpop.f32.mrf.mxu0
  %1001 = vmatprep.mubr.bf16.mxu0 0
  %1002 = vmatmul.mubr.bf16.gmra.mxu0 %v724
  %v1003 = vpop.f32.mrf.mxu0
  %v1004 = vadd.f32 %v607, %v1003
  %v1005 = vpop.f32.mrf.mxu0
  %v1006 = vpop.f32.mrf.mxu0
  %v1007 = vadd.f32 %v610, %v1006
  %v1008 = vpop.f32.mrf.mxu0
  %1009 = vmatprep.mubr.bf16.mxu0 0
  %1010 = vmatmul.mubr.bf16.gmra.mxu0 %v727
  %v1011 = vpop.f32.mrf.mxu0
  %v1012 = vadd.f32 %v615, %v1011
  %v1013 = vpop.f32.mrf.mxu0
  %v1014 = vpop.f32.mrf.mxu0
  %v1015 = vadd.f32 %v618, %v1014
  %v1016 = vpop.f32.mrf.mxu0
  %1017 = vdwg.mxu0
  %v1018 = vld [vmem:[%s4] sm:$0x1]
  %v1020 = vlaneseq
  %v1021 = vshrl.u32 %v1020, 7
  %v1022 = vsub.s32 0, %v1021
  %v1023 = vrot.slane %v1018, %v1022
  %v1025 = vadd.f32 %v764, %v1023
  %v1026 = vadd.f32 %v767, %v1023
  %v1027 = vadd.f32 %v772, %v1023
  %v1028 = vadd.f32 %v775, %v1023
  %v1029 = vadd.f32 %v780, %v1023
  %v1030 = vadd.f32 %v783, %v1023
  %v1031 = vadd.f32 %v788, %v1023
  %v1032 = vadd.f32 %v791, %v1023
  %v1033 = vadd.f32 %v796, %v1023
  %v1034 = vadd.f32 %v799, %v1023
  %v1035 = vadd.f32 %v804, %v1023
  %v1036 = vadd.f32 %v807, %v1023
  %v1037 = vadd.f32 %v812, %v1023
  %v1038 = vadd.f32 %v815, %v1023
  %v1039 = vadd.f32 %v820, %v1023
  %v1040 = vadd.f32 %v823, %v1023
  %v1041 = vadd.f32 %v828, %v1023
  %v1042 = vadd.f32 %v831, %v1023
  %v1043 = vadd.f32 %v836, %v1023
  %v1044 = vadd.f32 %v839, %v1023
  %v1045 = vadd.f32 %v844, %v1023
  %v1046 = vadd.f32 %v847, %v1023
  %v1047 = vadd.f32 %v852, %v1023
  %v1048 = vadd.f32 %v855, %v1023
  %v1049 = vadd.f32 %v860, %v1023
  %v1050 = vadd.f32 %v863, %v1023
  %v1051 = vadd.f32 %v868, %v1023
  %v1052 = vadd.f32 %v871, %v1023
  %v1053 = vadd.f32 %v876, %v1023
  %v1054 = vadd.f32 %v879, %v1023
  %v1055 = vadd.f32 %v884, %v1023
  %v1056 = vadd.f32 %v887, %v1023
  %v1057 = vadd.f32 %v892, %v1023
  %v1058 = vadd.f32 %v895, %v1023
  %v1059 = vadd.f32 %v900, %v1023
  %v1060 = vadd.f32 %v903, %v1023
  %v1061 = vadd.f32 %v908, %v1023
  %v1062 = vadd.f32 %v911, %v1023
  %v1063 = vadd.f32 %v916, %v1023
  %v1064 = vadd.f32 %v919, %v1023
  %v1065 = vadd.f32 %v924, %v1023
  %v1066 = vadd.f32 %v927, %v1023
  %v1067 = vadd.f32 %v932, %v1023
  %v1068 = vadd.f32 %v935, %v1023
  %v1069 = vadd.f32 %v940, %v1023
  %v1070 = vadd.f32 %v943, %v1023
  %v1071 = vadd.f32 %v948, %v1023
  %v1072 = vadd.f32 %v951, %v1023
  %v1073 = vadd.f32 %v956, %v1023
  %v1074 = vadd.f32 %v959, %v1023
  %v1075 = vadd.f32 %v964, %v1023
  %v1076 = vadd.f32 %v967, %v1023
  %v1077 = vadd.f32 %v972, %v1023
  %v1078 = vadd.f32 %v975, %v1023
  %v1079 = vadd.f32 %v980, %v1023
  %v1080 = vadd.f32 %v983, %v1023
  %v1081 = vadd.f32 %v988, %v1023
  %v1082 = vadd.f32 %v991, %v1023
  %v1083 = vadd.f32 %v996, %v1023
  %v1084 = vadd.f32 %v999, %v1023
  %v1085 = vadd.f32 %v1004, %v1023
  %v1086 = vadd.f32 %v1007, %v1023
  %v1087 = vadd.f32 %v1012, %v1023
  %v1088 = vadd.f32 %v1015, %v1023
  %1089 = vst.msk [vmem:[%s5] sm:$0xff] %vm235, %v1025
  %1090 = vst.msk [vmem:[%s5 + $0x8] sm:$0xff] %vm235, %v1026
  %1091 = vst.msk [vmem:[%s5 + $0x10] sm:$0xff] %vm235, %v1027
  %1092 = vst.msk [vmem:[%s5 + $0x18] sm:$0xff] %vm235, %v1028
  %1093 = vst.msk [vmem:[%s5 + $0x20] sm:$0xff] %vm235, %v1029
  %1094 = vst.msk [vmem:[%s5 + $0x28] sm:$0xff] %vm235, %v1030
  %1095 = vst.msk [vmem:[%s5 + $0x30] sm:$0xff] %vm235, %v1031
  %1096 = vst.msk [vmem:[%s5 + $0x38] sm:$0xff] %vm235, %v1032
  %1097 = vst.msk [vmem:[%s5 + $0x40] sm:$0xff] %vm235, %v1033
  %1098 = vst.msk [vmem:[%s5 + $0x48] sm:$0xff] %vm235, %v1034
  %1099 = vst.msk [vmem:[%s5 + $0x50] sm:$0xff] %vm235, %v1035
  %1100 = vst.msk [vmem:[%s5 + $0x58] sm:$0xff] %vm235, %v1036
  %1101 = vst.msk [vmem:[%s5 + $0x60] sm:$0xff] %vm235, %v1037
  %1102 = vst.msk [vmem:[%s5 + $0x68] sm:$0xff] %vm235, %v1038
  %1103 = vst.msk [vmem:[%s5 + $0x70] sm:$0xff] %vm235, %v1039
  %1104 = vst.msk [vmem:[%s5 + $0x78] sm:$0xff] %vm235, %v1040
  %1105 = vst.msk [vmem:[%s5 + $0x80] sm:$0xff] %vm235, %v1041
  %1106 = vst.msk [vmem:[%s5 + $0x88] sm:$0xff] %vm235, %v1042
  %1107 = vst.msk [vmem:[%s5 + $0x90] sm:$0xff] %vm235, %v1043
  %1108 = vst.msk [vmem:[%s5 + $0x98] sm:$0xff] %vm235, %v1044
  %1109 = vst.msk [vmem:[%s5 + $0xa0] sm:$0xff] %vm235, %v1045
  %1110 = vst.msk [vmem:[%s5 + $0xa8] sm:$0xff] %vm235, %v1046
  %1111 = vst.msk [vmem:[%s5 + $0xb0] sm:$0xff] %vm235, %v1047
  %1112 = vst.msk [vmem:[%s5 + $0xb8] sm:$0xff] %vm235, %v1048
  %1113 = vst.msk [vmem:[%s5 + $0xc0] sm:$0xff] %vm235, %v1049
  %1114 = vst.msk [vmem:[%s5 + $0xc8] sm:$0xff] %vm235, %v1050
  %1115 = vst.msk [vmem:[%s5 + $0xd0] sm:$0xff] %vm235, %v1051
  %1116 = vst.msk [vmem:[%s5 + $0xd8] sm:$0xff] %vm235, %v1052
  %1117 = vst.msk [vmem:[%s5 + $0xe0] sm:$0xff] %vm235, %v1053
  %1118 = vst.msk [vmem:[%s5 + $0xe8] sm:$0xff] %vm235, %v1054
  %1119 = vst.msk [vmem:[%s5 + $0xf0] sm:$0xff] %vm235, %v1055
  %1120 = vst.msk [vmem:[%s5 + $0xf8] sm:$0xff] %vm235, %v1056
  %1121 = vst.msk [vmem:[%s5 + $0x100] sm:$0xff] %vm235, %v1057
  %1122 = vst.msk [vmem:[%s5 + $0x108] sm:$0xff] %vm235, %v1058
  %1123 = vst.msk [vmem:[%s5 + $0x110] sm:$0xff] %vm235, %v1059
  %1124 = vst.msk [vmem:[%s5 + $0x118] sm:$0xff] %vm235, %v1060
  %1125 = vst.msk [vmem:[%s5 + $0x120] sm:$0xff] %vm235, %v1061
  %1126 = vst.msk [vmem:[%s5 + $0x128] sm:$0xff] %vm235, %v1062
  %1127 = vst.msk [vmem:[%s5 + $0x130] sm:$0xff] %vm235, %v1063
  %1128 = vst.msk [vmem:[%s5 + $0x138] sm:$0xff] %vm235, %v1064
  %1129 = vst.msk [vmem:[%s5 + $0x140] sm:$0xff] %vm235, %v1065
  %1130 = vst.msk [vmem:[%s5 + $0x148] sm:$0xff] %vm235, %v1066
  %1131 = vst.msk [vmem:[%s5 + $0x150] sm:$0xff] %vm235, %v1067
  %1132 = vst.msk [vmem:[%s5 + $0x158] sm:$0xff] %vm235, %v1068
  %1133 = vst.msk [vmem:[%s5 + $0x160] sm:$0xff] %vm235, %v1069
  %1134 = vst.msk [vmem:[%s5 + $0x168] sm:$0xff] %vm235, %v1070
  %1135 = vst.msk [vmem:[%s5 + $0x170] sm:$0xff] %vm235, %v1071
  %1136 = vst.msk [vmem:[%s5 + $0x178] sm:$0xff] %vm235, %v1072
  %1137 = vst.msk [vmem:[%s5 + $0x180] sm:$0xff] %vm235, %v1073
  %1138 = vst.msk [vmem:[%s5 + $0x188] sm:$0xff] %vm235, %v1074
  %1139 = vst.msk [vmem:[%s5 + $0x190] sm:$0xff] %vm235, %v1075
  %1140 = vst.msk [vmem:[%s5 + $0x198] sm:$0xff] %vm235, %v1076
  %1141 = vst.msk [vmem:[%s5 + $0x1a0] sm:$0xff] %vm235, %v1077
  %1142 = vst.msk [vmem:[%s5 + $0x1a8] sm:$0xff] %vm235, %v1078
  %1143 = vst.msk [vmem:[%s5 + $0x1b0] sm:$0xff] %vm235, %v1079
  %1144 = vst.msk [vmem:[%s5 + $0x1b8] sm:$0xff] %vm235, %v1080
  %1145 = vst.msk [vmem:[%s5 + $0x1c0] sm:$0xff] %vm235, %v1081
  %1146 = vst.msk [vmem:[%s5 + $0x1c8] sm:$0xff] %vm235, %v1082
  %1147 = vst.msk [vmem:[%s5 + $0x1d0] sm:$0xff] %vm235, %v1083
  %1148 = vst.msk [vmem:[%s5 + $0x1d8] sm:$0xff] %vm235, %v1084
  %1149 = vst.msk [vmem:[%s5 + $0x1e0] sm:$0xff] %vm235, %v1085
  %1150 = vst.msk [vmem:[%s5 + $0x1e8] sm:$0xff] %vm235, %v1086
  %1151 = vst.msk [vmem:[%s5 + $0x1f0] sm:$0xff] %vm235, %v1087
  %1152 = vst.msk [vmem:[%s5 + $0x1f8] sm:$0xff] %vm235, %v1088
  %v1153 = vsel %vm235, %v1025, 0.0
  %v1154 = vsel %vm235, %v1026, 0.0
  %v1155 = vadd.f32 %v1153, %v1154
  %v1156 = vsel %vm235, %v1027, 0.0
  %v1157 = vadd.f32 %v1155, %v1156
  %v1158 = vsel %vm235, %v1028, 0.0
  %v1159 = vadd.f32 %v1157, %v1158
  %v1160 = vsel %vm235, %v1029, 0.0
  %v1161 = vadd.f32 %v1159, %v1160
  %v1162 = vsel %vm235, %v1030, 0.0
  %v1163 = vadd.f32 %v1161, %v1162
  %v1164 = vsel %vm235, %v1031, 0.0
  %v1165 = vadd.f32 %v1163, %v1164
  %v1166 = vsel %vm235, %v1032, 0.0
  %v1167 = vadd.f32 %v1165, %v1166
  %v1168 = vsel %vm235, %v1033, 0.0
  %v1169 = vadd.f32 %v1167, %v1168
  %v1170 = vsel %vm235, %v1034, 0.0
  %v1171 = vadd.f32 %v1169, %v1170
  %v1172 = vsel %vm235, %v1035, 0.0
  %v1173 = vadd.f32 %v1171, %v1172
  %v1174 = vsel %vm235, %v1036, 0.0
  %v1175 = vadd.f32 %v1173, %v1174
  %v1176 = vsel %vm235, %v1037, 0.0
  %v1177 = vadd.f32 %v1175, %v1176
  %v1178 = vsel %vm235, %v1038, 0.0
  %v1179 = vadd.f32 %v1177, %v1178
  %v1180 = vsel %vm235, %v1039, 0.0
  %v1181 = vadd.f32 %v1179, %v1180
  %v1182 = vsel %vm235, %v1040, 0.0
  %v1183 = vadd.f32 %v1181, %v1182
  %v1184 = vsel %vm235, %v1041, 0.0
  %v1185 = vadd.f32 %v1183, %v1184
  %v1186 = vsel %vm235, %v1042, 0.0
  %v1187 = vadd.f32 %v1185, %v1186
  %v1188 = vsel %vm235, %v1043, 0.0
  %v1189 = vadd.f32 %v1187, %v1188
  %v1190 = vsel %vm235, %v1044, 0.0
  %v1191 = vadd.f32 %v1189, %v1190
  %v1192 = vsel %vm235, %v1045, 0.0
  %v1193 = vadd.f32 %v1191, %v1192
  %v1194 = vsel %vm235, %v1046, 0.0
  %v1195 = vadd.f32 %v1193, %v1194
  %v1196 = vsel %vm235, %v1047, 0.0
  %v1197 = vadd.f32 %v1195, %v1196
  %v1198 = vsel %vm235, %v1048, 0.0
  %v1199 = vadd.f32 %v1197, %v1198
  %v1200 = vsel %vm235, %v1049, 0.0
  %v1201 = vadd.f32 %v1199, %v1200
  %v1202 = vsel %vm235, %v1050, 0.0
  %v1203 = vadd.f32 %v1201, %v1202
  %v1204 = vsel %vm235, %v1051, 0.0
  %v1205 = vadd.f32 %v1203, %v1204
  %v1206 = vsel %vm235, %v1052, 0.0
  %v1207 = vadd.f32 %v1205, %v1206
  %v1208 = vsel %vm235, %v1053, 0.0
  %v1209 = vadd.f32 %v1207, %v1208
  %v1210 = vsel %vm235, %v1054, 0.0
  %v1211 = vadd.f32 %v1209, %v1210
  %v1212 = vsel %vm235, %v1055, 0.0
  %v1213 = vadd.f32 %v1211, %v1212
  %v1214 = vsel %vm235, %v1056, 0.0
  %v1215 = vadd.f32 %v1213, %v1214
  %v1216 = vsel %vm235, %v1057, 0.0
  %v1217 = vadd.f32 %v1215, %v1216
  %v1218 = vsel %vm235, %v1058, 0.0
  %v1219 = vadd.f32 %v1217, %v1218
  %v1220 = vsel %vm235, %v1059, 0.0
  %v1221 = vadd.f32 %v1219, %v1220
  %v1222 = vsel %vm235, %v1060, 0.0
  %v1223 = vadd.f32 %v1221, %v1222
  %v1224 = vsel %vm235, %v1061, 0.0
  %v1225 = vadd.f32 %v1223, %v1224
  %v1226 = vsel %vm235, %v1062, 0.0
  %v1227 = vadd.f32 %v1225, %v1226
  %v1228 = vsel %vm235, %v1063, 0.0
  %v1229 = vadd.f32 %v1227, %v1228
  %v1230 = vsel %vm235, %v1064, 0.0
  %v1231 = vadd.f32 %v1229, %v1230
  %v1232 = vsel %vm235, %v1065, 0.0
  %v1233 = vadd.f32 %v1231, %v1232
  %v1234 = vsel %vm235, %v1066, 0.0
  %v1235 = vadd.f32 %v1233, %v1234
  %v1236 = vsel %vm235, %v1067, 0.0
  %v1237 = vadd.f32 %v1235, %v1236
  %v1238 = vsel %vm235, %v1068, 0.0
  %v1239 = vadd.f32 %v1237, %v1238
  %v1240 = vsel %vm235, %v1069, 0.0
  %v1241 = vadd.f32 %v1239, %v1240
  %v1242 = vsel %vm235, %v1070, 0.0
  %v1243 = vadd.f32 %v1241, %v1242
  %v1244 = vsel %vm235, %v1071, 0.0
  %v1245 = vadd.f32 %v1243, %v1244
  %v1246 = vsel %vm235, %v1072, 0.0
  %v1247 = vadd.f32 %v1245, %v1246
  %v1248 = vsel %vm235, %v1073, 0.0
  %v1249 = vadd.f32 %v1247, %v1248
  %v1250 = vsel %vm235, %v1074, 0.0
  %v1251 = vadd.f32 %v1249, %v1250
  %v1252 = vsel %vm235, %v1075, 0.0
  %v1253 = vadd.f32 %v1251, %v1252
  %v1254 = vsel %vm235, %v1076, 0.0
  %v1255 = vadd.f32 %v1253, %v1254
  %v1256 = vsel %vm235, %v1077, 0.0
  %v1257 = vadd.f32 %v1255, %v1256
  %v1258 = vsel %vm235, %v1078, 0.0
  %v1259 = vadd.f32 %v1257, %v1258
  %v1260 = vsel %vm235, %v1079, 0.0
  %v1261 = vadd.f32 %v1259, %v1260
  %v1262 = vsel %vm235, %v1080, 0.0
  %v1263 = vadd.f32 %v1261, %v1262
  %v1264 = vsel %vm235, %v1081, 0.0
  %v1265 = vadd.f32 %v1263, %v1264
  %v1266 = vsel %vm235, %v1082, 0.0
  %v1267 = vadd.f32 %v1265, %v1266
  %v1268 = vsel %vm235, %v1083, 0.0
  %v1269 = vadd.f32 %v1267, %v1268
  %v1270 = vsel %vm235, %v1084, 0.0
  %v1271 = vadd.f32 %v1269, %v1270
  %v1272 = vsel %vm235, %v1085, 0.0
  %v1273 = vadd.f32 %v1271, %v1272
  %v1274 = vsel %vm235, %v1086, 0.0
  %v1275 = vadd.f32 %v1273, %v1274
  %v1276 = vsel %vm235, %v1087, 0.0
  %v1277 = vadd.f32 %v1275, %v1276
  %v1278 = vsel %vm235, %v1088, 0.0
  %v1279 = vadd.f32 %v1277, %v1278
  %v1280 = vrot.slane %v1279, 4
  %v1281 = vadd.f32 %v1279, %v1280
  %v1282 = vrot.slane %v1281, 2
  %v1283 = vadd.f32 %v1281, %v1282
  %v1284 = vrot.slane %v1283, 1
  %v1285 = vadd.f32 %v1283, %v1284
  %vm1286 = vcmask 253952
  %1287 = vst.msk [vmem:[%s6] sm:$0x1] %vm1286, %v1285
  %v1288 = vmul.f32 %v1025, %v1025
  %v1289 = vmul.f32 %v1026, %v1026
  %v1290 = vmul.f32 %v1027, %v1027
  %v1291 = vmul.f32 %v1028, %v1028
  %v1292 = vmul.f32 %v1029, %v1029
  %v1293 = vmul.f32 %v1030, %v1030
  %v1294 = vmul.f32 %v1031, %v1031
  %v1295 = vmul.f32 %v1032, %v1032
  %v1296 = vmul.f32 %v1033, %v1033
  %v1297 = vmul.f32 %v1034, %v1034
  %v1298 = vmul.f32 %v1035, %v1035
  %v1299 = vmul.f32 %v1036, %v1036
  %v1300 = vmul.f32 %v1037, %v1037
  %v1301 = vmul.f32 %v1038, %v1038
  %v1302 = vmul.f32 %v1039, %v1039
  %v1303 = vmul.f32 %v1040, %v1040
  %v1304 = vmul.f32 %v1041, %v1041
  %v1305 = vmul.f32 %v1042, %v1042
  %v1306 = vmul.f32 %v1043, %v1043
  %v1307 = vmul.f32 %v1044, %v1044
  %v1308 = vmul.f32 %v1045, %v1045
  %v1309 = vmul.f32 %v1046, %v1046
  %v1310 = vmul.f32 %v1047, %v1047
  %v1311 = vmul.f32 %v1048, %v1048
  %v1312 = vmul.f32 %v1049, %v1049
  %v1313 = vmul.f32 %v1050, %v1050
  %v1314 = vmul.f32 %v1051, %v1051
  %v1315 = vmul.f32 %v1052, %v1052
  %v1316 = vmul.f32 %v1053, %v1053
  %v1317 = vmul.f32 %v1054, %v1054
  %v1318 = vmul.f32 %v1055, %v1055
  %v1319 = vmul.f32 %v1056, %v1056
  %v1320 = vmul.f32 %v1057, %v1057
  %v1321 = vmul.f32 %v1058, %v1058
  %v1322 = vmul.f32 %v1059, %v1059
  %v1323 = vmul.f32 %v1060, %v1060
  %v1324 = vmul.f32 %v1061, %v1061
  %v1325 = vmul.f32 %v1062, %v1062
  %v1326 = vmul.f32 %v1063, %v1063
  %v1327 = vmul.f32 %v1064, %v1064
  %v1328 = vmul.f32 %v1065, %v1065
  %v1329 = vmul.f32 %v1066, %v1066
  %v1330 = vmul.f32 %v1067, %v1067
  %v1331 = vmul.f32 %v1068, %v1068
  %v1332 = vmul.f32 %v1069, %v1069
  %v1333 = vmul.f32 %v1070, %v1070
  %v1334 = vmul.f32 %v1071, %v1071
  %v1335 = vmul.f32 %v1072, %v1072
  %v1336 = vmul.f32 %v1073, %v1073
  %v1337 = vmul.f32 %v1074, %v1074
  %v1338 = vmul.f32 %v1075, %v1075
  %v1339 = vmul.f32 %v1076, %v1076
  %v1340 = vmul.f32 %v1077, %v1077
  %v1341 = vmul.f32 %v1078, %v1078
  %v1342 = vmul.f32 %v1079, %v1079
  %v1343 = vmul.f32 %v1080, %v1080
  %v1344 = vmul.f32 %v1081, %v1081
  %v1345 = vmul.f32 %v1082, %v1082
  %v1346 = vmul.f32 %v1083, %v1083
  %v1347 = vmul.f32 %v1084, %v1084
  %v1348 = vmul.f32 %v1085, %v1085
  %v1349 = vmul.f32 %v1086, %v1086
  %v1350 = vmul.f32 %v1087, %v1087
  %v1351 = vmul.f32 %v1088, %v1088
  %v1352 = vsel %vm235, %v1288, 0.0
  %v1353 = vsel %vm235, %v1289, 0.0
  %v1354 = vadd.f32 %v1352, %v1353
  %v1355 = vsel %vm235, %v1290, 0.0
  %v1356 = vadd.f32 %v1354, %v1355
  %v1357 = vsel %vm235, %v1291, 0.0
  %v1358 = vadd.f32 %v1356, %v1357
  %v1359 = vsel %vm235, %v1292, 0.0
  %v1360 = vadd.f32 %v1358, %v1359
  %v1361 = vsel %vm235, %v1293, 0.0
  %v1362 = vadd.f32 %v1360, %v1361
  %v1363 = vsel %vm235, %v1294, 0.0
  %v1364 = vadd.f32 %v1362, %v1363
  %v1365 = vsel %vm235, %v1295, 0.0
  %v1366 = vadd.f32 %v1364, %v1365
  %v1367 = vsel %vm235, %v1296, 0.0
  %v1368 = vadd.f32 %v1366, %v1367
  %v1369 = vsel %vm235, %v1297, 0.0
  %v1370 = vadd.f32 %v1368, %v1369
  %v1371 = vsel %vm235, %v1298, 0.0
  %v1372 = vadd.f32 %v1370, %v1371
  %v1373 = vsel %vm235, %v1299, 0.0
  %v1374 = vadd.f32 %v1372, %v1373
  %v1375 = vsel %vm235, %v1300, 0.0
  %v1376 = vadd.f32 %v1374, %v1375
  %v1377 = vsel %vm235, %v1301, 0.0
  %v1378 = vadd.f32 %v1376, %v1377
  %v1379 = vsel %vm235, %v1302, 0.0
  %v1380 = vadd.f32 %v1378, %v1379
  %v1381 = vsel %vm235, %v1303, 0.0
  %v1382 = vadd.f32 %v1380, %v1381
  %v1383 = vsel %vm235, %v1304, 0.0
  %v1384 = vadd.f32 %v1382, %v1383
  %v1385 = vsel %vm235, %v1305, 0.0
  %v1386 = vadd.f32 %v1384, %v1385
  %v1387 = vsel %vm235, %v1306, 0.0
  %v1388 = vadd.f32 %v1386, %v1387
  %v1389 = vsel %vm235, %v1307, 0.0
  %v1390 = vadd.f32 %v1388, %v1389
  %v1391 = vsel %vm235, %v1308, 0.0
  %v1392 = vadd.f32 %v1390, %v1391
  %v1393 = vsel %vm235, %v1309, 0.0
  %v1394 = vadd.f32 %v1392, %v1393
  %v1395 = vsel %vm235, %v1310, 0.0
  %v1396 = vadd.f32 %v1394, %v1395
  %v1397 = vsel %vm235, %v1311, 0.0
  %v1398 = vadd.f32 %v1396, %v1397
  %v1399 = vsel %vm235, %v1312, 0.0
  %v1400 = vadd.f32 %v1398, %v1399
  %v1401 = vsel %vm235, %v1313, 0.0
  %v1402 = vadd.f32 %v1400, %v1401
  %v1403 = vsel %vm235, %v1314, 0.0
  %v1404 = vadd.f32 %v1402, %v1403
  %v1405 = vsel %vm235, %v1315, 0.0
  %v1406 = vadd.f32 %v1404, %v1405
  %v1407 = vsel %vm235, %v1316, 0.0
  %v1408 = vadd.f32 %v1406, %v1407
  %v1409 = vsel %vm235, %v1317, 0.0
  %v1410 = vadd.f32 %v1408, %v1409
  %v1411 = vsel %vm235, %v1318, 0.0
  %v1412 = vadd.f32 %v1410, %v1411
  %v1413 = vsel %vm235, %v1319, 0.0
  %v1414 = vadd.f32 %v1412, %v1413
  %v1415 = vsel %vm235, %v1320, 0.0
  %v1416 = vadd.f32 %v1414, %v1415
  %v1417 = vsel %vm235, %v1321, 0.0
  %v1418 = vadd.f32 %v1416, %v1417
  %v1419 = vsel %vm235, %v1322, 0.0
  %v1420 = vadd.f32 %v1418, %v1419
  %v1421 = vsel %vm235, %v1323, 0.0
  %v1422 = vadd.f32 %v1420, %v1421
  %v1423 = vsel %vm235, %v1324, 0.0
  %v1424 = vadd.f32 %v1422, %v1423
  %v1425 = vsel %vm235, %v1325, 0.0
  %v1426 = vadd.f32 %v1424, %v1425
  %v1427 = vsel %vm235, %v1326, 0.0
  %v1428 = vadd.f32 %v1426, %v1427
  %v1429 = vsel %vm235, %v1327, 0.0
  %v1430 = vadd.f32 %v1428, %v1429
  %v1431 = vsel %vm235, %v1328, 0.0
  %v1432 = vadd.f32 %v1430, %v1431
  %v1433 = vsel %vm235, %v1329, 0.0
  %v1434 = vadd.f32 %v1432, %v1433
  %v1435 = vsel %vm235, %v1330, 0.0
  %v1436 = vadd.f32 %v1434, %v1435
  %v1437 = vsel %vm235, %v1331, 0.0
  %v1438 = vadd.f32 %v1436, %v1437
  %v1439 = vsel %vm235, %v1332, 0.0
  %v1440 = vadd.f32 %v1438, %v1439
  %v1441 = vsel %vm235, %v1333, 0.0
  %v1442 = vadd.f32 %v1440, %v1441
  %v1443 = vsel %vm235, %v1334, 0.0
  %v1444 = vadd.f32 %v1442, %v1443
  %v1445 = vsel %vm235, %v1335, 0.0
  %v1446 = vadd.f32 %v1444, %v1445
  %v1447 = vsel %vm235, %v1336, 0.0
  %v1448 = vadd.f32 %v1446, %v1447
  %v1449 = vsel %vm235, %v1337, 0.0
  %v1450 = vadd.f32 %v1448, %v1449
  %v1451 = vsel %vm235, %v1338, 0.0
  %v1452 = vadd.f32 %v1450, %v1451
  %v1453 = vsel %vm235, %v1339, 0.0
  %v1454 = vadd.f32 %v1452, %v1453
  %v1455 = vsel %vm235, %v1340, 0.0
  %v1456 = vadd.f32 %v1454, %v1455
  %v1457 = vsel %vm235, %v1341, 0.0
  %v1458 = vadd.f32 %v1456, %v1457
  %v1459 = vsel %vm235, %v1342, 0.0
  %v1460 = vadd.f32 %v1458, %v1459
  %v1461 = vsel %vm235, %v1343, 0.0
  %v1462 = vadd.f32 %v1460, %v1461
  %v1463 = vsel %vm235, %v1344, 0.0
  %v1464 = vadd.f32 %v1462, %v1463
  %v1465 = vsel %vm235, %v1345, 0.0
  %v1466 = vadd.f32 %v1464, %v1465
  %v1467 = vsel %vm235, %v1346, 0.0
  %v1468 = vadd.f32 %v1466, %v1467
  %v1469 = vsel %vm235, %v1347, 0.0
  %v1470 = vadd.f32 %v1468, %v1469
  %v1471 = vsel %vm235, %v1348, 0.0
  %v1472 = vadd.f32 %v1470, %v1471
  %v1473 = vsel %vm235, %v1349, 0.0
  %v1474 = vadd.f32 %v1472, %v1473
  %v1475 = vsel %vm235, %v1350, 0.0
  %v1476 = vadd.f32 %v1474, %v1475
  %v1477 = vsel %vm235, %v1351, 0.0
  %v1478 = vadd.f32 %v1476, %v1477
  %v1479 = vrot.slane %v1478, 4
  %v1480 = vadd.f32 %v1478, %v1479
  %v1481 = vrot.slane %v1480, 2
  %v1482 = vadd.f32 %v1480, %v1481
  %v1483 = vrot.slane %v1482, 1
  %v1484 = vadd.f32 %v1482, %v1483
  %1485 = vst.msk [vmem:[%s6 + $0x1] sm:$0x1] %vm1286, %v1484
  // Predicated region
  $region22: #{recurrent_residual_block_tl.12} parent=0 // pred_check
    _
  $region23: #{recurrent_residual_block_tl.12} parent=0 // pred_check_branch
    %1487 = sbr.rel (0) target = $region25
  $region24: #{recurrent_residual_block_tl.12} parent=0 // pred_region
    _
  $region25: #{recurrent_residual_block_tl.12} parent=0 // pred_fallthru
    _
  // Predicated region
  $region26: #{recurrent_residual_block_tl.12} parent=0 // pred_check
    _
  $region27: #{recurrent_residual_block_tl.12} parent=0 // pred_check_branch
    %1489 = sbr.rel (0) target = $region29
  $region28: #{recurrent_residual_block_tl.12} parent=0 // pred_region
    _
  $region29: #{recurrent_residual_block_tl.12} parent=0 // pred_fallthru
    _
  // Predicated region
  $region30: #{recurrent_residual_block_tl.12} parent=0 // pred_check
    _
  $region31: #{recurrent_residual_block_tl.12} parent=0 // pred_check_branch
    %1491 = sbr.rel (0) target = $region33
  $region32: #{recurrent_residual_block_tl.12} parent=0 // pred_region
    _
  $region33: #{recurrent_residual_block_tl.12} parent=0 // pred_fallthru
    _
  // Predicated region
  $region34: #{recurrent_residual_block_tl.12} parent=0 // pred_check
    _
  $region35: #{recurrent_residual_block_tl.12} parent=0 // pred_check_branch
    %1493 = sbr.rel (0) target = $region37
  $region36: #{recurrent_residual_block_tl.12} parent=0 // pred_region
    _
  $region37: #{recurrent_residual_block_tl.12} parent=0 // pred_fallthru
    _

// kernel: recurrent_residual_block_tl.13
$region0: #{recurrent_residual_block_tl.13}
  #allocation0 [shape = 'u32[]', space=smem, size = 0x4, offset = 0x4, fixed_abs, tag = 'smem constant byte address 0x4 - core index']
  #allocation1 [shape = 'u32[144,128]{1,0:T(1,128)}', space=vmem, size = 0x12000, scoped, tag = 'internal scratch']
  #allocation2 [shape = 'f32[1,1]{1,0:T(1,128)S(1)}', space=vmem, size = 0x200, scoped, tag = 'scoped memory for recurrent_residual_block_tl.13']
  %s0 = inlined_call_operand.vmem [shape: f32[2,256,32], index: 0, kind: input, shape index: {}]
  %s1 = inlined_call_operand.vmem [shape: f32[1,32], index: 1, kind: input, shape index: {}]
  %s2 = inlined_call_operand.vmem [shape: f32[1,32], index: 2, kind: input, shape index: {}]
  %s3 = inlined_call_operand.<no memory space> [shape: f32[1,1], index: 3, kind: input, shape index: {}]
  %s4 = inlined_call_operand.vmem [shape: bf16[32,32], index: 4, kind: input, shape index: {}]
  %s5 = inlined_call_operand.vmem [shape: f32[1,32], index: 5, kind: input, shape index: {}]
  %s6 = inlined_call_operand.vmem [shape: f32[32,2], index: 6, kind: input, shape index: {}]
  %s7 = inlined_call_operand.vmem [shape: f32[1,2], index: 7, kind: input, shape index: {}]
  %s8 = inlined_call_operand.vmem [shape: f32[2,256,32], index: 8, kind: output, shape index: {0}]
  %s9 = inlined_call_operand.vmem [shape: f32[2,256,2], index: 9, kind: output, shape index: {1}]
  %s10 = inlined_call_operand.vmem [shape: f32[2,1,1,32], index: 10, kind: output, shape index: {2}]
  %11 = xla_tuple %s8, %s9, %s10
  %s12 = sld [smem:[#allocation0]]
  $region81: #{recurrent_residual_block_tl.13} parent=0
    _
  %s14 = ssub.s32 1, %s12
  %s15 = scalar_select 0, %s14, %s12
  %v16 = vstv %s3
  %17 = vst [vmem:[#allocation2] sm:$0x1] %v16
  loop: start=0, step=1, limit=4
  $region2: #{recurrent_residual_block_tl.13} parent=0 // loop_pre_header
    _
  $region3: #{recurrent_residual_block_tl.13} parent=0 // loop_header
    %s19 = sphi 0, %s23
    %p20 = scmp.ge.s32.totalorder %s19, 4
    %s26 = sphi 0, %s38
    %s27 = sphi 0, %s34
    %s28 = sphi 0, %s26
    %s29 = sphi 0, %s27
    %s30 = sphi 0, %s28
    %s31 = sphi 0, %s29
    %s43 = sphi 0, %s45
    %s46 = sphi 0, %s43
    %s47 = sphi 0, %s46
    %s63 = sphi 0, %s47
    %s67 = sphi 0, %s67
    %s69 = sphi 0, %s67
    %s70 = sphi 0, %s69
    %s84 = sphi 0, %s70
    %s88 = sphi 0, %s88
    %s90 = sphi 0, %s88
    %s91 = sphi 0, %s90
    %s105 = sphi 0, %s91
    %s109 = sphi 0, %s109
    %s111 = sphi 0, %s109
    %s112 = sphi 0, %s111
    %s126 = sphi 0, %s112
    %s130 = sphi 0, %s130
    %s132 = sphi 0, %s130
    %s133 = sphi 0, %s132
    %s147 = sphi 0, %s133
    %s151 = sphi 0, %s151
    %s153 = sphi 0, %s151
    %s154 = sphi 0, %s153
    %s168 = sphi 0, %s154
    %s172 = sphi 0, %s172
    %s174 = sphi 0, %s172
    %s175 = sphi 0, %s174
    %s189 = sphi 0, %s175
    %s193 = sphi 0, %s193
    %s195 = sphi 0, %s193
    %s196 = sphi 0, %s195
    %s210 = sphi 0, %s196
    %s218 = sphi 0, %s220
    %s221 = sphi 0, %s218
    %s222 = sphi 0, %s221
    %s238 = sphi 0, %s222
    %s246 = sphi 0, %s248
    %s249 = sphi 0, %s246
    %s250 = sphi 0, %s249
    %s266 = sphi 0, %s250
    %s274 = sphi 0, %s276
    %s277 = sphi 0, %s274
    %s278 = sphi 0, %s277
    %s294 = sphi 0, %s278
  $region4: #{recurrent_residual_block_tl.13} parent=0 // loop_header_branch
    %22 = sbr.rel (%p20) target = $region8
  $region5: #{recurrent_residual_block_tl.13} parent=0 // loop_body
    %s24 = ssub.s32 %s19, 1
    %s25 = ssub.s32 %s19, 2
    %s32 = sadd.s32 1, %s27
    %p33 = scmp.ge.s32.totalorder %s32, 1
    %s34 = scalar_select %p33, 0, %s32
    %s35 = sadd.s32 1, %s26
    %s36 = scalar_select %p33, %s35, %s26
    %p37 = scmp.ge.s32.totalorder %s36, 2
    %s38 = scalar_select %p37, 0, %s36
    %s39 = ssub.s32 %s26, %s38
    %s40 = ssub.s32 %s27, %s34
    %s41 = sor.u32 %s39, %s40
    %p42 = scmp.eq.s32.totalorder %s41, 0
    %s44 = sadd.s32 %s43, 1
    %s45 = scalar_select %p42, %s43, %s44
    %p48 = pneg %p42
    %p49 = scmp.eq.s32.totalorder %s19, 1
    %p50 = por %p48, %p49
    %p51 = scmp.ne.s32.totalorder %s43, %s46
    %p52 = scmp.eq.s32.totalorder %s19, 0
    %p53 = por %p51, %p52
    %p54 = scmp.ne.s32.totalorder %s43, %s46
    %p55 = scmp.eq.s32.totalorder %s24, 1
    %p56 = por %p54, %p55
    %p57 = scmp.ne.s32.totalorder %s46, %s47
    %p58 = scmp.eq.s32.totalorder %s24, 0
    %p59 = por %p57, %p58
    %p60 = scmp.ne.s32.totalorder %s46, %s47
    %p61 = scmp.eq.s32.totalorder %s25, 1
    %p62 = por %p60, %p61
    %p64 = scmp.ne.s32.totalorder %s47, %s63
    %p65 = scmp.eq.s32.totalorder %s25, 0
    %p66 = por %p64, %p65
    %s68 = sadd.s32 %s67, 1
    %p71 = scmp.eq.s32.totalorder %s19, 1
    %p72 = scmp.ne.s32.totalorder %s67, %s69
    %p73 = scmp.eq.s32.totalorder %s19, 0
    %p74 = por %p72, %p73
    %p75 = scmp.ne.s32.totalorder %s67, %s69
    %p76 = scmp.eq.s32.totalorder %s24, 1
    %p77 = por %p75, %p76
    %p78 = scmp.ne.s32.totalorder %s69, %s70
    %p79 = scmp.eq.s32.totalorder %s24, 0
    %p80 = por %p78, %p79
    %p81 = scmp.ne.s32.totalorder %s69, %s70
    %p82 = scmp.eq.s32.totalorder %s25, 1
    %p83 = por %p81, %p82
    %p85 = scmp.ne.s32.totalorder %s70, %s84
    %p86 = scmp.eq.s32.totalorder %s25, 0
    %p87 = por %p85, %p86
    %s89 = sadd.s32 %s88, 1
    %p92 = scmp.eq.s32.totalorder %s19, 1
    %p93 = scmp.ne.s32.totalorder %s88, %s90
    %p94 = scmp.eq.s32.totalorder %s19, 0
    %p95 = por %p93, %p94
    %p96 = scmp.ne.s32.totalorder %s88, %s90
    %p97 = scmp.eq.s32.totalorder %s24, 1
    %p98 = por %p96, %p97
    %p99 = scmp.ne.s32.totalorder %s90, %s91
    %p100 = scmp.eq.s32.totalorder %s24, 0
    %p101 = por %p99, %p100
    %p102 = scmp.ne.s32.totalorder %s90, %s91
    %p103 = scmp.eq.s32.totalorder %s25, 1
    %p104 = por %p102, %p103
    %p106 = scmp.ne.s32.totalorder %s91, %s105
    %p107 = scmp.eq.s32.totalorder %s25, 0
    %p108 = por %p106, %p107
    %s110 = sadd.s32 %s109, 1
    %p113 = scmp.eq.s32.totalorder %s19, 1
    %p114 = scmp.ne.s32.totalorder %s109, %s111
    %p115 = scmp.eq.s32.totalorder %s19, 0
    %p116 = por %p114, %p115
    %p117 = scmp.ne.s32.totalorder %s109, %s111
    %p118 = scmp.eq.s32.totalorder %s24, 1
    %p119 = por %p117, %p118
    %p120 = scmp.ne.s32.totalorder %s111, %s112
    %p121 = scmp.eq.s32.totalorder %s24, 0
    %p122 = por %p120, %p121
    %p123 = scmp.ne.s32.totalorder %s111, %s112
    %p124 = scmp.eq.s32.totalorder %s25, 1
    %p125 = por %p123, %p124
    %p127 = scmp.ne.s32.totalorder %s112, %s126
    %p128 = scmp.eq.s32.totalorder %s25, 0
    %p129 = por %p127, %p128
    %s131 = sadd.s32 %s130, 1
    %p134 = scmp.eq.s32.totalorder %s19, 1
    %p135 = scmp.ne.s32.totalorder %s130, %s132
    %p136 = scmp.eq.s32.totalorder %s19, 0
    %p137 = por %p135, %p136
    %p138 = scmp.ne.s32.totalorder %s130, %s132
    %p139 = scmp.eq.s32.totalorder %s24, 1
    %p140 = por %p138, %p139
    %p141 = scmp.ne.s32.totalorder %s132, %s133
    %p142 = scmp.eq.s32.totalorder %s24, 0
    %p143 = por %p141, %p142
    %p144 = scmp.ne.s32.totalorder %s132, %s133
    %p145 = scmp.eq.s32.totalorder %s25, 1
    %p146 = por %p144, %p145
    %p148 = scmp.ne.s32.totalorder %s133, %s147
    %p149 = scmp.eq.s32.totalorder %s25, 0
    %p150 = por %p148, %p149
    %s152 = sadd.s32 %s151, 1
    %p155 = scmp.eq.s32.totalorder %s19, 1
    %p156 = scmp.ne.s32.totalorder %s151, %s153
    %p157 = scmp.eq.s32.totalorder %s19, 0
    %p158 = por %p156, %p157
    %p159 = scmp.ne.s32.totalorder %s151, %s153
    %p160 = scmp.eq.s32.totalorder %s24, 1
    %p161 = por %p159, %p160
    %p162 = scmp.ne.s32.totalorder %s153, %s154
    %p163 = scmp.eq.s32.totalorder %s24, 0
    %p164 = por %p162, %p163
    %p165 = scmp.ne.s32.totalorder %s153, %s154
    %p166 = scmp.eq.s32.totalorder %s25, 1
    %p167 = por %p165, %p166
    %p169 = scmp.ne.s32.totalorder %s154, %s168
    %p170 = scmp.eq.s32.totalorder %s25, 0
    %p171 = por %p169, %p170
    %s173 = sadd.s32 %s172, 1
    %p176 = scmp.eq.s32.totalorder %s19, 1
    %p177 = scmp.ne.s32.totalorder %s172, %s174
    %p178 = scmp.eq.s32.totalorder %s19, 0
    %p179 = por %p177, %p178
    %p180 = scmp.ne.s32.totalorder %s172, %s174
    %p181 = scmp.eq.s32.totalorder %s24, 1
    %p182 = por %p180, %p181
    %p183 = scmp.ne.s32.totalorder %s174, %s175
    %p184 = scmp.eq.s32.totalorder %s24, 0
    %p185 = por %p183, %p184
    %p186 = scmp.ne.s32.totalorder %s174, %s175
    %p187 = scmp.eq.s32.totalorder %s25, 1
    %p188 = por %p186, %p187
    %p190 = scmp.ne.s32.totalorder %s175, %s189
    %p191 = scmp.eq.s32.totalorder %s25, 0
    %p192 = por %p190, %p191
    %s194 = sadd.s32 %s193, 1
    %p197 = scmp.eq.s32.totalorder %s19, 1
    %p198 = scmp.ne.s32.totalorder %s193, %s195
    %p199 = scmp.eq.s32.totalorder %s19, 0
    %p200 = por %p198, %p199
    %p201 = scmp.ne.s32.totalorder %s193, %s195
    %p202 = scmp.eq.s32.totalorder %s24, 1
    %p203 = por %p201, %p202
    %p204 = scmp.ne.s32.totalorder %s195, %s196
    %p205 = scmp.eq.s32.totalorder %s24, 0
    %p206 = por %p204, %p205
    %p207 = scmp.ne.s32.totalorder %s195, %s196
    %p208 = scmp.eq.s32.totalorder %s25, 1
    %p209 = por %p207, %p208
    %p211 = scmp.ne.s32.totalorder %s196, %s210
    %p212 = scmp.eq.s32.totalorder %s25, 0
    %p213 = por %p211, %p212
    %s214 = ssub.s32 %s26, %s38
    %s215 = ssub.s32 %s27, %s34
    %s216 = sor.u32 %s214, %s215
    %p217 = scmp.eq.s32.totalorder %s216, 0
    %s219 = sadd.s32 %s218, 1
    %s220 = scalar_select %p217, %s218, %s219
    %p223 = pneg %p217
    %p224 = scmp.eq.s32.totalorder %s19, 1
    %p225 = por %p223, %p224
    %p226 = scmp.ne.s32.totalorder %s218, %s221
    %p227 = scmp.eq.s32.totalorder %s19, 0
    %p228 = por %p226, %p227
    %p229 = scmp.ne.s32.totalorder %s218, %s221
    %p230 = scmp.eq.s32.totalorder %s24, 1
    %p231 = por %p229, %p230
    %p232 = scmp.ne.s32.totalorder %s221, %s222
    %p233 = scmp.eq.s32.totalorder %s24, 0
    %p234 = por %p232, %p233
    %p235 = scmp.ne.s32.totalorder %s221, %s222
    %p236 = scmp.eq.s32.totalorder %s25, 1
    %p237 = por %p235, %p236
    %p239 = scmp.ne.s32.totalorder %s222, %s238
    %p240 = scmp.eq.s32.totalorder %s25, 0
    %p241 = por %p239, %p240
    %s242 = ssub.s32 %s26, %s38
    %s243 = ssub.s32 %s27, %s34
    %s244 = sor.u32 %s242, %s243
    %p245 = scmp.eq.s32.totalorder %s244, 0
    %s247 = sadd.s32 %s246, 1
    %s248 = scalar_select %p245, %s246, %s247
    %p251 = pneg %p245
    %p252 = scmp.eq.s32.totalorder %s19, 1
    %p253 = por %p251, %p252
    %p254 = scmp.ne.s32.totalorder %s246, %s249
    %p255 = scmp.eq.s32.totalorder %s19, 0
    %p256 = por %p254, %p255
    %p257 = scmp.ne.s32.totalorder %s246, %s249
    %p258 = scmp.eq.s32.totalorder %s24, 1
    %p259 = por %p257, %p258
    %p260 = scmp.ne.s32.totalorder %s249, %s250
    %p261 = scmp.eq.s32.totalorder %s24, 0
    %p262 = por %p260, %p261
    %p263 = scmp.ne.s32.totalorder %s249, %s250
    %p264 = scmp.eq.s32.totalorder %s25, 1
    %p265 = por %p263, %p264
    %p267 = scmp.ne.s32.totalorder %s250, %s266
    %p268 = scmp.eq.s32.totalorder %s25, 0
    %p269 = por %p267, %p268
    %s270 = ssub.s32 %s26, %s38
    %s271 = ssub.s32 %s27, %s34
    %s272 = sor.u32 %s270, %s271
    %p273 = scmp.eq.s32.totalorder %s272, 0
    %s275 = sadd.s32 %s274, 1
    %s276 = scalar_select %p273, %s274, %s275
    %p279 = pneg %p273
    %p280 = scmp.eq.s32.totalorder %s19, 1
    %p281 = por %p279, %p280
    %p282 = scmp.ne.s32.totalorder %s274, %s277
    %p283 = scmp.eq.s32.totalorder %s19, 0
    %p284 = por %p282, %p283
    %p285 = scmp.ne.s32.totalorder %s274, %s277
    %p286 = scmp.eq.s32.totalorder %s24, 1
    %p287 = por %p285, %p286
    %p288 = scmp.ne.s32.totalorder %s277, %s278
    %p289 = scmp.eq.s32.totalorder %s24, 0
    %p290 = por %p288, %p289
    %p291 = scmp.ne.s32.totalorder %s277, %s278
    %p292 = scmp.eq.s32.totalorder %s25, 1
    %p293 = por %p291, %p292
    %p295 = scmp.ne.s32.totalorder %s278, %s294
    %p296 = scmp.eq.s32.totalorder %s25, 0
    %p297 = por %p295, %p296
    %p298 = scmp.le.s32.totalorder 1, %s19
    %p299 = scmp.lt.s32.totalorder %s19, 3
    %p300 = pnand %p298, %p299
    %p301 = pneg %p300
    // Predicated region
    $region9: #{recurrent_residual_block_tl.13} parent=5 // pred_check
      _
    $region10: #{recurrent_residual_block_tl.13} parent=5 // pred_check_branch
      %303 = sbr.rel (%p300) target = $region12
    $region11: #{recurrent_residual_block_tl.13} parent=5 // pred_region
      %s304 = ssub.s32 %s19, 1
      // Predicated region
      $region13: #{recurrent_residual_block_tl.13} parent=11 // pred_check
        %p305 = pneg %p80
      $region14: #{recurrent_residual_block_tl.13} parent=11 // pred_check_branch
        %307 = sbr.rel (%p305) target = $region16
      $region15: #{recurrent_residual_block_tl.13} parent=11 // pred_region
        _
      $region16: #{recurrent_residual_block_tl.13} parent=11 // pred_fallthru
        _
      // Predicated region
      $region17: #{recurrent_residual_block_tl.13} parent=11 // pred_check
        %p308 = pneg %p101
      $region18: #{recurrent_residual_block_tl.13} parent=11 // pred_check_branch
        %310 = sbr.rel (%p308) target = $region20
      $region19: #{recurrent_residual_block_tl.13} parent=11 // pred_region
        _
      $region20: #{recurrent_residual_block_tl.13} parent=11 // pred_fallthru
        _
      // Predicated region
      $region21: #{recurrent_residual_block_tl.13} parent=11 // pred_check
        %p311 = pneg %p122
      $region22: #{recurrent_residual_block_tl.13} parent=11 // pred_check_branch
        %313 = sbr.rel (%p311) target = $region24
      $region23: #{recurrent_residual_block_tl.13} parent=11 // pred_region
        _
      $region24: #{recurrent_residual_block_tl.13} parent=11 // pred_fallthru
        _
      // Predicated region
      $region25: #{recurrent_residual_block_tl.13} parent=11 // pred_check
        %p314 = pneg %p143
      $region26: #{recurrent_residual_block_tl.13} parent=11 // pred_check_branch
        %316 = sbr.rel (%p314) target = $region28
      $region27: #{recurrent_residual_block_tl.13} parent=11 // pred_region
        _
      $region28: #{recurrent_residual_block_tl.13} parent=11 // pred_fallthru
        _
      // Predicated region
      $region29: #{recurrent_residual_block_tl.13} parent=11 // pred_check
        %p317 = pneg %p164
      $region30: #{recurrent_residual_block_tl.13} parent=11 // pred_check_branch
        %319 = sbr.rel (%p317) target = $region32
      $region31: #{recurrent_residual_block_tl.13} parent=11 // pred_region
        _
      $region32: #{recurrent_residual_block_tl.13} parent=11 // pred_fallthru
        _
      // Predicated region
      $region33: #{recurrent_residual_block_tl.13} parent=11 // pred_check
        %p320 = pneg %p185
      $region34: #{recurrent_residual_block_tl.13} parent=11 // pred_check_branch
        %322 = sbr.rel (%p320) target = $region36
      $region35: #{recurrent_residual_block_tl.13} parent=11 // pred_region
        _
      $region36: #{recurrent_residual_block_tl.13} parent=11 // pred_fallthru
        _
      // Predicated region
      $region37: #{recurrent_residual_block_tl.13} parent=11 // pred_check
        %p323 = pneg %p206
      $region38: #{recurrent_residual_block_tl.13} parent=11 // pred_check_branch
        %325 = sbr.rel (%p323) target = $region40
      $region39: #{recurrent_residual_block_tl.13} parent=11 // pred_region
        _
      $region40: #{recurrent_residual_block_tl.13} parent=11 // pred_fallthru
        _
    $region12: #{recurrent_residual_block_tl.13} parent=5 // pred_fallthru
      _
    %p326 = scmp.lt.s32.totalorder %s19, 2
    // Predicated region
    $region41: #{recurrent_residual_block_tl.13} parent=5 // pred_check
      %p327 = pneg %p326
    $region42: #{recurrent_residual_block_tl.13} parent=5 // pred_check_branch
      %329 = sbr.rel (%p327) target = $region44
    $region43: #{recurrent_residual_block_tl.13} parent=5 // pred_region
      // Predicated region
      $region45: #{recurrent_residual_block_tl.13} parent=43 // pred_check
        %p330 = pneg %p53
      $region46: #{recurrent_residual_block_tl.13} parent=43 // pred_check_branch
        %332 = sbr.rel (%p330) target = $region48
      $region47: #{recurrent_residual_block_tl.13} parent=43 // pred_region
        %s333 = smul.u32 32, %s27
        %p334 = scmp.lt.s32.totalorder %s26, 1
        %s335 = scalar_select %p334, %s26, 1
        %p336 = scmp.lt.s32.totalorder %s333, 31
        %s337 = scalar_select %p336, %s333, 31
        %s338 = smul.addr %s335, 32
        %s339 = sadd.s32 %s337, %s338
        %s340 = smul.addr %s339, 8
        %s341 = scalar_lea.vmem %s0, %s340
        %s342 = smul.u32 32, %s27
      $region48: #{recurrent_residual_block_tl.13} parent=43 // pred_fallthru
        _
    $region44: #{recurrent_residual_block_tl.13} parent=5 // pred_fallthru
      _
    %p343 = scmp.le.s32.totalorder 1, %s19
    %p344 = scmp.lt.s32.totalorder %s19, 3
    %p345 = pnand %p343, %p344
    %p346 = pneg %p345
    // Predicated region
    $region49: #{recurrent_residual_block_tl.13} parent=5 // pred_check
      _
    $region50: #{recurrent_residual_block_tl.13} parent=5 // pred_check_branch
      %348 = sbr.rel (%p345) target = $region52
    $region51: #{recurrent_residual_block_tl.13} parent=5 // pred_region
      %s349 = ssub.s32 %s19, 1
      %s350 = smul.u32 32, %s29
      %p351 = scmp.lt.s32.totalorder %s28, 1
      %s352 = scalar_select %p351, %s28, 1
      %p353 = scmp.lt.s32.totalorder %s350, 31
      %s354 = scalar_select %p353, %s350, 31
      %s355 = smul.addr %s352, 32
      %s356 = sadd.s32 %s354, %s355
      %s357 = smul.addr %s356, 8
      %s358 = scalar_lea.vmem %s0, %s357
      %p359 = pneg %p59
      %p360 = pneg %p56
      %p361 = pneg %p80
      %p362 = pneg %p77
      %p363 = pneg %p101
      %p364 = pneg %p98
      %p365 = pneg %p122
      %p366 = pneg %p119
      %p367 = pneg %p143
      %p368 = pneg %p140
      %p369 = pneg %p164
      %p370 = pneg %p161
      %p371 = pneg %p185
      %p372 = pneg %p182
      %p373 = pneg %p206
      %p374 = pneg %p203
      %p375 = pneg %p234
      %p376 = pneg %p231
      %s377 = smul.u32 32, %s29
      %p378 = scmp.lt.s32.totalorder %s28, 1
      %s379 = scalar_select %p378, %s28, 1
      %p380 = scmp.lt.s32.totalorder %s377, 31
      %s381 = scalar_select %p380, %s377, 31
      %s382 = smul.addr %s379, 32
      %s383 = sadd.s32 %s381, %s382
      %s384 = smul.addr %s383, 8
      %s385 = scalar_lea.vmem %s8, %s384
      %p386 = pneg %p262
      %p387 = pneg %p259
      %s388 = smul.u32 32, %s29
      %p389 = scmp.lt.s32.totalorder %s28, 1
      %s390 = scalar_select %p389, %s28, 1
      %p391 = scmp.lt.s32.totalorder %s388, 31
      %s392 = scalar_select %p391, %s388, 31
      %s393 = smul.addr %s390, 32
      %s394 = sadd.s32 %s392, %s393
      %s395 = smul.addr %s394, 8
      %s396 = scalar_lea.vmem %s9, %s395
      %p397 = pneg %p290
      %p398 = pneg %p287
      %p399 = scmp.lt.s32.totalorder %s28, 1
      %s400 = scalar_select %p399, %s28, 1
      %p401 = scmp.lt.s32.totalorder %s29, 0
      %s402 = scalar_select %p401, %s29, 0
      %s403 = sadd.s32 %s402, %s400
      %s404 = scalar_lea.vmem %s10, %s403
      %s405 = smul.u32 32, %s29
      %p406 = scmp.lt.s32.totalorder %s28, 1
      %s407 = scalar_select %p406, %s28, 1
      %p408 = scmp.lt.s32.totalorder %s405, 31
      %s409 = scalar_select %p408, %s405, 31
      %s410 = smul.addr %s407, 32
      %s411 = sadd.s32 %s409, %s410
      %s412 = smul.addr %s411, 8
      %s413 = scalar_lea.vmem %s0, %s412
      %s414 = smul.u32 32, %s29
      %s415 = smul.u32 32, %s29
      %p416 = scmp.lt.s32.totalorder %s28, 1
      %s417 = scalar_select %p416, %s28, 1
      %p418 = scmp.lt.s32.totalorder %s415, 31
      %s419 = scalar_select %p418, %s415, 31
      %s420 = smul.addr %s417, 32
      %s421 = sadd.s32 %s419, %s420
      %s422 = smul.addr %s421, 8
      %s423 = scalar_lea.vmem %s8, %s422
      %s424 = smul.u32 32, %s29
      %s425 = smul.u32 32, %s29
      %p426 = scmp.lt.s32.totalorder %s28, 1
      %s427 = scalar_select %p426, %s28, 1
      %p428 = scmp.lt.s32.totalorder %s425, 31
      %s429 = scalar_select %p428, %s425, 31
      %s430 = smul.addr %s427, 32
      %s431 = sadd.s32 %s429, %s430
      %s432 = smul.addr %s431, 8
      %s433 = scalar_lea.vmem %s9, %s432
      %s434 = smul.u32 32, %s29
      %p435 = scmp.lt.s32.totalorder %s28, 1
      %s436 = scalar_select %p435, %s28, 1
      %p437 = scmp.lt.s32.totalorder %s29, 0
      %s438 = scalar_select %p437, %s29, 0
      %s439 = sadd.s32 %s438, %s436
      %s440 = scalar_lea.vmem %s10, %s439
      %v442 = vld [vmem:[%s413] sm:$0xff]
      %v443 = vld [vmem:[%s413 + $0x8] sm:$0xff]
      %v444 = vld [vmem:[%s413 + $0x10] sm:$0xff]
      %v445 = vld [vmem:[%s413 + $0x18] sm:$0xff]
      %v446 = vld [vmem:[%s413 + $0x20] sm:$0xff]
      %v447 = vld [vmem:[%s413 + $0x28] sm:$0xff]
      %v448 = vld [vmem:[%s413 + $0x30] sm:$0xff]
      %v449 = vld [vmem:[%s413 + $0x38] sm:$0xff]
      %v450 = vld [vmem:[%s413 + $0x40] sm:$0xff]
      %v451 = vld [vmem:[%s413 + $0x48] sm:$0xff]
      %v452 = vld [vmem:[%s413 + $0x50] sm:$0xff]
      %v453 = vld [vmem:[%s413 + $0x58] sm:$0xff]
      %v454 = vld [vmem:[%s413 + $0x60] sm:$0xff]
      %v455 = vld [vmem:[%s413 + $0x68] sm:$0xff]
      %v456 = vld [vmem:[%s413 + $0x70] sm:$0xff]
      %v457 = vld [vmem:[%s413 + $0x78] sm:$0xff]
      %v458 = vld [vmem:[%s413 + $0x80] sm:$0xff]
      %v459 = vld [vmem:[%s413 + $0x88] sm:$0xff]
      %v460 = vld [vmem:[%s413 + $0x90] sm:$0xff]
      %v461 = vld [vmem:[%s413 + $0x98] sm:$0xff]
      %v462 = vld [vmem:[%s413 + $0xa0] sm:$0xff]
      %v463 = vld [vmem:[%s413 + $0xa8] sm:$0xff]
      %v464 = vld [vmem:[%s413 + $0xb0] sm:$0xff]
      %v465 = vld [vmem:[%s413 + $0xb8] sm:$0xff]
      %v466 = vld [vmem:[%s413 + $0xc0] sm:$0xff]
      %v467 = vld [vmem:[%s413 + $0xc8] sm:$0xff]
      %v468 = vld [vmem:[%s413 + $0xd0] sm:$0xff]
      %v469 = vld [vmem:[%s413 + $0xd8] sm:$0xff]
      %v470 = vld [vmem:[%s413 + $0xe0] sm:$0xff]
      %v471 = vld [vmem:[%s413 + $0xe8] sm:$0xff]
      %v472 = vld [vmem:[%s413 + $0xf0] sm:$0xff]
      %v473 = vld [vmem:[%s413 + $0xf8] sm:$0xff]
      %v474 = vld [vmem:[%s1] sm:$0x1]
      %v476 = vlaneseq
      %v477 = vshrl.u32 %v476, 7
      %v478 = vsub.s32 0, %v477
      %v479 = vrot.slane %v474, %v478
      %v481 = vmul.f32 %v442, %v479
      %v482 = vmul.f32 %v443, %v479
      %v483 = vmul.f32 %v444, %v479
      %v484 = vmul.f32 %v445, %v479
      %v485 = vmul.f32 %v446, %v479
      %v486 = vmul.f32 %v447, %v479
      %v487 = vmul.f32 %v448, %v479
      %v488 = vmul.f32 %v449, %v479
      %v489 = vmul.f32 %v450, %v479
      %v490 = vmul.f32 %v451, %v479
      %v491 = vmul.f32 %v452, %v479
      %v492 = vmul.f32 %v453, %v479
      %v493 = vmul.f32 %v454, %v479
      %v494 = vmul.f32 %v455, %v479
      %v495 = vmul.f32 %v456, %v479
      %v496 = vmul.f32 %v457, %v479
      %v497 = vmul.f32 %v458, %v479
      %v498 = vmul.f32 %v459, %v479
      %v499 = vmul.f32 %v460, %v479
      %v500 = vmul.f32 %v461, %v479
      %v501 = vmul.f32 %v462, %v479
      %v502 = vmul.f32 %v463, %v479
      %v503 = vmul.f32 %v464, %v479
      %v504 = vmul.f32 %v465, %v479
      %v505 = vmul.f32 %v466, %v479
      %v506 = vmul.f32 %v467, %v479
      %v507 = vmul.f32 %v468, %v479
      %v508 = vmul.f32 %v469, %v479
      %v509 = vmul.f32 %v470, %v479
      %v510 = vmul.f32 %v471, %v479
      %v511 = vmul.f32 %v472, %v479
      %v512 = vmul.f32 %v473, %v479
      %v513 = vld [vmem:[%s2] sm:$0x1]
      %v515 = vlaneseq
      %v516 = vshrl.u32 %v515, 7
      %v517 = vsub.s32 0, %v516
      %v518 = vrot.slane %v513, %v517
      %v520 = vadd.f32 %v481, %v518
      %v521 = vadd.f32 %v482, %v518
      %v522 = vadd.f32 %v483, %v518
      %v523 = vadd.f32 %v484, %v518
      %v524 = vadd.f32 %v485, %v518
      %v525 = vadd.f32 %v486, %v518
      %v526 = vadd.f32 %v487, %v518
      %v527 = vadd.f32 %v488, %v518
      %v528 = vadd.f32 %v489, %v518
      %v529 = vadd.f32 %v490, %v518
      %v530 = vadd.f32 %v491, %v518
      %v531 = vadd.f32 %v492, %v518
      %v532 = vadd.f32 %v493, %v518
      %v533 = vadd.f32 %v494, %v518
      %v534 = vadd.f32 %v495, %v518
      %v535 = vadd.f32 %v496, %v518
      %v536 = vadd.f32 %v497, %v518
      %v537 = vadd.f32 %v498, %v518
      %v538 = vadd.f32 %v499, %v518
      %v539 = vadd.f32 %v500, %v518
      %v540 = vadd.f32 %v501, %v518
      %v541 = vadd.f32 %v502, %v518
      %v542 = vadd.f32 %v503, %v518
      %v543 = vadd.f32 %v504, %v518
      %v544 = vadd.f32 %v505, %v518
      %v545 = vadd.f32 %v506, %v518
      %v546 = vadd.f32 %v507, %v518
      %v547 = vadd.f32 %v508, %v518
      %v548 = vadd.f32 %v509, %v518
      %v549 = vadd.f32 %v510, %v518
      %v550 = vadd.f32 %v511, %v518
      %v551 = vadd.f32 %v512, %v518
      %vm552 = vcmp.ge.f32.partialorder %v520, 0.0
      %vm553 = vcmp.ge.f32.partialorder %v521, 0.0
      %vm554 = vcmp.ge.f32.partialorder %v522, 0.0
      %vm555 = vcmp.ge.f32.partialorder %v523, 0.0
      %vm556 = vcmp.ge.f32.partialorder %v524, 0.0
      %vm557 = vcmp.ge.f32.partialorder %v525, 0.0
      %vm558 = vcmp.ge.f32.partialorder %v526, 0.0
      %vm559 = vcmp.ge.f32.partialorder %v527, 0.0
      %vm560 = vcmp.ge.f32.partialorder %v528, 0.0
      %vm561 = vcmp.ge.f32.partialorder %v529, 0.0
      %vm562 = vcmp.ge.f32.partialorder %v530, 0.0
      %vm563 = vcmp.ge.f32.partialorder %v531, 0.0
      %vm564 = vcmp.ge.f32.partialorder %v532, 0.0
      %vm565 = vcmp.ge.f32.partialorder %v533, 0.0
      %vm566 = vcmp.ge.f32.partialorder %v534, 0.0
      %vm567 = vcmp.ge.f32.partialorder %v535, 0.0
      %vm568 = vcmp.ge.f32.partialorder %v536, 0.0
      %vm569 = vcmp.ge.f32.partialorder %v537, 0.0
      %vm570 = vcmp.ge.f32.partialorder %v538, 0.0
      %vm571 = vcmp.ge.f32.partialorder %v539, 0.0
      %vm572 = vcmp.ge.f32.partialorder %v540, 0.0
      %vm573 = vcmp.ge.f32.partialorder %v541, 0.0
      %vm574 = vcmp.ge.f32.partialorder %v542, 0.0
      %vm575 = vcmp.ge.f32.partialorder %v543, 0.0
      %vm576 = vcmp.ge.f32.partialorder %v544, 0.0
      %vm577 = vcmp.ge.f32.partialorder %v545, 0.0
      %vm578 = vcmp.ge.f32.partialorder %v546, 0.0
      %vm579 = vcmp.ge.f32.partialorder %v547, 0.0
      %vm580 = vcmp.ge.f32.partialorder %v548, 0.0
      %vm581 = vcmp.ge.f32.partialorder %v549, 0.0
      %vm582 = vcmp.ge.f32.partialorder %v550, 0.0
      %vm583 = vcmp.ge.f32.partialorder %v551, 0.0
      %v584 = vld [vmem:[#allocation2] sm:$0x1]
      %v586 = vlaneseq
      %v587 = vshrl.u32 %v586, 7
      %v588 = vsub.s32 0, %v587
      %v589 = vrot.slane %v584, %v588
      %590 = vset.pattern.permute.xlu0 0
      %591 = vperm.xlu0 %590, %v589
      %v592 = vpop.permute.xlu0 %591
      %v594 = vmul.f32 %v520, %v592
      %v595 = vmul.f32 %v521, %v592
      %v596 = vmul.f32 %v522, %v592
      %v597 = vmul.f32 %v523, %v592
      %v598 = vmul.f32 %v524, %v592
      %v599 = vmul.f32 %v525, %v592
      %v600 = vmul.f32 %v526, %v592
      %v601 = vmul.f32 %v527, %v592
      %v602 = vmul.f32 %v528, %v592
      %v603 = vmul.f32 %v529, %v592
      %v604 = vmul.f32 %v530, %v592
      %v605 = vmul.f32 %v531, %v592
      %v606 = vmul.f32 %v532, %v592
      %v607 = vmul.f32 %v533, %v592
      %v608 = vmul.f32 %v534, %v592
      %v609 = vmul.f32 %v535, %v592
      %v610 = vmul.f32 %v536, %v592
      %v611 = vmul.f32 %v537, %v592
      %v612 = vmul.f32 %v538, %v592
      %v613 = vmul.f32 %v539, %v592
      %v614 = vmul.f32 %v540, %v592
      %v615 = vmul.f32 %v541, %v592
      %v616 = vmul.f32 %v542, %v592
      %v617 = vmul.f32 %v543, %v592
      %v618 = vmul.f32 %v544, %v592
      %v619 = vmul.f32 %v545, %v592
      %v620 = vmul.f32 %v546, %v592
      %v621 = vmul.f32 %v547, %v592
      %v622 = vmul.f32 %v548, %v592
      %v623 = vmul.f32 %v549, %v592
      %v624 = vmul.f32 %v550, %v592
      %v625 = vmul.f32 %v551, %v592
      %v626 = vsel %vm552, %v520, %v594
      %v627 = vsel %vm553, %v521, %v595
      %v628 = vsel %vm554, %v522, %v596
      %v629 = vsel %vm555, %v523, %v597
      %v630 = vsel %vm556, %v524, %v598
      %v631 = vsel %vm557, %v525, %v599
      %v632 = vsel %vm558, %v526, %v600
      %v633 = vsel %vm559, %v527, %v601
      %v634 = vsel %vm560, %v528, %v602
      %v635 = vsel %vm561, %v529, %v603
      %v636 = vsel %vm562, %v530, %v604
      %v637 = vsel %vm563, %v531, %v605
      %v638 = vsel %vm564, %v532, %v606
      %v639 = vsel %vm565, %v533, %v607
      %v640 = vsel %vm566, %v534, %v608
      %v641 = vsel %vm567, %v535, %v609
      %v642 = vsel %vm568, %v536, %v610
      %v643 = vsel %vm569, %v537, %v611
      %v644 = vsel %vm570, %v538, %v612
      %v645 = vsel %vm571, %v539, %v613
      %v646 = vsel %vm572, %v540, %v614
      %v647 = vsel %vm573, %v541, %v615
      %v648 = vsel %vm574, %v542, %v616
      %v649 = vsel %vm575, %v543, %v617
      %v650 = vsel %vm576, %v544, %v618
      %v651 = vsel %vm577, %v545, %v619
      %v652 = vsel %vm578, %v546, %v620
      %v653 = vsel %vm579, %v547, %v621
      %v654 = vsel %vm580, %v548, %v622
      %v655 = vsel %vm581, %v549, %v623
      %v656 = vsel %vm582, %v550, %v624
      %v657 = vsel %vm583, %v551, %v625
      %v658 = vpack.c.bf16 %v627, %v626
      %v659 = vpack.c.bf16 %v629, %v628
      %v660 = vpack.c.bf16 %v631, %v630
      %v661 = vpack.c.bf16 %v633, %v632
      %v662 = vpack.c.bf16 %v635, %v634
      %v663 = vpack.c.bf16 %v637, %v636
      %v664 = vpack.c.bf16 %v639, %v638
      %v665 = vpack.c.bf16 %v641, %v640
      %v666 = vpack.c.bf16 %v643, %v642
      %v667 = vpack.c.bf16 %v645, %v644
      %v668 = vpack.c.bf16 %v647, %v646
      %v669 = vpack.c.bf16 %v649, %v648
      %v670 = vpack.c.bf16 %v651, %v650
      %v671 = vpack.c.bf16 %v653, %v652
      %v672 = vpack.c.bf16 %v655, %v654
      %v673 = vpack.c.bf16 %v657, %v656
      %v674 = vld [vmem:[%s4] sm:$0xf]
      %v675 = vld [vmem:[%s4 + $0x4] sm:$0xf]
      %v676 = vld [vmem:[%s4 + $0x8] sm:$0xf]
      %v677 = vld [vmem:[%s4 + $0xc] sm:$0xf]
      %v678 = vld [vmem:[%s5] sm:$0x1]
      %v680 = vlaneseq
      %v681 = vshrl.u32 %v680, 7
      %v682 = vsub.s32 0, %v681
      %v683 = vrot.slane %v678, %v682
      %v689 = vunpack.c.l.b16 %v674
      %v690 = vunpack.c.l.b16 %v675
      %v691 = vunpack.c.l.b16 %v676
      %v692 = vunpack.c.l.b16 %v677
      %v693 = vpack.c.b16 %v690, %v689
      %v694 = vpack.c.b16 %v692, %v691
      %vm697 = vcmask 261120
      %v699 = vsel %vm697, %v658, 0
      %v702 = vsel %vm697, %v659, 0
      %v705 = vsel %vm697, %v660, 0
      %v708 = vsel %vm697, %v661, 0
      %v711 = vsel %vm697, %v662, 0
      %v714 = vsel %vm697, %v663, 0
      %v717 = vsel %vm697, %v664, 0
      %v720 = vsel %vm697, %v665, 0
      %v723 = vsel %vm697, %v666, 0
      %v726 = vsel %vm697, %v667, 0
      %v729 = vsel %vm697, %v668, 0
      %v732 = vsel %vm697, %v669, 0
      %v735 = vsel %vm697, %v670, 0
      %v738 = vsel %vm697, %v671, 0
      %v741 = vsel %vm697, %v672, 0
      %v744 = vsel %vm697, %v673, 0
      %746 = vmatprep.subr.bf16.mxu0 0
      %747 = vmatpush1.bf16.msra.mxu0 0
      %748 = vmatprep.subr.bf16.mxu0 0
      %749 = vmatpush1.bf16.msra.mxu0 0
      %750 = vmatprep.subr.bf16.mxu0 0
      %751 = vmatpush1.bf16.msra.mxu0 0
      %752 = vmatprep.subr.bf16.mxu0 0
      %753 = vmatpush1.bf16.msra.mxu0 0
      %754 = vmatprep.subr.bf16.mxu0 0
      %755 = vmatpush1.bf16.msra.mxu0 0
      %756 = vmatprep.subr.bf16.mxu0 0
      %757 = vmatpush1.bf16.msra.mxu0 0
      %758 = vmatprep.subr.bf16.mxu0 0
      %759 = vmatpush1.bf16.msra.mxu0 %v694
      %760 = vmatprep.subr.bf16.mxu0 0
      %761 = vmatpush1.bf16.msra.mxu0 %v693
      %762 = vmatprep.subr.bf16.mxu0 0
      %763 = vmatpush2.bf16.msra.mxu0 0
      %764 = vmatprep.subr.bf16.mxu0 0
      %765 = vmatpush2.bf16.msra.mxu0 0
      %766 = vmatprep.subr.bf16.mxu0 0
      %767 = vmatpush2.bf16.msra.mxu0 0
      %768 = vmatprep.subr.bf16.mxu0 0
      %769 = vmatpush2.bf16.msra.mxu0 0
      %770 = vmatprep.subr.bf16.mxu0 0
      %771 = vmatpush2.bf16.msra.mxu0 0
      %772 = vmatprep.subr.bf16.mxu0 0
      %773 = vmatpush2.bf16.msra.mxu0 0
      %774 = vmatprep.subr.bf16.mxu0 0
      %775 = vmatpush2.bf16.msra.mxu0 0
      %776 = vmatprep.subr.bf16.mxu0 0
      %777 = vmatpush2.bf16.msra.mxu0 0
      %778 = vmatprep.mubr.bf16.mxu0 0
      %779 = vmatmul.mubr.bf16.gmra.mxu0 %v699
      %v780 = vpop.f32.mrf.mxu0
      %v781 = vadd.f32 %v683, %v780
      %v782 = vpop.f32.mrf.mxu0
      %v783 = vpop.f32.mrf.mxu0
      %v784 = vadd.f32 %v683, %v783
      %v785 = vpop.f32.mrf.mxu0
      %786 = vmatprep.mubr.bf16.mxu0 0
      %787 = vmatmul.mubr.bf16.gmra.mxu0 %v702
      %v788 = vpop.f32.mrf.mxu0
      %v789 = vadd.f32 %v683, %v788
      %v790 = vpop.f32.mrf.mxu0
      %v791 = vpop.f32.mrf.mxu0
      %v792 = vadd.f32 %v683, %v791
      %v793 = vpop.f32.mrf.mxu0
      %794 = vmatprep.mubr.bf16.mxu0 0
      %795 = vmatmul.mubr.bf16.gmra.mxu0 %v705
      %v796 = vpop.f32.mrf.mxu0
      %v797 = vadd.f32 %v683, %v796
      %v798 = vpop.f32.mrf.mxu0
      %v799 = vpop.f32.mrf.mxu0
      %v800 = vadd.f32 %v683, %v799
      %v801 = vpop.f32.mrf.mxu0
      %802 = vmatprep.mubr.bf16.mxu0 0
      %803 = vmatmul.mubr.bf16.gmra.mxu0 %v708
      %v804 = vpop.f32.mrf.mxu0
      %v805 = vadd.f32 %v683, %v804
      %v806 = vpop.f32.mrf.mxu0
      %v807 = vpop.f32.mrf.mxu0
      %v808 = vadd.f32 %v683, %v807
      %v809 = vpop.f32.mrf.mxu0
      %810 = vmatprep.mubr.bf16.mxu0 0
      %811 = vmatmul.mubr.bf16.gmra.mxu0 %v711
      %v812 = vpop.f32.mrf.mxu0
      %v813 = vadd.f32 %v683, %v812
      %v814 = vpop.f32.mrf.mxu0
      %v815 = vpop.f32.mrf.mxu0
      %v816 = vadd.f32 %v683, %v815
      %v817 = vpop.f32.mrf.mxu0
      %818 = vmatprep.mubr.bf16.mxu0 0
      %819 = vmatmul.mubr.bf16.gmra.mxu0 %v714
      %v820 = vpop.f32.mrf.mxu0
      %v821 = vadd.f32 %v683, %v820
      %v822 = vpop.f32.mrf.mxu0
      %v823 = vpop.f32.mrf.mxu0
      %v824 = vadd.f32 %v683, %v823
      %v825 = vpop.f32.mrf.mxu0
      %826 = vmatprep.mubr.bf16.mxu0 0
      %827 = vmatmul.mubr.bf16.gmra.mxu0 %v717
      %v828 = vpop.f32.mrf.mxu0
      %v829 = vadd.f32 %v683, %v828
      %v830 = vpop.f32.mrf.mxu0
      %v831 = vpop.f32.mrf.mxu0
      %v832 = vadd.f32 %v683, %v831
      %v833 = vpop.f32.mrf.mxu0
      %834 = vmatprep.mubr.bf16.mxu0 0
      %835 = vmatmul.mubr.bf16.gmra.mxu0 %v720
      %v836 = vpop.f32.mrf.mxu0
      %v837 = vadd.f32 %v683, %v836
      %v838 = vpop.f32.mrf.mxu0
      %v839 = vpop.f32.mrf.mxu0
      %v840 = vadd.f32 %v683, %v839
      %v841 = vpop.f32.mrf.mxu0
      %842 = vmatprep.mubr.bf16.mxu0 0
      %843 = vmatmul.mubr.bf16.gmra.mxu0 %v723
      %v844 = vpop.f32.mrf.mxu0
      %v845 = vadd.f32 %v683, %v844
      %v846 = vpop.f32.mrf.mxu0
      %v847 = vpop.f32.mrf.mxu0
      %v848 = vadd.f32 %v683, %v847
      %v849 = vpop.f32.mrf.mxu0
      %850 = vmatprep.mubr.bf16.mxu0 0
      %851 = vmatmul.mubr.bf16.gmra.mxu0 %v726
      %v852 = vpop.f32.mrf.mxu0
      %v853 = vadd.f32 %v683, %v852
      %v854 = vpop.f32.mrf.mxu0
      %v855 = vpop.f32.mrf.mxu0
      %v856 = vadd.f32 %v683, %v855
      %v857 = vpop.f32.mrf.mxu0
      %858 = vmatprep.mubr.bf16.mxu0 0
      %859 = vmatmul.mubr.bf16.gmra.mxu0 %v729
      %v860 = vpop.f32.mrf.mxu0
      %v861 = vadd.f32 %v683, %v860
      %v862 = vpop.f32.mrf.mxu0
      %v863 = vpop.f32.mrf.mxu0
      %v864 = vadd.f32 %v683, %v863
      %v865 = vpop.f32.mrf.mxu0
      %866 = vmatprep.mubr.bf16.mxu0 0
      %867 = vmatmul.mubr.bf16.gmra.mxu0 %v732
      %v868 = vpop.f32.mrf.mxu0
      %v869 = vadd.f32 %v683, %v868
      %v870 = vpop.f32.mrf.mxu0
      %v871 = vpop.f32.mrf.mxu0
      %v872 = vadd.f32 %v683, %v871
      %v873 = vpop.f32.mrf.mxu0
      %874 = vmatprep.mubr.bf16.mxu0 0
      %875 = vmatmul.mubr.bf16.gmra.mxu0 %v735
      %v876 = vpop.f32.mrf.mxu0
      %v877 = vadd.f32 %v683, %v876
      %v878 = vpop.f32.mrf.mxu0
      %v879 = vpop.f32.mrf.mxu0
      %v880 = vadd.f32 %v683, %v879
      %v881 = vpop.f32.mrf.mxu0
      %882 = vmatprep.mubr.bf16.mxu0 0
      %883 = vmatmul.mubr.bf16.gmra.mxu0 %v738
      %v884 = vpop.f32.mrf.mxu0
      %v885 = vadd.f32 %v683, %v884
      %v886 = vpop.f32.mrf.mxu0
      %v887 = vpop.f32.mrf.mxu0
      %v888 = vadd.f32 %v683, %v887
      %v889 = vpop.f32.mrf.mxu0
      %890 = vmatprep.mubr.bf16.mxu0 0
      %891 = vmatmul.mubr.bf16.gmra.mxu0 %v741
      %v892 = vpop.f32.mrf.mxu0
      %v893 = vadd.f32 %v683, %v892
      %v894 = vpop.f32.mrf.mxu0
      %v895 = vpop.f32.mrf.mxu0
      %v896 = vadd.f32 %v683, %v895
      %v897 = vpop.f32.mrf.mxu0
      %898 = vmatprep.mubr.bf16.mxu0 0
      %899 = vmatmul.mubr.bf16.gmra.mxu0 %v744
      %v900 = vpop.f32.mrf.mxu0
      %v901 = vadd.f32 %v683, %v900
      %v902 = vpop.f32.mrf.mxu0
      %v903 = vpop.f32.mrf.mxu0
      %v904 = vadd.f32 %v683, %v903
      %v905 = vpop.f32.mrf.mxu0
      %906 = vdwg.mxu0
      %907 = vst.msk [vmem:[%s423] sm:$0xff] %vm697, %v781
      %908 = vst.msk [vmem:[%s423 + $0x8] sm:$0xff] %vm697, %v784
      %909 = vst.msk [vmem:[%s423 + $0x10] sm:$0xff] %vm697, %v789
      %910 = vst.msk [vmem:[%s423 + $0x18] sm:$0xff] %vm697, %v792
      %911 = vst.msk [vmem:[%s423 + $0x20] sm:$0xff] %vm697, %v797
      %912 = vst.msk [vmem:[%s423 + $0x28] sm:$0xff] %vm697, %v800
      %913 = vst.msk [vmem:[%s423 + $0x30] sm:$0xff] %vm697, %v805
      %914 = vst.msk [vmem:[%s423 + $0x38] sm:$0xff] %vm697, %v808
      %915 = vst.msk [vmem:[%s423 + $0x40] sm:$0xff] %vm697, %v813
      %916 = vst.msk [vmem:[%s423 + $0x48] sm:$0xff] %vm697, %v816
      %917 = vst.msk [vmem:[%s423 + $0x50] sm:$0xff] %vm697, %v821
      %918 = vst.msk [vmem:[%s423 + $0x58] sm:$0xff] %vm697, %v824
      %919 = vst.msk [vmem:[%s423 + $0x60] sm:$0xff] %vm697, %v829
      %920 = vst.msk [vmem:[%s423 + $0x68] sm:$0xff] %vm697, %v832
      %921 = vst.msk [vmem:[%s423 + $0x70] sm:$0xff] %vm697, %v837
      %922 = vst.msk [vmem:[%s423 + $0x78] sm:$0xff] %vm697, %v840
      %923 = vst.msk [vmem:[%s423 + $0x80] sm:$0xff] %vm697, %v845
      %924 = vst.msk [vmem:[%s423 + $0x88] sm:$0xff] %vm697, %v848
      %925 = vst.msk [vmem:[%s423 + $0x90] sm:$0xff] %vm697, %v853
      %926 = vst.msk [vmem:[%s423 + $0x98] sm:$0xff] %vm697, %v856
      %927 = vst.msk [vmem:[%s423 + $0xa0] sm:$0xff] %vm697, %v861
      %928 = vst.msk [vmem:[%s423 + $0xa8] sm:$0xff] %vm697, %v864
      %929 = vst.msk [vmem:[%s423 + $0xb0] sm:$0xff] %vm697, %v869
      %930 = vst.msk [vmem:[%s423 + $0xb8] sm:$0xff] %vm697, %v872
      %931 = vst.msk [vmem:[%s423 + $0xc0] sm:$0xff] %vm697, %v877
      %932 = vst.msk [vmem:[%s423 + $0xc8] sm:$0xff] %vm697, %v880
      %933 = vst.msk [vmem:[%s423 + $0xd0] sm:$0xff] %vm697, %v885
      %934 = vst.msk [vmem:[%s423 + $0xd8] sm:$0xff] %vm697, %v888
      %935 = vst.msk [vmem:[%s423 + $0xe0] sm:$0xff] %vm697, %v893
      %936 = vst.msk [vmem:[%s423 + $0xe8] sm:$0xff] %vm697, %v896
      %937 = vst.msk [vmem:[%s423 + $0xf0] sm:$0xff] %vm697, %v901
      %938 = vst.msk [vmem:[%s423 + $0xf8] sm:$0xff] %vm697, %v904
      %v939 = vld [vmem:[%s6] sm:$0xff]
      %v940 = vld [vmem:[%s6 + $0x8] sm:$0xff]
      %v941 = vld [vmem:[%s6 + $0x10] sm:$0xff]
      %v942 = vld [vmem:[%s6 + $0x18] sm:$0xff]
      %v943 = vld [vmem:[%s7] sm:$0x1]
      %v945 = vlaneseq
      %v946 = vshrl.u32 %v945, 7
      %v947 = vsub.s32 0, %v946
      %v948 = vrot.slane %v943, %v947
      %v951 = vsel %vm697, %v781, 0
      %v954 = vsel %vm697, %v784, 0
      %v957 = vsel %vm697, %v789, 0
      %v960 = vsel %vm697, %v792, 0
      %v963 = vsel %vm697, %v797, 0
      %v966 = vsel %vm697, %v800, 0
      %v969 = vsel %vm697, %v805, 0
      %v972 = vsel %vm697, %v808, 0
      %v975 = vsel %vm697, %v813, 0
      %v978 = vsel %vm697, %v816, 0
      %v981 = vsel %vm697, %v821, 0
      %v984 = vsel %vm697, %v824, 0
      %v987 = vsel %vm697, %v829, 0
      %v990 = vsel %vm697, %v832, 0
      %v993 = vsel %vm697, %v837, 0
      %v996 = vsel %vm697, %v840, 0
      %v999 = vsel %vm697, %v845, 0
      %v1002 = vsel %vm697, %v848, 0
      %v1005 = vsel %vm697, %v853, 0
      %v1008 = vsel %vm697, %v856, 0
      %v1011 = vsel %vm697, %v861, 0
      %v1014 = vsel %vm697, %v864, 0
      %v1017 = vsel %vm697, %v869, 0
      %v1020 = vsel %vm697, %v872, 0
      %v1023 = vsel %vm697, %v877, 0
      %v1026 = vsel %vm697, %v880, 0
      %v1029 = vsel %vm697, %v885, 0
      %v1032 = vsel %vm697, %v888, 0
      %v1035 = vsel %vm697, %v893, 0
      %v1038 = vsel %vm697, %v896, 0
      %v1041 = vsel %vm697, %v901, 0
      %v1044 = vsel %vm697, %v904, 0
      %1046 = vmatprep.subr.mxu0 0.0
      %1047 = vmatpush1.msra.mxu0 0.0
      %1048 = vmatprep.subr.mxu0 0.0
      %1049 = vmatpush1.msra.mxu0 0.0
      %1050 = vmatprep.subr.mxu0 0.0
      %1051 = vmatpush1.msra.mxu0 0.0
      %1052 = vmatprep.subr.mxu0 0.0
      %1053 = vmatpush1.msra.mxu0 0.0
      %1054 = vmatprep.subr.mxu0 0.0
      %1055 = vmatpush1.msra.mxu0 0.0
      %1056 = vmatprep.subr.mxu0 0.0
      %1057 = vmatpush1.msra.mxu0 0.0
      %1058 = vmatprep.subr.mxu0 0.0
      %1059 = vmatpush1.msra.mxu0 0.0
      %1060 = vmatprep.subr.mxu0 0.0
      %1061 = vmatpush1.msra.mxu0 0.0
      %1062 = vmatprep.subr.mxu0 0.0
      %1063 = vmatpush1.msra.mxu0 0.0
      %1064 = vmatprep.subr.mxu0 0.0
      %1065 = vmatpush1.msra.mxu0 0.0
      %1066 = vmatprep.subr.mxu0 0.0
      %1067 = vmatpush1.msra.mxu0 0.0
      %1068 = vmatprep.subr.mxu0 0.0
      %1069 = vmatpush1.msra.mxu0 0.0
      %1070 = vmatprep.subr.mxu0 0.0
      %1071 = vmatpush1.msra.mxu0 %v942
      %1072 = vmatprep.subr.mxu0 0.0
      %1073 = vmatpush1.msra.mxu0 %v941
      %1074 = vmatprep.subr.mxu0 0.0
      %1075 = vmatpush1.msra.mxu0 %v940
      %1076 = vmatprep.subr.mxu0 0.0
      %1077 = vmatpush1.msra.mxu0 %v939
      %1078 = vmatprep.subr.mxu0 0.0
      %1079 = vmatpush2.msra.mxu0 0.0
      %1080 = vmatprep.subr.mxu0 0.0
      %1081 = vmatpush2.msra.mxu0 0.0
      %1082 = vmatprep.subr.mxu0 0.0
      %1083 = vmatpush2.msra.mxu0 0.0
      %1084 = vmatprep.subr.mxu0 0.0
      %1085 = vmatpush2.msra.mxu0 0.0
      %1086 = vmatprep.subr.mxu0 0.0
      %1087 = vmatpush2.msra.mxu0 0.0
      %1088 = vmatprep.subr.mxu0 0.0
      %1089 = vmatpush2.msra.mxu0 0.0
      %1090 = vmatprep.subr.mxu0 0.0
      %1091 = vmatpush2.msra.mxu0 0.0
      %1092 = vmatprep.subr.mxu0 0.0
      %1093 = vmatpush2.msra.mxu0 0.0
      %1094 = vmatprep.subr.mxu0 0.0
      %1095 = vmatpush2.msra.mxu0 0.0
      %1096 = vmatprep.subr.mxu0 0.0
      %1097 = vmatpush2.msra.mxu0 0.0
      %1098 = vmatprep.subr.mxu0 0.0
      %1099 = vmatpush2.msra.mxu0 0.0
      %1100 = vmatprep.subr.mxu0 0.0
      %1101 = vmatpush2.msra.mxu0 0.0
      %1102 = vmatprep.subr.mxu0 0.0
      %1103 = vmatpush2.msra.mxu0 0.0
      %1104 = vmatprep.subr.mxu0 0.0
      %1105 = vmatpush2.msra.mxu0 0.0
      %1106 = vmatprep.subr.mxu0 0.0
      %1107 = vmatpush2.msra.mxu0 0.0
      %1108 = vmatprep.subr.mxu0 0.0
      %1109 = vmatpush2.msra.mxu0 0.0
      %1110 = vmatprep.mubr.f32.mxu0 0.0
      %1111 = vmatmul.mubr.f32.gmra.mxu0 %v951
      %v1112 = vpop.f32.mrf.mxu0
      %v1113 = vadd.f32 %v948, %v1112
      %v1114 = vpop.f32.mrf.mxu0
      %1115 = vmatprep.mubr.f32.mxu0 0.0
      %1116 = vmatmul.mubr.f32.gmra.mxu0 %v954
      %v1117 = vpop.f32.mrf.mxu0
      %v1118 = vadd.f32 %v948, %v1117
      %v1119 = vpop.f32.mrf.mxu0
      %1120 = vmatprep.mubr.f32.mxu0 0.0
      %1121 = vmatmul.mubr.f32.gmra.mxu0 %v957
      %v1122 = vpop.f32.mrf.mxu0
      %v1123 = vadd.f32 %v948, %v1122
      %v1124 = vpop.f32.mrf.mxu0
      %1125 = vmatprep.mubr.f32.mxu0 0.0
      %1126 = vmatmul.mubr.f32.gmra.mxu0 %v960
      %v1127 = vpop.f32.mrf.mxu0
      %v1128 = vadd.f32 %v948, %v1127
      %v1129 = vpop.f32.mrf.mxu0
      %1130 = vmatprep.mubr.f32.mxu0 0.0
      %1131 = vmatmul.mubr.f32.gmra.mxu0 %v963
      %v1132 = vpop.f32.mrf.mxu0
      %v1133 = vadd.f32 %v948, %v1132
      %v1134 = vpop.f32.mrf.mxu0
      %1135 = vmatprep.mubr.f32.mxu0 0.0
      %1136 = vmatmul.mubr.f32.gmra.mxu0 %v966
      %v1137 = vpop.f32.mrf.mxu0
      %v1138 = vadd.f32 %v948, %v1137
      %v1139 = vpop.f32.mrf.mxu0
      %1140 = vmatprep.mubr.f32.mxu0 0.0
      %1141 = vmatmul.mubr.f32.gmra.mxu0 %v969
      %v1142 = vpop.f32.mrf.mxu0
      %v1143 = vadd.f32 %v948, %v1142
      %v1144 = vpop.f32.mrf.mxu0
      %1145 = vmatprep.mubr.f32.mxu0 0.0
      %1146 = vmatmul.mubr.f32.gmra.mxu0 %v972
      %v1147 = vpop.f32.mrf.mxu0
      %v1148 = vadd.f32 %v948, %v1147
      %v1149 = vpop.f32.mrf.mxu0
      %1150 = vmatprep.mubr.f32.mxu0 0.0
      %1151 = vmatmul.mubr.f32.gmra.mxu0 %v975
      %v1152 = vpop.f32.mrf.mxu0
      %v1153 = vadd.f32 %v948, %v1152
      %v1154 = vpop.f32.mrf.mxu0
      %1155 = vmatprep.mubr.f32.mxu0 0.0
      %1156 = vmatmul.mubr.f32.gmra.mxu0 %v978
      %v1157 = vpop.f32.mrf.mxu0
      %v1158 = vadd.f32 %v948, %v1157
      %v1159 = vpop.f32.mrf.mxu0
      %1160 = vmatprep.mubr.f32.mxu0 0.0
      %1161 = vmatmul.mubr.f32.gmra.mxu0 %v981
      %v1162 = vpop.f32.mrf.mxu0
      %v1163 = vadd.f32 %v948, %v1162
      %v1164 = vpop.f32.mrf.mxu0
      %1165 = vmatprep.mubr.f32.mxu0 0.0
      %1166 = vmatmul.mubr.f32.gmra.mxu0 %v984
      %v1167 = vpop.f32.mrf.mxu0
      %v1168 = vadd.f32 %v948, %v1167
      %v1169 = vpop.f32.mrf.mxu0
      %1170 = vmatprep.mubr.f32.mxu0 0.0
      %1171 = vmatmul.mubr.f32.gmra.mxu0 %v987
      %v1172 = vpop.f32.mrf.mxu0
      %v1173 = vadd.f32 %v948, %v1172
      %v1174 = vpop.f32.mrf.mxu0
      %1175 = vmatprep.mubr.f32.mxu0 0.0
      %1176 = vmatmul.mubr.f32.gmra.mxu0 %v990
      %v1177 = vpop.f32.mrf.mxu0
      %v1178 = vadd.f32 %v948, %v1177
      %v1179 = vpop.f32.mrf.mxu0
      %1180 = vmatprep.mubr.f32.mxu0 0.0
      %1181 = vmatmul.mubr.f32.gmra.mxu0 %v993
      %v1182 = vpop.f32.mrf.mxu0
      %v1183 = vadd.f32 %v948, %v1182
      %v1184 = vpop.f32.mrf.mxu0
      %1185 = vmatprep.mubr.f32.mxu0 0.0
      %1186 = vmatmul.mubr.f32.gmra.mxu0 %v996
      %v1187 = vpop.f32.mrf.mxu0
      %v1188 = vadd.f32 %v948, %v1187
      %v1189 = vpop.f32.mrf.mxu0
      %1190 = vmatprep.mubr.f32.mxu0 0.0
      %1191 = vmatmul.mubr.f32.gmra.mxu0 %v999
      %v1192 = vpop.f32.mrf.mxu0
      %v1193 = vadd.f32 %v948, %v1192
      %v1194 = vpop.f32.mrf.mxu0
      %1195 = vmatprep.mubr.f32.mxu0 0.0
      %1196 = vmatmul.mubr.f32.gmra.mxu0 %v1002
      %v1197 = vpop.f32.mrf.mxu0
      %v1198 = vadd.f32 %v948, %v1197
      %v1199 = vpop.f32.mrf.mxu0
      %1200 = vmatprep.mubr.f32.mxu0 0.0
      %1201 = vmatmul.mubr.f32.gmra.mxu0 %v1005
      %v1202 = vpop.f32.mrf.mxu0
      %v1203 = vadd.f32 %v948, %v1202
      %v1204 = vpop.f32.mrf.mxu0
      %1205 = vmatprep.mubr.f32.mxu0 0.0
      %1206 = vmatmul.mubr.f32.gmra.mxu0 %v1008
      %v1207 = vpop.f32.mrf.mxu0
      %v1208 = vadd.f32 %v948, %v1207
      %v1209 = vpop.f32.mrf.mxu0
      %1210 = vmatprep.mubr.f32.mxu0 0.0
      %1211 = vmatmul.mubr.f32.gmra.mxu0 %v1011
      %v1212 = vpop.f32.mrf.mxu0
      %v1213 = vadd.f32 %v948, %v1212
      %v1214 = vpop.f32.mrf.mxu0
      %1215 = vmatprep.mubr.f32.mxu0 0.0
      %1216 = vmatmul.mubr.f32.gmra.mxu0 %v1014
      %v1217 = vpop.f32.mrf.mxu0
      %v1218 = vadd.f32 %v948, %v1217
      %v1219 = vpop.f32.mrf.mxu0
      %1220 = vmatprep.mubr.f32.mxu0 0.0
      %1221 = vmatmul.mubr.f32.gmra.mxu0 %v1017
      %v1222 = vpop.f32.mrf.mxu0
      %v1223 = vadd.f32 %v948, %v1222
      %v1224 = vpop.f32.mrf.mxu0
      %1225 = vmatprep.mubr.f32.mxu0 0.0
      %1226 = vmatmul.mubr.f32.gmra.mxu0 %v1020
      %v1227 = vpop.f32.mrf.mxu0
      %v1228 = vadd.f32 %v948, %v1227
      %v1229 = vpop.f32.mrf.mxu0
      %1230 = vmatprep.mubr.f32.mxu0 0.0
      %1231 = vmatmul.mubr.f32.gmra.mxu0 %v1023
      %v1232 = vpop.f32.mrf.mxu0
      %v1233 = vadd.f32 %v948, %v1232
      %v1234 = vpop.f32.mrf.mxu0
      %1235 = vmatprep.mubr.f32.mxu0 0.0
      %1236 = vmatmul.mubr.f32.gmra.mxu0 %v1026
      %v1237 = vpop.f32.mrf.mxu0
      %v1238 = vadd.f32 %v948, %v1237
      %v1239 = vpop.f32.mrf.mxu0
      %1240 = vmatprep.mubr.f32.mxu0 0.0
      %1241 = vmatmul.mubr.f32.gmra.mxu0 %v1029
      %v1242 = vpop.f32.mrf.mxu0
      %v1243 = vadd.f32 %v948, %v1242
      %v1244 = vpop.f32.mrf.mxu0
      %1245 = vmatprep.mubr.f32.mxu0 0.0
      %1246 = vmatmul.mubr.f32.gmra.mxu0 %v1032
      %v1247 = vpop.f32.mrf.mxu0
      %v1248 = vadd.f32 %v948, %v1247
      %v1249 = vpop.f32.mrf.mxu0
      %1250 = vmatprep.mubr.f32.mxu0 0.0
      %1251 = vmatmul.mubr.f32.gmra.mxu0 %v1035
      %v1252 = vpop.f32.mrf.mxu0
      %v1253 = vadd.f32 %v948, %v1252
      %v1254 = vpop.f32.mrf.mxu0
      %1255 = vmatprep.mubr.f32.mxu0 0.0
      %1256 = vmatmul.mubr.f32.gmra.mxu0 %v1038
      %v1257 = vpop.f32.mrf.mxu0
      %v1258 = vadd.f32 %v948, %v1257
      %v1259 = vpop.f32.mrf.mxu0
      %1260 = vmatprep.mubr.f32.mxu0 0.0
      %1261 = vmatmul.mubr.f32.gmra.mxu0 %v1041
      %v1262 = vpop.f32.mrf.mxu0
      %v1263 = vadd.f32 %v948, %v1262
      %v1264 = vpop.f32.mrf.mxu0
      %1265 = vmatprep.mubr.f32.mxu0 0.0
      %1266 = vmatmul.mubr.f32.gmra.mxu0 %v1044
      %v1267 = vpop.f32.mrf.mxu0
      %v1268 = vadd.f32 %v948, %v1267
      %v1269 = vpop.f32.mrf.mxu0
      %1270 = vdwg.mxu0
      %vm1271 = vcmask 15360
      %1272 = vst.msk [vmem:[%s433] sm:$0xff] %vm1271, %v1113
      %1273 = vst.msk [vmem:[%s433 + $0x8] sm:$0xff] %vm1271, %v1118
      %1274 = vst.msk [vmem:[%s433 + $0x10] sm:$0xff] %vm1271, %v1123
      %1275 = vst.msk [vmem:[%s433 + $0x18] sm:$0xff] %vm1271, %v1128
      %1276 = vst.msk [vmem:[%s433 + $0x20] sm:$0xff] %vm1271, %v1133
      %1277 = vst.msk [vmem:[%s433 + $0x28] sm:$0xff] %vm1271, %v1138
      %1278 = vst.msk [vmem:[%s433 + $0x30] sm:$0xff] %vm1271, %v1143
      %1279 = vst.msk [vmem:[%s433 + $0x38] sm:$0xff] %vm1271, %v1148
      %1280 = vst.msk [vmem:[%s433 + $0x40] sm:$0xff] %vm1271, %v1153
      %1281 = vst.msk [vmem:[%s433 + $0x48] sm:$0xff] %vm1271, %v1158
      %1282 = vst.msk [vmem:[%s433 + $0x50] sm:$0xff] %vm1271, %v1163
      %1283 = vst.msk [vmem:[%s433 + $0x58] sm:$0xff] %vm1271, %v1168
      %1284 = vst.msk [vmem:[%s433 + $0x60] sm:$0xff] %vm1271, %v1173
      %1285 = vst.msk [vmem:[%s433 + $0x68] sm:$0xff] %vm1271, %v1178
      %1286 = vst.msk [vmem:[%s433 + $0x70] sm:$0xff] %vm1271, %v1183
      %1287 = vst.msk [vmem:[%s433 + $0x78] sm:$0xff] %vm1271, %v1188
      %1288 = vst.msk [vmem:[%s433 + $0x80] sm:$0xff] %vm1271, %v1193
      %1289 = vst.msk [vmem:[%s433 + $0x88] sm:$0xff] %vm1271, %v1198
      %1290 = vst.msk [vmem:[%s433 + $0x90] sm:$0xff] %vm1271, %v1203
      %1291 = vst.msk [vmem:[%s433 + $0x98] sm:$0xff] %vm1271, %v1208
      %1292 = vst.msk [vmem:[%s433 + $0xa0] sm:$0xff] %vm1271, %v1213
      %1293 = vst.msk [vmem:[%s433 + $0xa8] sm:$0xff] %vm1271, %v1218
      %1294 = vst.msk [vmem:[%s433 + $0xb0] sm:$0xff] %vm1271, %v1223
      %1295 = vst.msk [vmem:[%s433 + $0xb8] sm:$0xff] %vm1271, %v1228
      %1296 = vst.msk [vmem:[%s433 + $0xc0] sm:$0xff] %vm1271, %v1233
      %1297 = vst.msk [vmem:[%s433 + $0xc8] sm:$0xff] %vm1271, %v1238
      %1298 = vst.msk [vmem:[%s433 + $0xd0] sm:$0xff] %vm1271, %v1243
      %1299 = vst.msk [vmem:[%s433 + $0xd8] sm:$0xff] %vm1271, %v1248
      %1300 = vst.msk [vmem:[%s433 + $0xe0] sm:$0xff] %vm1271, %v1253
      %1301 = vst.msk [vmem:[%s433 + $0xe8] sm:$0xff] %vm1271, %v1258
      %1302 = vst.msk [vmem:[%s433 + $0xf0] sm:$0xff] %vm1271, %v1263
      %1303 = vst.msk [vmem:[%s433 + $0xf8] sm:$0xff] %vm1271, %v1268
      %v1304 = vsel %vm697, %v781, 0.0
      %v1305 = vsel %vm697, %v784, 0.0
      %v1306 = vadd.f32 %v1304, %v1305
      %v1307 = vsel %vm697, %v789, 0.0
      %v1308 = vadd.f32 %v1306, %v1307
      %v1309 = vsel %vm697, %v792, 0.0
      %v1310 = vadd.f32 %v1308, %v1309
      %v1311 = vsel %vm697, %v797, 0.0
      %v1312 = vadd.f32 %v1310, %v1311
      %v1313 = vsel %vm697, %v800, 0.0
      %v1314 = vadd.f32 %v1312, %v1313
      %v1315 = vsel %vm697, %v805, 0.0
      %v1316 = vadd.f32 %v1314, %v1315
      %v1317 = vsel %vm697, %v808, 0.0
      %v1318 = vadd.f32 %v1316, %v1317
      %v1319 = vsel %vm697, %v813, 0.0
      %v1320 = vadd.f32 %v1318, %v1319
      %v1321 = vsel %vm697, %v816, 0.0
      %v1322 = vadd.f32 %v1320, %v1321
      %v1323 = vsel %vm697, %v821, 0.0
      %v1324 = vadd.f32 %v1322, %v1323
      %v1325 = vsel %vm697, %v824, 0.0
      %v1326 = vadd.f32 %v1324, %v1325
      %v1327 = vsel %vm697, %v829, 0.0
      %v1328 = vadd.f32 %v1326, %v1327
      %v1329 = vsel %vm697, %v832, 0.0
      %v1330 = vadd.f32 %v1328, %v1329
      %v1331 = vsel %vm697, %v837, 0.0
      %v1332 = vadd.f32 %v1330, %v1331
      %v1333 = vsel %vm697, %v840, 0.0
      %v1334 = vadd.f32 %v1332, %v1333
      %v1335 = vsel %vm697, %v845, 0.0
      %v1336 = vadd.f32 %v1334, %v1335
      %v1337 = vsel %vm697, %v848, 0.0
      %v1338 = vadd.f32 %v1336, %v1337
      %v1339 = vsel %vm697, %v853, 0.0
      %v1340 = vadd.f32 %v1338, %v1339
      %v1341 = vsel %vm697, %v856, 0.0
      %v1342 = vadd.f32 %v1340, %v1341
      %v1343 = vsel %vm697, %v861, 0.0
      %v1344 = vadd.f32 %v1342, %v1343
      %v1345 = vsel %vm697, %v864, 0.0
      %v1346 = vadd.f32 %v1344, %v1345
      %v1347 = vsel %vm697, %v869, 0.0
      %v1348 = vadd.f32 %v1346, %v1347
      %v1349 = vsel %vm697, %v872, 0.0
      %v1350 = vadd.f32 %v1348, %v1349
      %v1351 = vsel %vm697, %v877, 0.0
      %v1352 = vadd.f32 %v1350, %v1351
      %v1353 = vsel %vm697, %v880, 0.0
      %v1354 = vadd.f32 %v1352, %v1353
      %v1355 = vsel %vm697, %v885, 0.0
      %v1356 = vadd.f32 %v1354, %v1355
      %v1357 = vsel %vm697, %v888, 0.0
      %v1358 = vadd.f32 %v1356, %v1357
      %v1359 = vsel %vm697, %v893, 0.0
      %v1360 = vadd.f32 %v1358, %v1359
      %v1361 = vsel %vm697, %v896, 0.0
      %v1362 = vadd.f32 %v1360, %v1361
      %v1363 = vsel %vm697, %v901, 0.0
      %v1364 = vadd.f32 %v1362, %v1363
      %v1365 = vsel %vm697, %v904, 0.0
      %v1366 = vadd.f32 %v1364, %v1365
      %v1367 = vrot.slane %v1366, 4
      %v1368 = vadd.f32 %v1366, %v1367
      %v1369 = vrot.slane %v1368, 2
      %v1370 = vadd.f32 %v1368, %v1369
      %v1371 = vrot.slane %v1370, 1
      %v1372 = vadd.f32 %v1370, %v1371
      %vm1373 = vcmask 253952
      %1374 = vst.msk [vmem:[%s440] sm:$0x1] %vm1373, %v1372
      %s1375 = smul.u32 32, %s29
      %p1376 = scmp.lt.s32.totalorder %s28, 1
      %s1377 = scalar_select %p1376, %s28, 1
      %p1378 = scmp.lt.s32.totalorder %s1375, 31
      %s1379 = scalar_select %p1378, %s1375, 31
      %s1380 = smul.addr %s1377, 32
      %s1381 = sadd.s32 %s1379, %s1380
      %s1382 = smul.addr %s1381, 8
      %s1383 = scalar_lea.vmem %s8, %s1382
      %s1384 = smul.u32 32, %s29
      %p1385 = scmp.lt.s32.totalorder %s28, 1
      %s1386 = scalar_select %p1385, %s28, 1
      %p1387 = scmp.lt.s32.totalorder %s1384, 31
      %s1388 = scalar_select %p1387, %s1384, 31
      %s1389 = smul.addr %s1386, 32
      %s1390 = sadd.s32 %s1388, %s1389
      %s1391 = smul.addr %s1390, 8
      %s1392 = scalar_lea.vmem %s9, %s1391
      %p1393 = scmp.lt.s32.totalorder %s28, 1
      %s1394 = scalar_select %p1393, %s28, 1
      %p1395 = scmp.lt.s32.totalorder %s29, 0
      %s1396 = scalar_select %p1395, %s29, 0
      %s1397 = sadd.s32 %s1396, %s1394
      %s1398 = scalar_lea.vmem %s10, %s1397
      // Predicated region
      $region53: #{recurrent_residual_block_tl.13} parent=51 // pred_check
        %p1399 = pneg %p231
      $region54: #{recurrent_residual_block_tl.13} parent=51 // pred_check_branch
        %1401 = sbr.rel (%p1399) target = $region56
      $region55: #{recurrent_residual_block_tl.13} parent=51 // pred_region
        %s1402 = smul.u32 32, %s29
      $region56: #{recurrent_residual_block_tl.13} parent=51 // pred_fallthru
        _
      // Predicated region
      $region57: #{recurrent_residual_block_tl.13} parent=51 // pred_check
        %p1403 = pneg %p259
      $region58: #{recurrent_residual_block_tl.13} parent=51 // pred_check_branch
        %1405 = sbr.rel (%p1403) target = $region60
      $region59: #{recurrent_residual_block_tl.13} parent=51 // pred_region
        %s1406 = smul.u32 32, %s29
      $region60: #{recurrent_residual_block_tl.13} parent=51 // pred_fallthru
        _
      // Predicated region
      $region61: #{recurrent_residual_block_tl.13} parent=51 // pred_check
        %p1407 = pneg %p287
      $region62: #{recurrent_residual_block_tl.13} parent=51 // pred_check_branch
        %1409 = sbr.rel (%p1407) target = $region64
      $region63: #{recurrent_residual_block_tl.13} parent=51 // pred_region
        _
      $region64: #{recurrent_residual_block_tl.13} parent=51 // pred_fallthru
        _
    $region52: #{recurrent_residual_block_tl.13} parent=5 // pred_fallthru
      _
    %p1410 = scmp.le.s32.totalorder 2, %s19
    // Predicated region
    $region65: #{recurrent_residual_block_tl.13} parent=5 // pred_check
      %p1411 = pneg %p1410
    $region66: #{recurrent_residual_block_tl.13} parent=5 // pred_check_branch
      %1413 = sbr.rel (%p1411) target = $region68
    $region67: #{recurrent_residual_block_tl.13} parent=5 // pred_region
      %s1414 = ssub.s32 %s19, 2
      // Predicated region
      $region69: #{recurrent_residual_block_tl.13} parent=67 // pred_check
        %p1415 = pneg %p237
      $region70: #{recurrent_residual_block_tl.13} parent=67 // pred_check_branch
        %1417 = sbr.rel (%p1415) target = $region72
      $region71: #{recurrent_residual_block_tl.13} parent=67 // pred_region
        %s1418 = smul.u32 32, %s31
        %p1419 = scmp.lt.s32.totalorder %s30, 1
        %s1420 = scalar_select %p1419, %s30, 1
        %p1421 = scmp.lt.s32.totalorder %s1418, 31
        %s1422 = scalar_select %p1421, %s1418, 31
        %s1423 = smul.addr %s1420, 32
        %s1424 = sadd.s32 %s1422, %s1423
        %s1425 = smul.addr %s1424, 8
        %s1426 = scalar_lea.vmem %s8, %s1425
      $region72: #{recurrent_residual_block_tl.13} parent=67 // pred_fallthru
        _
      // Predicated region
      $region73: #{recurrent_residual_block_tl.13} parent=67 // pred_check
        %p1427 = pneg %p265
      $region74: #{recurrent_residual_block_tl.13} parent=67 // pred_check_branch
        %1429 = sbr.rel (%p1427) target = $region76
      $region75: #{recurrent_residual_block_tl.13} parent=67 // pred_region
        %s1430 = smul.u32 32, %s31
        %p1431 = scmp.lt.s32.totalorder %s30, 1
        %s1432 = scalar_select %p1431, %s30, 1
        %p1433 = scmp.lt.s32.totalorder %s1430, 31
        %s1434 = scalar_select %p1433, %s1430, 31
        %s1435 = smul.addr %s1432, 32
        %s1436 = sadd.s32 %s1434, %s1435
        %s1437 = smul.addr %s1436, 8
        %s1438 = scalar_lea.vmem %s9, %s1437
      $region76: #{recurrent_residual_block_tl.13} parent=67 // pred_fallthru
        _
      // Predicated region
      $region77: #{recurrent_residual_block_tl.13} parent=67 // pred_check
        %p1439 = pneg %p293
      $region78: #{recurrent_residual_block_tl.13} parent=67 // pred_check_branch
        %1441 = sbr.rel (%p1439) target = $region80
      $region79: #{recurrent_residual_block_tl.13} parent=67 // pred_region
        %p1442 = scmp.lt.s32.totalorder %s30, 1
        %s1443 = scalar_select %p1442, %s30, 1
        %p1444 = scmp.lt.s32.totalorder %s31, 0
        %s1445 = scalar_select %p1444, %s31, 0
        %s1446 = sadd.s32 %s1445, %s1443
        %s1447 = scalar_lea.vmem %s10, %s1446
      $region80: #{recurrent_residual_block_tl.13} parent=67 // pred_fallthru
        _
    $region68: #{recurrent_residual_block_tl.13} parent=5 // pred_fallthru
      _
  $region6: #{recurrent_residual_block_tl.13} parent=0 // loop_footer
    %s23 = sadd.s32 1, %s19
  $region7: #{recurrent_residual_block_tl.13} parent=0 // loop_footer_branch
    %18 = sbr.rel target = $region3
  $region8: #{recurrent_residual_block_tl.13} parent=0 // loop_exit
    _

// kernel: recurrent_residual_block_tl.15
$region0: #{recurrent_residual_block_tl.15}
  #allocation0 [shape = 'u32[]', space=smem, size = 0x4, offset = 0x4, fixed_abs, tag = 'smem constant byte address 0x4 - core index']
  #allocation1 [shape = 'u32[144,128]{1,0:T(1,128)}', space=vmem, size = 0x12000, scoped, tag = 'internal scratch']
  %s0 = inlined_call_operand.vmem [shape: f32[2,16,16,96], index: 0, kind: input, shape index: {}]
  %s1 = inlined_call_operand.vmem [shape: f32[32,96], index: 1, kind: input, shape index: {}]
  %s2 = inlined_call_operand.vmem [shape: f32[1,96], index: 2, kind: input, shape index: {}]
  %s3 = inlined_call_operand.vmem [shape: f32[2,16,16,32], index: 3, kind: output, shape index: {}]
  %s4 = sld [smem:[#allocation0]]
  $region52: #{recurrent_residual_block_tl.15} parent=0
    _
  %s6 = ssub.s32 1, %s4
  %s7 = scalar_select 0, %s6, %s4
  loop: start=0, step=1, limit=4
  $region2: #{recurrent_residual_block_tl.15} parent=0 // loop_pre_header
    _
  $region3: #{recurrent_residual_block_tl.15} parent=0 // loop_header
    %s9 = sphi 0, %s13
    %p10 = scmp.ge.s32.totalorder %s9, 4
    %s16 = sphi 0, %s28
    %s17 = sphi 0, %s24
    %s18 = sphi 0, %s16
    %s19 = sphi 0, %s17
    %s20 = sphi 0, %s18
    %s21 = sphi 0, %s19
    %s33 = sphi 0, %s35
    %s36 = sphi 0, %s33
    %s37 = sphi 0, %s36
    %s53 = sphi 0, %s37
    %s57 = sphi 0, %s57
    %s59 = sphi 0, %s57
    %s60 = sphi 0, %s59
    %s74 = sphi 0, %s60
    %s78 = sphi 0, %s78
    %s80 = sphi 0, %s78
    %s81 = sphi 0, %s80
    %s95 = sphi 0, %s81
    %s103 = sphi 0, %s105
    %s106 = sphi 0, %s103
    %s107 = sphi 0, %s106
    %s123 = sphi 0, %s107
  $region4: #{recurrent_residual_block_tl.15} parent=0 // loop_header_branch
    %12 = sbr.rel (%p10) target = $region8
  $region5: #{recurrent_residual_block_tl.15} parent=0 // loop_body
    %s14 = ssub.s32 %s9, 1
    %s15 = ssub.s32 %s9, 2
    %s22 = sadd.s32 1, %s17
    %p23 = scmp.ge.s32.totalorder %s22, 1
    %s24 = scalar_select %p23, 0, %s22
    %s25 = sadd.s32 1, %s16
    %s26 = scalar_select %p23, %s25, %s16
    %p27 = scmp.ge.s32.totalorder %s26, 2
    %s28 = scalar_select %p27, 0, %s26
    %s29 = ssub.s32 %s16, %s28
    %s30 = ssub.s32 %s17, %s24
    %s31 = sor.u32 %s29, %s30
    %p32 = scmp.eq.s32.totalorder %s31, 0
    %s34 = sadd.s32 %s33, 1
    %s35 = scalar_select %p32, %s33, %s34
    %p38 = pneg %p32
    %p39 = scmp.eq.s32.totalorder %s9, 1
    %p40 = por %p38, %p39
    %p41 = scmp.ne.s32.totalorder %s33, %s36
    %p42 = scmp.eq.s32.totalorder %s9, 0
    %p43 = por %p41, %p42
    %p44 = scmp.ne.s32.totalorder %s33, %s36
    %p45 = scmp.eq.s32.totalorder %s14, 1
    %p46 = por %p44, %p45
    %p47 = scmp.ne.s32.totalorder %s36, %s37
    %p48 = scmp.eq.s32.totalorder %s14, 0
    %p49 = por %p47, %p48
    %p50 = scmp.ne.s32.totalorder %s36, %s37
    %p51 = scmp.eq.s32.totalorder %s15, 1
    %p52 = por %p50, %p51
    %p54 = scmp.ne.s32.totalorder %s37, %s53
    %p55 = scmp.eq.s32.totalorder %s15, 0
    %p56 = por %p54, %p55
    %s58 = sadd.s32 %s57, 1
    %p61 = scmp.eq.s32.totalorder %s9, 1
    %p62 = scmp.ne.s32.totalorder %s57, %s59
    %p63 = scmp.eq.s32.totalorder %s9, 0
    %p64 = por %p62, %p63
    %p65 = scmp.ne.s32.totalorder %s57, %s59
    %p66 = scmp.eq.s32.totalorder %s14, 1
    %p67 = por %p65, %p66
    %p68 = scmp.ne.s32.totalorder %s59, %s60
    %p69 = scmp.eq.s32.totalorder %s14, 0
    %p70 = por %p68, %p69
    %p71 = scmp.ne.s32.totalorder %s59, %s60
    %p72 = scmp.eq.s32.totalorder %s15, 1
    %p73 = por %p71, %p72
    %p75 = scmp.ne.s32.totalorder %s60, %s74
    %p76 = scmp.eq.s32.totalorder %s15, 0
    %p77 = por %p75, %p76
    %s79 = sadd.s32 %s78, 1
    %p82 = scmp.eq.s32.totalorder %s9, 1
    %p83 = scmp.ne.s32.totalorder %s78, %s80
    %p84 = scmp.eq.s32.totalorder %s9, 0
    %p85 = por %p83, %p84
    %p86 = scmp.ne.s32.totalorder %s78, %s80
    %p87 = scmp.eq.s32.totalorder %s14, 1
    %p88 = por %p86, %p87
    %p89 = scmp.ne.s32.totalorder %s80, %s81
    %p90 = scmp.eq.s32.totalorder %s14, 0
    %p91 = por %p89, %p90
    %p92 = scmp.ne.s32.totalorder %s80, %s81
    %p93 = scmp.eq.s32.totalorder %s15, 1
    %p94 = por %p92, %p93
    %p96 = scmp.ne.s32.totalorder %s81, %s95
    %p97 = scmp.eq.s32.totalorder %s15, 0
    %p98 = por %p96, %p97
    %s99 = ssub.s32 %s16, %s28
    %s100 = ssub.s32 %s17, %s24
    %s101 = sor.u32 %s99, %s100
    %p102 = scmp.eq.s32.totalorder %s101, 0
    %s104 = sadd.s32 %s103, 1
    %s105 = scalar_select %p102, %s103, %s104
    %p108 = pneg %p102
    %p109 = scmp.eq.s32.totalorder %s9, 1
    %p110 = por %p108, %p109
    %p111 = scmp.ne.s32.totalorder %s103, %s106
    %p112 = scmp.eq.s32.totalorder %s9, 0
    %p113 = por %p111, %p112
    %p114 = scmp.ne.s32.totalorder %s103, %s106
    %p115 = scmp.eq.s32.totalorder %s14, 1
    %p116 = por %p114, %p115
    %p117 = scmp.ne.s32.totalorder %s106, %s107
    %p118 = scmp.eq.s32.totalorder %s14, 0
    %p119 = por %p117, %p118
    %p120 = scmp.ne.s32.totalorder %s106, %s107
    %p121 = scmp.eq.s32.totalorder %s15, 1
    %p122 = por %p120, %p121
    %p124 = scmp.ne.s32.totalorder %s107, %s123
    %p125 = scmp.eq.s32.totalorder %s15, 0
    %p126 = por %p124, %p125
    %p127 = scmp.le.s32.totalorder 1, %s9
    %p128 = scmp.lt.s32.totalorder %s9, 3
    %p129 = pnand %p127, %p128
    %p130 = pneg %p129
    // Predicated region
    $region9: #{recurrent_residual_block_tl.15} parent=5 // pred_check
      _
    $region10: #{recurrent_residual_block_tl.15} parent=5 // pred_check_branch
      %132 = sbr.rel (%p129) target = $region12
    $region11: #{recurrent_residual_block_tl.15} parent=5 // pred_region
      %s133 = ssub.s32 %s9, 1
      // Predicated region
      $region13: #{recurrent_residual_block_tl.15} parent=11 // pred_check
        %p134 = pneg %p70
      $region14: #{recurrent_residual_block_tl.15} parent=11 // pred_check_branch
        %136 = sbr.rel (%p134) target = $region16
      $region15: #{recurrent_residual_block_tl.15} parent=11 // pred_region
        _
      $region16: #{recurrent_residual_block_tl.15} parent=11 // pred_fallthru
        _
      // Predicated region
      $region17: #{recurrent_residual_block_tl.15} parent=11 // pred_check
        %p137 = pneg %p91
      $region18: #{recurrent_residual_block_tl.15} parent=11 // pred_check_branch
        %139 = sbr.rel (%p137) target = $region20
      $region19: #{recurrent_residual_block_tl.15} parent=11 // pred_region
        _
      $region20: #{recurrent_residual_block_tl.15} parent=11 // pred_fallthru
        _
    $region12: #{recurrent_residual_block_tl.15} parent=5 // pred_fallthru
      _
    %p140 = scmp.lt.s32.totalorder %s9, 2
    // Predicated region
    $region21: #{recurrent_residual_block_tl.15} parent=5 // pred_check
      %p141 = pneg %p140
    $region22: #{recurrent_residual_block_tl.15} parent=5 // pred_check_branch
      %143 = sbr.rel (%p141) target = $region24
    $region23: #{recurrent_residual_block_tl.15} parent=5 // pred_region
      // Predicated region
      $region25: #{recurrent_residual_block_tl.15} parent=23 // pred_check
        %p144 = pneg %p43
      $region26: #{recurrent_residual_block_tl.15} parent=23 // pred_check_branch
        %146 = sbr.rel (%p144) target = $region28
      $region27: #{recurrent_residual_block_tl.15} parent=23 // pred_region
        %s147 = smul.u32 2, %s17
        %p148 = scmp.lt.s32.totalorder %s16, 1
        %s149 = scalar_select %p148, %s16, 1
        %p150 = scmp.lt.s32.totalorder %s147, 1
        %s151 = scalar_select %p150, %s147, 1
        %s152 = smul.addr %s149, 32
        %s153 = sadd.s32 %s151, %s152
        %s154 = smul.addr %s153, 8
        %s155 = scalar_lea.vmem %s0, %s154
        %s156 = smul.u32 2, %s17
      $region28: #{recurrent_residual_block_tl.15} parent=23 // pred_fallthru
        _
    $region24: #{recurrent_residual_block_tl.15} parent=5 // pred_fallthru
      _
    %p157 = scmp.le.s32.totalorder 1, %s9
    %p158 = scmp.lt.s32.totalorder %s9, 3
    %p159 = pnand %p157, %p158
    %p160 = pneg %p159
    // Predicated region
    $region29: #{recurrent_residual_block_tl.15} parent=5 // pred_check
      _
    $region30: #{recurrent_residual_block_tl.15} parent=5 // pred_check_branch
      %162 = sbr.rel (%p159) target = $region32
    $region31: #{recurrent_residual_block_tl.15} parent=5 // pred_region
      %s163 = ssub.s32 %s9, 1
      %s164 = smul.u32 2, %s19
      %p165 = scmp.lt.s32.totalorder %s18, 1
      %s166 = scalar_select %p165, %s18, 1
      %p167 = scmp.lt.s32.totalorder %s164, 1
      %s168 = scalar_select %p167, %s164, 1
      %s169 = smul.addr %s166, 32
      %s170 = sadd.s32 %s168, %s169
      %s171 = smul.addr %s170, 8
      %s172 = scalar_lea.vmem %s0, %s171
      %p173 = pneg %p49
      %p174 = pneg %p46
      %p175 = pneg %p70
      %p176 = pneg %p67
      %p177 = pneg %p91
      %p178 = pneg %p88
      %p179 = pneg %p119
      %p180 = pneg %p116
      %s181 = smul.u32 2, %s19
      %p182 = scmp.lt.s32.totalorder %s18, 1
      %s183 = scalar_select %p182, %s18, 1
      %p184 = scmp.lt.s32.totalorder %s181, 1
      %s185 = scalar_select %p184, %s181, 1
      %s186 = smul.addr %s183, 32
      %s187 = sadd.s32 %s185, %s186
      %s188 = smul.addr %s187, 8
      %s189 = scalar_lea.vmem %s3, %s188
      %s190 = smul.u32 2, %s19
      %p191 = scmp.lt.s32.totalorder %s18, 1
      %s192 = scalar_select %p191, %s18, 1
      %p193 = scmp.lt.s32.totalorder %s190, 1
      %s194 = scalar_select %p193, %s190, 1
      %s195 = smul.addr %s192, 32
      %s196 = sadd.s32 %s194, %s195
      %s197 = smul.addr %s196, 8
      %s198 = scalar_lea.vmem %s0, %s197
      %s199 = smul.u32 2, %s19
      %s200 = smul.u32 2, %s19
      %p201 = scmp.lt.s32.totalorder %s18, 1
      %s202 = scalar_select %p201, %s18, 1
      %p203 = scmp.lt.s32.totalorder %s200, 1
      %s204 = scalar_select %p203, %s200, 1
      %s205 = smul.addr %s202, 32
      %s206 = sadd.s32 %s204, %s205
      %s207 = smul.addr %s206, 8
      %s208 = scalar_lea.vmem %s3, %s207
      %s209 = smul.u32 2, %s19
      loop: start=0, step=1, limit=16
      $region33: #{recurrent_residual_block_tl.15} parent=31 // loop_pre_header
        _
      $region34: #{recurrent_residual_block_tl.15} parent=31 // loop_header
        %s211 = sphi 0, %s215
        %p212 = scmp.ge.s32.totalorder %s211, 16
        %v216 = vphi 0.0, %v452
        %v217 = vphi 0.0, %v453
      $region35: #{recurrent_residual_block_tl.15} parent=31 // loop_header_branch
        %214 = sbr.rel (%p212) target = $region39
      $region36: #{recurrent_residual_block_tl.15} parent=31 // loop_body
        %s218 = ssub.s32 15, %s211
        %s219 = smul.u32 %s211, 16
        %s220 = scalar_lea.vmem %s198, %s219
        %v221 = vld [vmem:[%s220] sm:$0xff]
        %v222 = vld [vmem:[%s220 + $0x8] sm:$0xff]
        %s223 = smul.u32 %s218, 16
        %s224 = scalar_lea.vmem %s198, %s223
        %v225 = vld [vmem:[%s224] sm:$0xff]
        %v226 = vld [vmem:[%s224 + $0x8] sm:$0xff]
        %v227 = vld [vmem:[%s1] sm:$0xff]
        %v228 = vld [vmem:[%s1 + $0x8] sm:$0xff]
        %v229 = vld [vmem:[%s1 + $0x10] sm:$0xff]
        %v230 = vld [vmem:[%s1 + $0x18] sm:$0xff]
        %v231 = vld [vmem:[%s2] sm:$0x1]
        %v233 = vlaneseq
        %v234 = vshrl.u32 %v233, 7
        %v235 = vsub.s32 0, %v234
        %v236 = vrot.slane %v231, %v235
        %vm238 = vcmask 261120
        %v240 = vsel %vm238, %v216, 0
        %v243 = vsel %vm238, %v217, 0
        %245 = vmatprep.subr.mxu0 0.0
        %246 = vmatpush1.msra.mxu0 0.0
        %247 = vmatprep.subr.mxu0 0.0
        %248 = vmatpush1.msra.mxu0 0.0
        %249 = vmatprep.subr.mxu0 0.0
        %250 = vmatpush1.msra.mxu0 0.0
        %251 = vmatprep.subr.mxu0 0.0
        %252 = vmatpush1.msra.mxu0 0.0
        %253 = vmatprep.subr.mxu0 0.0
        %254 = vmatpush1.msra.mxu0 0.0
        %255 = vmatprep.subr.mxu0 0.0
        %256 = vmatpush1.msra.mxu0 0.0
        %257 = vmatprep.subr.mxu0 0.0
        %258 = vmatpush1.msra.mxu0 0.0
        %259 = vmatprep.subr.mxu0 0.0
        %260 = vmatpush1.msra.mxu0 0.0
        %261 = vmatprep.subr.mxu0 0.0
        %262 = vmatpush1.msra.mxu0 0.0
        %263 = vmatprep.subr.mxu0 0.0
        %264 = vmatpush1.msra.mxu0 0.0
        %265 = vmatprep.subr.mxu0 0.0
        %266 = vmatpush1.msra.mxu0 0.0
        %267 = vmatprep.subr.mxu0 0.0
        %268 = vmatpush1.msra.mxu0 0.0
        %269 = vmatprep.subr.mxu0 0.0
        %270 = vmatpush1.msra.mxu0 %v230
        %271 = vmatprep.subr.mxu0 0.0
        %272 = vmatpush1.msra.mxu0 %v229
        %273 = vmatprep.subr.mxu0 0.0
        %274 = vmatpush1.msra.mxu0 %v228
        %275 = vmatprep.subr.mxu0 0.0
        %276 = vmatpush1.msra.mxu0 %v227
        %277 = vmatprep.subr.mxu0 0.0
        %278 = vmatpush2.msra.mxu0 0.0
        %279 = vmatprep.subr.mxu0 0.0
        %280 = vmatpush2.msra.mxu0 0.0
        %281 = vmatprep.subr.mxu0 0.0
        %282 = vmatpush2.msra.mxu0 0.0
        %283 = vmatprep.subr.mxu0 0.0
        %284 = vmatpush2.msra.mxu0 0.0
        %285 = vmatprep.subr.mxu0 0.0
        %286 = vmatpush2.msra.mxu0 0.0
        %287 = vmatprep.subr.mxu0 0.0
        %288 = vmatpush2.msra.mxu0 0.0
        %289 = vmatprep.subr.mxu0 0.0
        %290 = vmatpush2.msra.mxu0 0.0
        %291 = vmatprep.subr.mxu0 0.0
        %292 = vmatpush2.msra.mxu0 0.0
        %293 = vmatprep.subr.mxu0 0.0
        %294 = vmatpush2.msra.mxu0 0.0
        %295 = vmatprep.subr.mxu0 0.0
        %296 = vmatpush2.msra.mxu0 0.0
        %297 = vmatprep.subr.mxu0 0.0
        %298 = vmatpush2.msra.mxu0 0.0
        %299 = vmatprep.subr.mxu0 0.0
        %300 = vmatpush2.msra.mxu0 0.0
        %301 = vmatprep.subr.mxu0 0.0
        %302 = vmatpush2.msra.mxu0 0.0
        %303 = vmatprep.subr.mxu0 0.0
        %304 = vmatpush2.msra.mxu0 0.0
        %305 = vmatprep.subr.mxu0 0.0
        %306 = vmatpush2.msra.mxu0 0.0
        %307 = vmatprep.subr.mxu0 0.0
        %308 = vmatpush2.msra.mxu0 0.0
        %309 = vmatprep.mubr.f32.mxu0 0.0
        %310 = vmatmul.mubr.f32.gmra.mxu0 %v240
        %v311 = vpop.f32.mrf.mxu0
        %v312 = vadd.f32 %v236, %v311
        %v313 = vpop.f32.mrf.mxu0
        %314 = vmatprep.mubr.f32.mxu0 0.0
        %315 = vmatmul.mubr.f32.gmra.mxu0 %v243
        %v316 = vpop.f32.mrf.mxu0
        %v317 = vadd.f32 %v236, %v316
        %v318 = vpop.f32.mrf.mxu0
        %319 = vdwg.mxu0
        %v320 = vadd.f32 %v221, %v312
        %v321 = vadd.f32 %v222, %v317
        %v322 = vxor.u32 %v320, 2147483648
        %v323 = vxor.u32 %v321, 2147483648
        %v324 = vmul.f32 %v322, 1.442695
        %v325 = vpow.pop %v324
        %v326 = vmul.f32 %v323, 1.442695
        %v327 = vpow.pop %v326
        %v328 = vadd.f32 %v325, 1.0
        %v329 = vadd.f32 %v327, 1.0
        %v330 = vrcp.pop %v328
        %v331 = vmul.f32 1.0, %v330
        %v332 = vrcp.pop %v329
        %v333 = vmul.f32 1.0, %v332
        %336 = vrot.lane.b32.xlu0 %v312, 96
        %v337 = vpop.permute.xlu0 %336
        %338 = vrot.lane.b32.xlu0 %v317, 96
        %v339 = vpop.permute.xlu0 %338
        %v342 = vmul.f32 %v331, %v337
        %v343 = vmul.f32 %v333, %v339
        %346 = vrot.lane.b32.xlu0 %v342, 32
        %v347 = vpop.permute.xlu0 %346
        %348 = vrot.lane.b32.xlu0 %v343, 32
        %v349 = vpop.permute.xlu0 %348
        %v352 = vadd.f32 %v221, %v347
        %v353 = vadd.f32 %v222, %v349
        %v354 = vtanh.pop %v352
        %v355 = vtanh.pop %v353
        %v356 = vsub.f32 1.0, %v331
        %v357 = vsub.f32 1.0, %v333
        %360 = vrot.lane.b32.xlu0 %v354, 112
        %v361 = vpop.permute.xlu0 %360
        %362 = vrot.lane.b32.xlu0 %v355, 112
        %v363 = vpop.permute.xlu0 %362
        %v366 = vmul.f32 %v356, %v361
        %v367 = vmul.f32 %v357, %v363
        %368 = vrot.lane.b32.xlu0 %v216, 16
        %v369 = vpop.permute.xlu0 %368
        %370 = vrot.lane.b32.xlu0 %v217, 16
        %v371 = vpop.permute.xlu0 %370
        %v374 = vmul.f32 %v331, %v369
        %v375 = vmul.f32 %v333, %v371
        %v376 = vadd.f32 %v366, %v374
        %v377 = vadd.f32 %v367, %v375
        %v378 = vadd.f32 %v225, %v312
        %v379 = vadd.f32 %v226, %v317
        %v380 = vxor.u32 %v378, 2147483648
        %v381 = vxor.u32 %v379, 2147483648
        %v382 = vmul.f32 %v380, 1.442695
        %v383 = vpow.pop %v382
        %v384 = vmul.f32 %v381, 1.442695
        %v385 = vpow.pop %v384
        %v386 = vadd.f32 %v383, 1.0
        %v387 = vadd.f32 %v385, 1.0
        %v388 = vrcp.pop %v386
        %v389 = vmul.f32 1.0, %v388
        %v390 = vrcp.pop %v387
        %v391 = vmul.f32 1.0, %v390
        %v392 = vmul.f32 %v389, %v337
        %v393 = vmul.f32 %v391, %v339
        %396 = vrot.lane.b32.xlu0 %v392, 32
        %v397 = vpop.permute.xlu0 %396
        %398 = vrot.lane.b32.xlu0 %v393, 32
        %v399 = vpop.permute.xlu0 %398
        %v402 = vadd.f32 %v225, %v397
        %v403 = vadd.f32 %v226, %v399
        %v404 = vtanh.pop %v402
        %v405 = vtanh.pop %v403
        %v406 = vsub.f32 1.0, %v389
        %v407 = vsub.f32 1.0, %v391
        %410 = vrot.lane.b32.xlu0 %v404, 112
        %v411 = vpop.permute.xlu0 %410
        %412 = vrot.lane.b32.xlu0 %v405, 112
        %v413 = vpop.permute.xlu0 %412
        %v416 = vmul.f32 %v406, %v411
        %v417 = vmul.f32 %v407, %v413
        %418 = vrot.lane.b32.xlu0 %v216, 48
        %v419 = vpop.permute.xlu0 %418
        %420 = vrot.lane.b32.xlu0 %v217, 48
        %v421 = vpop.permute.xlu0 %420
        %v424 = vmul.f32 %v389, %v419
        %v425 = vmul.f32 %v391, %v421
        %v426 = vadd.f32 %v416, %v424
        %v427 = vadd.f32 %v417, %v425
        %430 = vrot.lane.b32.xlu0 %v376, 112
        %v431 = vpop.permute.xlu0 %430
        %432 = vrot.lane.b32.xlu0 %v377, 112
        %v433 = vpop.permute.xlu0 %432
        %s436 = scalar_lea.vmem %s208, %s219
        %vm437 = vcmask 130048
        %438 = vst.msk [vmem:[%s436] sm:$0xff] %vm437, %v431
        %439 = vst.msk [vmem:[%s436 + $0x8] sm:$0xff] %vm437, %v433
        %442 = vrot.lane.b32.xlu0 %v426, 80
        %v443 = vpop.permute.xlu0 %442
        %444 = vrot.lane.b32.xlu0 %v427, 80
        %v445 = vpop.permute.xlu0 %444
        %s448 = scalar_lea.vmem %s208, %s223
        %vm449 = vcmask 261248
        %450 = vst.msk [vmem:[%s448] sm:$0xff] %vm449, %v443
        %451 = vst.msk [vmem:[%s448 + $0x8] sm:$0xff] %vm449, %v445
        %v452 = vsel %vm437, %v431, %v443
        %v453 = vsel %vm437, %v433, %v445
      $region37: #{recurrent_residual_block_tl.15} parent=31 // loop_footer
        %s215 = sadd.s32 1, %s211
      $region38: #{recurrent_residual_block_tl.15} parent=31 // loop_footer_branch
        %210 = sbr.rel target = $region34
      $region39: #{recurrent_residual_block_tl.15} parent=31 // loop_exit
        _
      %s454 = smul.u32 2, %s19
      %p455 = scmp.lt.s32.totalorder %s18, 1
      %s456 = scalar_select %p455, %s18, 1
      %p457 = scmp.lt.s32.totalorder %s454, 1
      %s458 = scalar_select %p457, %s454, 1
      %s459 = smul.addr %s456, 32
      %s460 = sadd.s32 %s458, %s459
      %s461 = smul.addr %s460, 8
      %s462 = scalar_lea.vmem %s3, %s461
      // Predicated region
      $region40: #{recurrent_residual_block_tl.15} parent=31 // pred_check
        %p463 = pneg %p116
      $region41: #{recurrent_residual_block_tl.15} parent=31 // pred_check_branch
        %465 = sbr.rel (%p463) target = $region43
      $region42: #{recurrent_residual_block_tl.15} parent=31 // pred_region
        %s466 = smul.u32 2, %s19
      $region43: #{recurrent_residual_block_tl.15} parent=31 // pred_fallthru
        _
    $region32: #{recurrent_residual_block_tl.15} parent=5 // pred_fallthru
      _
    %p467 = scmp.le.s32.totalorder 2, %s9
    // Predicated region
    $region44: #{recurrent_residual_block_tl.15} parent=5 // pred_check
      %p468 = pneg %p467
    $region45: #{recurrent_residual_block_tl.15} parent=5 // pred_check_branch
      %470 = sbr.rel (%p468) target = $region47
    $region46: #{recurrent_residual_block_tl.15} parent=5 // pred_region
      %s471 = ssub.s32 %s9, 2
      // Predicated region
      $region48: #{recurrent_residual_block_tl.15} parent=46 // pred_check
        %p472 = pneg %p122
      $region49: #{recurrent_residual_block_tl.15} parent=46 // pred_check_branch
        %474 = sbr.rel (%p472) target = $region51
      $region50: #{recurrent_residual_block_tl.15} parent=46 // pred_region
        %s475 = smul.u32 2, %s21
        %p476 = scmp.lt.s32.totalorder %s20, 1
        %s477 = scalar_select %p476, %s20, 1
        %p478 = scmp.lt.s32.totalorder %s475, 1
        %s479 = scalar_select %p478, %s475, 1
        %s480 = smul.addr %s477, 32
        %s481 = sadd.s32 %s479, %s480
        %s482 = smul.addr %s481, 8
        %s483 = scalar_lea.vmem %s3, %s482
      $region51: #{recurrent_residual_block_tl.15} parent=46 // pred_fallthru
        _
    $region47: #{recurrent_residual_block_tl.15} parent=5 // pred_fallthru
      _
  $region6: #{recurrent_residual_block_tl.15} parent=0 // loop_footer
    %s13 = sadd.s32 1, %s9
  $region7: #{recurrent_residual_block_tl.15} parent=0 // loop_footer_branch
    %8 = sbr.rel target = $region3
  $region8: #{recurrent_residual_block_tl.15} parent=0 // loop_exit
    _

// kernel: recurrent_residual_block_tl.14
$region0: #{recurrent_residual_block_tl.14}
  #allocation0 [shape = 'u32[]', space=smem, size = 0x4, offset = 0x4, fixed_abs, tag = 'smem constant byte address 0x4 - core index']
  #allocation1 [shape = 'u32[144,128]{1,0:T(1,128)}', space=vmem, size = 0x12000, scoped, tag = 'internal scratch']
  %s0 = inlined_call_operand.vmem [shape: f32[2,256,32], index: 0, kind: input, shape index: {}]
  %s1 = inlined_call_operand.vmem [shape: f32[2,256,2], index: 1, kind: input, shape index: {}]
  %s2 = inlined_call_operand.vmem [shape: f32[2,256,2], index: 2, kind: input, shape index: {}]
  %s3 = inlined_call_operand.vmem [shape: f32[2,1,32], index: 3, kind: input, shape index: {}]
  %s4 = inlined_call_operand.vmem [shape: f32[2,2], index: 4, kind: input, shape index: {}]
  %s5 = inlined_call_operand.vmem [shape: f32[1,2], index: 5, kind: input, shape index: {}]
  %s6 = inlined_call_operand.vmem [shape: f32[2,32], index: 6, kind: input, shape index: {}]
  %s7 = inlined_call_operand.vmem [shape: f32[1,32], index: 7, kind: input, shape index: {}]
  %s8 = inlined_call_operand.vmem [shape: bf16[32,96], index: 8, kind: input, shape index: {}]
  %s9 = inlined_call_operand.vmem [shape: f32[1,96], index: 9, kind: input, shape index: {}]
  %s10 = inlined_call_operand.vmem [shape: f32[2,256,96], index: 10, kind: output, shape index: {}]
  %s11 = sld [smem:[#allocation0]]
  $region73: #{recurrent_residual_block_tl.14} parent=0
    _
  %s13 = ssub.s32 1, %s11
  %s14 = scalar_select 0, %s13, %s11
  loop: start=0, step=1, limit=4
  $region2: #{recurrent_residual_block_tl.14} parent=0 // loop_pre_header
    _
  $region3: #{recurrent_residual_block_tl.14} parent=0 // loop_header
    %s16 = sphi 0, %s20
    %p17 = scmp.ge.s32.totalorder %s16, 4
    %s23 = sphi 0, %s35
    %s24 = sphi 0, %s31
    %s25 = sphi 0, %s23
    %s26 = sphi 0, %s24
    %s27 = sphi 0, %s25
    %s28 = sphi 0, %s26
    %s40 = sphi 0, %s42
    %s43 = sphi 0, %s40
    %s44 = sphi 0, %s43
    %s60 = sphi 0, %s44
    %s68 = sphi 0, %s70
    %s71 = sphi 0, %s68
    %s72 = sphi 0, %s71
    %s88 = sphi 0, %s72
    %s96 = sphi 0, %s98
    %s99 = sphi 0, %s96
    %s100 = sphi 0, %s99
    %s116 = sphi 0, %s100
    %s122 = sphi 0, %s124
    %s125 = sphi 0, %s122
    %s126 = sphi 0, %s125
    %s142 = sphi 0, %s126
    %s146 = sphi 0, %s146
    %s148 = sphi 0, %s146
    %s149 = sphi 0, %s148
    %s163 = sphi 0, %s149
    %s167 = sphi 0, %s167
    %s169 = sphi 0, %s167
    %s170 = sphi 0, %s169
    %s184 = sphi 0, %s170
    %s188 = sphi 0, %s188
    %s190 = sphi 0, %s188
    %s191 = sphi 0, %s190
    %s205 = sphi 0, %s191
    %s209 = sphi 0, %s209
    %s211 = sphi 0, %s209
    %s212 = sphi 0, %s211
    %s226 = sphi 0, %s212
    %s230 = sphi 0, %s230
    %s232 = sphi 0, %s230
    %s233 = sphi 0, %s232
    %s247 = sphi 0, %s233
    %s251 = sphi 0, %s251
    %s253 = sphi 0, %s251
    %s254 = sphi 0, %s253
    %s268 = sphi 0, %s254
    %s276 = sphi 0, %s278
    %s279 = sphi 0, %s276
    %s280 = sphi 0, %s279
    %s296 = sphi 0, %s280
  $region4: #{recurrent_residual_block_tl.14} parent=0 // loop_header_branch
    %19 = sbr.rel (%p17) target = $region8
  $region5: #{recurrent_residual_block_tl.14} parent=0 // loop_body
    %s21 = ssub.s32 %s16, 1
    %s22 = ssub.s32 %s16, 2
    %s29 = sadd.s32 1, %s24
    %p30 = scmp.ge.s32.totalorder %s29, 1
    %s31 = scalar_select %p30, 0, %s29
    %s32 = sadd.s32 1, %s23
    %s33 = scalar_select %p30, %s32, %s23
    %p34 = scmp.ge.s32.totalorder %s33, 2
    %s35 = scalar_select %p34, 0, %s33
    %s36 = ssub.s32 %s23, %s35
    %s37 = ssub.s32 %s24, %s31
    %s38 = sor.u32 %s36, %s37
    %p39 = scmp.eq.s32.totalorder %s38, 0
    %s41 = sadd.s32 %s40, 1
    %s42 = scalar_select %p39, %s40, %s41
    %p45 = pneg %p39
    %p46 = scmp.eq.s32.totalorder %s16, 1
    %p47 = por %p45, %p46
    %p48 = scmp.ne.s32.totalorder %s40, %s43
    %p49 = scmp.eq.s32.totalorder %s16, 0
    %p50 = por %p48, %p49
    %p51 = scmp.ne.s32.totalorder %s40, %s43
    %p52 = scmp.eq.s32.totalorder %s21, 1
    %p53 = por %p51, %p52
    %p54 = scmp.ne.s32.totalorder %s43, %s44
    %p55 = scmp.eq.s32.totalorder %s21, 0
    %p56 = por %p54, %p55
    %p57 = scmp.ne.s32.totalorder %s43, %s44
    %p58 = scmp.eq.s32.totalorder %s22, 1
    %p59 = por %p57, %p58
    %p61 = scmp.ne.s32.totalorder %s44, %s60
    %p62 = scmp.eq.s32.totalorder %s22, 0
    %p63 = por %p61, %p62
    %s64 = ssub.s32 %s23, %s35
    %s65 = ssub.s32 %s24, %s31
    %s66 = sor.u32 %s64, %s65
    %p67 = scmp.eq.s32.totalorder %s66, 0
    %s69 = sadd.s32 %s68, 1
    %s70 = scalar_select %p67, %s68, %s69
    %p73 = pneg %p67
    %p74 = scmp.eq.s32.totalorder %s16, 1
    %p75 = por %p73, %p74
    %p76 = scmp.ne.s32.totalorder %s68, %s71
    %p77 = scmp.eq.s32.totalorder %s16, 0
    %p78 = por %p76, %p77
    %p79 = scmp.ne.s32.totalorder %s68, %s71
    %p80 = scmp.eq.s32.totalorder %s21, 1
    %p81 = por %p79, %p80
    %p82 = scmp.ne.s32.totalorder %s71, %s72
    %p83 = scmp.eq.s32.totalorder %s21, 0
    %p84 = por %p82, %p83
    %p85 = scmp.ne.s32.totalorder %s71, %s72
    %p86 = scmp.eq.s32.totalorder %s22, 1
    %p87 = por %p85, %p86
    %p89 = scmp.ne.s32.totalorder %s72, %s88
    %p90 = scmp.eq.s32.totalorder %s22, 0
    %p91 = por %p89, %p90
    %s92 = ssub.s32 %s23, %s35
    %s93 = ssub.s32 %s24, %s31
    %s94 = sor.u32 %s92, %s93
    %p95 = scmp.eq.s32.totalorder %s94, 0
    %s97 = sadd.s32 %s96, 1
    %s98 = scalar_select %p95, %s96, %s97
    %p101 = pneg %p95
    %p102 = scmp.eq.s32.totalorder %s16, 1
    %p103 = por %p101, %p102
    %p104 = scmp.ne.s32.totalorder %s96, %s99
    %p105 = scmp.eq.s32.totalorder %s16, 0
    %p106 = por %p104, %p105
    %p107 = scmp.ne.s32.totalorder %s96, %s99
    %p108 = scmp.eq.s32.totalorder %s21, 1
    %p109 = por %p107, %p108
    %p110 = scmp.ne.s32.totalorder %s99, %s100
    %p111 = scmp.eq.s32.totalorder %s21, 0
    %p112 = por %p110, %p111
    %p113 = scmp.ne.s32.totalorder %s99, %s100
    %p114 = scmp.eq.s32.totalorder %s22, 1
    %p115 = por %p113, %p114
    %p117 = scmp.ne.s32.totalorder %s100, %s116
    %p118 = scmp.eq.s32.totalorder %s22, 0
    %p119 = por %p117, %p118
    %s120 = ssub.s32 %s23, %s35
    %p121 = scmp.eq.s32.totalorder %s120, 0
    %s123 = sadd.s32 %s122, 1
    %s124 = scalar_select %p121, %s122, %s123
    %p127 = pneg %p121
    %p128 = scmp.eq.s32.totalorder %s16, 1
    %p129 = por %p127, %p128
    %p130 = scmp.ne.s32.totalorder %s122, %s125
    %p131 = scmp.eq.s32.totalorder %s16, 0
    %p132 = por %p130, %p131
    %p133 = scmp.ne.s32.totalorder %s122, %s125
    %p134 = scmp.eq.s32.totalorder %s21, 1
    %p135 = por %p133, %p134
    %p136 = scmp.ne.s32.totalorder %s125, %s126
    %p137 = scmp.eq.s32.totalorder %s21, 0
    %p138 = por %p136, %p137
    %p139 = scmp.ne.s32.totalorder %s125, %s126
    %p140 = scmp.eq.s32.totalorder %s22, 1
    %p141 = por %p139, %p140
    %p143 = scmp.ne.s32.totalorder %s126, %s142
    %p144 = scmp.eq.s32.totalorder %s22, 0
    %p145 = por %p143, %p144
    %s147 = sadd.s32 %s146, 1
    %p150 = scmp.eq.s32.totalorder %s16, 1
    %p151 = scmp.ne.s32.totalorder %s146, %s148
    %p152 = scmp.eq.s32.totalorder %s16, 0
    %p153 = por %p151, %p152
    %p154 = scmp.ne.s32.totalorder %s146, %s148
    %p155 = scmp.eq.s32.totalorder %s21, 1
    %p156 = por %p154, %p155
    %p157 = scmp.ne.s32.totalorder %s148, %s149
    %p158 = scmp.eq.s32.totalorder %s21, 0
    %p159 = por %p157, %p158
    %p160 = scmp.ne.s32.totalorder %s148, %s149
    %p161 = scmp.eq.s32.totalorder %s22, 1
    %p162 = por %p160, %p161
    %p164 = scmp.ne.s32.totalorder %s149, %s163
    %p165 = scmp.eq.s32.totalorder %s22, 0
    %p166 = por %p164, %p165
    %s168 = sadd.s32 %s167, 1
    %p171 = scmp.eq.s32.totalorder %s16, 1
    %p172 = scmp.ne.s32.totalorder %s167, %s169
    %p173 = scmp.eq.s32.totalorder %s16, 0
    %p174 = por %p172, %p173
    %p175 = scmp.ne.s32.totalorder %s167, %s169
    %p176 = scmp.eq.s32.totalorder %s21, 1
    %p177 = por %p175, %p176
    %p178 = scmp.ne.s32.totalorder %s169, %s170
    %p179 = scmp.eq.s32.totalorder %s21, 0
    %p180 = por %p178, %p179
    %p181 = scmp.ne.s32.totalorder %s169, %s170
    %p182 = scmp.eq.s32.totalorder %s22, 1
    %p183 = por %p181, %p182
    %p185 = scmp.ne.s32.totalorder %s170, %s184
    %p186 = scmp.eq.s32.totalorder %s22, 0
    %p187 = por %p185, %p186
    %s189 = sadd.s32 %s188, 1
    %p192 = scmp.eq.s32.totalorder %s16, 1
    %p193 = scmp.ne.s32.totalorder %s188, %s190
    %p194 = scmp.eq.s32.totalorder %s16, 0
    %p195 = por %p193, %p194
    %p196 = scmp.ne.s32.totalorder %s188, %s190
    %p197 = scmp.eq.s32.totalorder %s21, 1
    %p198 = por %p196, %p197
    %p199 = scmp.ne.s32.totalorder %s190, %s191
    %p200 = scmp.eq.s32.totalorder %s21, 0
    %p201 = por %p199, %p200
    %p202 = scmp.ne.s32.totalorder %s190, %s191
    %p203 = scmp.eq.s32.totalorder %s22, 1
    %p204 = por %p202, %p203
    %p206 = scmp.ne.s32.totalorder %s191, %s205
    %p207 = scmp.eq.s32.totalorder %s22, 0
    %p208 = por %p206, %p207
    %s210 = sadd.s32 %s209, 1
    %p213 = scmp.eq.s32.totalorder %s16, 1
    %p214 = scmp.ne.s32.totalorder %s209, %s211
    %p215 = scmp.eq.s32.totalorder %s16, 0
    %p216 = por %p214, %p215
    %p217 = scmp.ne.s32.totalorder %s209, %s211
    %p218 = scmp.eq.s32.totalorder %s21, 1
    %p219 = por %p217, %p218
    %p220 = scmp.ne.s32.totalorder %s211, %s212
    %p221 = scmp.eq.s32.totalorder %s21, 0
    %p222 = por %p220, %p221
    %p223 = scmp.ne.s32.totalorder %s211, %s212
    %p224 = scmp.eq.s32.totalorder %s22, 1
    %p225 = por %p223, %p224
    %p227 = scmp.ne.s32.totalorder %s212, %s226
    %p228 = scmp.eq.s32.totalorder %s22, 0
    %p229 = por %p227, %p228
    %s231 = sadd.s32 %s230, 1
    %p234 = scmp.eq.s32.totalorder %s16, 1
    %p235 = scmp.ne.s32.totalorder %s230, %s232
    %p236 = scmp.eq.s32.totalorder %s16, 0
    %p237 = por %p235, %p236
    %p238 = scmp.ne.s32.totalorder %s230, %s232
    %p239 = scmp.eq.s32.totalorder %s21, 1
    %p240 = por %p238, %p239
    %p241 = scmp.ne.s32.totalorder %s232, %s233
    %p242 = scmp.eq.s32.totalorder %s21, 0
    %p243 = por %p241, %p242
    %p244 = scmp.ne.s32.totalorder %s232, %s233
    %p245 = scmp.eq.s32.totalorder %s22, 1
    %p246 = por %p244, %p245
    %p248 = scmp.ne.s32.totalorder %s233, %s247
    %p249 = scmp.eq.s32.totalorder %s22, 0
    %p250 = por %p248, %p249
    %s252 = sadd.s32 %s251, 1
    %p255 = scmp.eq.s32.totalorder %s16, 1
    %p256 = scmp.ne.s32.totalorder %s251, %s253
    %p257 = scmp.eq.s32.totalorder %s16, 0
    %p258 = por %p256, %p257
    %p259 = scmp.ne.s32.totalorder %s251, %s253
    %p260 = scmp.eq.s32.totalorder %s21, 1
    %p261 = por %p259, %p260
    %p262 = scmp.ne.s32.totalorder %s253, %s254
    %p263 = scmp.eq.s32.totalorder %s21, 0
    %p264 = por %p262, %p263
    %p265 = scmp.ne.s32.totalorder %s253, %s254
    %p266 = scmp.eq.s32.totalorder %s22, 1
    %p267 = por %p265, %p266
    %p269 = scmp.ne.s32.totalorder %s254, %s268
    %p270 = scmp.eq.s32.totalorder %s22, 0
    %p271 = por %p269, %p270
    %s272 = ssub.s32 %s23, %s35
    %s273 = ssub.s32 %s24, %s31
    %s274 = sor.u32 %s272, %s273
    %p275 = scmp.eq.s32.totalorder %s274, 0
    %s277 = sadd.s32 %s276, 1
    %s278 = scalar_select %p275, %s276, %s277
    %p281 = pneg %p275
    %p282 = scmp.eq.s32.totalorder %s16, 1
    %p283 = por %p281, %p282
    %p284 = scmp.ne.s32.totalorder %s276, %s279
    %p285 = scmp.eq.s32.totalorder %s16, 0
    %p286 = por %p284, %p285
    %p287 = scmp.ne.s32.totalorder %s276, %s279
    %p288 = scmp.eq.s32.totalorder %s21, 1
    %p289 = por %p287, %p288
    %p290 = scmp.ne.s32.totalorder %s279, %s280
    %p291 = scmp.eq.s32.totalorder %s21, 0
    %p292 = por %p290, %p291
    %p293 = scmp.ne.s32.totalorder %s279, %s280
    %p294 = scmp.eq.s32.totalorder %s22, 1
    %p295 = por %p293, %p294
    %p297 = scmp.ne.s32.totalorder %s280, %s296
    %p298 = scmp.eq.s32.totalorder %s22, 0
    %p299 = por %p297, %p298
    %p300 = scmp.le.s32.totalorder 1, %s16
    %p301 = scmp.lt.s32.totalorder %s16, 3
    %p302 = pnand %p300, %p301
    %p303 = pneg %p302
    // Predicated region
    $region9: #{recurrent_residual_block_tl.14} parent=5 // pred_check
      _
    $region10: #{recurrent_residual_block_tl.14} parent=5 // pred_check_branch
      %305 = sbr.rel (%p302) target = $region12
    $region11: #{recurrent_residual_block_tl.14} parent=5 // pred_region
      %s306 = ssub.s32 %s16, 1
      // Predicated region
      $region13: #{recurrent_residual_block_tl.14} parent=11 // pred_check
        %p307 = pneg %p159
      $region14: #{recurrent_residual_block_tl.14} parent=11 // pred_check_branch
        %309 = sbr.rel (%p307) target = $region16
      $region15: #{recurrent_residual_block_tl.14} parent=11 // pred_region
        _
      $region16: #{recurrent_residual_block_tl.14} parent=11 // pred_fallthru
        _
      // Predicated region
      $region17: #{recurrent_residual_block_tl.14} parent=11 // pred_check
        %p310 = pneg %p180
      $region18: #{recurrent_residual_block_tl.14} parent=11 // pred_check_branch
        %312 = sbr.rel (%p310) target = $region20
      $region19: #{recurrent_residual_block_tl.14} parent=11 // pred_region
        _
      $region20: #{recurrent_residual_block_tl.14} parent=11 // pred_fallthru
        _
      // Predicated region
      $region21: #{recurrent_residual_block_tl.14} parent=11 // pred_check
        %p313 = pneg %p201
      $region22: #{recurrent_residual_block_tl.14} parent=11 // pred_check_branch
        %315 = sbr.rel (%p313) target = $region24
      $region23: #{recurrent_residual_block_tl.14} parent=11 // pred_region
        _
      $region24: #{recurrent_residual_block_tl.14} parent=11 // pred_fallthru
        _
      // Predicated region
      $region25: #{recurrent_residual_block_tl.14} parent=11 // pred_check
        %p316 = pneg %p222
      $region26: #{recurrent_residual_block_tl.14} parent=11 // pred_check_branch
        %318 = sbr.rel (%p316) target = $region28
      $region27: #{recurrent_residual_block_tl.14} parent=11 // pred_region
        _
      $region28: #{recurrent_residual_block_tl.14} parent=11 // pred_fallthru
        _
      // Predicated region
      $region29: #{recurrent_residual_block_tl.14} parent=11 // pred_check
        %p319 = pneg %p243
      $region30: #{recurrent_residual_block_tl.14} parent=11 // pred_check_branch
        %321 = sbr.rel (%p319) target = $region32
      $region31: #{recurrent_residual_block_tl.14} parent=11 // pred_region
        _
      $region32: #{recurrent_residual_block_tl.14} parent=11 // pred_fallthru
        _
      // Predicated region
      $region33: #{recurrent_residual_block_tl.14} parent=11 // pred_check
        %p322 = pneg %p264
      $region34: #{recurrent_residual_block_tl.14} parent=11 // pred_check_branch
        %324 = sbr.rel (%p322) target = $region36
      $region35: #{recurrent_residual_block_tl.14} parent=11 // pred_region
        _
      $region36: #{recurrent_residual_block_tl.14} parent=11 // pred_fallthru
        _
    $region12: #{recurrent_residual_block_tl.14} parent=5 // pred_fallthru
      _
    %p325 = scmp.lt.s32.totalorder %s16, 2
    // Predicated region
    $region37: #{recurrent_residual_block_tl.14} parent=5 // pred_check
      %p326 = pneg %p325
    $region38: #{recurrent_residual_block_tl.14} parent=5 // pred_check_branch
      %328 = sbr.rel (%p326) target = $region40
    $region39: #{recurrent_residual_block_tl.14} parent=5 // pred_region
      // Predicated region
      $region41: #{recurrent_residual_block_tl.14} parent=39 // pred_check
        %p329 = pneg %p50
      $region42: #{recurrent_residual_block_tl.14} parent=39 // pred_check_branch
        %331 = sbr.rel (%p329) target = $region44
      $region43: #{recurrent_residual_block_tl.14} parent=39 // pred_region
        %s332 = smul.u32 32, %s24
        %p333 = scmp.lt.s32.totalorder %s23, 1
        %s334 = scalar_select %p333, %s23, 1
        %p335 = scmp.lt.s32.totalorder %s332, 31
        %s336 = scalar_select %p335, %s332, 31
        %s337 = smul.addr %s334, 32
        %s338 = sadd.s32 %s336, %s337
        %s339 = smul.addr %s338, 8
        %s340 = scalar_lea.vmem %s0, %s339
        %s341 = smul.u32 32, %s24
      $region44: #{recurrent_residual_block_tl.14} parent=39 // pred_fallthru
        _
      // Predicated region
      $region45: #{recurrent_residual_block_tl.14} parent=39 // pred_check
        %p342 = pneg %p78
      $region46: #{recurrent_residual_block_tl.14} parent=39 // pred_check_branch
        %344 = sbr.rel (%p342) target = $region48
      $region47: #{recurrent_residual_block_tl.14} parent=39 // pred_region
        %s345 = smul.u32 32, %s24
        %p346 = scmp.lt.s32.totalorder %s23, 1
        %s347 = scalar_select %p346, %s23, 1
        %p348 = scmp.lt.s32.totalorder %s345, 31
        %s349 = scalar_select %p348, %s345, 31
        %s350 = smul.addr %s347, 32
        %s351 = sadd.s32 %s349, %s350
        %s352 = smul.addr %s351, 8
        %s353 = scalar_lea.vmem %s1, %s352
        %s354 = smul.u32 32, %s24
      $region48: #{recurrent_residual_block_tl.14} parent=39 // pred_fallthru
        _
      // Predicated region
      $region49: #{recurrent_residual_block_tl.14} parent=39 // pred_check
        %p355 = pneg %p106
      $region50: #{recurrent_residual_block_tl.14} parent=39 // pred_check_branch
        %357 = sbr.rel (%p355) target = $region52
      $region51: #{recurrent_residual_block_tl.14} parent=39 // pred_region
        %s358 = smul.u32 32, %s24
        %p359 = scmp.lt.s32.totalorder %s23, 1
        %s360 = scalar_select %p359, %s23, 1
        %p361 = scmp.lt.s32.totalorder %s358, 31
        %s362 = scalar_select %p361, %s358, 31
        %s363 = smul.addr %s360, 32
        %s364 = sadd.s32 %s362, %s363
        %s365 = smul.addr %s364, 8
        %s366 = scalar_lea.vmem %s2, %s365
        %s367 = smul.u32 32, %s24
      $region52: #{recurrent_residual_block_tl.14} parent=39 // pred_fallthru
        _
      // Predicated region
      $region53: #{recurrent_residual_block_tl.14} parent=39 // pred_check
        %p368 = pneg %p132
      $region54: #{recurrent_residual_block_tl.14} parent=39 // pred_check_branch
        %370 = sbr.rel (%p368) target = $region56
      $region55: #{recurrent_residual_block_tl.14} parent=39 // pred_region
        %p371 = scmp.lt.s32.totalorder %s23, 1
        %s372 = scalar_select %p371, %s23, 1
        %s373 = scalar_lea.vmem %s3, %s372
      $region56: #{recurrent_residual_block_tl.14} parent=39 // pred_fallthru
        _
    $region40: #{recurrent_residual_block_tl.14} parent=5 // pred_fallthru
      _
    %p374 = scmp.le.s32.totalorder 1, %s16
    %p375 = scmp.lt.s32.totalorder %s16, 3
    %p376 = pnand %p374, %p375
    %p377 = pneg %p376
    // Predicated region
    $region57: #{recurrent_residual_block_tl.14} parent=5 // pred_check
      _
    $region58: #{recurrent_residual_block_tl.14} parent=5 // pred_check_branch
      %379 = sbr.rel (%p376) target = $region60
    $region59: #{recurrent_residual_block_tl.14} parent=5 // pred_region
      %s380 = ssub.s32 %s16, 1
      %s381 = smul.u32 32, %s26
      %p382 = scmp.lt.s32.totalorder %s25, 1
      %s383 = scalar_select %p382, %s25, 1
      %p384 = scmp.lt.s32.totalorder %s381, 31
      %s385 = scalar_select %p384, %s381, 31
      %s386 = smul.addr %s383, 32
      %s387 = sadd.s32 %s385, %s386
      %s388 = smul.addr %s387, 8
      %s389 = scalar_lea.vmem %s0, %s388
      %p390 = pneg %p56
      %p391 = pneg %p53
      %s392 = smul.u32 32, %s26
      %p393 = scmp.lt.s32.totalorder %s25, 1
      %s394 = scalar_select %p393, %s25, 1
      %p395 = scmp.lt.s32.totalorder %s392, 31
      %s396 = scalar_select %p395, %s392, 31
      %s397 = smul.addr %s394, 32
      %s398 = sadd.s32 %s396, %s397
      %s399 = smul.addr %s398, 8
      %s400 = scalar_lea.vmem %s1, %s399
      %p401 = pneg %p84
      %p402 = pneg %p81
      %s403 = smul.u32 32, %s26
      %p404 = scmp.lt.s32.totalorder %s25, 1
      %s405 = scalar_select %p404, %s25, 1
      %p406 = scmp.lt.s32.totalorder %s403, 31
      %s407 = scalar_select %p406, %s403, 31
      %s408 = smul.addr %s405, 32
      %s409 = sadd.s32 %s407, %s408
      %s410 = smul.addr %s409, 8
      %s411 = scalar_lea.vmem %s2, %s410
      %p412 = pneg %p112
      %p413 = pneg %p109
      %p414 = scmp.lt.s32.totalorder %s25, 1
      %s415 = scalar_select %p414, %s25, 1
      %s416 = scalar_lea.vmem %s3, %s415
      %p417 = pneg %p138
      %p418 = pneg %p135
      %p419 = pneg %p159
      %p420 = pneg %p156
      %p421 = pneg %p180
      %p422 = pneg %p177
      %p423 = pneg %p201
      %p424 = pneg %p198
      %p425 = pneg %p222
      %p426 = pneg %p219
      %p427 = pneg %p243
      %p428 = pneg %p240
      %p429 = pneg %p264
      %p430 = pneg %p261
      %p431 = pneg %p292
      %p432 = pneg %p289
      %s433 = smul.u32 32, %s26
      %p434 = scmp.lt.s32.totalorder %s25, 1
      %s435 = scalar_select %p434, %s25, 1
      %p436 = scmp.lt.s32.totalorder %s433, 31
      %s437 = scalar_select %p436, %s433, 31
      %s438 = smul.addr %s435, 32
      %s439 = sadd.s32 %s437, %s438
      %s440 = smul.addr %s439, 8
      %s441 = scalar_lea.vmem %s10, %s440
      %s442 = smul.u32 32, %s26
      %p443 = scmp.lt.s32.totalorder %s25, 1
      %s444 = scalar_select %p443, %s25, 1
      %p445 = scmp.lt.s32.totalorder %s442, 31
      %s446 = scalar_select %p445, %s442, 31
      %s447 = smul.addr %s444, 32
      %s448 = sadd.s32 %s446, %s447
      %s449 = smul.addr %s448, 8
      %s450 = scalar_lea.vmem %s0, %s449
      %s451 = smul.u32 32, %s26
      %s452 = smul.u32 32, %s26
      %p453 = scmp.lt.s32.totalorder %s25, 1
      %s454 = scalar_select %p453, %s25, 1
      %p455 = scmp.lt.s32.totalorder %s452, 31
      %s456 = scalar_select %p455, %s452, 31
      %s457 = smul.addr %s454, 32
      %s458 = sadd.s32 %s456, %s457
      %s459 = smul.addr %s458, 8
      %s460 = scalar_lea.vmem %s1, %s459
      %s461 = smul.u32 32, %s26
      %s462 = smul.u32 32, %s26
      %p463 = scmp.lt.s32.totalorder %s25, 1
      %s464 = scalar_select %p463, %s25, 1
      %p465 = scmp.lt.s32.totalorder %s462, 31
      %s466 = scalar_select %p465, %s462, 31
      %s467 = smul.addr %s464, 32
      %s468 = sadd.s32 %s466, %s467
      %s469 = smul.addr %s468, 8
      %s470 = scalar_lea.vmem %s2, %s469
      %s471 = smul.u32 32, %s26
      %p472 = scmp.lt.s32.totalorder %s25, 1
      %s473 = scalar_select %p472, %s25, 1
      %s474 = scalar_lea.vmem %s3, %s473
      %s475 = smul.u32 32, %s26
      %p476 = scmp.lt.s32.totalorder %s25, 1
      %s477 = scalar_select %p476, %s25, 1
      %p478 = scmp.lt.s32.totalorder %s475, 31
      %s479 = scalar_select %p478, %s475, 31
      %s480 = smul.addr %s477, 32
      %s481 = sadd.s32 %s479, %s480
      %s482 = smul.addr %s481, 8
      %s483 = scalar_lea.vmem %s10, %s482
      %s484 = smul.u32 32, %s26
      %v486 = vld [vmem:[%s450] sm:$0xff]
      %v487 = vld [vmem:[%s450 + $0x8] sm:$0xff]
      %v488 = vld [vmem:[%s450 + $0x10] sm:$0xff]
      %v489 = vld [vmem:[%s450 + $0x18] sm:$0xff]
      %v490 = vld [vmem:[%s450 + $0x20] sm:$0xff]
      %v491 = vld [vmem:[%s450 + $0x28] sm:$0xff]
      %v492 = vld [vmem:[%s450 + $0x30] sm:$0xff]
      %v493 = vld [vmem:[%s450 + $0x38] sm:$0xff]
      %v494 = vld [vmem:[%s450 + $0x40] sm:$0xff]
      %v495 = vld [vmem:[%s450 + $0x48] sm:$0xff]
      %v496 = vld [vmem:[%s450 + $0x50] sm:$0xff]
      %v497 = vld [vmem:[%s450 + $0x58] sm:$0xff]
      %v498 = vld [vmem:[%s450 + $0x60] sm:$0xff]
      %v499 = vld [vmem:[%s450 + $0x68] sm:$0xff]
      %v500 = vld [vmem:[%s450 + $0x70] sm:$0xff]
      %v501 = vld [vmem:[%s450 + $0x78] sm:$0xff]
      %v502 = vld [vmem:[%s450 + $0x80] sm:$0xff]
      %v503 = vld [vmem:[%s450 + $0x88] sm:$0xff]
      %v504 = vld [vmem:[%s450 + $0x90] sm:$0xff]
      %v505 = vld [vmem:[%s450 + $0x98] sm:$0xff]
      %v506 = vld [vmem:[%s450 + $0xa0] sm:$0xff]
      %v507 = vld [vmem:[%s450 + $0xa8] sm:$0xff]
      %v508 = vld [vmem:[%s450 + $0xb0] sm:$0xff]
      %v509 = vld [vmem:[%s450 + $0xb8] sm:$0xff]
      %v510 = vld [vmem:[%s450 + $0xc0] sm:$0xff]
      %v511 = vld [vmem:[%s450 + $0xc8] sm:$0xff]
      %v512 = vld [vmem:[%s450 + $0xd0] sm:$0xff]
      %v513 = vld [vmem:[%s450 + $0xd8] sm:$0xff]
      %v514 = vld [vmem:[%s450 + $0xe0] sm:$0xff]
      %v515 = vld [vmem:[%s450 + $0xe8] sm:$0xff]
      %v516 = vld [vmem:[%s450 + $0xf0] sm:$0xff]
      %v517 = vld [vmem:[%s450 + $0xf8] sm:$0xff]
      %v518 = vld [vmem:[%s460] sm:$0xff]
      %v519 = vld [vmem:[%s460 + $0x8] sm:$0xff]
      %v520 = vld [vmem:[%s460 + $0x10] sm:$0xff]
      %v521 = vld [vmem:[%s460 + $0x18] sm:$0xff]
      %v522 = vld [vmem:[%s460 + $0x20] sm:$0xff]
      %v523 = vld [vmem:[%s460 + $0x28] sm:$0xff]
      %v524 = vld [vmem:[%s460 + $0x30] sm:$0xff]
      %v525 = vld [vmem:[%s460 + $0x38] sm:$0xff]
      %v526 = vld [vmem:[%s460 + $0x40] sm:$0xff]
      %v527 = vld [vmem:[%s460 + $0x48] sm:$0xff]
      %v528 = vld [vmem:[%s460 + $0x50] sm:$0xff]
      %v529 = vld [vmem:[%s460 + $0x58] sm:$0xff]
      %v530 = vld [vmem:[%s460 + $0x60] sm:$0xff]
      %v531 = vld [vmem:[%s460 + $0x68] sm:$0xff]
      %v532 = vld [vmem:[%s460 + $0x70] sm:$0xff]
      %v533 = vld [vmem:[%s460 + $0x78] sm:$0xff]
      %v534 = vld [vmem:[%s460 + $0x80] sm:$0xff]
      %v535 = vld [vmem:[%s460 + $0x88] sm:$0xff]
      %v536 = vld [vmem:[%s460 + $0x90] sm:$0xff]
      %v537 = vld [vmem:[%s460 + $0x98] sm:$0xff]
      %v538 = vld [vmem:[%s460 + $0xa0] sm:$0xff]
      %v539 = vld [vmem:[%s460 + $0xa8] sm:$0xff]
      %v540 = vld [vmem:[%s460 + $0xb0] sm:$0xff]
      %v541 = vld [vmem:[%s460 + $0xb8] sm:$0xff]
      %v542 = vld [vmem:[%s460 + $0xc0] sm:$0xff]
      %v543 = vld [vmem:[%s460 + $0xc8] sm:$0xff]
      %v544 = vld [vmem:[%s460 + $0xd0] sm:$0xff]
      %v545 = vld [vmem:[%s460 + $0xd8] sm:$0xff]
      %v546 = vld [vmem:[%s460 + $0xe0] sm:$0xff]
      %v547 = vld [vmem:[%s460 + $0xe8] sm:$0xff]
      %v548 = vld [vmem:[%s460 + $0xf0] sm:$0xff]
      %v549 = vld [vmem:[%s460 + $0xf8] sm:$0xff]
      %v550 = vld [vmem:[%s4] sm:$0x3]
      %v551 = vld [vmem:[%s5] sm:$0x1]
      %v553 = vlaneseq
      %v554 = vshrl.u32 %v553, 7
      %v555 = vsub.s32 0, %v554
      %v556 = vrot.slane %v551, %v555
      %vm558 = vcmask 15360
      %v560 = vsel %vm558, %v518, 0
      %v563 = vsel %vm558, %v519, 0
      %v566 = vsel %vm558, %v520, 0
      %v569 = vsel %vm558, %v521, 0
      %v572 = vsel %vm558, %v522, 0
      %v575 = vsel %vm558, %v523, 0
      %v578 = vsel %vm558, %v524, 0
      %v581 = vsel %vm558, %v525, 0
      %v584 = vsel %vm558, %v526, 0
      %v587 = vsel %vm558, %v527, 0
      %v590 = vsel %vm558, %v528, 0
      %v593 = vsel %vm558, %v529, 0
      %v596 = vsel %vm558, %v530, 0
      %v599 = vsel %vm558, %v531, 0
      %v602 = vsel %vm558, %v532, 0
      %v605 = vsel %vm558, %v533, 0
      %v608 = vsel %vm558, %v534, 0
      %v611 = vsel %vm558, %v535, 0
      %v614 = vsel %vm558, %v536, 0
      %v617 = vsel %vm558, %v537, 0
      %v620 = vsel %vm558, %v538, 0
      %v623 = vsel %vm558, %v539, 0
      %v626 = vsel %vm558, %v540, 0
      %v629 = vsel %vm558, %v541, 0
      %v632 = vsel %vm558, %v542, 0
      %v635 = vsel %vm558, %v543, 0
      %v638 = vsel %vm558, %v544, 0
      %v641 = vsel %vm558, %v545, 0
      %v644 = vsel %vm558, %v546, 0
      %v647 = vsel %vm558, %v547, 0
      %v650 = vsel %vm558, %v548, 0
      %v653 = vsel %vm558, %v549, 0
      %vm655 = vcmask 1041408
      %v657 = vsel %vm655, %v550, 0
      %659 = vmatprep.subr.mxu0 0.0
      %660 = vmatpush1.msra.mxu0 0.0
      %661 = vmatprep.subr.mxu0 0.0
      %662 = vmatpush1.msra.mxu0 0.0
      %663 = vmatprep.subr.mxu0 0.0
      %664 = vmatpush1.msra.mxu0 0.0
      %665 = vmatprep.subr.mxu0 0.0
      %666 = vmatpush1.msra.mxu0 0.0
      %667 = vmatprep.subr.mxu0 0.0
      %668 = vmatpush1.msra.mxu0 0.0
      %669 = vmatprep.subr.mxu0 0.0
      %670 = vmatpush1.msra.mxu0 0.0
      %671 = vmatprep.subr.mxu0 0.0
      %672 = vmatpush1.msra.mxu0 0.0
      %673 = vmatprep.subr.mxu0 0.0
      %674 = vmatpush1.msra.mxu0 0.0
      %675 = vmatprep.subr.mxu0 0.0
      %676 = vmatpush1.msra.mxu0 0.0
      %677 = vmatprep.subr.mxu0 0.0
      %678 = vmatpush1.msra.mxu0 0.0
      %679 = vmatprep.subr.mxu0 0.0
      %680 = vmatpush1.msra.mxu0 0.0
      %681 = vmatprep.subr.mxu0 0.0
      %682 = vmatpush1.msra.mxu0 0.0
      %683 = vmatprep.subr.mxu0 0.0
      %684 = vmatpush1.msra.mxu0 0.0
      %685 = vmatprep.subr.mxu0 0.0
      %686 = vmatpush1.msra.mxu0 0.0
      %687 = vmatprep.subr.mxu0 0.0
      %688 = vmatpush1.msra.mxu0 0.0
      %689 = vmatprep.subr.mxu0 0.0
      %690 = vmatpush1.msra.mxu0 %v657
      %691 = vmatprep.subr.mxu0 0.0
      %692 = vmatpush2.msra.mxu0 0.0
      %693 = vmatprep.subr.mxu0 0.0
      %694 = vmatpush2.msra.mxu0 0.0
      %695 = vmatprep.subr.mxu0 0.0
      %696 = vmatpush2.msra.mxu0 0.0
      %697 = vmatprep.subr.mxu0 0.0
      %698 = vmatpush2.msra.mxu0 0.0
      %699 = vmatprep.subr.mxu0 0.0
      %700 = vmatpush2.msra.mxu0 0.0
      %701 = vmatprep.subr.mxu0 0.0
      %702 = vmatpush2.msra.mxu0 0.0
      %703 = vmatprep.subr.mxu0 0.0
      %704 = vmatpush2.msra.mxu0 0.0
      %705 = vmatprep.subr.mxu0 0.0
      %706 = vmatpush2.msra.mxu0 0.0
      %707 = vmatprep.subr.mxu0 0.0
      %708 = vmatpush2.msra.mxu0 0.0
      %709 = vmatprep.subr.mxu0 0.0
      %710 = vmatpush2.msra.mxu0 0.0
      %711 = vmatprep.subr.mxu0 0.0
      %712 = vmatpush2.msra.mxu0 0.0
      %713 = vmatprep.subr.mxu0 0.0
      %714 = vmatpush2.msra.mxu0 0.0
      %715 = vmatprep.subr.mxu0 0.0
      %716 = vmatpush2.msra.mxu0 0.0
      %717 = vmatprep.subr.mxu0 0.0
      %718 = vmatpush2.msra.mxu0 0.0
      %719 = vmatprep.subr.mxu0 0.0
      %720 = vmatpush2.msra.mxu0 0.0
      %721 = vmatprep.subr.mxu0 0.0
      %722 = vmatpush2.msra.mxu0 0.0
      %723 = vmatprep.mubr.f32.mxu0 0.0
      %724 = vmatmul.mubr.f32.gmra.mxu0 %v560
      %v725 = vpop.f32.mrf.mxu0
      %v726 = vadd.f32 %v556, %v725
      %v727 = vpop.f32.mrf.mxu0
      %728 = vmatprep.mubr.f32.mxu0 0.0
      %729 = vmatmul.mubr.f32.gmra.mxu0 %v563
      %v730 = vpop.f32.mrf.mxu0
      %v731 = vadd.f32 %v556, %v730
      %v732 = vpop.f32.mrf.mxu0
      %733 = vmatprep.mubr.f32.mxu0 0.0
      %734 = vmatmul.mubr.f32.gmra.mxu0 %v566
      %v735 = vpop.f32.mrf.mxu0
      %v736 = vadd.f32 %v556, %v735
      %v737 = vpop.f32.mrf.mxu0
      %738 = vmatprep.mubr.f32.mxu0 0.0
      %739 = vmatmul.mubr.f32.gmra.mxu0 %v569
      %v740 = vpop.f32.mrf.mxu0
      %v741 = vadd.f32 %v556, %v740
      %v742 = vpop.f32.mrf.mxu0
      %743 = vmatprep.mubr.f32.mxu0 0.0
      %744 = vmatmul.mubr.f32.gmra.mxu0 %v572
      %v745 = vpop.f32.mrf.mxu0
      %v746 = vadd.f32 %v556, %v745
      %v747 = vpop.f32.mrf.mxu0
      %748 = vmatprep.mubr.f32.mxu0 0.0
      %749 = vmatmul.mubr.f32.gmra.mxu0 %v575
      %v750 = vpop.f32.mrf.mxu0
      %v751 = vadd.f32 %v556, %v750
      %v752 = vpop.f32.mrf.mxu0
      %753 = vmatprep.mubr.f32.mxu0 0.0
      %754 = vmatmul.mubr.f32.gmra.mxu0 %v578
      %v755 = vpop.f32.mrf.mxu0
      %v756 = vadd.f32 %v556, %v755
      %v757 = vpop.f32.mrf.mxu0
      %758 = vmatprep.mubr.f32.mxu0 0.0
      %759 = vmatmul.mubr.f32.gmra.mxu0 %v581
      %v760 = vpop.f32.mrf.mxu0
      %v761 = vadd.f32 %v556, %v760
      %v762 = vpop.f32.mrf.mxu0
      %763 = vmatprep.mubr.f32.mxu0 0.0
      %764 = vmatmul.mubr.f32.gmra.mxu0 %v584
      %v765 = vpop.f32.mrf.mxu0
      %v766 = vadd.f32 %v556, %v765
      %v767 = vpop.f32.mrf.mxu0
      %768 = vmatprep.mubr.f32.mxu0 0.0
      %769 = vmatmul.mubr.f32.gmra.mxu0 %v587
      %v770 = vpop.f32.mrf.mxu0
      %v771 = vadd.f32 %v556, %v770
      %v772 = vpop.f32.mrf.mxu0
      %773 = vmatprep.mubr.f32.mxu0 0.0
      %774 = vmatmul.mubr.f32.gmra.mxu0 %v590
      %v775 = vpop.f32.mrf.mxu0
      %v776 = vadd.f32 %v556, %v775
      %v777 = vpop.f32.mrf.mxu0
      %778 = vmatprep.mubr.f32.mxu0 0.0
      %779 = vmatmul.mubr.f32.gmra.mxu0 %v593
      %v780 = vpop.f32.mrf.mxu0
      %v781 = vadd.f32 %v556, %v780
      %v782 = vpop.f32.mrf.mxu0
      %783 = vmatprep.mubr.f32.mxu0 0.0
      %784 = vmatmul.mubr.f32.gmra.mxu0 %v596
      %v785 = vpop.f32.mrf.mxu0
      %v786 = vadd.f32 %v556, %v785
      %v787 = vpop.f32.mrf.mxu0
      %788 = vmatprep.mubr.f32.mxu0 0.0
      %789 = vmatmul.mubr.f32.gmra.mxu0 %v599
      %v790 = vpop.f32.mrf.mxu0
      %v791 = vadd.f32 %v556, %v790
      %v792 = vpop.f32.mrf.mxu0
      %793 = vmatprep.mubr.f32.mxu0 0.0
      %794 = vmatmul.mubr.f32.gmra.mxu0 %v602
      %v795 = vpop.f32.mrf.mxu0
      %v796 = vadd.f32 %v556, %v795
      %v797 = vpop.f32.mrf.mxu0
      %798 = vmatprep.mubr.f32.mxu0 0.0
      %799 = vmatmul.mubr.f32.gmra.mxu0 %v605
      %v800 = vpop.f32.mrf.mxu0
      %v801 = vadd.f32 %v556, %v800
      %v802 = vpop.f32.mrf.mxu0
      %803 = vmatprep.mubr.f32.mxu0 0.0
      %804 = vmatmul.mubr.f32.gmra.mxu0 %v608
      %v805 = vpop.f32.mrf.mxu0
      %v806 = vadd.f32 %v556, %v805
      %v807 = vpop.f32.mrf.mxu0
      %808 = vmatprep.mubr.f32.mxu0 0.0
      %809 = vmatmul.mubr.f32.gmra.mxu0 %v611
      %v810 = vpop.f32.mrf.mxu0
      %v811 = vadd.f32 %v556, %v810
      %v812 = vpop.f32.mrf.mxu0
      %813 = vmatprep.mubr.f32.mxu0 0.0
      %814 = vmatmul.mubr.f32.gmra.mxu0 %v614
      %v815 = vpop.f32.mrf.mxu0
      %v816 = vadd.f32 %v556, %v815
      %v817 = vpop.f32.mrf.mxu0
      %818 = vmatprep.mubr.f32.mxu0 0.0
      %819 = vmatmul.mubr.f32.gmra.mxu0 %v617
      %v820 = vpop.f32.mrf.mxu0
      %v821 = vadd.f32 %v556, %v820
      %v822 = vpop.f32.mrf.mxu0
      %823 = vmatprep.mubr.f32.mxu0 0.0
      %824 = vmatmul.mubr.f32.gmra.mxu0 %v620
      %v825 = vpop.f32.mrf.mxu0
      %v826 = vadd.f32 %v556, %v825
      %v827 = vpop.f32.mrf.mxu0
      %828 = vmatprep.mubr.f32.mxu0 0.0
      %829 = vmatmul.mubr.f32.gmra.mxu0 %v623
      %v830 = vpop.f32.mrf.mxu0
      %v831 = vadd.f32 %v556, %v830
      %v832 = vpop.f32.mrf.mxu0
      %833 = vmatprep.mubr.f32.mxu0 0.0
      %834 = vmatmul.mubr.f32.gmra.mxu0 %v626
      %v835 = vpop.f32.mrf.mxu0
      %v836 = vadd.f32 %v556, %v835
      %v837 = vpop.f32.mrf.mxu0
      %838 = vmatprep.mubr.f32.mxu0 0.0
      %839 = vmatmul.mubr.f32.gmra.mxu0 %v629
      %v840 = vpop.f32.mrf.mxu0
      %v841 = vadd.f32 %v556, %v840
      %v842 = vpop.f32.mrf.mxu0
      %843 = vmatprep.mubr.f32.mxu0 0.0
      %844 = vmatmul.mubr.f32.gmra.mxu0 %v632
      %v845 = vpop.f32.mrf.mxu0
      %v846 = vadd.f32 %v556, %v845
      %v847 = vpop.f32.mrf.mxu0
      %848 = vmatprep.mubr.f32.mxu0 0.0
      %849 = vmatmul.mubr.f32.gmra.mxu0 %v635
      %v850 = vpop.f32.mrf.mxu0
      %v851 = vadd.f32 %v556, %v850
      %v852 = vpop.f32.mrf.mxu0
      %853 = vmatprep.mubr.f32.mxu0 0.0
      %854 = vmatmul.mubr.f32.gmra.mxu0 %v638
      %v855 = vpop.f32.mrf.mxu0
      %v856 = vadd.f32 %v556, %v855
      %v857 = vpop.f32.mrf.mxu0
      %858 = vmatprep.mubr.f32.mxu0 0.0
      %859 = vmatmul.mubr.f32.gmra.mxu0 %v641
      %v860 = vpop.f32.mrf.mxu0
      %v861 = vadd.f32 %v556, %v860
      %v862 = vpop.f32.mrf.mxu0
      %863 = vmatprep.mubr.f32.mxu0 0.0
      %864 = vmatmul.mubr.f32.gmra.mxu0 %v644
      %v865 = vpop.f32.mrf.mxu0
      %v866 = vadd.f32 %v556, %v865
      %v867 = vpop.f32.mrf.mxu0
      %868 = vmatprep.mubr.f32.mxu0 0.0
      %869 = vmatmul.mubr.f32.gmra.mxu0 %v647
      %v870 = vpop.f32.mrf.mxu0
      %v871 = vadd.f32 %v556, %v870
      %v872 = vpop.f32.mrf.mxu0
      %873 = vmatprep.mubr.f32.mxu0 0.0
      %874 = vmatmul.mubr.f32.gmra.mxu0 %v650
      %v875 = vpop.f32.mrf.mxu0
      %v876 = vadd.f32 %v556, %v875
      %v877 = vpop.f32.mrf.mxu0
      %878 = vmatprep.mubr.f32.mxu0 0.0
      %879 = vmatmul.mubr.f32.gmra.mxu0 %v653
      %v880 = vpop.f32.mrf.mxu0
      %v881 = vadd.f32 %v556, %v880
      %v882 = vpop.f32.mrf.mxu0
      %883 = vdwg.mxu0
      %v884 = vld [vmem:[%s470] sm:$0xff]
      %v885 = vld [vmem:[%s470 + $0x8] sm:$0xff]
      %v886 = vld [vmem:[%s470 + $0x10] sm:$0xff]
      %v887 = vld [vmem:[%s470 + $0x18] sm:$0xff]
      %v888 = vld [vmem:[%s470 + $0x20] sm:$0xff]
      %v889 = vld [vmem:[%s470 + $0x28] sm:$0xff]
      %v890 = vld [vmem:[%s470 + $0x30] sm:$0xff]
      %v891 = vld [vmem:[%s470 + $0x38] sm:$0xff]
      %v892 = vld [vmem:[%s470 + $0x40] sm:$0xff]
      %v893 = vld [vmem:[%s470 + $0x48] sm:$0xff]
      %v894 = vld [vmem:[%s470 + $0x50] sm:$0xff]
      %v895 = vld [vmem:[%s470 + $0x58] sm:$0xff]
      %v896 = vld [vmem:[%s470 + $0x60] sm:$0xff]
      %v897 = vld [vmem:[%s470 + $0x68] sm:$0xff]
      %v898 = vld [vmem:[%s470 + $0x70] sm:$0xff]
      %v899 = vld [vmem:[%s470 + $0x78] sm:$0xff]
      %v900 = vld [vmem:[%s470 + $0x80] sm:$0xff]
      %v901 = vld [vmem:[%s470 + $0x88] sm:$0xff]
      %v902 = vld [vmem:[%s470 + $0x90] sm:$0xff]
      %v903 = vld [vmem:[%s470 + $0x98] sm:$0xff]
      %v904 = vld [vmem:[%s470 + $0xa0] sm:$0xff]
      %v905 = vld [vmem:[%s470 + $0xa8] sm:$0xff]
      %v906 = vld [vmem:[%s470 + $0xb0] sm:$0xff]
      %v907 = vld [vmem:[%s470 + $0xb8] sm:$0xff]
      %v908 = vld [vmem:[%s470 + $0xc0] sm:$0xff]
      %v909 = vld [vmem:[%s470 + $0xc8] sm:$0xff]
      %v910 = vld [vmem:[%s470 + $0xd0] sm:$0xff]
      %v911 = vld [vmem:[%s470 + $0xd8] sm:$0xff]
      %v912 = vld [vmem:[%s470 + $0xe0] sm:$0xff]
      %v913 = vld [vmem:[%s470 + $0xe8] sm:$0xff]
      %v914 = vld [vmem:[%s470 + $0xf0] sm:$0xff]
      %v915 = vld [vmem:[%s470 + $0xf8] sm:$0xff]
      %v916 = vadd.f32 %v884, %v726
      %v917 = vadd.f32 %v885, %v731
      %v918 = vadd.f32 %v886, %v736
      %v919 = vadd.f32 %v887, %v741
      %v920 = vadd.f32 %v888, %v746
      %v921 = vadd.f32 %v889, %v751
      %v922 = vadd.f32 %v890, %v756
      %v923 = vadd.f32 %v891, %v761
      %v924 = vadd.f32 %v892, %v766
      %v925 = vadd.f32 %v893, %v771
      %v926 = vadd.f32 %v894, %v776
      %v927 = vadd.f32 %v895, %v781
      %v928 = vadd.f32 %v896, %v786
      %v929 = vadd.f32 %v897, %v791
      %v930 = vadd.f32 %v898, %v796
      %v931 = vadd.f32 %v899, %v801
      %v932 = vadd.f32 %v900, %v806
      %v933 = vadd.f32 %v901, %v811
      %v934 = vadd.f32 %v902, %v816
      %v935 = vadd.f32 %v903, %v821
      %v936 = vadd.f32 %v904, %v826
      %v937 = vadd.f32 %v905, %v831
      %v938 = vadd.f32 %v906, %v836
      %v939 = vadd.f32 %v907, %v841
      %v940 = vadd.f32 %v908, %v846
      %v941 = vadd.f32 %v909, %v851
      %v942 = vadd.f32 %v910, %v856
      %v943 = vadd.f32 %v911, %v861
      %v944 = vadd.f32 %v912, %v866
      %v945 = vadd.f32 %v913, %v871
      %v946 = vadd.f32 %v914, %v876
      %v947 = vadd.f32 %v915, %v881
      %v948 = vld [vmem:[%s6] sm:$0x3]
      %v949 = vld [vmem:[%s7] sm:$0x1]
      %v951 = vlaneseq
      %v952 = vshrl.u32 %v951, 7
      %v953 = vsub.s32 0, %v952
      %v954 = vrot.slane %v949, %v953
      %v957 = vsel %vm558, %v916, 0
      %v960 = vsel %vm558, %v917, 0
      %v963 = vsel %vm558, %v918, 0
      %v966 = vsel %vm558, %v919, 0
      %v969 = vsel %vm558, %v920, 0
      %v972 = vsel %vm558, %v921, 0
      %v975 = vsel %vm558, %v922, 0
      %v978 = vsel %vm558, %v923, 0
      %v981 = vsel %vm558, %v924, 0
      %v984 = vsel %vm558, %v925, 0
      %v987 = vsel %vm558, %v926, 0
      %v990 = vsel %vm558, %v927, 0
      %v993 = vsel %vm558, %v928, 0
      %v996 = vsel %vm558, %v929, 0
      %v999 = vsel %vm558, %v930, 0
      %v1002 = vsel %vm558, %v931, 0
      %v1005 = vsel %vm558, %v932, 0
      %v1008 = vsel %vm558, %v933, 0
      %v1011 = vsel %vm558, %v934, 0
      %v1014 = vsel %vm558, %v935, 0
      %v1017 = vsel %vm558, %v936, 0
      %v1020 = vsel %vm558, %v937, 0
      %v1023 = vsel %vm558, %v938, 0
      %v1026 = vsel %vm558, %v939, 0
      %v1029 = vsel %vm558, %v940, 0
      %v1032 = vsel %vm558, %v941, 0
      %v1035 = vsel %vm558, %v942, 0
      %v1038 = vsel %vm558, %v943, 0
      %v1041 = vsel %vm558, %v944, 0
      %v1044 = vsel %vm558, %v945, 0
      %v1047 = vsel %vm558, %v946, 0
      %v1050 = vsel %vm558, %v947, 0
      %v1053 = vsel %vm655, %v948, 0
      %1055 = vmatprep.subr.mxu0 0.0
      %1056 = vmatpush1.msra.mxu0 0.0
      %1057 = vmatprep.subr.mxu0 0.0
      %1058 = vmatpush1.msra.mxu0 0.0
      %1059 = vmatprep.subr.mxu0 0.0
      %1060 = vmatpush1.msra.mxu0 0.0
      %1061 = vmatprep.subr.mxu0 0.0
      %1062 = vmatpush1.msra.mxu0 0.0
      %1063 = vmatprep.subr.mxu0 0.0
      %1064 = vmatpush1.msra.mxu0 0.0
      %1065 = vmatprep.subr.mxu0 0.0
      %1066 = vmatpush1.msra.mxu0 0.0
      %1067 = vmatprep.subr.mxu0 0.0
      %1068 = vmatpush1.msra.mxu0 0.0
      %1069 = vmatprep.subr.mxu0 0.0
      %1070 = vmatpush1.msra.mxu0 0.0
      %1071 = vmatprep.subr.mxu0 0.0
      %1072 = vmatpush1.msra.mxu0 0.0
      %1073 = vmatprep.subr.mxu0 0.0
      %1074 = vmatpush1.msra.mxu0 0.0
      %1075 = vmatprep.subr.mxu0 0.0
      %1076 = vmatpush1.msra.mxu0 0.0
      %1077 = vmatprep.subr.mxu0 0.0
      %1078 = vmatpush1.msra.mxu0 0.0
      %1079 = vmatprep.subr.mxu0 0.0
      %1080 = vmatpush1.msra.mxu0 0.0
      %1081 = vmatprep.subr.mxu0 0.0
      %1082 = vmatpush1.msra.mxu0 0.0
      %1083 = vmatprep.subr.mxu0 0.0
      %1084 = vmatpush1.msra.mxu0 0.0
      %1085 = vmatprep.subr.mxu0 0.0
      %1086 = vmatpush1.msra.mxu0 %v1053
      %1087 = vmatprep.subr.mxu0 0.0
      %1088 = vmatpush2.msra.mxu0 0.0
      %1089 = vmatprep.subr.mxu0 0.0
      %1090 = vmatpush2.msra.mxu0 0.0
      %1091 = vmatprep.subr.mxu0 0.0
      %1092 = vmatpush2.msra.mxu0 0.0
      %1093 = vmatprep.subr.mxu0 0.0
      %1094 = vmatpush2.msra.mxu0 0.0
      %1095 = vmatprep.subr.mxu0 0.0
      %1096 = vmatpush2.msra.mxu0 0.0
      %1097 = vmatprep.subr.mxu0 0.0
      %1098 = vmatpush2.msra.mxu0 0.0
      %1099 = vmatprep.subr.mxu0 0.0
      %1100 = vmatpush2.msra.mxu0 0.0
      %1101 = vmatprep.subr.mxu0 0.0
      %1102 = vmatpush2.msra.mxu0 0.0
      %1103 = vmatprep.subr.mxu0 0.0
      %1104 = vmatpush2.msra.mxu0 0.0
      %1105 = vmatprep.subr.mxu0 0.0
      %1106 = vmatpush2.msra.mxu0 0.0
      %1107 = vmatprep.subr.mxu0 0.0
      %1108 = vmatpush2.msra.mxu0 0.0
      %1109 = vmatprep.subr.mxu0 0.0
      %1110 = vmatpush2.msra.mxu0 0.0
      %1111 = vmatprep.subr.mxu0 0.0
      %1112 = vmatpush2.msra.mxu0 0.0
      %1113 = vmatprep.subr.mxu0 0.0
      %1114 = vmatpush2.msra.mxu0 0.0
      %1115 = vmatprep.subr.mxu0 0.0
      %1116 = vmatpush2.msra.mxu0 0.0
      %1117 = vmatprep.subr.mxu0 0.0
      %1118 = vmatpush2.msra.mxu0 0.0
      %1119 = vmatprep.mubr.f32.mxu0 0.0
      %1120 = vmatmul.mubr.f32.gmra.mxu0 %v957
      %v1121 = vpop.f32.mrf.mxu0
      %v1122 = vadd.f32 %v954, %v1121
      %v1123 = vpop.f32.mrf.mxu0
      %1124 = vmatprep.mubr.f32.mxu0 0.0
      %1125 = vmatmul.mubr.f32.gmra.mxu0 %v960
      %v1126 = vpop.f32.mrf.mxu0
      %v1127 = vadd.f32 %v954, %v1126
      %v1128 = vpop.f32.mrf.mxu0
      %1129 = vmatprep.mubr.f32.mxu0 0.0
      %1130 = vmatmul.mubr.f32.gmra.mxu0 %v963
      %v1131 = vpop.f32.mrf.mxu0
      %v1132 = vadd.f32 %v954, %v1131
      %v1133 = vpop.f32.mrf.mxu0
      %1134 = vmatprep.mubr.f32.mxu0 0.0
      %1135 = vmatmul.mubr.f32.gmra.mxu0 %v966
      %v1136 = vpop.f32.mrf.mxu0
      %v1137 = vadd.f32 %v954, %v1136
      %v1138 = vpop.f32.mrf.mxu0
      %1139 = vmatprep.mubr.f32.mxu0 0.0
      %1140 = vmatmul.mubr.f32.gmra.mxu0 %v969
      %v1141 = vpop.f32.mrf.mxu0
      %v1142 = vadd.f32 %v954, %v1141
      %v1143 = vpop.f32.mrf.mxu0
      %1144 = vmatprep.mubr.f32.mxu0 0.0
      %1145 = vmatmul.mubr.f32.gmra.mxu0 %v972
      %v1146 = vpop.f32.mrf.mxu0
      %v1147 = vadd.f32 %v954, %v1146
      %v1148 = vpop.f32.mrf.mxu0
      %1149 = vmatprep.mubr.f32.mxu0 0.0
      %1150 = vmatmul.mubr.f32.gmra.mxu0 %v975
      %v1151 = vpop.f32.mrf.mxu0
      %v1152 = vadd.f32 %v954, %v1151
      %v1153 = vpop.f32.mrf.mxu0
      %1154 = vmatprep.mubr.f32.mxu0 0.0
      %1155 = vmatmul.mubr.f32.gmra.mxu0 %v978
      %v1156 = vpop.f32.mrf.mxu0
      %v1157 = vadd.f32 %v954, %v1156
      %v1158 = vpop.f32.mrf.mxu0
      %1159 = vmatprep.mubr.f32.mxu0 0.0
      %1160 = vmatmul.mubr.f32.gmra.mxu0 %v981
      %v1161 = vpop.f32.mrf.mxu0
      %v1162 = vadd.f32 %v954, %v1161
      %v1163 = vpop.f32.mrf.mxu0
      %1164 = vmatprep.mubr.f32.mxu0 0.0
      %1165 = vmatmul.mubr.f32.gmra.mxu0 %v984
      %v1166 = vpop.f32.mrf.mxu0
      %v1167 = vadd.f32 %v954, %v1166
      %v1168 = vpop.f32.mrf.mxu0
      %1169 = vmatprep.mubr.f32.mxu0 0.0
      %1170 = vmatmul.mubr.f32.gmra.mxu0 %v987
      %v1171 = vpop.f32.mrf.mxu0
      %v1172 = vadd.f32 %v954, %v1171
      %v1173 = vpop.f32.mrf.mxu0
      %1174 = vmatprep.mubr.f32.mxu0 0.0
      %1175 = vmatmul.mubr.f32.gmra.mxu0 %v990
      %v1176 = vpop.f32.mrf.mxu0
      %v1177 = vadd.f32 %v954, %v1176
      %v1178 = vpop.f32.mrf.mxu0
      %1179 = vmatprep.mubr.f32.mxu0 0.0
      %1180 = vmatmul.mubr.f32.gmra.mxu0 %v993
      %v1181 = vpop.f32.mrf.mxu0
      %v1182 = vadd.f32 %v954, %v1181
      %v1183 = vpop.f32.mrf.mxu0
      %1184 = vmatprep.mubr.f32.mxu0 0.0
      %1185 = vmatmul.mubr.f32.gmra.mxu0 %v996
      %v1186 = vpop.f32.mrf.mxu0
      %v1187 = vadd.f32 %v954, %v1186
      %v1188 = vpop.f32.mrf.mxu0
      %1189 = vmatprep.mubr.f32.mxu0 0.0
      %1190 = vmatmul.mubr.f32.gmra.mxu0 %v999
      %v1191 = vpop.f32.mrf.mxu0
      %v1192 = vadd.f32 %v954, %v1191
      %v1193 = vpop.f32.mrf.mxu0
      %1194 = vmatprep.mubr.f32.mxu0 0.0
      %1195 = vmatmul.mubr.f32.gmra.mxu0 %v1002
      %v1196 = vpop.f32.mrf.mxu0
      %v1197 = vadd.f32 %v954, %v1196
      %v1198 = vpop.f32.mrf.mxu0
      %1199 = vmatprep.mubr.f32.mxu0 0.0
      %1200 = vmatmul.mubr.f32.gmra.mxu0 %v1005
      %v1201 = vpop.f32.mrf.mxu0
      %v1202 = vadd.f32 %v954, %v1201
      %v1203 = vpop.f32.mrf.mxu0
      %1204 = vmatprep.mubr.f32.mxu0 0.0
      %1205 = vmatmul.mubr.f32.gmra.mxu0 %v1008
      %v1206 = vpop.f32.mrf.mxu0
      %v1207 = vadd.f32 %v954, %v1206
      %v1208 = vpop.f32.mrf.mxu0
      %1209 = vmatprep.mubr.f32.mxu0 0.0
      %1210 = vmatmul.mubr.f32.gmra.mxu0 %v1011
      %v1211 = vpop.f32.mrf.mxu0
      %v1212 = vadd.f32 %v954, %v1211
      %v1213 = vpop.f32.mrf.mxu0
      %1214 = vmatprep.mubr.f32.mxu0 0.0
      %1215 = vmatmul.mubr.f32.gmra.mxu0 %v1014
      %v1216 = vpop.f32.mrf.mxu0
      %v1217 = vadd.f32 %v954, %v1216
      %v1218 = vpop.f32.mrf.mxu0
      %1219 = vmatprep.mubr.f32.mxu0 0.0
      %1220 = vmatmul.mubr.f32.gmra.mxu0 %v1017
      %v1221 = vpop.f32.mrf.mxu0
      %v1222 = vadd.f32 %v954, %v1221
      %v1223 = vpop.f32.mrf.mxu0
      %1224 = vmatprep.mubr.f32.mxu0 0.0
      %1225 = vmatmul.mubr.f32.gmra.mxu0 %v1020
      %v1226 = vpop.f32.mrf.mxu0
      %v1227 = vadd.f32 %v954, %v1226
      %v1228 = vpop.f32.mrf.mxu0
      %1229 = vmatprep.mubr.f32.mxu0 0.0
      %1230 = vmatmul.mubr.f32.gmra.mxu0 %v1023
      %v1231 = vpop.f32.mrf.mxu0
      %v1232 = vadd.f32 %v954, %v1231
      %v1233 = vpop.f32.mrf.mxu0
      %1234 = vmatprep.mubr.f32.mxu0 0.0
      %1235 = vmatmul.mubr.f32.gmra.mxu0 %v1026
      %v1236 = vpop.f32.mrf.mxu0
      %v1237 = vadd.f32 %v954, %v1236
      %v1238 = vpop.f32.mrf.mxu0
      %1239 = vmatprep.mubr.f32.mxu0 0.0
      %1240 = vmatmul.mubr.f32.gmra.mxu0 %v1029
      %v1241 = vpop.f32.mrf.mxu0
      %v1242 = vadd.f32 %v954, %v1241
      %v1243 = vpop.f32.mrf.mxu0
      %1244 = vmatprep.mubr.f32.mxu0 0.0
      %1245 = vmatmul.mubr.f32.gmra.mxu0 %v1032
      %v1246 = vpop.f32.mrf.mxu0
      %v1247 = vadd.f32 %v954, %v1246
      %v1248 = vpop.f32.mrf.mxu0
      %1249 = vmatprep.mubr.f32.mxu0 0.0
      %1250 = vmatmul.mubr.f32.gmra.mxu0 %v1035
      %v1251 = vpop.f32.mrf.mxu0
      %v1252 = vadd.f32 %v954, %v1251
      %v1253 = vpop.f32.mrf.mxu0
      %1254 = vmatprep.mubr.f32.mxu0 0.0
      %1255 = vmatmul.mubr.f32.gmra.mxu0 %v1038
      %v1256 = vpop.f32.mrf.mxu0
      %v1257 = vadd.f32 %v954, %v1256
      %v1258 = vpop.f32.mrf.mxu0
      %1259 = vmatprep.mubr.f32.mxu0 0.0
      %1260 = vmatmul.mubr.f32.gmra.mxu0 %v1041
      %v1261 = vpop.f32.mrf.mxu0
      %v1262 = vadd.f32 %v954, %v1261
      %v1263 = vpop.f32.mrf.mxu0
      %1264 = vmatprep.mubr.f32.mxu0 0.0
      %1265 = vmatmul.mubr.f32.gmra.mxu0 %v1044
      %v1266 = vpop.f32.mrf.mxu0
      %v1267 = vadd.f32 %v954, %v1266
      %v1268 = vpop.f32.mrf.mxu0
      %1269 = vmatprep.mubr.f32.mxu0 0.0
      %1270 = vmatmul.mubr.f32.gmra.mxu0 %v1047
      %v1271 = vpop.f32.mrf.mxu0
      %v1272 = vadd.f32 %v954, %v1271
      %v1273 = vpop.f32.mrf.mxu0
      %1274 = vmatprep.mubr.f32.mxu0 0.0
      %1275 = vmatmul.mubr.f32.gmra.mxu0 %v1050
      %v1276 = vpop.f32.mrf.mxu0
      %v1277 = vadd.f32 %v954, %v1276
      %v1278 = vpop.f32.mrf.mxu0
      %1279 = vdwg.mxu0
      %v1280 = vxor.u32 %v1122, 2147483648
      %v1281 = vxor.u32 %v1127, 2147483648
      %v1282 = vxor.u32 %v1132, 2147483648
      %v1283 = vxor.u32 %v1137, 2147483648
      %v1284 = vxor.u32 %v1142, 2147483648
      %v1285 = vxor.u32 %v1147, 2147483648
      %v1286 = vxor.u32 %v1152, 2147483648
      %v1287 = vxor.u32 %v1157, 2147483648
      %v1288 = vxor.u32 %v1162, 2147483648
      %v1289 = vxor.u32 %v1167, 2147483648
      %v1290 = vxor.u32 %v1172, 2147483648
      %v1291 = vxor.u32 %v1177, 2147483648
      %v1292 = vxor.u32 %v1182, 2147483648
      %v1293 = vxor.u32 %v1187, 2147483648
      %v1294 = vxor.u32 %v1192, 2147483648
      %v1295 = vxor.u32 %v1197, 2147483648
      %v1296 = vxor.u32 %v1202, 2147483648
      %v1297 = vxor.u32 %v1207, 2147483648
      %v1298 = vxor.u32 %v1212, 2147483648
      %v1299 = vxor.u32 %v1217, 2147483648
      %v1300 = vxor.u32 %v1222, 2147483648
      %v1301 = vxor.u32 %v1227, 2147483648
      %v1302 = vxor.u32 %v1232, 2147483648
      %v1303 = vxor.u32 %v1237, 2147483648
      %v1304 = vxor.u32 %v1242, 2147483648
      %v1305 = vxor.u32 %v1247, 2147483648
      %v1306 = vxor.u32 %v1252, 2147483648
      %v1307 = vxor.u32 %v1257, 2147483648
      %v1308 = vxor.u32 %v1262, 2147483648
      %v1309 = vxor.u32 %v1267, 2147483648
      %v1310 = vxor.u32 %v1272, 2147483648
      %v1311 = vxor.u32 %v1277, 2147483648
      %v1312 = vmul.f32 %v1280, 1.442695
      %v1313 = vpow.pop %v1312
      %v1314 = vmul.f32 %v1281, 1.442695
      %v1315 = vpow.pop %v1314
      %v1316 = vmul.f32 %v1282, 1.442695
      %v1317 = vpow.pop %v1316
      %v1318 = vmul.f32 %v1283, 1.442695
      %v1319 = vpow.pop %v1318
      %v1320 = vmul.f32 %v1284, 1.442695
      %v1321 = vpow.pop %v1320
      %v1322 = vmul.f32 %v1285, 1.442695
      %v1323 = vpow.pop %v1322
      %v1324 = vmul.f32 %v1286, 1.442695
      %v1325 = vpow.pop %v1324
      %v1326 = vmul.f32 %v1287, 1.442695
      %v1327 = vpow.pop %v1326
      %v1328 = vmul.f32 %v1288, 1.442695
      %v1329 = vpow.pop %v1328
      %v1330 = vmul.f32 %v1289, 1.442695
      %v1331 = vpow.pop %v1330
      %v1332 = vmul.f32 %v1290, 1.442695
      %v1333 = vpow.pop %v1332
      %v1334 = vmul.f32 %v1291, 1.442695
      %v1335 = vpow.pop %v1334
      %v1336 = vmul.f32 %v1292, 1.442695
      %v1337 = vpow.pop %v1336
      %v1338 = vmul.f32 %v1293, 1.442695
      %v1339 = vpow.pop %v1338
      %v1340 = vmul.f32 %v1294, 1.442695
      %v1341 = vpow.pop %v1340
      %v1342 = vmul.f32 %v1295, 1.442695
      %v1343 = vpow.pop %v1342
      %v1344 = vmul.f32 %v1296, 1.442695
      %v1345 = vpow.pop %v1344
      %v1346 = vmul.f32 %v1297, 1.442695
      %v1347 = vpow.pop %v1346
      %v1348 = vmul.f32 %v1298, 1.442695
      %v1349 = vpow.pop %v1348
      %v1350 = vmul.f32 %v1299, 1.442695
      %v1351 = vpow.pop %v1350
      %v1352 = vmul.f32 %v1300, 1.442695
      %v1353 = vpow.pop %v1352
      %v1354 = vmul.f32 %v1301, 1.442695
      %v1355 = vpow.pop %v1354
      %v1356 = vmul.f32 %v1302, 1.442695
      %v1357 = vpow.pop %v1356
      %v1358 = vmul.f32 %v1303, 1.442695
      %v1359 = vpow.pop %v1358
      %v1360 = vmul.f32 %v1304, 1.442695
      %v1361 = vpow.pop %v1360
      %v1362 = vmul.f32 %v1305, 1.442695
      %v1363 = vpow.pop %v1362
      %v1364 = vmul.f32 %v1306, 1.442695
      %v1365 = vpow.pop %v1364
      %v1366 = vmul.f32 %v1307, 1.442695
      %v1367 = vpow.pop %v1366
      %v1368 = vmul.f32 %v1308, 1.442695
      %v1369 = vpow.pop %v1368
      %v1370 = vmul.f32 %v1309, 1.442695
      %v1371 = vpow.pop %v1370
      %v1372 = vmul.f32 %v1310, 1.442695
      %v1373 = vpow.pop %v1372
      %v1374 = vmul.f32 %v1311, 1.442695
      %v1375 = vpow.pop %v1374
      %v1376 = vadd.f32 %v1313, 1.0
      %v1377 = vadd.f32 %v1315, 1.0
      %v1378 = vadd.f32 %v1317, 1.0
      %v1379 = vadd.f32 %v1319, 1.0
      %v1380 = vadd.f32 %v1321, 1.0
      %v1381 = vadd.f32 %v1323, 1.0
      %v1382 = vadd.f32 %v1325, 1.0
      %v1383 = vadd.f32 %v1327, 1.0
      %v1384 = vadd.f32 %v1329, 1.0
      %v1385 = vadd.f32 %v1331, 1.0
      %v1386 = vadd.f32 %v1333, 1.0
      %v1387 = vadd.f32 %v1335, 1.0
      %v1388 = vadd.f32 %v1337, 1.0
      %v1389 = vadd.f32 %v1339, 1.0
      %v1390 = vadd.f32 %v1341, 1.0
      %v1391 = vadd.f32 %v1343, 1.0
      %v1392 = vadd.f32 %v1345, 1.0
      %v1393 = vadd.f32 %v1347, 1.0
      %v1394 = vadd.f32 %v1349, 1.0
      %v1395 = vadd.f32 %v1351, 1.0
      %v1396 = vadd.f32 %v1353, 1.0
      %v1397 = vadd.f32 %v1355, 1.0
      %v1398 = vadd.f32 %v1357, 1.0
      %v1399 = vadd.f32 %v1359, 1.0
      %v1400 = vadd.f32 %v1361, 1.0
      %v1401 = vadd.f32 %v1363, 1.0
      %v1402 = vadd.f32 %v1365, 1.0
      %v1403 = vadd.f32 %v1367, 1.0
      %v1404 = vadd.f32 %v1369, 1.0
      %v1405 = vadd.f32 %v1371, 1.0
      %v1406 = vadd.f32 %v1373, 1.0
      %v1407 = vadd.f32 %v1375, 1.0
      %v1408 = vrcp.pop %v1376
      %v1409 = vmul.f32 1.0, %v1408
      %v1410 = vrcp.pop %v1377
      %v1411 = vmul.f32 1.0, %v1410
      %v1412 = vrcp.pop %v1378
      %v1413 = vmul.f32 1.0, %v1412
      %v1414 = vrcp.pop %v1379
      %v1415 = vmul.f32 1.0, %v1414
      %v1416 = vrcp.pop %v1380
      %v1417 = vmul.f32 1.0, %v1416
      %v1418 = vrcp.pop %v1381
      %v1419 = vmul.f32 1.0, %v1418
      %v1420 = vrcp.pop %v1382
      %v1421 = vmul.f32 1.0, %v1420
      %v1422 = vrcp.pop %v1383
      %v1423 = vmul.f32 1.0, %v1422
      %v1424 = vrcp.pop %v1384
      %v1425 = vmul.f32 1.0, %v1424
      %v1426 = vrcp.pop %v1385
      %v1427 = vmul.f32 1.0, %v1426
      %v1428 = vrcp.pop %v1386
      %v1429 = vmul.f32 1.0, %v1428
      %v1430 = vrcp.pop %v1387
      %v1431 = vmul.f32 1.0, %v1430
      %v1432 = vrcp.pop %v1388
      %v1433 = vmul.f32 1.0, %v1432
      %v1434 = vrcp.pop %v1389
      %v1435 = vmul.f32 1.0, %v1434
      %v1436 = vrcp.pop %v1390
      %v1437 = vmul.f32 1.0, %v1436
      %v1438 = vrcp.pop %v1391
      %v1439 = vmul.f32 1.0, %v1438
      %v1440 = vrcp.pop %v1392
      %v1441 = vmul.f32 1.0, %v1440
      %v1442 = vrcp.pop %v1393
      %v1443 = vmul.f32 1.0, %v1442
      %v1444 = vrcp.pop %v1394
      %v1445 = vmul.f32 1.0, %v1444
      %v1446 = vrcp.pop %v1395
      %v1447 = vmul.f32 1.0, %v1446
      %v1448 = vrcp.pop %v1396
      %v1449 = vmul.f32 1.0, %v1448
      %v1450 = vrcp.pop %v1397
      %v1451 = vmul.f32 1.0, %v1450
      %v1452 = vrcp.pop %v1398
      %v1453 = vmul.f32 1.0, %v1452
      %v1454 = vrcp.pop %v1399
      %v1455 = vmul.f32 1.0, %v1454
      %v1456 = vrcp.pop %v1400
      %v1457 = vmul.f32 1.0, %v1456
      %v1458 = vrcp.pop %v1401
      %v1459 = vmul.f32 1.0, %v1458
      %v1460 = vrcp.pop %v1402
      %v1461 = vmul.f32 1.0, %v1460
      %v1462 = vrcp.pop %v1403
      %v1463 = vmul.f32 1.0, %v1462
      %v1464 = vrcp.pop %v1404
      %v1465 = vmul.f32 1.0, %v1464
      %v1466 = vrcp.pop %v1405
      %v1467 = vmul.f32 1.0, %v1466
      %v1468 = vrcp.pop %v1406
      %v1469 = vmul.f32 1.0, %v1468
      %v1470 = vrcp.pop %v1407
      %v1471 = vmul.f32 1.0, %v1470
      %v1472 = vld [vmem:[%s474] sm:$0x1]
      %v1474 = vlaneseq
      %v1475 = vshrl.u32 %v1474, 7
      %v1476 = vsub.s32 0, %v1475
      %v1477 = vrot.slane %v1472, %v1476
      %v1479 = vadd.f32 %v1409, %v1477
      %v1480 = vadd.f32 %v1411, %v1477
      %v1481 = vadd.f32 %v1413, %v1477
      %v1482 = vadd.f32 %v1415, %v1477
      %v1483 = vadd.f32 %v1417, %v1477
      %v1484 = vadd.f32 %v1419, %v1477
      %v1485 = vadd.f32 %v1421, %v1477
      %v1486 = vadd.f32 %v1423, %v1477
      %v1487 = vadd.f32 %v1425, %v1477
      %v1488 = vadd.f32 %v1427, %v1477
      %v1489 = vadd.f32 %v1429, %v1477
      %v1490 = vadd.f32 %v1431, %v1477
      %v1491 = vadd.f32 %v1433, %v1477
      %v1492 = vadd.f32 %v1435, %v1477
      %v1493 = vadd.f32 %v1437, %v1477
      %v1494 = vadd.f32 %v1439, %v1477
      %v1495 = vadd.f32 %v1441, %v1477
      %v1496 = vadd.f32 %v1443, %v1477
      %v1497 = vadd.f32 %v1445, %v1477
      %v1498 = vadd.f32 %v1447, %v1477
      %v1499 = vadd.f32 %v1449, %v1477
      %v1500 = vadd.f32 %v1451, %v1477
      %v1501 = vadd.f32 %v1453, %v1477
      %v1502 = vadd.f32 %v1455, %v1477
      %v1503 = vadd.f32 %v1457, %v1477
      %v1504 = vadd.f32 %v1459, %v1477
      %v1505 = vadd.f32 %v1461, %v1477
      %v1506 = vadd.f32 %v1463, %v1477
      %v1507 = vadd.f32 %v1465, %v1477
      %v1508 = vadd.f32 %v1467, %v1477
      %v1509 = vadd.f32 %v1469, %v1477
      %v1510 = vadd.f32 %v1471, %v1477
      %v1511 = vmul.f32 %v486, %v1479
      %v1512 = vmul.f32 %v487, %v1480
      %v1513 = vmul.f32 %v488, %v1481
      %v1514 = vmul.f32 %v489, %v1482
      %v1515 = vmul.f32 %v490, %v1483
      %v1516 = vmul.f32 %v491, %v1484
      %v1517 = vmul.f32 %v492, %v1485
      %v1518 = vmul.f32 %v493, %v1486
      %v1519 = vmul.f32 %v494, %v1487
      %v1520 = vmul.f32 %v495, %v1488
      %v1521 = vmul.f32 %v496, %v1489
      %v1522 = vmul.f32 %v497, %v1490
      %v1523 = vmul.f32 %v498, %v1491
      %v1524 = vmul.f32 %v499, %v1492
      %v1525 = vmul.f32 %v500, %v1493
      %v1526 = vmul.f32 %v501, %v1494
      %v1527 = vmul.f32 %v502, %v1495
      %v1528 = vmul.f32 %v503, %v1496
      %v1529 = vmul.f32 %v504, %v1497
      %v1530 = vmul.f32 %v505, %v1498
      %v1531 = vmul.f32 %v506, %v1499
      %v1532 = vmul.f32 %v507, %v1500
      %v1533 = vmul.f32 %v508, %v1501
      %v1534 = vmul.f32 %v509, %v1502
      %v1535 = vmul.f32 %v510, %v1503
      %v1536 = vmul.f32 %v511, %v1504
      %v1537 = vmul.f32 %v512, %v1505
      %v1538 = vmul.f32 %v513, %v1506
      %v1539 = vmul.f32 %v514, %v1507
      %v1540 = vmul.f32 %v515, %v1508
      %v1541 = vmul.f32 %v516, %v1509
      %v1542 = vmul.f32 %v517, %v1510
      %v1543 = vpack.c.bf16 %v1512, %v1511
      %v1544 = vpack.c.bf16 %v1514, %v1513
      %v1545 = vpack.c.bf16 %v1516, %v1515
      %v1546 = vpack.c.bf16 %v1518, %v1517
      %v1547 = vpack.c.bf16 %v1520, %v1519
      %v1548 = vpack.c.bf16 %v1522, %v1521
      %v1549 = vpack.c.bf16 %v1524, %v1523
      %v1550 = vpack.c.bf16 %v1526, %v1525
      %v1551 = vpack.c.bf16 %v1528, %v1527
      %v1552 = vpack.c.bf16 %v1530, %v1529
      %v1553 = vpack.c.bf16 %v1532, %v1531
      %v1554 = vpack.c.bf16 %v1534, %v1533
      %v1555 = vpack.c.bf16 %v1536, %v1535
      %v1556 = vpack.c.bf16 %v1538, %v1537
      %v1557 = vpack.c.bf16 %v1540, %v1539
      %v1558 = vpack.c.bf16 %v1542, %v1541
      %v1559 = vld [vmem:[%s8] sm:$0xf]
      %v1560 = vld [vmem:[%s8 + $0x4] sm:$0xf]
      %v1561 = vld [vmem:[%s8 + $0x8] sm:$0xf]
      %v1562 = vld [vmem:[%s8 + $0xc] sm:$0xf]
      %v1563 = vld [vmem:[%s9] sm:$0x1]
      %v1565 = vlaneseq
      %v1566 = vshrl.u32 %v1565, 7
      %v1567 = vsub.s32 0, %v1566
      %v1568 = vrot.slane %v1563, %v1567
      %v1574 = vunpack.c.l.b16 %v1559
      %v1575 = vunpack.c.l.b16 %v1560
      %v1576 = vunpack.c.l.b16 %v1561
      %v1577 = vunpack.c.l.b16 %v1562
      %v1578 = vpack.c.b16 %v1575, %v1574
      %v1579 = vpack.c.b16 %v1577, %v1576
      %vm1582 = vcmask 261120
      %v1584 = vsel %vm1582, %v1543, 0
      %v1587 = vsel %vm1582, %v1544, 0
      %v1590 = vsel %vm1582, %v1545, 0
      %v1593 = vsel %vm1582, %v1546, 0
      %v1596 = vsel %vm1582, %v1547, 0
      %v1599 = vsel %vm1582, %v1548, 0
      %v1602 = vsel %vm1582, %v1549, 0
      %v1605 = vsel %vm1582, %v1550, 0
      %v1608 = vsel %vm1582, %v1551, 0
      %v1611 = vsel %vm1582, %v1552, 0
      %v1614 = vsel %vm1582, %v1553, 0
      %v1617 = vsel %vm1582, %v1554, 0
      %v1620 = vsel %vm1582, %v1555, 0
      %v1623 = vsel %vm1582, %v1556, 0
      %v1626 = vsel %vm1582, %v1557, 0
      %v1629 = vsel %vm1582, %v1558, 0
      %1631 = vmatprep.subr.bf16.mxu0 0
      %1632 = vmatpush1.bf16.msra.mxu0 0
      %1633 = vmatprep.subr.bf16.mxu0 0
      %1634 = vmatpush1.bf16.msra.mxu0 0
      %1635 = vmatprep.subr.bf16.mxu0 0
      %1636 = vmatpush1.bf16.msra.mxu0 0
      %1637 = vmatprep.subr.bf16.mxu0 0
      %1638 = vmatpush1.bf16.msra.mxu0 0
      %1639 = vmatprep.subr.bf16.mxu0 0
      %1640 = vmatpush1.bf16.msra.mxu0 0
      %1641 = vmatprep.subr.bf16.mxu0 0
      %1642 = vmatpush1.bf16.msra.mxu0 0
      %1643 = vmatprep.subr.bf16.mxu0 0
      %1644 = vmatpush1.bf16.msra.mxu0 %v1579
      %1645 = vmatprep.subr.bf16.mxu0 0
      %1646 = vmatpush1.bf16.msra.mxu0 %v1578
      %1647 = vmatprep.subr.bf16.mxu0 0
      %1648 = vmatpush2.bf16.msra.mxu0 0
      %1649 = vmatprep.subr.bf16.mxu0 0
      %1650 = vmatpush2.bf16.msra.mxu0 0
      %1651 = vmatprep.subr.bf16.mxu0 0
      %1652 = vmatpush2.bf16.msra.mxu0 0
      %1653 = vmatprep.subr.bf16.mxu0 0
      %1654 = vmatpush2.bf16.msra.mxu0 0
      %1655 = vmatprep.subr.bf16.mxu0 0
      %1656 = vmatpush2.bf16.msra.mxu0 0
      %1657 = vmatprep.subr.bf16.mxu0 0
      %1658 = vmatpush2.bf16.msra.mxu0 0
      %1659 = vmatprep.subr.bf16.mxu0 0
      %1660 = vmatpush2.bf16.msra.mxu0 0
      %1661 = vmatprep.subr.bf16.mxu0 0
      %1662 = vmatpush2.bf16.msra.mxu0 0
      %1663 = vmatprep.mubr.bf16.mxu0 0
      %1664 = vmatmul.mubr.bf16.gmra.mxu0 %v1584
      %v1665 = vpop.f32.mrf.mxu0
      %v1666 = vadd.f32 %v1568, %v1665
      %v1667 = vpop.f32.mrf.mxu0
      %v1668 = vpop.f32.mrf.mxu0
      %v1669 = vadd.f32 %v1568, %v1668
      %v1670 = vpop.f32.mrf.mxu0
      %1671 = vmatprep.mubr.bf16.mxu0 0
      %1672 = vmatmul.mubr.bf16.gmra.mxu0 %v1587
      %v1673 = vpop.f32.mrf.mxu0
      %v1674 = vadd.f32 %v1568, %v1673
      %v1675 = vpop.f32.mrf.mxu0
      %v1676 = vpop.f32.mrf.mxu0
      %v1677 = vadd.f32 %v1568, %v1676
      %v1678 = vpop.f32.mrf.mxu0
      %1679 = vmatprep.mubr.bf16.mxu0 0
      %1680 = vmatmul.mubr.bf16.gmra.mxu0 %v1590
      %v1681 = vpop.f32.mrf.mxu0
      %v1682 = vadd.f32 %v1568, %v1681
      %v1683 = vpop.f32.mrf.mxu0
      %v1684 = vpop.f32.mrf.mxu0
      %v1685 = vadd.f32 %v1568, %v1684
      %v1686 = vpop.f32.mrf.mxu0
      %1687 = vmatprep.mubr.bf16.mxu0 0
      %1688 = vmatmul.mubr.bf16.gmra.mxu0 %v1593
      %v1689 = vpop.f32.mrf.mxu0
      %v1690 = vadd.f32 %v1568, %v1689
      %v1691 = vpop.f32.mrf.mxu0
      %v1692 = vpop.f32.mrf.mxu0
      %v1693 = vadd.f32 %v1568, %v1692
      %v1694 = vpop.f32.mrf.mxu0
      %1695 = vmatprep.mubr.bf16.mxu0 0
      %1696 = vmatmul.mubr.bf16.gmra.mxu0 %v1596
      %v1697 = vpop.f32.mrf.mxu0
      %v1698 = vadd.f32 %v1568, %v1697
      %v1699 = vpop.f32.mrf.mxu0
      %v1700 = vpop.f32.mrf.mxu0
      %v1701 = vadd.f32 %v1568, %v1700
      %v1702 = vpop.f32.mrf.mxu0
      %1703 = vmatprep.mubr.bf16.mxu0 0
      %1704 = vmatmul.mubr.bf16.gmra.mxu0 %v1599
      %v1705 = vpop.f32.mrf.mxu0
      %v1706 = vadd.f32 %v1568, %v1705
      %v1707 = vpop.f32.mrf.mxu0
      %v1708 = vpop.f32.mrf.mxu0
      %v1709 = vadd.f32 %v1568, %v1708
      %v1710 = vpop.f32.mrf.mxu0
      %1711 = vmatprep.mubr.bf16.mxu0 0
      %1712 = vmatmul.mubr.bf16.gmra.mxu0 %v1602
      %v1713 = vpop.f32.mrf.mxu0
      %v1714 = vadd.f32 %v1568, %v1713
      %v1715 = vpop.f32.mrf.mxu0
      %v1716 = vpop.f32.mrf.mxu0
      %v1717 = vadd.f32 %v1568, %v1716
      %v1718 = vpop.f32.mrf.mxu0
      %1719 = vmatprep.mubr.bf16.mxu0 0
      %1720 = vmatmul.mubr.bf16.gmra.mxu0 %v1605
      %v1721 = vpop.f32.mrf.mxu0
      %v1722 = vadd.f32 %v1568, %v1721
      %v1723 = vpop.f32.mrf.mxu0
      %v1724 = vpop.f32.mrf.mxu0
      %v1725 = vadd.f32 %v1568, %v1724
      %v1726 = vpop.f32.mrf.mxu0
      %1727 = vmatprep.mubr.bf16.mxu0 0
      %1728 = vmatmul.mubr.bf16.gmra.mxu0 %v1608
      %v1729 = vpop.f32.mrf.mxu0
      %v1730 = vadd.f32 %v1568, %v1729
      %v1731 = vpop.f32.mrf.mxu0
      %v1732 = vpop.f32.mrf.mxu0
      %v1733 = vadd.f32 %v1568, %v1732
      %v1734 = vpop.f32.mrf.mxu0
      %1735 = vmatprep.mubr.bf16.mxu0 0
      %1736 = vmatmul.mubr.bf16.gmra.mxu0 %v1611
      %v1737 = vpop.f32.mrf.mxu0
      %v1738 = vadd.f32 %v1568, %v1737
      %v1739 = vpop.f32.mrf.mxu0
      %v1740 = vpop.f32.mrf.mxu0
      %v1741 = vadd.f32 %v1568, %v1740
      %v1742 = vpop.f32.mrf.mxu0
      %1743 = vmatprep.mubr.bf16.mxu0 0
      %1744 = vmatmul.mubr.bf16.gmra.mxu0 %v1614
      %v1745 = vpop.f32.mrf.mxu0
      %v1746 = vadd.f32 %v1568, %v1745
      %v1747 = vpop.f32.mrf.mxu0
      %v1748 = vpop.f32.mrf.mxu0
      %v1749 = vadd.f32 %v1568, %v1748
      %v1750 = vpop.f32.mrf.mxu0
      %1751 = vmatprep.mubr.bf16.mxu0 0
      %1752 = vmatmul.mubr.bf16.gmra.mxu0 %v1617
      %v1753 = vpop.f32.mrf.mxu0
      %v1754 = vadd.f32 %v1568, %v1753
      %v1755 = vpop.f32.mrf.mxu0
      %v1756 = vpop.f32.mrf.mxu0
      %v1757 = vadd.f32 %v1568, %v1756
      %v1758 = vpop.f32.mrf.mxu0
      %1759 = vmatprep.mubr.bf16.mxu0 0
      %1760 = vmatmul.mubr.bf16.gmra.mxu0 %v1620
      %v1761 = vpop.f32.mrf.mxu0
      %v1762 = vadd.f32 %v1568, %v1761
      %v1763 = vpop.f32.mrf.mxu0
      %v1764 = vpop.f32.mrf.mxu0
      %v1765 = vadd.f32 %v1568, %v1764
      %v1766 = vpop.f32.mrf.mxu0
      %1767 = vmatprep.mubr.bf16.mxu0 0
      %1768 = vmatmul.mubr.bf16.gmra.mxu0 %v1623
      %v1769 = vpop.f32.mrf.mxu0
      %v1770 = vadd.f32 %v1568, %v1769
      %v1771 = vpop.f32.mrf.mxu0
      %v1772 = vpop.f32.mrf.mxu0
      %v1773 = vadd.f32 %v1568, %v1772
      %v1774 = vpop.f32.mrf.mxu0
      %1775 = vmatprep.mubr.bf16.mxu0 0
      %1776 = vmatmul.mubr.bf16.gmra.mxu0 %v1626
      %v1777 = vpop.f32.mrf.mxu0
      %v1778 = vadd.f32 %v1568, %v1777
      %v1779 = vpop.f32.mrf.mxu0
      %v1780 = vpop.f32.mrf.mxu0
      %v1781 = vadd.f32 %v1568, %v1780
      %v1782 = vpop.f32.mrf.mxu0
      %1783 = vmatprep.mubr.bf16.mxu0 0
      %1784 = vmatmul.mubr.bf16.gmra.mxu0 %v1629
      %v1785 = vpop.f32.mrf.mxu0
      %v1786 = vadd.f32 %v1568, %v1785
      %v1787 = vpop.f32.mrf.mxu0
      %v1788 = vpop.f32.mrf.mxu0
      %v1789 = vadd.f32 %v1568, %v1788
      %v1790 = vpop.f32.mrf.mxu0
      %1791 = vdwg.mxu0
      %vm1792 = vcmask 785408
      %1793 = vst.msk [vmem:[%s483] sm:$0xff] %vm1792, %v1666
      %1794 = vst.msk [vmem:[%s483 + $0x8] sm:$0xff] %vm1792, %v1669
      %1795 = vst.msk [vmem:[%s483 + $0x10] sm:$0xff] %vm1792, %v1674
      %1796 = vst.msk [vmem:[%s483 + $0x18] sm:$0xff] %vm1792, %v1677
      %1797 = vst.msk [vmem:[%s483 + $0x20] sm:$0xff] %vm1792, %v1682
      %1798 = vst.msk [vmem:[%s483 + $0x28] sm:$0xff] %vm1792, %v1685
      %1799 = vst.msk [vmem:[%s483 + $0x30] sm:$0xff] %vm1792, %v1690
      %1800 = vst.msk [vmem:[%s483 + $0x38] sm:$0xff] %vm1792, %v1693
      %1801 = vst.msk [vmem:[%s483 + $0x40] sm:$0xff] %vm1792, %v1698
      %1802 = vst.msk [vmem:[%s483 + $0x48] sm:$0xff] %vm1792, %v1701
      %1803 = vst.msk [vmem:[%s483 + $0x50] sm:$0xff] %vm1792, %v1706
      %1804 = vst.msk [vmem:[%s483 + $0x58] sm:$0xff] %vm1792, %v1709
      %1805 = vst.msk [vmem:[%s483 + $0x60] sm:$0xff] %vm1792, %v1714
      %1806 = vst.msk [vmem:[%s483 + $0x68] sm:$0xff] %vm1792, %v1717
      %1807 = vst.msk [vmem:[%s483 + $0x70] sm:$0xff] %vm1792, %v1722
      %1808 = vst.msk [vmem:[%s483 + $0x78] sm:$0xff] %vm1792, %v1725
      %1809 = vst.msk [vmem:[%s483 + $0x80] sm:$0xff] %vm1792, %v1730
      %1810 = vst.msk [vmem:[%s483 + $0x88] sm:$0xff] %vm1792, %v1733
      %1811 = vst.msk [vmem:[%s483 + $0x90] sm:$0xff] %vm1792, %v1738
      %1812 = vst.msk [vmem:[%s483 + $0x98] sm:$0xff] %vm1792, %v1741
      %1813 = vst.msk [vmem:[%s483 + $0xa0] sm:$0xff] %vm1792, %v1746
      %1814 = vst.msk [vmem:[%s483 + $0xa8] sm:$0xff] %vm1792, %v1749
      %1815 = vst.msk [vmem:[%s483 + $0xb0] sm:$0xff] %vm1792, %v1754
      %1816 = vst.msk [vmem:[%s483 + $0xb8] sm:$0xff] %vm1792, %v1757
      %1817 = vst.msk [vmem:[%s483 + $0xc0] sm:$0xff] %vm1792, %v1762
      %1818 = vst.msk [vmem:[%s483 + $0xc8] sm:$0xff] %vm1792, %v1765
      %1819 = vst.msk [vmem:[%s483 + $0xd0] sm:$0xff] %vm1792, %v1770
      %1820 = vst.msk [vmem:[%s483 + $0xd8] sm:$0xff] %vm1792, %v1773
      %1821 = vst.msk [vmem:[%s483 + $0xe0] sm:$0xff] %vm1792, %v1778
      %1822 = vst.msk [vmem:[%s483 + $0xe8] sm:$0xff] %vm1792, %v1781
      %1823 = vst.msk [vmem:[%s483 + $0xf0] sm:$0xff] %vm1792, %v1786
      %1824 = vst.msk [vmem:[%s483 + $0xf8] sm:$0xff] %vm1792, %v1789
      %s1825 = smul.u32 32, %s26
      %p1826 = scmp.lt.s32.totalorder %s25, 1
      %s1827 = scalar_select %p1826, %s25, 1
      %p1828 = scmp.lt.s32.totalorder %s1825, 31
      %s1829 = scalar_select %p1828, %s1825, 31
      %s1830 = smul.addr %s1827, 32
      %s1831 = sadd.s32 %s1829, %s1830
      %s1832 = smul.addr %s1831, 8
      %s1833 = scalar_lea.vmem %s10, %s1832
      // Predicated region
      $region61: #{recurrent_residual_block_tl.14} parent=59 // pred_check
        %p1834 = pneg %p289
      $region62: #{recurrent_residual_block_tl.14} parent=59 // pred_check_branch
        %1836 = sbr.rel (%p1834) target = $region64
      $region63: #{recurrent_residual_block_tl.14} parent=59 // pred_region
        %s1837 = smul.u32 32, %s26
      $region64: #{recurrent_residual_block_tl.14} parent=59 // pred_fallthru
        _
    $region60: #{recurrent_residual_block_tl.14} parent=5 // pred_fallthru
      _
    %p1838 = scmp.le.s32.totalorder 2, %s16
    // Predicated region
    $region65: #{recurrent_residual_block_tl.14} parent=5 // pred_check
      %p1839 = pneg %p1838
    $region66: #{recurrent_residual_block_tl.14} parent=5 // pred_check_branch
      %1841 = sbr.rel (%p1839) target = $region68
    $region67: #{recurrent_residual_block_tl.14} parent=5 // pred_region
      %s1842 = ssub.s32 %s16, 2
      // Predicated region
      $region69: #{recurrent_residual_block_tl.14} parent=67 // pred_check
        %p1843 = pneg %p295
      $region70: #{recurrent_residual_block_tl.14} parent=67 // pred_check_branch
        %1845 = sbr.rel (%p1843) target = $region72
      $region71: #{recurrent_residual_block_tl.14} parent=67 // pred_region
        %s1846 = smul.u32 32, %s28
        %p1847 = scmp.lt.s32.totalorder %s27, 1
        %s1848 = scalar_select %p1847, %s27, 1
        %p1849 = scmp.lt.s32.totalorder %s1846, 31
        %s1850 = scalar_select %p1849, %s1846, 31
        %s1851 = smul.addr %s1848, 32
        %s1852 = sadd.s32 %s1850, %s1851
        %s1853 = smul.addr %s1852, 8
        %s1854 = scalar_lea.vmem %s10, %s1853
      $region72: #{recurrent_residual_block_tl.14} parent=67 // pred_fallthru
        _
    $region68: #{recurrent_residual_block_tl.14} parent=5 // pred_fallthru
      _
  $region6: #{recurrent_residual_block_tl.14} parent=0 // loop_footer
    %s20 = sadd.s32 1, %s16
  $region7: #{recurrent_residual_block_tl.14} parent=0 // loop_footer_branch
    %15 = sbr.rel target = $region3
  $region8: #{recurrent_residual_block_tl.14} parent=0 // loop_exit
    _

// kernel: recurrent_residual_block_tl.16
$region0: #{recurrent_residual_block_tl.16}
  #allocation0 [shape = 'u32[]', space=smem, size = 0x4, offset = 0x4, fixed_abs, tag = 'smem constant byte address 0x4 - core index']
  #allocation1 [shape = 'u32[144,128]{1,0:T(1,128)}', space=vmem, size = 0x12000, scoped, tag = 'internal scratch']
  %s0 = inlined_call_operand.vmem [shape: f32[512,32], index: 0, kind: input, shape index: {}]
  %s1 = inlined_call_operand.vmem [shape: f32[512,32], index: 1, kind: input, shape index: {}]
  %s2 = inlined_call_operand.vmem [shape: bf16[32,96], index: 2, kind: input, shape index: {}]
  %s3 = inlined_call_operand.vmem [shape: f32[1,96], index: 3, kind: input, shape index: {}]
  %s4 = inlined_call_operand.vmem [shape: f32[512,96], index: 4, kind: output, shape index: {}]
  %s5 = sld [smem:[#allocation0]]
  $region26: #{recurrent_residual_block_tl.16} parent=0
    _
  %s7 = ssub.s32 1, %s5
  %s8 = scalar_select 0, %s7, %s5
  // Predicated region
  $region2: #{recurrent_residual_block_tl.16} parent=0 // pred_check
    _
  $region3: #{recurrent_residual_block_tl.16} parent=0 // pred_check_branch
    %10 = sbr.rel (0) target = $region5
  $region4: #{recurrent_residual_block_tl.16} parent=0 // pred_region
    _
  $region5: #{recurrent_residual_block_tl.16} parent=0 // pred_fallthru
    _
  // Predicated region
  $region6: #{recurrent_residual_block_tl.16} parent=0 // pred_check
    _
  $region7: #{recurrent_residual_block_tl.16} parent=0 // pred_check_branch
    %12 = sbr.rel (0) target = $region9
  $region8: #{recurrent_residual_block_tl.16} parent=0 // pred_region
    _
  $region9: #{recurrent_residual_block_tl.16} parent=0 // pred_fallthru
    _
  // Predicated region
  $region10: #{recurrent_residual_block_tl.16} parent=0 // pred_check
    _
  $region11: #{recurrent_residual_block_tl.16} parent=0 // pred_check_branch
    %14 = sbr.rel (0) target = $region13
  $region12: #{recurrent_residual_block_tl.16} parent=0 // pred_region
    _
  $region13: #{recurrent_residual_block_tl.16} parent=0 // pred_fallthru
    _
  // Predicated region
  $region14: #{recurrent_residual_block_tl.16} parent=0 // pred_check
    _
  $region15: #{recurrent_residual_block_tl.16} parent=0 // pred_check_branch
    %16 = sbr.rel (0) target = $region17
  $region16: #{recurrent_residual_block_tl.16} parent=0 // pred_region
    _
  $region17: #{recurrent_residual_block_tl.16} parent=0 // pred_fallthru
    _
  %v18 = vld [vmem:[%s0] sm:$0xff]
  %v19 = vld [vmem:[%s0 + $0x8] sm:$0xff]
  %v20 = vld [vmem:[%s0 + $0x10] sm:$0xff]
  %v21 = vld [vmem:[%s0 + $0x18] sm:$0xff]
  %v22 = vld [vmem:[%s0 + $0x20] sm:$0xff]
  %v23 = vld [vmem:[%s0 + $0x28] sm:$0xff]
  %v24 = vld [vmem:[%s0 + $0x30] sm:$0xff]
  %v25 = vld [vmem:[%s0 + $0x38] sm:$0xff]
  %v26 = vld [vmem:[%s0 + $0x40] sm:$0xff]
  %v27 = vld [vmem:[%s0 + $0x48] sm:$0xff]
  %v28 = vld [vmem:[%s0 + $0x50] sm:$0xff]
  %v29 = vld [vmem:[%s0 + $0x58] sm:$0xff]
  %v30 = vld [vmem:[%s0 + $0x60] sm:$0xff]
  %v31 = vld [vmem:[%s0 + $0x68] sm:$0xff]
  %v32 = vld [vmem:[%s0 + $0x70] sm:$0xff]
  %v33 = vld [vmem:[%s0 + $0x78] sm:$0xff]
  %v34 = vld [vmem:[%s0 + $0x80] sm:$0xff]
  %v35 = vld [vmem:[%s0 + $0x88] sm:$0xff]
  %v36 = vld [vmem:[%s0 + $0x90] sm:$0xff]
  %v37 = vld [vmem:[%s0 + $0x98] sm:$0xff]
  %v38 = vld [vmem:[%s0 + $0xa0] sm:$0xff]
  %v39 = vld [vmem:[%s0 + $0xa8] sm:$0xff]
  %v40 = vld [vmem:[%s0 + $0xb0] sm:$0xff]
  %v41 = vld [vmem:[%s0 + $0xb8] sm:$0xff]
  %v42 = vld [vmem:[%s0 + $0xc0] sm:$0xff]
  %v43 = vld [vmem:[%s0 + $0xc8] sm:$0xff]
  %v44 = vld [vmem:[%s0 + $0xd0] sm:$0xff]
  %v45 = vld [vmem:[%s0 + $0xd8] sm:$0xff]
  %v46 = vld [vmem:[%s0 + $0xe0] sm:$0xff]
  %v47 = vld [vmem:[%s0 + $0xe8] sm:$0xff]
  %v48 = vld [vmem:[%s0 + $0xf0] sm:$0xff]
  %v49 = vld [vmem:[%s0 + $0xf8] sm:$0xff]
  %v50 = vld [vmem:[%s0 + $0x100] sm:$0xff]
  %v51 = vld [vmem:[%s0 + $0x108] sm:$0xff]
  %v52 = vld [vmem:[%s0 + $0x110] sm:$0xff]
  %v53 = vld [vmem:[%s0 + $0x118] sm:$0xff]
  %v54 = vld [vmem:[%s0 + $0x120] sm:$0xff]
  %v55 = vld [vmem:[%s0 + $0x128] sm:$0xff]
  %v56 = vld [vmem:[%s0 + $0x130] sm:$0xff]
  %v57 = vld [vmem:[%s0 + $0x138] sm:$0xff]
  %v58 = vld [vmem:[%s0 + $0x140] sm:$0xff]
  %v59 = vld [vmem:[%s0 + $0x148] sm:$0xff]
  %v60 = vld [vmem:[%s0 + $0x150] sm:$0xff]
  %v61 = vld [vmem:[%s0 + $0x158] sm:$0xff]
  %v62 = vld [vmem:[%s0 + $0x160] sm:$0xff]
  %v63 = vld [vmem:[%s0 + $0x168] sm:$0xff]
  %v64 = vld [vmem:[%s0 + $0x170] sm:$0xff]
  %v65 = vld [vmem:[%s0 + $0x178] sm:$0xff]
  %v66 = vld [vmem:[%s0 + $0x180] sm:$0xff]
  %v67 = vld [vmem:[%s0 + $0x188] sm:$0xff]
  %v68 = vld [vmem:[%s0 + $0x190] sm:$0xff]
  %v69 = vld [vmem:[%s0 + $0x198] sm:$0xff]
  %v70 = vld [vmem:[%s0 + $0x1a0] sm:$0xff]
  %v71 = vld [vmem:[%s0 + $0x1a8] sm:$0xff]
  %v72 = vld [vmem:[%s0 + $0x1b0] sm:$0xff]
  %v73 = vld [vmem:[%s0 + $0x1b8] sm:$0xff]
  %v74 = vld [vmem:[%s0 + $0x1c0] sm:$0xff]
  %v75 = vld [vmem:[%s0 + $0x1c8] sm:$0xff]
  %v76 = vld [vmem:[%s0 + $0x1d0] sm:$0xff]
  %v77 = vld [vmem:[%s0 + $0x1d8] sm:$0xff]
  %v78 = vld [vmem:[%s0 + $0x1e0] sm:$0xff]
  %v79 = vld [vmem:[%s0 + $0x1e8] sm:$0xff]
  %v80 = vld [vmem:[%s0 + $0x1f0] sm:$0xff]
  %v81 = vld [vmem:[%s0 + $0x1f8] sm:$0xff]
  %v82 = vld [vmem:[%s1] sm:$0xff]
  %v83 = vld [vmem:[%s1 + $0x8] sm:$0xff]
  %v84 = vld [vmem:[%s1 + $0x10] sm:$0xff]
  %v85 = vld [vmem:[%s1 + $0x18] sm:$0xff]
  %v86 = vld [vmem:[%s1 + $0x20] sm:$0xff]
  %v87 = vld [vmem:[%s1 + $0x28] sm:$0xff]
  %v88 = vld [vmem:[%s1 + $0x30] sm:$0xff]
  %v89 = vld [vmem:[%s1 + $0x38] sm:$0xff]
  %v90 = vld [vmem:[%s1 + $0x40] sm:$0xff]
  %v91 = vld [vmem:[%s1 + $0x48] sm:$0xff]
  %v92 = vld [vmem:[%s1 + $0x50] sm:$0xff]
  %v93 = vld [vmem:[%s1 + $0x58] sm:$0xff]
  %v94 = vld [vmem:[%s1 + $0x60] sm:$0xff]
  %v95 = vld [vmem:[%s1 + $0x68] sm:$0xff]
  %v96 = vld [vmem:[%s1 + $0x70] sm:$0xff]
  %v97 = vld [vmem:[%s1 + $0x78] sm:$0xff]
  %v98 = vld [vmem:[%s1 + $0x80] sm:$0xff]
  %v99 = vld [vmem:[%s1 + $0x88] sm:$0xff]
  %v100 = vld [vmem:[%s1 + $0x90] sm:$0xff]
  %v101 = vld [vmem:[%s1 + $0x98] sm:$0xff]
  %v102 = vld [vmem:[%s1 + $0xa0] sm:$0xff]
  %v103 = vld [vmem:[%s1 + $0xa8] sm:$0xff]
  %v104 = vld [vmem:[%s1 + $0xb0] sm:$0xff]
  %v105 = vld [vmem:[%s1 + $0xb8] sm:$0xff]
  %v106 = vld [vmem:[%s1 + $0xc0] sm:$0xff]
  %v107 = vld [vmem:[%s1 + $0xc8] sm:$0xff]
  %v108 = vld [vmem:[%s1 + $0xd0] sm:$0xff]
  %v109 = vld [vmem:[%s1 + $0xd8] sm:$0xff]
  %v110 = vld [vmem:[%s1 + $0xe0] sm:$0xff]
  %v111 = vld [vmem:[%s1 + $0xe8] sm:$0xff]
  %v112 = vld [vmem:[%s1 + $0xf0] sm:$0xff]
  %v113 = vld [vmem:[%s1 + $0xf8] sm:$0xff]
  %v114 = vld [vmem:[%s1 + $0x100] sm:$0xff]
  %v115 = vld [vmem:[%s1 + $0x108] sm:$0xff]
  %v116 = vld [vmem:[%s1 + $0x110] sm:$0xff]
  %v117 = vld [vmem:[%s1 + $0x118] sm:$0xff]
  %v118 = vld [vmem:[%s1 + $0x120] sm:$0xff]
  %v119 = vld [vmem:[%s1 + $0x128] sm:$0xff]
  %v120 = vld [vmem:[%s1 + $0x130] sm:$0xff]
  %v121 = vld [vmem:[%s1 + $0x138] sm:$0xff]
  %v122 = vld [vmem:[%s1 + $0x140] sm:$0xff]
  %v123 = vld [vmem:[%s1 + $0x148] sm:$0xff]
  %v124 = vld [vmem:[%s1 + $0x150] sm:$0xff]
  %v125 = vld [vmem:[%s1 + $0x158] sm:$0xff]
  %v126 = vld [vmem:[%s1 + $0x160] sm:$0xff]
  %v127 = vld [vmem:[%s1 + $0x168] sm:$0xff]
  %v128 = vld [vmem:[%s1 + $0x170] sm:$0xff]
  %v129 = vld [vmem:[%s1 + $0x178] sm:$0xff]
  %v130 = vld [vmem:[%s1 + $0x180] sm:$0xff]
  %v131 = vld [vmem:[%s1 + $0x188] sm:$0xff]
  %v132 = vld [vmem:[%s1 + $0x190] sm:$0xff]
  %v133 = vld [vmem:[%s1 + $0x198] sm:$0xff]
  %v134 = vld [vmem:[%s1 + $0x1a0] sm:$0xff]
  %v135 = vld [vmem:[%s1 + $0x1a8] sm:$0xff]
  %v136 = vld [vmem:[%s1 + $0x1b0] sm:$0xff]
  %v137 = vld [vmem:[%s1 + $0x1b8] sm:$0xff]
  %v138 = vld [vmem:[%s1 + $0x1c0] sm:$0xff]
  %v139 = vld [vmem:[%s1 + $0x1c8] sm:$0xff]
  %v140 = vld [vmem:[%s1 + $0x1d0] sm:$0xff]
  %v141 = vld [vmem:[%s1 + $0x1d8] sm:$0xff]
  %v142 = vld [vmem:[%s1 + $0x1e0] sm:$0xff]
  %v143 = vld [vmem:[%s1 + $0x1e8] sm:$0xff]
  %v144 = vld [vmem:[%s1 + $0x1f0] sm:$0xff]
  %v145 = vld [vmem:[%s1 + $0x1f8] sm:$0xff]
  %v146 = vadd.f32 %v18, %v82
  %v147 = vadd.f32 %v19, %v83
  %v148 = vadd.f32 %v20, %v84
  %v149 = vadd.f32 %v21, %v85
  %v150 = vadd.f32 %v22, %v86
  %v151 = vadd.f32 %v23, %v87
  %v152 = vadd.f32 %v24, %v88
  %v153 = vadd.f32 %v25, %v89
  %v154 = vadd.f32 %v26, %v90
  %v155 = vadd.f32 %v27, %v91
  %v156 = vadd.f32 %v28, %v92
  %v157 = vadd.f32 %v29, %v93
  %v158 = vadd.f32 %v30, %v94
  %v159 = vadd.f32 %v31, %v95
  %v160 = vadd.f32 %v32, %v96
  %v161 = vadd.f32 %v33, %v97
  %v162 = vadd.f32 %v34, %v98
  %v163 = vadd.f32 %v35, %v99
  %v164 = vadd.f32 %v36, %v100
  %v165 = vadd.f32 %v37, %v101
  %v166 = vadd.f32 %v38, %v102
  %v167 = vadd.f32 %v39, %v103
  %v168 = vadd.f32 %v40, %v104
  %v169 = vadd.f32 %v41, %v105
  %v170 = vadd.f32 %v42, %v106
  %v171 = vadd.f32 %v43, %v107
  %v172 = vadd.f32 %v44, %v108
  %v173 = vadd.f32 %v45, %v109
  %v174 = vadd.f32 %v46, %v110
  %v175 = vadd.f32 %v47, %v111
  %v176 = vadd.f32 %v48, %v112
  %v177 = vadd.f32 %v49, %v113
  %v178 = vadd.f32 %v50, %v114
  %v179 = vadd.f32 %v51, %v115
  %v180 = vadd.f32 %v52, %v116
  %v181 = vadd.f32 %v53, %v117
  %v182 = vadd.f32 %v54, %v118
  %v183 = vadd.f32 %v55, %v119
  %v184 = vadd.f32 %v56, %v120
  %v185 = vadd.f32 %v57, %v121
  %v186 = vadd.f32 %v58, %v122
  %v187 = vadd.f32 %v59, %v123
  %v188 = vadd.f32 %v60, %v124
  %v189 = vadd.f32 %v61, %v125
  %v190 = vadd.f32 %v62, %v126
  %v191 = vadd.f32 %v63, %v127
  %v192 = vadd.f32 %v64, %v128
  %v193 = vadd.f32 %v65, %v129
  %v194 = vadd.f32 %v66, %v130
  %v195 = vadd.f32 %v67, %v131
  %v196 = vadd.f32 %v68, %v132
  %v197 = vadd.f32 %v69, %v133
  %v198 = vadd.f32 %v70, %v134
  %v199 = vadd.f32 %v71, %v135
  %v200 = vadd.f32 %v72, %v136
  %v201 = vadd.f32 %v73, %v137
  %v202 = vadd.f32 %v74, %v138
  %v203 = vadd.f32 %v75, %v139
  %v204 = vadd.f32 %v76, %v140
  %v205 = vadd.f32 %v77, %v141
  %v206 = vadd.f32 %v78, %v142
  %v207 = vadd.f32 %v79, %v143
  %v208 = vadd.f32 %v80, %v144
  %v209 = vadd.f32 %v81, %v145
  %v210 = vpack.c.bf16 %v147, %v146
  %v211 = vpack.c.bf16 %v149, %v148
  %v212 = vpack.c.bf16 %v151, %v150
  %v213 = vpack.c.bf16 %v153, %v152
  %v214 = vpack.c.bf16 %v155, %v154
  %v215 = vpack.c.bf16 %v157, %v156
  %v216 = vpack.c.bf16 %v159, %v158
  %v217 = vpack.c.bf16 %v161, %v160
  %v218 = vpack.c.bf16 %v163, %v162
  %v219 = vpack.c.bf16 %v165, %v164
  %v220 = vpack.c.bf16 %v167, %v166
  %v221 = vpack.c.bf16 %v169, %v168
  %v222 = vpack.c.bf16 %v171, %v170
  %v223 = vpack.c.bf16 %v173, %v172
  %v224 = vpack.c.bf16 %v175, %v174
  %v225 = vpack.c.bf16 %v177, %v176
  %v226 = vpack.c.bf16 %v179, %v178
  %v227 = vpack.c.bf16 %v181, %v180
  %v228 = vpack.c.bf16 %v183, %v182
  %v229 = vpack.c.bf16 %v185, %v184
  %v230 = vpack.c.bf16 %v187, %v186
  %v231 = vpack.c.bf16 %v189, %v188
  %v232 = vpack.c.bf16 %v191, %v190
  %v233 = vpack.c.bf16 %v193, %v192
  %v234 = vpack.c.bf16 %v195, %v194
  %v235 = vpack.c.bf16 %v197, %v196
  %v236 = vpack.c.bf16 %v199, %v198
  %v237 = vpack.c.bf16 %v201, %v200
  %v238 = vpack.c.bf16 %v203, %v202
  %v239 = vpack.c.bf16 %v205, %v204
  %v240 = vpack.c.bf16 %v207, %v206
  %v241 = vpack.c.bf16 %v209, %v208
  %v242 = vld [vmem:[%s2] sm:$0xf]
  %v243 = vld [vmem:[%s2 + $0x4] sm:$0xf]
  %v244 = vld [vmem:[%s2 + $0x8] sm:$0xf]
  %v245 = vld [vmem:[%s2 + $0xc] sm:$0xf]
  %v246 = vld [vmem:[%s3] sm:$0x1]
  %v248 = vlaneseq
  %v249 = vshrl.u32 %v248, 7
  %v250 = vsub.s32 0, %v249
  %v251 = vrot.slane %v246, %v250
  %v257 = vunpack.c.l.b16 %v242
  %v258 = vunpack.c.l.b16 %v243
  %v259 = vunpack.c.l.b16 %v244
  %v260 = vunpack.c.l.b16 %v245
  %v261 = vpack.c.b16 %v258, %v257
  %v262 = vpack.c.b16 %v260, %v259
  %vm265 = vcmask 261120
  %v267 = vsel %vm265, %v210, 0
  %v270 = vsel %vm265, %v211, 0
  %v273 = vsel %vm265, %v212, 0
  %v276 = vsel %vm265, %v213, 0
  %v279 = vsel %vm265, %v214, 0
  %v282 = vsel %vm265, %v215, 0
  %v285 = vsel %vm265, %v216, 0
  %v288 = vsel %vm265, %v217, 0
  %v291 = vsel %vm265, %v218, 0
  %v294 = vsel %vm265, %v219, 0
  %v297 = vsel %vm265, %v220, 0
  %v300 = vsel %vm265, %v221, 0
  %v303 = vsel %vm265, %v222, 0
  %v306 = vsel %vm265, %v223, 0
  %v309 = vsel %vm265, %v224, 0
  %v312 = vsel %vm265, %v225, 0
  %v315 = vsel %vm265, %v226, 0
  %v318 = vsel %vm265, %v227, 0
  %v321 = vsel %vm265, %v228, 0
  %v324 = vsel %vm265, %v229, 0
  %v327 = vsel %vm265, %v230, 0
  %v330 = vsel %vm265, %v231, 0
  %v333 = vsel %vm265, %v232, 0
  %v336 = vsel %vm265, %v233, 0
  %v339 = vsel %vm265, %v234, 0
  %v342 = vsel %vm265, %v235, 0
  %v345 = vsel %vm265, %v236, 0
  %v348 = vsel %vm265, %v237, 0
  %v351 = vsel %vm265, %v238, 0
  %v354 = vsel %vm265, %v239, 0
  %v357 = vsel %vm265, %v240, 0
  %v360 = vsel %vm265, %v241, 0
  %362 = vmatprep.subr.bf16.mxu0 0
  %363 = vmatpush1.bf16.msra.mxu0 0
  %364 = vmatprep.subr.bf16.mxu0 0
  %365 = vmatpush1.bf16.msra.mxu0 0
  %366 = vmatprep.subr.bf16.mxu0 0
  %367 = vmatpush1.bf16.msra.mxu0 0
  %368 = vmatprep.subr.bf16.mxu0 0
  %369 = vmatpush1.bf16.msra.mxu0 0
  %370 = vmatprep.subr.bf16.mxu0 0
  %371 = vmatpush1.bf16.msra.mxu0 0
  %372 = vmatprep.subr.bf16.mxu0 0
  %373 = vmatpush1.bf16.msra.mxu0 0
  %374 = vmatprep.subr.bf16.mxu0 0
  %375 = vmatpush1.bf16.msra.mxu0 %v262
  %376 = vmatprep.subr.bf16.mxu0 0
  %377 = vmatpush1.bf16.msra.mxu0 %v261
  %378 = vmatprep.subr.bf16.mxu0 0
  %379 = vmatpush2.bf16.msra.mxu0 0
  %380 = vmatprep.subr.bf16.mxu0 0
  %381 = vmatpush2.bf16.msra.mxu0 0
  %382 = vmatprep.subr.bf16.mxu0 0
  %383 = vmatpush2.bf16.msra.mxu0 0
  %384 = vmatprep.subr.bf16.mxu0 0
  %385 = vmatpush2.bf16.msra.mxu0 0
  %386 = vmatprep.subr.bf16.mxu0 0
  %387 = vmatpush2.bf16.msra.mxu0 0
  %388 = vmatprep.subr.bf16.mxu0 0
  %389 = vmatpush2.bf16.msra.mxu0 0
  %390 = vmatprep.subr.bf16.mxu0 0
  %391 = vmatpush2.bf16.msra.mxu0 0
  %392 = vmatprep.subr.bf16.mxu0 0
  %393 = vmatpush2.bf16.msra.mxu0 0
  %394 = vmatprep.mubr.bf16.mxu0 0
  %395 = vmatmul.mubr.bf16.gmra.mxu0 %v267
  %v396 = vpop.f32.mrf.mxu0
  %v397 = vadd.f32 %v251, %v396
  %v398 = vpop.f32.mrf.mxu0
  %v399 = vpop.f32.mrf.mxu0
  %v400 = vadd.f32 %v251, %v399
  %v401 = vpop.f32.mrf.mxu0
  %402 = vmatprep.mubr.bf16.mxu0 0
  %403 = vmatmul.mubr.bf16.gmra.mxu0 %v270
  %v404 = vpop.f32.mrf.mxu0
  %v405 = vadd.f32 %v251, %v404
  %v406 = vpop.f32.mrf.mxu0
  %v407 = vpop.f32.mrf.mxu0
  %v408 = vadd.f32 %v251, %v407
  %v409 = vpop.f32.mrf.mxu0
  %410 = vmatprep.mubr.bf16.mxu0 0
  %411 = vmatmul.mubr.bf16.gmra.mxu0 %v273
  %v412 = vpop.f32.mrf.mxu0
  %v413 = vadd.f32 %v251, %v412
  %v414 = vpop.f32.mrf.mxu0
  %v415 = vpop.f32.mrf.mxu0
  %v416 = vadd.f32 %v251, %v415
  %v417 = vpop.f32.mrf.mxu0
  %418 = vmatprep.mubr.bf16.mxu0 0
  %419 = vmatmul.mubr.bf16.gmra.mxu0 %v276
  %v420 = vpop.f32.mrf.mxu0
  %v421 = vadd.f32 %v251, %v420
  %v422 = vpop.f32.mrf.mxu0
  %v423 = vpop.f32.mrf.mxu0
  %v424 = vadd.f32 %v251, %v423
  %v425 = vpop.f32.mrf.mxu0
  %426 = vmatprep.mubr.bf16.mxu0 0
  %427 = vmatmul.mubr.bf16.gmra.mxu0 %v279
  %v428 = vpop.f32.mrf.mxu0
  %v429 = vadd.f32 %v251, %v428
  %v430 = vpop.f32.mrf.mxu0
  %v431 = vpop.f32.mrf.mxu0
  %v432 = vadd.f32 %v251, %v431
  %v433 = vpop.f32.mrf.mxu0
  %434 = vmatprep.mubr.bf16.mxu0 0
  %435 = vmatmul.mubr.bf16.gmra.mxu0 %v282
  %v436 = vpop.f32.mrf.mxu0
  %v437 = vadd.f32 %v251, %v436
  %v438 = vpop.f32.mrf.mxu0
  %v439 = vpop.f32.mrf.mxu0
  %v440 = vadd.f32 %v251, %v439
  %v441 = vpop.f32.mrf.mxu0
  %442 = vmatprep.mubr.bf16.mxu0 0
  %443 = vmatmul.mubr.bf16.gmra.mxu0 %v285
  %v444 = vpop.f32.mrf.mxu0
  %v445 = vadd.f32 %v251, %v444
  %v446 = vpop.f32.mrf.mxu0
  %v447 = vpop.f32.mrf.mxu0
  %v448 = vadd.f32 %v251, %v447
  %v449 = vpop.f32.mrf.mxu0
  %450 = vmatprep.mubr.bf16.mxu0 0
  %451 = vmatmul.mubr.bf16.gmra.mxu0 %v288
  %v452 = vpop.f32.mrf.mxu0
  %v453 = vadd.f32 %v251, %v452
  %v454 = vpop.f32.mrf.mxu0
  %v455 = vpop.f32.mrf.mxu0
  %v456 = vadd.f32 %v251, %v455
  %v457 = vpop.f32.mrf.mxu0
  %458 = vmatprep.mubr.bf16.mxu0 0
  %459 = vmatmul.mubr.bf16.gmra.mxu0 %v291
  %v460 = vpop.f32.mrf.mxu0
  %v461 = vadd.f32 %v251, %v460
  %v462 = vpop.f32.mrf.mxu0
  %v463 = vpop.f32.mrf.mxu0
  %v464 = vadd.f32 %v251, %v463
  %v465 = vpop.f32.mrf.mxu0
  %466 = vmatprep.mubr.bf16.mxu0 0
  %467 = vmatmul.mubr.bf16.gmra.mxu0 %v294
  %v468 = vpop.f32.mrf.mxu0
  %v469 = vadd.f32 %v251, %v468
  %v470 = vpop.f32.mrf.mxu0
  %v471 = vpop.f32.mrf.mxu0
  %v472 = vadd.f32 %v251, %v471
  %v473 = vpop.f32.mrf.mxu0
  %474 = vmatprep.mubr.bf16.mxu0 0
  %475 = vmatmul.mubr.bf16.gmra.mxu0 %v297
  %v476 = vpop.f32.mrf.mxu0
  %v477 = vadd.f32 %v251, %v476
  %v478 = vpop.f32.mrf.mxu0
  %v479 = vpop.f32.mrf.mxu0
  %v480 = vadd.f32 %v251, %v479
  %v481 = vpop.f32.mrf.mxu0
  %482 = vmatprep.mubr.bf16.mxu0 0
  %483 = vmatmul.mubr.bf16.gmra.mxu0 %v300
  %v484 = vpop.f32.mrf.mxu0
  %v485 = vadd.f32 %v251, %v484
  %v486 = vpop.f32.mrf.mxu0
  %v487 = vpop.f32.mrf.mxu0
  %v488 = vadd.f32 %v251, %v487
  %v489 = vpop.f32.mrf.mxu0
  %490 = vmatprep.mubr.bf16.mxu0 0
  %491 = vmatmul.mubr.bf16.gmra.mxu0 %v303
  %v492 = vpop.f32.mrf.mxu0
  %v493 = vadd.f32 %v251, %v492
  %v494 = vpop.f32.mrf.mxu0
  %v495 = vpop.f32.mrf.mxu0
  %v496 = vadd.f32 %v251, %v495
  %v497 = vpop.f32.mrf.mxu0
  %498 = vmatprep.mubr.bf16.mxu0 0
  %499 = vmatmul.mubr.bf16.gmra.mxu0 %v306
  %v500 = vpop.f32.mrf.mxu0
  %v501 = vadd.f32 %v251, %v500
  %v502 = vpop.f32.mrf.mxu0
  %v503 = vpop.f32.mrf.mxu0
  %v504 = vadd.f32 %v251, %v503
  %v505 = vpop.f32.mrf.mxu0
  %506 = vmatprep.mubr.bf16.mxu0 0
  %507 = vmatmul.mubr.bf16.gmra.mxu0 %v309
  %v508 = vpop.f32.mrf.mxu0
  %v509 = vadd.f32 %v251, %v508
  %v510 = vpop.f32.mrf.mxu0
  %v511 = vpop.f32.mrf.mxu0
  %v512 = vadd.f32 %v251, %v511
  %v513 = vpop.f32.mrf.mxu0
  %514 = vmatprep.mubr.bf16.mxu0 0
  %515 = vmatmul.mubr.bf16.gmra.mxu0 %v312
  %v516 = vpop.f32.mrf.mxu0
  %v517 = vadd.f32 %v251, %v516
  %v518 = vpop.f32.mrf.mxu0
  %v519 = vpop.f32.mrf.mxu0
  %v520 = vadd.f32 %v251, %v519
  %v521 = vpop.f32.mrf.mxu0
  %522 = vmatprep.mubr.bf16.mxu0 0
  %523 = vmatmul.mubr.bf16.gmra.mxu0 %v315
  %v524 = vpop.f32.mrf.mxu0
  %v525 = vadd.f32 %v251, %v524
  %v526 = vpop.f32.mrf.mxu0
  %v527 = vpop.f32.mrf.mxu0
  %v528 = vadd.f32 %v251, %v527
  %v529 = vpop.f32.mrf.mxu0
  %530 = vmatprep.mubr.bf16.mxu0 0
  %531 = vmatmul.mubr.bf16.gmra.mxu0 %v318
  %v532 = vpop.f32.mrf.mxu0
  %v533 = vadd.f32 %v251, %v532
  %v534 = vpop.f32.mrf.mxu0
  %v535 = vpop.f32.mrf.mxu0
  %v536 = vadd.f32 %v251, %v535
  %v537 = vpop.f32.mrf.mxu0
  %538 = vmatprep.mubr.bf16.mxu0 0
  %539 = vmatmul.mubr.bf16.gmra.mxu0 %v321
  %v540 = vpop.f32.mrf.mxu0
  %v541 = vadd.f32 %v251, %v540
  %v542 = vpop.f32.mrf.mxu0
  %v543 = vpop.f32.mrf.mxu0
  %v544 = vadd.f32 %v251, %v543
  %v545 = vpop.f32.mrf.mxu0
  %546 = vmatprep.mubr.bf16.mxu0 0
  %547 = vmatmul.mubr.bf16.gmra.mxu0 %v324
  %v548 = vpop.f32.mrf.mxu0
  %v549 = vadd.f32 %v251, %v548
  %v550 = vpop.f32.mrf.mxu0
  %v551 = vpop.f32.mrf.mxu0
  %v552 = vadd.f32 %v251, %v551
  %v553 = vpop.f32.mrf.mxu0
  %554 = vmatprep.mubr.bf16.mxu0 0
  %555 = vmatmul.mubr.bf16.gmra.mxu0 %v327
  %v556 = vpop.f32.mrf.mxu0
  %v557 = vadd.f32 %v251, %v556
  %v558 = vpop.f32.mrf.mxu0
  %v559 = vpop.f32.mrf.mxu0
  %v560 = vadd.f32 %v251, %v559
  %v561 = vpop.f32.mrf.mxu0
  %562 = vmatprep.mubr.bf16.mxu0 0
  %563 = vmatmul.mubr.bf16.gmra.mxu0 %v330
  %v564 = vpop.f32.mrf.mxu0
  %v565 = vadd.f32 %v251, %v564
  %v566 = vpop.f32.mrf.mxu0
  %v567 = vpop.f32.mrf.mxu0
  %v568 = vadd.f32 %v251, %v567
  %v569 = vpop.f32.mrf.mxu0
  %570 = vmatprep.mubr.bf16.mxu0 0
  %571 = vmatmul.mubr.bf16.gmra.mxu0 %v333
  %v572 = vpop.f32.mrf.mxu0
  %v573 = vadd.f32 %v251, %v572
  %v574 = vpop.f32.mrf.mxu0
  %v575 = vpop.f32.mrf.mxu0
  %v576 = vadd.f32 %v251, %v575
  %v577 = vpop.f32.mrf.mxu0
  %578 = vmatprep.mubr.bf16.mxu0 0
  %579 = vmatmul.mubr.bf16.gmra.mxu0 %v336
  %v580 = vpop.f32.mrf.mxu0
  %v581 = vadd.f32 %v251, %v580
  %v582 = vpop.f32.mrf.mxu0
  %v583 = vpop.f32.mrf.mxu0
  %v584 = vadd.f32 %v251, %v583
  %v585 = vpop.f32.mrf.mxu0
  %586 = vmatprep.mubr.bf16.mxu0 0
  %587 = vmatmul.mubr.bf16.gmra.mxu0 %v339
  %v588 = vpop.f32.mrf.mxu0
  %v589 = vadd.f32 %v251, %v588
  %v590 = vpop.f32.mrf.mxu0
  %v591 = vpop.f32.mrf.mxu0
  %v592 = vadd.f32 %v251, %v591
  %v593 = vpop.f32.mrf.mxu0
  %594 = vmatprep.mubr.bf16.mxu0 0
  %595 = vmatmul.mubr.bf16.gmra.mxu0 %v342
  %v596 = vpop.f32.mrf.mxu0
  %v597 = vadd.f32 %v251, %v596
  %v598 = vpop.f32.mrf.mxu0
  %v599 = vpop.f32.mrf.mxu0
  %v600 = vadd.f32 %v251, %v599
  %v601 = vpop.f32.mrf.mxu0
  %602 = vmatprep.mubr.bf16.mxu0 0
  %603 = vmatmul.mubr.bf16.gmra.mxu0 %v345
  %v604 = vpop.f32.mrf.mxu0
  %v605 = vadd.f32 %v251, %v604
  %v606 = vpop.f32.mrf.mxu0
  %v607 = vpop.f32.mrf.mxu0
  %v608 = vadd.f32 %v251, %v607
  %v609 = vpop.f32.mrf.mxu0
  %610 = vmatprep.mubr.bf16.mxu0 0
  %611 = vmatmul.mubr.bf16.gmra.mxu0 %v348
  %v612 = vpop.f32.mrf.mxu0
  %v613 = vadd.f32 %v251, %v612
  %v614 = vpop.f32.mrf.mxu0
  %v615 = vpop.f32.mrf.mxu0
  %v616 = vadd.f32 %v251, %v615
  %v617 = vpop.f32.mrf.mxu0
  %618 = vmatprep.mubr.bf16.mxu0 0
  %619 = vmatmul.mubr.bf16.gmra.mxu0 %v351
  %v620 = vpop.f32.mrf.mxu0
  %v621 = vadd.f32 %v251, %v620
  %v622 = vpop.f32.mrf.mxu0
  %v623 = vpop.f32.mrf.mxu0
  %v624 = vadd.f32 %v251, %v623
  %v625 = vpop.f32.mrf.mxu0
  %626 = vmatprep.mubr.bf16.mxu0 0
  %627 = vmatmul.mubr.bf16.gmra.mxu0 %v354
  %v628 = vpop.f32.mrf.mxu0
  %v629 = vadd.f32 %v251, %v628
  %v630 = vpop.f32.mrf.mxu0
  %v631 = vpop.f32.mrf.mxu0
  %v632 = vadd.f32 %v251, %v631
  %v633 = vpop.f32.mrf.mxu0
  %634 = vmatprep.mubr.bf16.mxu0 0
  %635 = vmatmul.mubr.bf16.gmra.mxu0 %v357
  %v636 = vpop.f32.mrf.mxu0
  %v637 = vadd.f32 %v251, %v636
  %v638 = vpop.f32.mrf.mxu0
  %v639 = vpop.f32.mrf.mxu0
  %v640 = vadd.f32 %v251, %v639
  %v641 = vpop.f32.mrf.mxu0
  %642 = vmatprep.mubr.bf16.mxu0 0
  %643 = vmatmul.mubr.bf16.gmra.mxu0 %v360
  %v644 = vpop.f32.mrf.mxu0
  %v645 = vadd.f32 %v251, %v644
  %v646 = vpop.f32.mrf.mxu0
  %v647 = vpop.f32.mrf.mxu0
  %v648 = vadd.f32 %v251, %v647
  %v649 = vpop.f32.mrf.mxu0
  %650 = vdwg.mxu0
  %vm651 = vcmask 785408
  %652 = vst.msk [vmem:[%s4] sm:$0xff] %vm651, %v397
  %653 = vst.msk [vmem:[%s4 + $0x8] sm:$0xff] %vm651, %v400
  %654 = vst.msk [vmem:[%s4 + $0x10] sm:$0xff] %vm651, %v405
  %655 = vst.msk [vmem:[%s4 + $0x18] sm:$0xff] %vm651, %v408
  %656 = vst.msk [vmem:[%s4 + $0x20] sm:$0xff] %vm651, %v413
  %657 = vst.msk [vmem:[%s4 + $0x28] sm:$0xff] %vm651, %v416
  %658 = vst.msk [vmem:[%s4 + $0x30] sm:$0xff] %vm651, %v421
  %659 = vst.msk [vmem:[%s4 + $0x38] sm:$0xff] %vm651, %v424
  %660 = vst.msk [vmem:[%s4 + $0x40] sm:$0xff] %vm651, %v429
  %661 = vst.msk [vmem:[%s4 + $0x48] sm:$0xff] %vm651, %v432
  %662 = vst.msk [vmem:[%s4 + $0x50] sm:$0xff] %vm651, %v437
  %663 = vst.msk [vmem:[%s4 + $0x58] sm:$0xff] %vm651, %v440
  %664 = vst.msk [vmem:[%s4 + $0x60] sm:$0xff] %vm651, %v445
  %665 = vst.msk [vmem:[%s4 + $0x68] sm:$0xff] %vm651, %v448
  %666 = vst.msk [vmem:[%s4 + $0x70] sm:$0xff] %vm651, %v453
  %667 = vst.msk [vmem:[%s4 + $0x78] sm:$0xff] %vm651, %v456
  %668 = vst.msk [vmem:[%s4 + $0x80] sm:$0xff] %vm651, %v461
  %669 = vst.msk [vmem:[%s4 + $0x88] sm:$0xff] %vm651, %v464
  %670 = vst.msk [vmem:[%s4 + $0x90] sm:$0xff] %vm651, %v469
  %671 = vst.msk [vmem:[%s4 + $0x98] sm:$0xff] %vm651, %v472
  %672 = vst.msk [vmem:[%s4 + $0xa0] sm:$0xff] %vm651, %v477
  %673 = vst.msk [vmem:[%s4 + $0xa8] sm:$0xff] %vm651, %v480
  %674 = vst.msk [vmem:[%s4 + $0xb0] sm:$0xff] %vm651, %v485
  %675 = vst.msk [vmem:[%s4 + $0xb8] sm:$0xff] %vm651, %v488
  %676 = vst.msk [vmem:[%s4 + $0xc0] sm:$0xff] %vm651, %v493
  %677 = vst.msk [vmem:[%s4 + $0xc8] sm:$0xff] %vm651, %v496
  %678 = vst.msk [vmem:[%s4 + $0xd0] sm:$0xff] %vm651, %v501
  %679 = vst.msk [vmem:[%s4 + $0xd8] sm:$0xff] %vm651, %v504
  %680 = vst.msk [vmem:[%s4 + $0xe0] sm:$0xff] %vm651, %v509
  %681 = vst.msk [vmem:[%s4 + $0xe8] sm:$0xff] %vm651, %v512
  %682 = vst.msk [vmem:[%s4 + $0xf0] sm:$0xff] %vm651, %v517
  %683 = vst.msk [vmem:[%s4 + $0xf8] sm:$0xff] %vm651, %v520
  %684 = vst.msk [vmem:[%s4 + $0x100] sm:$0xff] %vm651, %v525
  %685 = vst.msk [vmem:[%s4 + $0x108] sm:$0xff] %vm651, %v528
  %686 = vst.msk [vmem:[%s4 + $0x110] sm:$0xff] %vm651, %v533
  %687 = vst.msk [vmem:[%s4 + $0x118] sm:$0xff] %vm651, %v536
  %688 = vst.msk [vmem:[%s4 + $0x120] sm:$0xff] %vm651, %v541
  %689 = vst.msk [vmem:[%s4 + $0x128] sm:$0xff] %vm651, %v544
  %690 = vst.msk [vmem:[%s4 + $0x130] sm:$0xff] %vm651, %v549
  %691 = vst.msk [vmem:[%s4 + $0x138] sm:$0xff] %vm651, %v552
  %692 = vst.msk [vmem:[%s4 + $0x140] sm:$0xff] %vm651, %v557
  %693 = vst.msk [vmem:[%s4 + $0x148] sm:$0xff] %vm651, %v560
  %694 = vst.msk [vmem:[%s4 + $0x150] sm:$0xff] %vm651, %v565
  %695 = vst.msk [vmem:[%s4 + $0x158] sm:$0xff] %vm651, %v568
  %696 = vst.msk [vmem:[%s4 + $0x160] sm:$0xff] %vm651, %v573
  %697 = vst.msk [vmem:[%s4 + $0x168] sm:$0xff] %vm651, %v576
  %698 = vst.msk [vmem:[%s4 + $0x170] sm:$0xff] %vm651, %v581
  %699 = vst.msk [vmem:[%s4 + $0x178] sm:$0xff] %vm651, %v584
  %700 = vst.msk [vmem:[%s4 + $0x180] sm:$0xff] %vm651, %v589
  %701 = vst.msk [vmem:[%s4 + $0x188] sm:$0xff] %vm651, %v592
  %702 = vst.msk [vmem:[%s4 + $0x190] sm:$0xff] %vm651, %v597
  %703 = vst.msk [vmem:[%s4 + $0x198] sm:$0xff] %vm651, %v600
  %704 = vst.msk [vmem:[%s4 + $0x1a0] sm:$0xff] %vm651, %v605
  %705 = vst.msk [vmem:[%s4 + $0x1a8] sm:$0xff] %vm651, %v608
  %706 = vst.msk [vmem:[%s4 + $0x1b0] sm:$0xff] %vm651, %v613
  %707 = vst.msk [vmem:[%s4 + $0x1b8] sm:$0xff] %vm651, %v616
  %708 = vst.msk [vmem:[%s4 + $0x1c0] sm:$0xff] %vm651, %v621
  %709 = vst.msk [vmem:[%s4 + $0x1c8] sm:$0xff] %vm651, %v624
  %710 = vst.msk [vmem:[%s4 + $0x1d0] sm:$0xff] %vm651, %v629
  %711 = vst.msk [vmem:[%s4 + $0x1d8] sm:$0xff] %vm651, %v632
  %712 = vst.msk [vmem:[%s4 + $0x1e0] sm:$0xff] %vm651, %v637
  %713 = vst.msk [vmem:[%s4 + $0x1e8] sm:$0xff] %vm651, %v640
  %714 = vst.msk [vmem:[%s4 + $0x1f0] sm:$0xff] %vm651, %v645
  %715 = vst.msk [vmem:[%s4 + $0x1f8] sm:$0xff] %vm651, %v648
  // Predicated region
  $region18: #{recurrent_residual_block_tl.16} parent=0 // pred_check
    _
  $region19: #{recurrent_residual_block_tl.16} parent=0 // pred_check_branch
    %717 = sbr.rel (0) target = $region21
  $region20: #{recurrent_residual_block_tl.16} parent=0 // pred_region
    _
  $region21: #{recurrent_residual_block_tl.16} parent=0 // pred_fallthru
    _
  // Predicated region
  $region22: #{recurrent_residual_block_tl.16} parent=0 // pred_check
    _
  $region23: #{recurrent_residual_block_tl.16} parent=0 // pred_check_branch
    %719 = sbr.rel (0) target = $region25
  $region24: #{recurrent_residual_block_tl.16} parent=0 // pred_region
    _
  $region25: #{recurrent_residual_block_tl.16} parent=0 // pred_fallthru
    _

</llo_original>
